<compile_context>
chip_gen: v7x
topology: tpu7x:2x2x1
jax: 0.10.0
libtpu: 0.0.40
codegen_flags: <defaults>
</compile_context>

<pallas_src>
import numpy as np

import jax
import jax.numpy as jnp
from jax.experimental import pallas as pl
from jax.experimental.pallas import tpu as pltpu

MAX_TILE_B = 64                                 # batch tile cap (multiple of 8)

# Geometry of the flattened-lane layout.
_PAD1 = 30                                      # conv1 grid: (28+2) x (28+2) -> 900 lanes
_PAD2 = 16                                      # conv2 grid: (14+2) x (14+2) -> 256 lanes
_CORE1 = _PAD1 * _PAD1 - 2 * (_PAD1 + 1)        # 838: conv1 output core lanes
_CORE2 = _PAD2 * _PAD2 - 2 * (_PAD2 + 1)        # 222: conv2 output core lanes
_M1W = _CORE1 - (_PAD1 + 1)                     # 807: pool1 2x2-max lanes
_M2W = _CORE2 - (_PAD2 + 1)                     # 205: pool2 2x2-max lanes


# --------------------------- fused whole-net kernel --------------------------

def _net_kernel(x_ref, w1_ref, b1_ref, w2_ref, b2_ref,
                sel1_ref, w1eff_ref, fc1b_ref, fc2w_ref, fc2b_ref, out_ref):
    """conv1+relu+pool1+conv2+relu+pool2+fc1+relu+fc2 for one batch tile.

    x_ref:     [TB, 900]       zero-padded 30x30 images, row-major lanes.
    sel1_ref:  [807, 256]      0/1: pool1 stride-2 selection + re-pad to 16x16.
    w1eff_ref: [8, 205, 32]    fc1 weights with pool2 selection + NCHW flatten
                               order folded in (rows not selected are zero).
    out_ref:   [TB, ncls]      logits.
    """
    f32 = jnp.float32
    x = x_ref[...]                                             # [TB, 900]
    sel1 = sel1_ref[...]                                       # [807, 256]

    # ---- conv1 + ReLU: unrolled tap FMAs on full-image lane spans ----------
    # Core lane q maps to padded position p = q + 31 = (h+1)*30 + (w+1).
    c1 = []
    for co in range(4):
        acc = None
        for dh in range(3):
            for dw in range(3):
                s = _PAD1 * dh + dw
                t = x[:, s:s + _CORE1] * w1_ref[co, 3 * dh + dw]
                acc = t if acc is None else acc + t
        c1.append(jnp.maximum(acc + b1_ref[co], 0.0))          # [TB, 838]

    # ---- pool1 (2x2 max) + zero re-pad to 16x16 via one selection matmul ---
    p1 = []
    for ci in range(4):
        a = c1[ci]
        t = jnp.maximum(a[:, :_M1W + _PAD1], a[:, 1:_M1W + _PAD1 + 1])
        m = jnp.maximum(t[:, :_M1W], t[:, _PAD1:_M1W + _PAD1])   # [TB, 807]
        p1.append(jnp.dot(m, sel1, preferred_element_type=f32))  # [TB, 256]

    # ---- conv2 + ReLU on the padded 16x16 grid ------------------------------
    # Core lane q2 maps to padded position p2 = q2 + 17 = (h+1)*16 + (w+1).
    c2 = []
    for co in range(8):
        acc = None
        for ci in range(4):
            pc = p1[ci]
            for dh in range(3):
                for dw in range(3):
                    s = _PAD2 * dh + dw
                    t = pc[:, s:s + _CORE2] * w2_ref[co, 9 * ci + 3 * dh + dw]
                    acc = t if acc is None else acc + t
        c2.append(jnp.maximum(acc + b2_ref[co], 0.0))           # [TB, 222]

    # ---- pool2 + flatten + fc1 (selection folded into the fc1 weights) -----
    hacc = None
    for co in range(8):
        a = c2[co]
        t = jnp.maximum(a[:, :_M2W + _PAD2], a[:, 1:_M2W + _PAD2 + 1])
        m = jnp.maximum(t[:, :_M2W], t[:, _PAD2:_M2W + _PAD2])     # [TB, 205]
        z = jnp.dot(m, w1eff_ref[co], preferred_element_type=f32)  # [TB, 32]
        hacc = z if hacc is None else hacc + z
    h = jnp.maximum(hacc + fc1b_ref[...], 0.0)

    # ---- fc2 ----------------------------------------------------------------
    out_ref[...] = (jnp.dot(h, fc2w_ref[...], preferred_element_type=f32)
                    + fc2b_ref[...])


# --------------------------- constants & weight prep -------------------------

def _pool1_selection():
    """[807, 256] 0/1 matrix: pool1 lane 60*hp + 2*wp -> lane (hp+1)*16+(wp+1)
    of the zero-padded 16x16 conv2 input grid (all other lanes stay zero)."""
    s = np.zeros((_M1W, _PAD2 * _PAD2), np.float32)
    for hp in range(14):
        for wp in range(14):
            s[2 * _PAD1 * hp + 2 * wp, (hp + 1) * _PAD2 + (wp + 1)] = 1.0
    return s


def _fc1_folded(fc1_w):
    """[8, 205, 32]: transposed fc1 weights scattered so the pool2 stride-2
    selection and torch's NCHW flatten order are folded into the matmul."""
    wt = np.asarray(fc1_w, np.float32).T                        # [392, 32]
    hid = wt.shape[1]
    w = np.zeros((8, _M2W, hid), np.float32)
    for co in range(8):
        for hp in range(7):
            for wp in range(7):
                w[co, 2 * _PAD2 * hp + 2 * wp, :] = wt[co * 49 + 7 * hp + wp, :]
    return w


def prepare_params(params):
    """Hoist all weight reshapes/transposes + constants out of the forward pass."""
    return {
        "w1": jnp.asarray(params["conv1_w"], jnp.float32).reshape(4, 9),
        "b1": jnp.asarray(params["conv1_b"], jnp.float32),
        "w2": jnp.asarray(params["conv2_w"], jnp.float32).reshape(8, 36),
        "b2": jnp.asarray(params["conv2_b"], jnp.float32),
        "sel1": jnp.asarray(_pool1_selection()),                 # [807, 256]
        "w1eff": jnp.asarray(_fc1_folded(params["fc1_w"])),      # [8, 205, 32]
        "fc1_b": jnp.asarray(params["fc1_b"], jnp.float32).reshape(1, -1),
        "fc2_w": jnp.asarray(params["fc2_w"], jnp.float32).T,    # [32, ncls]
        "fc2_b": jnp.asarray(params["fc2_b"], jnp.float32).reshape(1, -1),
    }


def _pick_tile(batch):
    """Batch tile (multiple of 8, <= MAX_TILE_B); keep >= 2 grid steps when the
    batch allows it so both v7x TensorCores get work."""
    bp8 = -(-batch // 8) * 8
    tb = min(MAX_TILE_B, bp8)
    if bp8 >= 16 and bp8 // tb < 2:
        tb = -(-(bp8 // 2) // 8) * 8
    bp = -(-batch // tb) * tb
    return tb, bp


# ------------------------------- forward pass --------------------------------

def net_forward(x, prep):
    """Forward pass of Net.  x: [B, 1, 28, 28] float32 -> logits [B, ncls]."""
    batch = x.shape[0]
    tb, bp = _pick_tile(batch)
    hid, ncls = prep["fc2_w"].shape                              # 32, ncls

    # Zero-pad batch (to the tile) and space (conv1 padding=1), then flatten
    # the padded 30x30 image onto the lane axis.  Single small XLA pad+reshape;
    # no per-tap shifted copies outside the kernel.
    xi = x.astype(jnp.float32).reshape(batch, 28, 28)
    xi = jnp.pad(xi, ((0, bp - batch), (1, 1), (1, 1)))          # [bp, 30, 30]
    xi = xi.reshape(bp, _PAD1 * _PAD1)                           # [bp, 900]

    full2 = lambda i: (0, 0)
    logits = pl.pallas_call(
        _net_kernel,
        grid=(bp // tb,),
        out_shape=jax.ShapeDtypeStruct((bp, ncls), jnp.float32),
        in_specs=[
            pl.BlockSpec((tb, _PAD1 * _PAD1), lambda i: (i, 0)),        # images
            pl.BlockSpec(memory_space=pltpu.MemorySpace.SMEM),          # conv1 w (4,9)
            pl.BlockSpec(memory_space=pltpu.MemorySpace.SMEM),          # conv1 b (4,)
            pl.BlockSpec(memory_space=pltpu.MemorySpace.SMEM),          # conv2 w (8,36)
            pl.BlockSpec(memory_space=pltpu.MemorySpace.SMEM),          # conv2 b (8,)
            pl.BlockSpec((_M1W, _PAD2 * _PAD2), full2),                 # sel1
            pl.BlockSpec((8, _M2W, hid), lambda i: (0, 0, 0)),          # fc1 folded
            pl.BlockSpec((1, hid), full2),                              # fc1 bias
            pl.BlockSpec((hid, ncls), full2),                           # fc2 w
            pl.BlockSpec((1, ncls), full2),                             # fc2 bias
        ],
        out_specs=pl.BlockSpec((tb, ncls), lambda i: (i, 0)),
        compiler_params=pltpu.CompilerParams(
            dimension_semantics=("parallel",),
            vmem_limit_bytes=32 * 1024 * 1024),
        cost_estimate=pl.CostEstimate(
            flops=int(bp * 2.2e6), transcendentals=0,
            bytes_accessed=int(xi.size * 4 + bp * ncls * 4)),
    )(xi, prep["w1"], prep["b1"], prep["w2"], prep["b2"],
      prep["sel1"], prep["w1eff"], prep["fc1_b"], prep["fc2_w"], prep["fc2_b"])

    return logits[:batch]


# ------------------------------- reference & init ----------------------------

def net_forward_reference(x, params):
    """Pure-JAX (no Pallas) reference used for validation."""
    dn = ("NCHW", "OIHW", "NCHW")
    hp = jax.lax.Precision.HIGHEST
    y = jax.lax.conv_general_dilated(x, params["conv1_w"], (1, 1), "SAME",
                                     dimension_numbers=dn, precision=hp)
    y = jax.nn.relu(y + params["conv1_b"].reshape(1, -1, 1, 1))
    y = jax.lax.reduce_window(y, -jnp.inf, jax.lax.max,
                              (1, 1, 2, 2), (1, 1, 2, 2), "VALID")
    y = jax.lax.conv_general_dilated(y, params["conv2_w"], (1, 1), "SAME",
                                     dimension_numbers=dn, precision=hp)
    y = jax.nn.relu(y + params["conv2_b"].reshape(1, -1, 1, 1))
    y = jax.lax.reduce_window(y, -jnp.inf, jax.lax.max,
                              (1, 1, 2, 2), (1, 1, 2, 2), "VALID")
    y = y.reshape(y.shape[0], -1)
    y = jax.nn.relu(jnp.dot(y, params["fc1_w"].T, precision=hp) + params["fc1_b"])
    return jnp.dot(y, params["fc2_w"].T, precision=hp) + params["fc2_b"]


def init_params(key, num_output_classes=10):
    """Deterministic init, PyTorch-default-style uniform(+-1/sqrt(fan_in))."""
    ks = jax.random.split(key, 8)

    def u(k, shape, fan_in):
        bound = 1.0 / float(fan_in) ** 0.5
        return jax.random.uniform(k, shape, jnp.float32, -bound, bound)

    return {
        "conv1_w": u(ks[0], (4, 1, 3, 3), 1 * 9),
        "conv1_b": u(ks[1], (4,), 1 * 9),
        "conv2_w": u(ks[2], (8, 4, 3, 3), 4 * 9),
        "conv2_b": u(ks[3], (8,), 4 * 9),
        "fc1_w":   u(ks[4], (32, 8 * 7 * 7), 8 * 7 * 7),
        "fc1_b":   u(ks[5], (32,), 8 * 7 * 7),
        "fc2_w":   u(ks[6], (num_output_classes, 32), 32),
        "fc2_b":   u(ks[7], (num_output_classes,), 32),
    }


if __name__ == "__main__":
    key = jax.random.PRNGKey(0)
    k_params, k_x = jax.random.split(key)

    params = init_params(k_params, num_output_classes=10)
    prep = prepare_params(params)             # weight/constant prep hoisted out

    # MNIST-shaped input (28x28 is required by fc1 = Linear(8*7*7, 32)).
    x = jax.random.normal(k_x, (2, 1, 28, 28), dtype=jnp.float32)

    fwd = jax.jit(net_forward)
    logits = fwd(x, prep)
    jax.block_until_ready(logits)

    assert logits.shape == (2, 10), logits.shape
    assert logits.dtype == jnp.float32

    ref = net_forward_reference(x, params)
    err = float(jnp.max(jnp.abs(logits - ref)))
    assert err < 2e-2, f"kernel/reference mismatch: max|diff|={err}"

    print("KERNEL_OK")
</pallas_src>

<mosaic_0001>
module attributes {stable_mosaic.version = 11 : i64} {
  func.func @_net_kernel(%arg0: i32, %arg1: memref<8x900xf32, #tpu.memory_space<vmem>>, %arg2: memref<4x9xf32, #tpu.memory_space<smem>>, %arg3: memref<4xf32, #tpu.memory_space<smem>>, %arg4: memref<8x36xf32, #tpu.memory_space<smem>>, %arg5: memref<8xf32, #tpu.memory_space<smem>>, %arg6: memref<807x256xf32, #tpu.memory_space<vmem>>, %arg7: memref<8x205x32xf32, #tpu.memory_space<vmem>>, %arg8: memref<1x32xf32, #tpu.memory_space<vmem>>, %arg9: memref<32x10xf32, #tpu.memory_space<vmem>>, %arg10: memref<1x10xf32, #tpu.memory_space<vmem>>, %arg11: memref<8x10xf32, #tpu.memory_space<vmem>>) attributes {dimension_semantics = [#tpu.dimension_semantics<parallel>], iteration_bounds = array<i64: 1>, scalar_prefetch = 0 : i64, scratch_operands = 0 : i64, tpu.core_type = #tpu.core_type<tc>, window_params = [{transform_indices = @transform_0, window_bounds = array<i64: 8, 900>}, {transform_indices = @transform_1, window_bounds = array<i64: 4, 9>}, {transform_indices = @transform_2, window_bounds = array<i64: 4>}, {transform_indices = @transform_3, window_bounds = array<i64: 8, 36>}, {transform_indices = @transform_4, window_bounds = array<i64: 8>}, {pipeline_mode = #tpu.pipeline_mode<synchronous>, transform_indices = @transform_5, window_bounds = array<i64: 807, 256>}, {pipeline_mode = #tpu.pipeline_mode<synchronous>, transform_indices = @transform_6, window_bounds = array<i64: 8, 205, 32>}, {pipeline_mode = #tpu.pipeline_mode<synchronous>, transform_indices = @transform_7, window_bounds = array<i64: 1, 32>}, {pipeline_mode = #tpu.pipeline_mode<synchronous>, transform_indices = @transform_8, window_bounds = array<i64: 32, 10>}, {pipeline_mode = #tpu.pipeline_mode<synchronous>, transform_indices = @transform_9, window_bounds = array<i64: 1, 10>}, {transform_indices = @transform_10, window_bounds = array<i64: 8, 10>}]} {
    %c0 = arith.constant 0 : index
    %c0_0 = arith.constant 0 : index
    %0 = vector.load %arg1[%c0, %c0_0] : memref<8x900xf32, #tpu.memory_space<vmem>>, vector<8x900xf32>
    %c0_1 = arith.constant 0 : index
    %c0_2 = arith.constant 0 : index
    %1 = vector.load %arg6[%c0_1, %c0_2] : memref<807x256xf32, #tpu.memory_space<vmem>>, vector<807x256xf32>
    %2 = vector.extract_strided_slice %0 {offsets = [0, 0], sizes = [8, 838], strides = [1, 1]} : vector<8x900xf32> to vector<8x838xf32>
    %c0_3 = arith.constant 0 : index
    %c0_4 = arith.constant 0 : index
    %3 = memref.load %arg2[%c0_3, %c0_4] : memref<4x9xf32, #tpu.memory_space<smem>>
    %4 = vector.broadcast %3 : f32 to vector<8x838xf32>
    %5 = arith.mulf %2, %4 : vector<8x838xf32>
    %6 = vector.extract_strided_slice %0 {offsets = [0, 1], sizes = [8, 838], strides = [1, 1]} : vector<8x900xf32> to vector<8x838xf32>
    %c0_5 = arith.constant 0 : index
    %c1 = arith.constant 1 : index
    %7 = memref.load %arg2[%c0_5, %c1] : memref<4x9xf32, #tpu.memory_space<smem>>
    %8 = vector.broadcast %7 : f32 to vector<8x838xf32>
    %9 = arith.mulf %6, %8 : vector<8x838xf32>
    %10 = arith.addf %5, %9 : vector<8x838xf32>
    %11 = vector.extract_strided_slice %0 {offsets = [0, 2], sizes = [8, 838], strides = [1, 1]} : vector<8x900xf32> to vector<8x838xf32>
    %c0_6 = arith.constant 0 : index
    %c2 = arith.constant 2 : index
    %12 = memref.load %arg2[%c0_6, %c2] : memref<4x9xf32, #tpu.memory_space<smem>>
    %13 = vector.broadcast %12 : f32 to vector<8x838xf32>
    %14 = arith.mulf %11, %13 : vector<8x838xf32>
    %15 = arith.addf %10, %14 : vector<8x838xf32>
    %16 = vector.extract_strided_slice %0 {offsets = [0, 30], sizes = [8, 838], strides = [1, 1]} : vector<8x900xf32> to vector<8x838xf32>
    %c0_7 = arith.constant 0 : index
    %c3 = arith.constant 3 : index
    %17 = memref.load %arg2[%c0_7, %c3] : memref<4x9xf32, #tpu.memory_space<smem>>
    %18 = vector.broadcast %17 : f32 to vector<8x838xf32>
    %19 = arith.mulf %16, %18 : vector<8x838xf32>
    %20 = arith.addf %15, %19 : vector<8x838xf32>
    %21 = vector.extract_strided_slice %0 {offsets = [0, 31], sizes = [8, 838], strides = [1, 1]} : vector<8x900xf32> to vector<8x838xf32>
    %c0_8 = arith.constant 0 : index
    %c4 = arith.constant 4 : index
    %22 = memref.load %arg2[%c0_8, %c4] : memref<4x9xf32, #tpu.memory_space<smem>>
    %23 = vector.broadcast %22 : f32 to vector<8x838xf32>
    %24 = arith.mulf %21, %23 : vector<8x838xf32>
    %25 = arith.addf %20, %24 : vector<8x838xf32>
    %26 = vector.extract_strided_slice %0 {offsets = [0, 32], sizes = [8, 838], strides = [1, 1]} : vector<8x900xf32> to vector<8x838xf32>
    %c0_9 = arith.constant 0 : index
    %c5 = arith.constant 5 : index
    %27 = memref.load %arg2[%c0_9, %c5] : memref<4x9xf32, #tpu.memory_space<smem>>
    %28 = vector.broadcast %27 : f32 to vector<8x838xf32>
    %29 = arith.mulf %26, %28 : vector<8x838xf32>
    %30 = arith.addf %25, %29 : vector<8x838xf32>
    %31 = vector.extract_strided_slice %0 {offsets = [0, 60], sizes = [8, 838], strides = [1, 1]} : vector<8x900xf32> to vector<8x838xf32>
    %c0_10 = arith.constant 0 : index
    %c6 = arith.constant 6 : index
    %32 = memref.load %arg2[%c0_10, %c6] : memref<4x9xf32, #tpu.memory_space<smem>>
    %33 = vector.broadcast %32 : f32 to vector<8x838xf32>
    %34 = arith.mulf %31, %33 : vector<8x838xf32>
    %35 = arith.addf %30, %34 : vector<8x838xf32>
    %36 = vector.extract_strided_slice %0 {offsets = [0, 61], sizes = [8, 838], strides = [1, 1]} : vector<8x900xf32> to vector<8x838xf32>
    %c0_11 = arith.constant 0 : index
    %c7 = arith.constant 7 : index
    %37 = memref.load %arg2[%c0_11, %c7] : memref<4x9xf32, #tpu.memory_space<smem>>
    %38 = vector.broadcast %37 : f32 to vector<8x838xf32>
    %39 = arith.mulf %36, %38 : vector<8x838xf32>
    %40 = arith.addf %35, %39 : vector<8x838xf32>
    %41 = vector.extract_strided_slice %0 {offsets = [0, 62], sizes = [8, 838], strides = [1, 1]} : vector<8x900xf32> to vector<8x838xf32>
    %c0_12 = arith.constant 0 : index
    %c8 = arith.constant 8 : index
    %42 = memref.load %arg2[%c0_12, %c8] : memref<4x9xf32, #tpu.memory_space<smem>>
    %43 = vector.broadcast %42 : f32 to vector<8x838xf32>
    %44 = arith.mulf %41, %43 : vector<8x838xf32>
    %45 = arith.addf %40, %44 : vector<8x838xf32>
    %c0_13 = arith.constant 0 : index
    %46 = memref.load %arg3[%c0_13] : memref<4xf32, #tpu.memory_space<smem>>
    %47 = vector.broadcast %46 : f32 to vector<8x838xf32>
    %48 = arith.addf %45, %47 : vector<8x838xf32>
    %cst = arith.constant 0.000000e+00 : f32
    %49 = vector.broadcast %cst : f32 to vector<8x838xf32>
    %50 = arith.maximumf %48, %49 : vector<8x838xf32>
    %51 = vector.extract_strided_slice %0 {offsets = [0, 0], sizes = [8, 838], strides = [1, 1]} : vector<8x900xf32> to vector<8x838xf32>
    %c1_14 = arith.constant 1 : index
    %c0_15 = arith.constant 0 : index
    %52 = memref.load %arg2[%c1_14, %c0_15] : memref<4x9xf32, #tpu.memory_space<smem>>
    %53 = vector.broadcast %52 : f32 to vector<8x838xf32>
    %54 = arith.mulf %51, %53 : vector<8x838xf32>
    %55 = vector.extract_strided_slice %0 {offsets = [0, 1], sizes = [8, 838], strides = [1, 1]} : vector<8x900xf32> to vector<8x838xf32>
    %c1_16 = arith.constant 1 : index
    %c1_17 = arith.constant 1 : index
    %56 = memref.load %arg2[%c1_16, %c1_17] : memref<4x9xf32, #tpu.memory_space<smem>>
    %57 = vector.broadcast %56 : f32 to vector<8x838xf32>
    %58 = arith.mulf %55, %57 : vector<8x838xf32>
    %59 = arith.addf %54, %58 : vector<8x838xf32>
    %60 = vector.extract_strided_slice %0 {offsets = [0, 2], sizes = [8, 838], strides = [1, 1]} : vector<8x900xf32> to vector<8x838xf32>
    %c1_18 = arith.constant 1 : index
    %c2_19 = arith.constant 2 : index
    %61 = memref.load %arg2[%c1_18, %c2_19] : memref<4x9xf32, #tpu.memory_space<smem>>
    %62 = vector.broadcast %61 : f32 to vector<8x838xf32>
    %63 = arith.mulf %60, %62 : vector<8x838xf32>
    %64 = arith.addf %59, %63 : vector<8x838xf32>
    %65 = vector.extract_strided_slice %0 {offsets = [0, 30], sizes = [8, 838], strides = [1, 1]} : vector<8x900xf32> to vector<8x838xf32>
    %c1_20 = arith.constant 1 : index
    %c3_21 = arith.constant 3 : index
    %66 = memref.load %arg2[%c1_20, %c3_21] : memref<4x9xf32, #tpu.memory_space<smem>>
    %67 = vector.broadcast %66 : f32 to vector<8x838xf32>
    %68 = arith.mulf %65, %67 : vector<8x838xf32>
    %69 = arith.addf %64, %68 : vector<8x838xf32>
    %70 = vector.extract_strided_slice %0 {offsets = [0, 31], sizes = [8, 838], strides = [1, 1]} : vector<8x900xf32> to vector<8x838xf32>
    %c1_22 = arith.constant 1 : index
    %c4_23 = arith.constant 4 : index
    %71 = memref.load %arg2[%c1_22, %c4_23] : memref<4x9xf32, #tpu.memory_space<smem>>
    %72 = vector.broadcast %71 : f32 to vector<8x838xf32>
    %73 = arith.mulf %70, %72 : vector<8x838xf32>
    %74 = arith.addf %69, %73 : vector<8x838xf32>
    %75 = vector.extract_strided_slice %0 {offsets = [0, 32], sizes = [8, 838], strides = [1, 1]} : vector<8x900xf32> to vector<8x838xf32>
    %c1_24 = arith.constant 1 : index
    %c5_25 = arith.constant 5 : index
    %76 = memref.load %arg2[%c1_24, %c5_25] : memref<4x9xf32, #tpu.memory_space<smem>>
    %77 = vector.broadcast %76 : f32 to vector<8x838xf32>
    %78 = arith.mulf %75, %77 : vector<8x838xf32>
    %79 = arith.addf %74, %78 : vector<8x838xf32>
    %80 = vector.extract_strided_slice %0 {offsets = [0, 60], sizes = [8, 838], strides = [1, 1]} : vector<8x900xf32> to vector<8x838xf32>
    %c1_26 = arith.constant 1 : index
    %c6_27 = arith.constant 6 : index
    %81 = memref.load %arg2[%c1_26, %c6_27] : memref<4x9xf32, #tpu.memory_space<smem>>
    %82 = vector.broadcast %81 : f32 to vector<8x838xf32>
    %83 = arith.mulf %80, %82 : vector<8x838xf32>
    %84 = arith.addf %79, %83 : vector<8x838xf32>
    %85 = vector.extract_strided_slice %0 {offsets = [0, 61], sizes = [8, 838], strides = [1, 1]} : vector<8x900xf32> to vector<8x838xf32>
    %c1_28 = arith.constant 1 : index
    %c7_29 = arith.constant 7 : index
    %86 = memref.load %arg2[%c1_28, %c7_29] : memref<4x9xf32, #tpu.memory_space<smem>>
    %87 = vector.broadcast %86 : f32 to vector<8x838xf32>
    %88 = arith.mulf %85, %87 : vector<8x838xf32>
    %89 = arith.addf %84, %88 : vector<8x838xf32>
    %90 = vector.extract_strided_slice %0 {offsets = [0, 62], sizes = [8, 838], strides = [1, 1]} : vector<8x900xf32> to vector<8x838xf32>
    %c1_30 = arith.constant 1 : index
    %c8_31 = arith.constant 8 : index
    %91 = memref.load %arg2[%c1_30, %c8_31] : memref<4x9xf32, #tpu.memory_space<smem>>
    %92 = vector.broadcast %91 : f32 to vector<8x838xf32>
    %93 = arith.mulf %90, %92 : vector<8x838xf32>
    %94 = arith.addf %89, %93 : vector<8x838xf32>
    %c1_32 = arith.constant 1 : index
    %95 = memref.load %arg3[%c1_32] : memref<4xf32, #tpu.memory_space<smem>>
    %96 = vector.broadcast %95 : f32 to vector<8x838xf32>
    %97 = arith.addf %94, %96 : vector<8x838xf32>
    %cst_33 = arith.constant 0.000000e+00 : f32
    %98 = vector.broadcast %cst_33 : f32 to vector<8x838xf32>
    %99 = arith.maximumf %97, %98 : vector<8x838xf32>
    %100 = vector.extract_strided_slice %0 {offsets = [0, 0], sizes = [8, 838], strides = [1, 1]} : vector<8x900xf32> to vector<8x838xf32>
    %c2_34 = arith.constant 2 : index
    %c0_35 = arith.constant 0 : index
    %101 = memref.load %arg2[%c2_34, %c0_35] : memref<4x9xf32, #tpu.memory_space<smem>>
    %102 = vector.broadcast %101 : f32 to vector<8x838xf32>
    %103 = arith.mulf %100, %102 : vector<8x838xf32>
    %104 = vector.extract_strided_slice %0 {offsets = [0, 1], sizes = [8, 838], strides = [1, 1]} : vector<8x900xf32> to vector<8x838xf32>
    %c2_36 = arith.constant 2 : index
    %c1_37 = arith.constant 1 : index
    %105 = memref.load %arg2[%c2_36, %c1_37] : memref<4x9xf32, #tpu.memory_space<smem>>
    %106 = vector.broadcast %105 : f32 to vector<8x838xf32>
    %107 = arith.mulf %104, %106 : vector<8x838xf32>
    %108 = arith.addf %103, %107 : vector<8x838xf32>
    %109 = vector.extract_strided_slice %0 {offsets = [0, 2], sizes = [8, 838], strides = [1, 1]} : vector<8x900xf32> to vector<8x838xf32>
    %c2_38 = arith.constant 2 : index
    %c2_39 = arith.constant 2 : index
    %110 = memref.load %arg2[%c2_38, %c2_39] : memref<4x9xf32, #tpu.memory_space<smem>>
    %111 = vector.broadcast %110 : f32 to vector<8x838xf32>
    %112 = arith.mulf %109, %111 : vector<8x838xf32>
    %113 = arith.addf %108, %112 : vector<8x838xf32>
    %114 = vector.extract_strided_slice %0 {offsets = [0, 30], sizes = [8, 838], strides = [1, 1]} : vector<8x900xf32> to vector<8x838xf32>
    %c2_40 = arith.constant 2 : index
    %c3_41 = arith.constant 3 : index
    %115 = memref.load %arg2[%c2_40, %c3_41] : memref<4x9xf32, #tpu.memory_space<smem>>
    %116 = vector.broadcast %115 : f32 to vector<8x838xf32>
    %117 = arith.mulf %114, %116 : vector<8x838xf32>
    %118 = arith.addf %113, %117 : vector<8x838xf32>
    %119 = vector.extract_strided_slice %0 {offsets = [0, 31], sizes = [8, 838], strides = [1, 1]} : vector<8x900xf32> to vector<8x838xf32>
    %c2_42 = arith.constant 2 : index
    %c4_43 = arith.constant 4 : index
    %120 = memref.load %arg2[%c2_42, %c4_43] : memref<4x9xf32, #tpu.memory_space<smem>>
    %121 = vector.broadcast %120 : f32 to vector<8x838xf32>
    %122 = arith.mulf %119, %121 : vector<8x838xf32>
    %123 = arith.addf %118, %122 : vector<8x838xf32>
    %124 = vector.extract_strided_slice %0 {offsets = [0, 32], sizes = [8, 838], strides = [1, 1]} : vector<8x900xf32> to vector<8x838xf32>
    %c2_44 = arith.constant 2 : index
    %c5_45 = arith.constant 5 : index
    %125 = memref.load %arg2[%c2_44, %c5_45] : memref<4x9xf32, #tpu.memory_space<smem>>
    %126 = vector.broadcast %125 : f32 to vector<8x838xf32>
    %127 = arith.mulf %124, %126 : vector<8x838xf32>
    %128 = arith.addf %123, %127 : vector<8x838xf32>
    %129 = vector.extract_strided_slice %0 {offsets = [0, 60], sizes = [8, 838], strides = [1, 1]} : vector<8x900xf32> to vector<8x838xf32>
    %c2_46 = arith.constant 2 : index
    %c6_47 = arith.constant 6 : index
    %130 = memref.load %arg2[%c2_46, %c6_47] : memref<4x9xf32, #tpu.memory_space<smem>>
    %131 = vector.broadcast %130 : f32 to vector<8x838xf32>
    %132 = arith.mulf %129, %131 : vector<8x838xf32>
    %133 = arith.addf %128, %132 : vector<8x838xf32>
    %134 = vector.extract_strided_slice %0 {offsets = [0, 61], sizes = [8, 838], strides = [1, 1]} : vector<8x900xf32> to vector<8x838xf32>
    %c2_48 = arith.constant 2 : index
    %c7_49 = arith.constant 7 : index
    %135 = memref.load %arg2[%c2_48, %c7_49] : memref<4x9xf32, #tpu.memory_space<smem>>
    %136 = vector.broadcast %135 : f32 to vector<8x838xf32>
    %137 = arith.mulf %134, %136 : vector<8x838xf32>
    %138 = arith.addf %133, %137 : vector<8x838xf32>
    %139 = vector.extract_strided_slice %0 {offsets = [0, 62], sizes = [8, 838], strides = [1, 1]} : vector<8x900xf32> to vector<8x838xf32>
    %c2_50 = arith.constant 2 : index
    %c8_51 = arith.constant 8 : index
    %140 = memref.load %arg2[%c2_50, %c8_51] : memref<4x9xf32, #tpu.memory_space<smem>>
    %141 = vector.broadcast %140 : f32 to vector<8x838xf32>
    %142 = arith.mulf %139, %141 : vector<8x838xf32>
    %143 = arith.addf %138, %142 : vector<8x838xf32>
    %c2_52 = arith.constant 2 : index
    %144 = memref.load %arg3[%c2_52] : memref<4xf32, #tpu.memory_space<smem>>
    %145 = vector.broadcast %144 : f32 to vector<8x838xf32>
    %146 = arith.addf %143, %145 : vector<8x838xf32>
    %cst_53 = arith.constant 0.000000e+00 : f32
    %147 = vector.broadcast %cst_53 : f32 to vector<8x838xf32>
    %148 = arith.maximumf %146, %147 : vector<8x838xf32>
    %149 = vector.extract_strided_slice %0 {offsets = [0, 0], sizes = [8, 838], strides = [1, 1]} : vector<8x900xf32> to vector<8x838xf32>
    %c3_54 = arith.constant 3 : index
    %c0_55 = arith.constant 0 : index
    %150 = memref.load %arg2[%c3_54, %c0_55] : memref<4x9xf32, #tpu.memory_space<smem>>
    %151 = vector.broadcast %150 : f32 to vector<8x838xf32>
    %152 = arith.mulf %149, %151 : vector<8x838xf32>
    %153 = vector.extract_strided_slice %0 {offsets = [0, 1], sizes = [8, 838], strides = [1, 1]} : vector<8x900xf32> to vector<8x838xf32>
    %c3_56 = arith.constant 3 : index
    %c1_57 = arith.constant 1 : index
    %154 = memref.load %arg2[%c3_56, %c1_57] : memref<4x9xf32, #tpu.memory_space<smem>>
    %155 = vector.broadcast %154 : f32 to vector<8x838xf32>
    %156 = arith.mulf %153, %155 : vector<8x838xf32>
    %157 = arith.addf %152, %156 : vector<8x838xf32>
    %158 = vector.extract_strided_slice %0 {offsets = [0, 2], sizes = [8, 838], strides = [1, 1]} : vector<8x900xf32> to vector<8x838xf32>
    %c3_58 = arith.constant 3 : index
    %c2_59 = arith.constant 2 : index
    %159 = memref.load %arg2[%c3_58, %c2_59] : memref<4x9xf32, #tpu.memory_space<smem>>
    %160 = vector.broadcast %159 : f32 to vector<8x838xf32>
    %161 = arith.mulf %158, %160 : vector<8x838xf32>
    %162 = arith.addf %157, %161 : vector<8x838xf32>
    %163 = vector.extract_strided_slice %0 {offsets = [0, 30], sizes = [8, 838], strides = [1, 1]} : vector<8x900xf32> to vector<8x838xf32>
    %c3_60 = arith.constant 3 : index
    %c3_61 = arith.constant 3 : index
    %164 = memref.load %arg2[%c3_60, %c3_61] : memref<4x9xf32, #tpu.memory_space<smem>>
    %165 = vector.broadcast %164 : f32 to vector<8x838xf32>
    %166 = arith.mulf %163, %165 : vector<8x838xf32>
    %167 = arith.addf %162, %166 : vector<8x838xf32>
    %168 = vector.extract_strided_slice %0 {offsets = [0, 31], sizes = [8, 838], strides = [1, 1]} : vector<8x900xf32> to vector<8x838xf32>
    %c3_62 = arith.constant 3 : index
    %c4_63 = arith.constant 4 : index
    %169 = memref.load %arg2[%c3_62, %c4_63] : memref<4x9xf32, #tpu.memory_space<smem>>
    %170 = vector.broadcast %169 : f32 to vector<8x838xf32>
    %171 = arith.mulf %168, %170 : vector<8x838xf32>
    %172 = arith.addf %167, %171 : vector<8x838xf32>
    %173 = vector.extract_strided_slice %0 {offsets = [0, 32], sizes = [8, 838], strides = [1, 1]} : vector<8x900xf32> to vector<8x838xf32>
    %c3_64 = arith.constant 3 : index
    %c5_65 = arith.constant 5 : index
    %174 = memref.load %arg2[%c3_64, %c5_65] : memref<4x9xf32, #tpu.memory_space<smem>>
    %175 = vector.broadcast %174 : f32 to vector<8x838xf32>
    %176 = arith.mulf %173, %175 : vector<8x838xf32>
    %177 = arith.addf %172, %176 : vector<8x838xf32>
    %178 = vector.extract_strided_slice %0 {offsets = [0, 60], sizes = [8, 838], strides = [1, 1]} : vector<8x900xf32> to vector<8x838xf32>
    %c3_66 = arith.constant 3 : index
    %c6_67 = arith.constant 6 : index
    %179 = memref.load %arg2[%c3_66, %c6_67] : memref<4x9xf32, #tpu.memory_space<smem>>
    %180 = vector.broadcast %179 : f32 to vector<8x838xf32>
    %181 = arith.mulf %178, %180 : vector<8x838xf32>
    %182 = arith.addf %177, %181 : vector<8x838xf32>
    %183 = vector.extract_strided_slice %0 {offsets = [0, 61], sizes = [8, 838], strides = [1, 1]} : vector<8x900xf32> to vector<8x838xf32>
    %c3_68 = arith.constant 3 : index
    %c7_69 = arith.constant 7 : index
    %184 = memref.load %arg2[%c3_68, %c7_69] : memref<4x9xf32, #tpu.memory_space<smem>>
    %185 = vector.broadcast %184 : f32 to vector<8x838xf32>
    %186 = arith.mulf %183, %185 : vector<8x838xf32>
    %187 = arith.addf %182, %186 : vector<8x838xf32>
    %188 = vector.extract_strided_slice %0 {offsets = [0, 62], sizes = [8, 838], strides = [1, 1]} : vector<8x900xf32> to vector<8x838xf32>
    %c3_70 = arith.constant 3 : index
    %c8_71 = arith.constant 8 : index
    %189 = memref.load %arg2[%c3_70, %c8_71] : memref<4x9xf32, #tpu.memory_space<smem>>
    %190 = vector.broadcast %189 : f32 to vector<8x838xf32>
    %191 = arith.mulf %188, %190 : vector<8x838xf32>
    %192 = arith.addf %187, %191 : vector<8x838xf32>
    %c3_72 = arith.constant 3 : index
    %193 = memref.load %arg3[%c3_72] : memref<4xf32, #tpu.memory_space<smem>>
    %194 = vector.broadcast %193 : f32 to vector<8x838xf32>
    %195 = arith.addf %192, %194 : vector<8x838xf32>
    %cst_73 = arith.constant 0.000000e+00 : f32
    %196 = vector.broadcast %cst_73 : f32 to vector<8x838xf32>
    %197 = arith.maximumf %195, %196 : vector<8x838xf32>
    %198 = vector.extract_strided_slice %50 {offsets = [0, 0], sizes = [8, 837], strides = [1, 1]} : vector<8x838xf32> to vector<8x837xf32>
    %199 = vector.extract_strided_slice %50 {offsets = [0, 1], sizes = [8, 837], strides = [1, 1]} : vector<8x838xf32> to vector<8x837xf32>
    %200 = arith.maximumf %198, %199 : vector<8x837xf32>
    %201 = vector.extract_strided_slice %200 {offsets = [0, 0], sizes = [8, 807], strides = [1, 1]} : vector<8x837xf32> to vector<8x807xf32>
    %202 = vector.extract_strided_slice %200 {offsets = [0, 30], sizes = [8, 807], strides = [1, 1]} : vector<8x837xf32> to vector<8x807xf32>
    %203 = arith.maximumf %201, %202 : vector<8x807xf32>
    %cst_74 = arith.constant dense<0.000000e+00> : vector<8x256xf32>
    %204 = tpu.matmul %203, %1, %cst_74 {dimension_numbers = #tpu.dot_dimension_numbers<[1], [0], [0], [1], [0, 0, 1, 1], [], []>} : vector<8x807xf32>, vector<807x256xf32>, vector<8x256xf32> -> vector<8x256xf32>
    %205 = vector.extract_strided_slice %99 {offsets = [0, 0], sizes = [8, 837], strides = [1, 1]} : vector<8x838xf32> to vector<8x837xf32>
    %206 = vector.extract_strided_slice %99 {offsets = [0, 1], sizes = [8, 837], strides = [1, 1]} : vector<8x838xf32> to vector<8x837xf32>
    %207 = arith.maximumf %205, %206 : vector<8x837xf32>
    %208 = vector.extract_strided_slice %207 {offsets = [0, 0], sizes = [8, 807], strides = [1, 1]} : vector<8x837xf32> to vector<8x807xf32>
    %209 = vector.extract_strided_slice %207 {offsets = [0, 30], sizes = [8, 807], strides = [1, 1]} : vector<8x837xf32> to vector<8x807xf32>
    %210 = arith.maximumf %208, %209 : vector<8x807xf32>
    %cst_75 = arith.constant dense<0.000000e+00> : vector<8x256xf32>
    %211 = tpu.matmul %210, %1, %cst_75 {dimension_numbers = #tpu.dot_dimension_numbers<[1], [0], [0], [1], [0, 0, 1, 1], [], []>} : vector<8x807xf32>, vector<807x256xf32>, vector<8x256xf32> -> vector<8x256xf32>
    %212 = vector.extract_strided_slice %148 {offsets = [0, 0], sizes = [8, 837], strides = [1, 1]} : vector<8x838xf32> to vector<8x837xf32>
    %213 = vector.extract_strided_slice %148 {offsets = [0, 1], sizes = [8, 837], strides = [1, 1]} : vector<8x838xf32> to vector<8x837xf32>
    %214 = arith.maximumf %212, %213 : vector<8x837xf32>
    %215 = vector.extract_strided_slice %214 {offsets = [0, 0], sizes = [8, 807], strides = [1, 1]} : vector<8x837xf32> to vector<8x807xf32>
    %216 = vector.extract_strided_slice %214 {offsets = [0, 30], sizes = [8, 807], strides = [1, 1]} : vector<8x837xf32> to vector<8x807xf32>
    %217 = arith.maximumf %215, %216 : vector<8x807xf32>
    %cst_76 = arith.constant dense<0.000000e+00> : vector<8x256xf32>
    %218 = tpu.matmul %217, %1, %cst_76 {dimension_numbers = #tpu.dot_dimension_numbers<[1], [0], [0], [1], [0, 0, 1, 1], [], []>} : vector<8x807xf32>, vector<807x256xf32>, vector<8x256xf32> -> vector<8x256xf32>
    %219 = vector.extract_strided_slice %197 {offsets = [0, 0], sizes = [8, 837], strides = [1, 1]} : vector<8x838xf32> to vector<8x837xf32>
    %220 = vector.extract_strided_slice %197 {offsets = [0, 1], sizes = [8, 837], strides = [1, 1]} : vector<8x838xf32> to vector<8x837xf32>
    %221 = arith.maximumf %219, %220 : vector<8x837xf32>
    %222 = vector.extract_strided_slice %221 {offsets = [0, 0], sizes = [8, 807], strides = [1, 1]} : vector<8x837xf32> to vector<8x807xf32>
    %223 = vector.extract_strided_slice %221 {offsets = [0, 30], sizes = [8, 807], strides = [1, 1]} : vector<8x837xf32> to vector<8x807xf32>
    %224 = arith.maximumf %222, %223 : vector<8x807xf32>
    %cst_77 = arith.constant dense<0.000000e+00> : vector<8x256xf32>
    %225 = tpu.matmul %224, %1, %cst_77 {dimension_numbers = #tpu.dot_dimension_numbers<[1], [0], [0], [1], [0, 0, 1, 1], [], []>} : vector<8x807xf32>, vector<807x256xf32>, vector<8x256xf32> -> vector<8x256xf32>
    %226 = vector.extract_strided_slice %204 {offsets = [0, 0], sizes = [8, 222], strides = [1, 1]} : vector<8x256xf32> to vector<8x222xf32>
    %c0_78 = arith.constant 0 : index
    %c0_79 = arith.constant 0 : index
    %227 = memref.load %arg4[%c0_78, %c0_79] : memref<8x36xf32, #tpu.memory_space<smem>>
    %228 = vector.broadcast %227 : f32 to vector<8x222xf32>
    %229 = arith.mulf %226, %228 : vector<8x222xf32>
    %230 = vector.extract_strided_slice %204 {offsets = [0, 1], sizes = [8, 222], strides = [1, 1]} : vector<8x256xf32> to vector<8x222xf32>
    %c0_80 = arith.constant 0 : index
    %c1_81 = arith.constant 1 : index
    %231 = memref.load %arg4[%c0_80, %c1_81] : memref<8x36xf32, #tpu.memory_space<smem>>
    %232 = vector.broadcast %231 : f32 to vector<8x222xf32>
    %233 = arith.mulf %230, %232 : vector<8x222xf32>
    %234 = arith.addf %229, %233 : vector<8x222xf32>
    %235 = vector.extract_strided_slice %204 {offsets = [0, 2], sizes = [8, 222], strides = [1, 1]} : vector<8x256xf32> to vector<8x222xf32>
    %c0_82 = arith.constant 0 : index
    %c2_83 = arith.constant 2 : index
    %236 = memref.load %arg4[%c0_82, %c2_83] : memref<8x36xf32, #tpu.memory_space<smem>>
    %237 = vector.broadcast %236 : f32 to vector<8x222xf32>
    %238 = arith.mulf %235, %237 : vector<8x222xf32>
    %239 = arith.addf %234, %238 : vector<8x222xf32>
    %240 = vector.extract_strided_slice %204 {offsets = [0, 16], sizes = [8, 222], strides = [1, 1]} : vector<8x256xf32> to vector<8x222xf32>
    %c0_84 = arith.constant 0 : index
    %c3_85 = arith.constant 3 : index
    %241 = memref.load %arg4[%c0_84, %c3_85] : memref<8x36xf32, #tpu.memory_space<smem>>
    %242 = vector.broadcast %241 : f32 to vector<8x222xf32>
    %243 = arith.mulf %240, %242 : vector<8x222xf32>
    %244 = arith.addf %239, %243 : vector<8x222xf32>
    %245 = vector.extract_strided_slice %204 {offsets = [0, 17], sizes = [8, 222], strides = [1, 1]} : vector<8x256xf32> to vector<8x222xf32>
    %c0_86 = arith.constant 0 : index
    %c4_87 = arith.constant 4 : index
    %246 = memref.load %arg4[%c0_86, %c4_87] : memref<8x36xf32, #tpu.memory_space<smem>>
    %247 = vector.broadcast %246 : f32 to vector<8x222xf32>
    %248 = arith.mulf %245, %247 : vector<8x222xf32>
    %249 = arith.addf %244, %248 : vector<8x222xf32>
    %250 = vector.extract_strided_slice %204 {offsets = [0, 18], sizes = [8, 222], strides = [1, 1]} : vector<8x256xf32> to vector<8x222xf32>
    %c0_88 = arith.constant 0 : index
    %c5_89 = arith.constant 5 : index
    %251 = memref.load %arg4[%c0_88, %c5_89] : memref<8x36xf32, #tpu.memory_space<smem>>
    %252 = vector.broadcast %251 : f32 to vector<8x222xf32>
    %253 = arith.mulf %250, %252 : vector<8x222xf32>
    %254 = arith.addf %249, %253 : vector<8x222xf32>
    %255 = vector.extract_strided_slice %204 {offsets = [0, 32], sizes = [8, 222], strides = [1, 1]} : vector<8x256xf32> to vector<8x222xf32>
    %c0_90 = arith.constant 0 : index
    %c6_91 = arith.constant 6 : index
    %256 = memref.load %arg4[%c0_90, %c6_91] : memref<8x36xf32, #tpu.memory_space<smem>>
    %257 = vector.broadcast %256 : f32 to vector<8x222xf32>
    %258 = arith.mulf %255, %257 : vector<8x222xf32>
    %259 = arith.addf %254, %258 : vector<8x222xf32>
    %260 = vector.extract_strided_slice %204 {offsets = [0, 33], sizes = [8, 222], strides = [1, 1]} : vector<8x256xf32> to vector<8x222xf32>
    %c0_92 = arith.constant 0 : index
    %c7_93 = arith.constant 7 : index
    %261 = memref.load %arg4[%c0_92, %c7_93] : memref<8x36xf32, #tpu.memory_space<smem>>
    %262 = vector.broadcast %261 : f32 to vector<8x222xf32>
    %263 = arith.mulf %260, %262 : vector<8x222xf32>
    %264 = arith.addf %259, %263 : vector<8x222xf32>
    %265 = vector.extract_strided_slice %204 {offsets = [0, 34], sizes = [8, 222], strides = [1, 1]} : vector<8x256xf32> to vector<8x222xf32>
    %c0_94 = arith.constant 0 : index
    %c8_95 = arith.constant 8 : index
    %266 = memref.load %arg4[%c0_94, %c8_95] : memref<8x36xf32, #tpu.memory_space<smem>>
    %267 = vector.broadcast %266 : f32 to vector<8x222xf32>
    %268 = arith.mulf %265, %267 : vector<8x222xf32>
    %269 = arith.addf %264, %268 : vector<8x222xf32>
    %270 = vector.extract_strided_slice %211 {offsets = [0, 0], sizes = [8, 222], strides = [1, 1]} : vector<8x256xf32> to vector<8x222xf32>
    %c0_96 = arith.constant 0 : index
    %c9 = arith.constant 9 : index
    %271 = memref.load %arg4[%c0_96, %c9] : memref<8x36xf32, #tpu.memory_space<smem>>
    %272 = vector.broadcast %271 : f32 to vector<8x222xf32>
    %273 = arith.mulf %270, %272 : vector<8x222xf32>
    %274 = arith.addf %269, %273 : vector<8x222xf32>
    %275 = vector.extract_strided_slice %211 {offsets = [0, 1], sizes = [8, 222], strides = [1, 1]} : vector<8x256xf32> to vector<8x222xf32>
    %c0_97 = arith.constant 0 : index
    %c10 = arith.constant 10 : index
    %276 = memref.load %arg4[%c0_97, %c10] : memref<8x36xf32, #tpu.memory_space<smem>>
    %277 = vector.broadcast %276 : f32 to vector<8x222xf32>
    %278 = arith.mulf %275, %277 : vector<8x222xf32>
    %279 = arith.addf %274, %278 : vector<8x222xf32>
    %280 = vector.extract_strided_slice %211 {offsets = [0, 2], sizes = [8, 222], strides = [1, 1]} : vector<8x256xf32> to vector<8x222xf32>
    %c0_98 = arith.constant 0 : index
    %c11 = arith.constant 11 : index
    %281 = memref.load %arg4[%c0_98, %c11] : memref<8x36xf32, #tpu.memory_space<smem>>
    %282 = vector.broadcast %281 : f32 to vector<8x222xf32>
    %283 = arith.mulf %280, %282 : vector<8x222xf32>
    %284 = arith.addf %279, %283 : vector<8x222xf32>
    %285 = vector.extract_strided_slice %211 {offsets = [0, 16], sizes = [8, 222], strides = [1, 1]} : vector<8x256xf32> to vector<8x222xf32>
    %c0_99 = arith.constant 0 : index
    %c12 = arith.constant 12 : index
    %286 = memref.load %arg4[%c0_99, %c12] : memref<8x36xf32, #tpu.memory_space<smem>>
    %287 = vector.broadcast %286 : f32 to vector<8x222xf32>
    %288 = arith.mulf %285, %287 : vector<8x222xf32>
    %289 = arith.addf %284, %288 : vector<8x222xf32>
    %290 = vector.extract_strided_slice %211 {offsets = [0, 17], sizes = [8, 222], strides = [1, 1]} : vector<8x256xf32> to vector<8x222xf32>
    %c0_100 = arith.constant 0 : index
    %c13 = arith.constant 13 : index
    %291 = memref.load %arg4[%c0_100, %c13] : memref<8x36xf32, #tpu.memory_space<smem>>
    %292 = vector.broadcast %291 : f32 to vector<8x222xf32>
    %293 = arith.mulf %290, %292 : vector<8x222xf32>
    %294 = arith.addf %289, %293 : vector<8x222xf32>
    %295 = vector.extract_strided_slice %211 {offsets = [0, 18], sizes = [8, 222], strides = [1, 1]} : vector<8x256xf32> to vector<8x222xf32>
    %c0_101 = arith.constant 0 : index
    %c14 = arith.constant 14 : index
    %296 = memref.load %arg4[%c0_101, %c14] : memref<8x36xf32, #tpu.memory_space<smem>>
    %297 = vector.broadcast %296 : f32 to vector<8x222xf32>
    %298 = arith.mulf %295, %297 : vector<8x222xf32>
    %299 = arith.addf %294, %298 : vector<8x222xf32>
    %300 = vector.extract_strided_slice %211 {offsets = [0, 32], sizes = [8, 222], strides = [1, 1]} : vector<8x256xf32> to vector<8x222xf32>
    %c0_102 = arith.constant 0 : index
    %c15 = arith.constant 15 : index
    %301 = memref.load %arg4[%c0_102, %c15] : memref<8x36xf32, #tpu.memory_space<smem>>
    %302 = vector.broadcast %301 : f32 to vector<8x222xf32>
    %303 = arith.mulf %300, %302 : vector<8x222xf32>
    %304 = arith.addf %299, %303 : vector<8x222xf32>
    %305 = vector.extract_strided_slice %211 {offsets = [0, 33], sizes = [8, 222], strides = [1, 1]} : vector<8x256xf32> to vector<8x222xf32>
    %c0_103 = arith.constant 0 : index
    %c16 = arith.constant 16 : index
    %306 = memref.load %arg4[%c0_103, %c16] : memref<8x36xf32, #tpu.memory_space<smem>>
    %307 = vector.broadcast %306 : f32 to vector<8x222xf32>
    %308 = arith.mulf %305, %307 : vector<8x222xf32>
    %309 = arith.addf %304, %308 : vector<8x222xf32>
    %310 = vector.extract_strided_slice %211 {offsets = [0, 34], sizes = [8, 222], strides = [1, 1]} : vector<8x256xf32> to vector<8x222xf32>
    %c0_104 = arith.constant 0 : index
    %c17 = arith.constant 17 : index
    %311 = memref.load %arg4[%c0_104, %c17] : memref<8x36xf32, #tpu.memory_space<smem>>
    %312 = vector.broadcast %311 : f32 to vector<8x222xf32>
    %313 = arith.mulf %310, %312 : vector<8x222xf32>
    %314 = arith.addf %309, %313 : vector<8x222xf32>
    %315 = vector.extract_strided_slice %218 {offsets = [0, 0], sizes = [8, 222], strides = [1, 1]} : vector<8x256xf32> to vector<8x222xf32>
    %c0_105 = arith.constant 0 : index
    %c18 = arith.constant 18 : index
    %316 = memref.load %arg4[%c0_105, %c18] : memref<8x36xf32, #tpu.memory_space<smem>>
    %317 = vector.broadcast %316 : f32 to vector<8x222xf32>
    %318 = arith.mulf %315, %317 : vector<8x222xf32>
    %319 = arith.addf %314, %318 : vector<8x222xf32>
    %320 = vector.extract_strided_slice %218 {offsets = [0, 1], sizes = [8, 222], strides = [1, 1]} : vector<8x256xf32> to vector<8x222xf32>
    %c0_106 = arith.constant 0 : index
    %c19 = arith.constant 19 : index
    %321 = memref.load %arg4[%c0_106, %c19] : memref<8x36xf32, #tpu.memory_space<smem>>
    %322 = vector.broadcast %321 : f32 to vector<8x222xf32>
    %323 = arith.mulf %320, %322 : vector<8x222xf32>
    %324 = arith.addf %319, %323 : vector<8x222xf32>
    %325 = vector.extract_strided_slice %218 {offsets = [0, 2], sizes = [8, 222], strides = [1, 1]} : vector<8x256xf32> to vector<8x222xf32>
    %c0_107 = arith.constant 0 : index
    %c20 = arith.constant 20 : index
    %326 = memref.load %arg4[%c0_107, %c20] : memref<8x36xf32, #tpu.memory_space<smem>>
    %327 = vector.broadcast %326 : f32 to vector<8x222xf32>
    %328 = arith.mulf %325, %327 : vector<8x222xf32>
    %329 = arith.addf %324, %328 : vector<8x222xf32>
    %330 = vector.extract_strided_slice %218 {offsets = [0, 16], sizes = [8, 222], strides = [1, 1]} : vector<8x256xf32> to vector<8x222xf32>
    %c0_108 = arith.constant 0 : index
    %c21 = arith.constant 21 : index
    %331 = memref.load %arg4[%c0_108, %c21] : memref<8x36xf32, #tpu.memory_space<smem>>
    %332 = vector.broadcast %331 : f32 to vector<8x222xf32>
    %333 = arith.mulf %330, %332 : vector<8x222xf32>
    %334 = arith.addf %329, %333 : vector<8x222xf32>
    %335 = vector.extract_strided_slice %218 {offsets = [0, 17], sizes = [8, 222], strides = [1, 1]} : vector<8x256xf32> to vector<8x222xf32>
    %c0_109 = arith.constant 0 : index
    %c22 = arith.constant 22 : index
    %336 = memref.load %arg4[%c0_109, %c22] : memref<8x36xf32, #tpu.memory_space<smem>>
    %337 = vector.broadcast %336 : f32 to vector<8x222xf32>
    %338 = arith.mulf %335, %337 : vector<8x222xf32>
    %339 = arith.addf %334, %338 : vector<8x222xf32>
    %340 = vector.extract_strided_slice %218 {offsets = [0, 18], sizes = [8, 222], strides = [1, 1]} : vector<8x256xf32> to vector<8x222xf32>
    %c0_110 = arith.constant 0 : index
    %c23 = arith.constant 23 : index
    %341 = memref.load %arg4[%c0_110, %c23] : memref<8x36xf32, #tpu.memory_space<smem>>
    %342 = vector.broadcast %341 : f32 to vector<8x222xf32>
    %343 = arith.mulf %340, %342 : vector<8x222xf32>
    %344 = arith.addf %339, %343 : vector<8x222xf32>
    %345 = vector.extract_strided_slice %218 {offsets = [0, 32], sizes = [8, 222], strides = [1, 1]} : vector<8x256xf32> to vector<8x222xf32>
    %c0_111 = arith.constant 0 : index
    %c24 = arith.constant 24 : index
    %346 = memref.load %arg4[%c0_111, %c24] : memref<8x36xf32, #tpu.memory_space<smem>>
    %347 = vector.broadcast %346 : f32 to vector<8x222xf32>
    %348 = arith.mulf %345, %347 : vector<8x222xf32>
    %349 = arith.addf %344, %348 : vector<8x222xf32>
    %350 = vector.extract_strided_slice %218 {offsets = [0, 33], sizes = [8, 222], strides = [1, 1]} : vector<8x256xf32> to vector<8x222xf32>
    %c0_112 = arith.constant 0 : index
    %c25 = arith.constant 25 : index
    %351 = memref.load %arg4[%c0_112, %c25] : memref<8x36xf32, #tpu.memory_space<smem>>
    %352 = vector.broadcast %351 : f32 to vector<8x222xf32>
    %353 = arith.mulf %350, %352 : vector<8x222xf32>
    %354 = arith.addf %349, %353 : vector<8x222xf32>
    %355 = vector.extract_strided_slice %218 {offsets = [0, 34], sizes = [8, 222], strides = [1, 1]} : vector<8x256xf32> to vector<8x222xf32>
    %c0_113 = arith.constant 0 : index
    %c26 = arith.constant 26 : index
    %356 = memref.load %arg4[%c0_113, %c26] : memref<8x36xf32, #tpu.memory_space<smem>>
    %357 = vector.broadcast %356 : f32 to vector<8x222xf32>
    %358 = arith.mulf %355, %357 : vector<8x222xf32>
    %359 = arith.addf %354, %358 : vector<8x222xf32>
    %360 = vector.extract_strided_slice %225 {offsets = [0, 0], sizes = [8, 222], strides = [1, 1]} : vector<8x256xf32> to vector<8x222xf32>
    %c0_114 = arith.constant 0 : index
    %c27 = arith.constant 27 : index
    %361 = memref.load %arg4[%c0_114, %c27] : memref<8x36xf32, #tpu.memory_space<smem>>
    %362 = vector.broadcast %361 : f32 to vector<8x222xf32>
    %363 = arith.mulf %360, %362 : vector<8x222xf32>
    %364 = arith.addf %359, %363 : vector<8x222xf32>
    %365 = vector.extract_strided_slice %225 {offsets = [0, 1], sizes = [8, 222], strides = [1, 1]} : vector<8x256xf32> to vector<8x222xf32>
    %c0_115 = arith.constant 0 : index
    %c28 = arith.constant 28 : index
    %366 = memref.load %arg4[%c0_115, %c28] : memref<8x36xf32, #tpu.memory_space<smem>>
    %367 = vector.broadcast %366 : f32 to vector<8x222xf32>
    %368 = arith.mulf %365, %367 : vector<8x222xf32>
    %369 = arith.addf %364, %368 : vector<8x222xf32>
    %370 = vector.extract_strided_slice %225 {offsets = [0, 2], sizes = [8, 222], strides = [1, 1]} : vector<8x256xf32> to vector<8x222xf32>
    %c0_116 = arith.constant 0 : index
    %c29 = arith.constant 29 : index
    %371 = memref.load %arg4[%c0_116, %c29] : memref<8x36xf32, #tpu.memory_space<smem>>
    %372 = vector.broadcast %371 : f32 to vector<8x222xf32>
    %373 = arith.mulf %370, %372 : vector<8x222xf32>
    %374 = arith.addf %369, %373 : vector<8x222xf32>
    %375 = vector.extract_strided_slice %225 {offsets = [0, 16], sizes = [8, 222], strides = [1, 1]} : vector<8x256xf32> to vector<8x222xf32>
    %c0_117 = arith.constant 0 : index
    %c30 = arith.constant 30 : index
    %376 = memref.load %arg4[%c0_117, %c30] : memref<8x36xf32, #tpu.memory_space<smem>>
    %377 = vector.broadcast %376 : f32 to vector<8x222xf32>
    %378 = arith.mulf %375, %377 : vector<8x222xf32>
    %379 = arith.addf %374, %378 : vector<8x222xf32>
    %380 = vector.extract_strided_slice %225 {offsets = [0, 17], sizes = [8, 222], strides = [1, 1]} : vector<8x256xf32> to vector<8x222xf32>
    %c0_118 = arith.constant 0 : index
    %c31 = arith.constant 31 : index
    %381 = memref.load %arg4[%c0_118, %c31] : memref<8x36xf32, #tpu.memory_space<smem>>
    %382 = vector.broadcast %381 : f32 to vector<8x222xf32>
    %383 = arith.mulf %380, %382 : vector<8x222xf32>
    %384 = arith.addf %379, %383 : vector<8x222xf32>
    %385 = vector.extract_strided_slice %225 {offsets = [0, 18], sizes = [8, 222], strides = [1, 1]} : vector<8x256xf32> to vector<8x222xf32>
    %c0_119 = arith.constant 0 : index
    %c32 = arith.constant 32 : index
    %386 = memref.load %arg4[%c0_119, %c32] : memref<8x36xf32, #tpu.memory_space<smem>>
    %387 = vector.broadcast %386 : f32 to vector<8x222xf32>
    %388 = arith.mulf %385, %387 : vector<8x222xf32>
    %389 = arith.addf %384, %388 : vector<8x222xf32>
    %390 = vector.extract_strided_slice %225 {offsets = [0, 32], sizes = [8, 222], strides = [1, 1]} : vector<8x256xf32> to vector<8x222xf32>
    %c0_120 = arith.constant 0 : index
    %c33 = arith.constant 33 : index
    %391 = memref.load %arg4[%c0_120, %c33] : memref<8x36xf32, #tpu.memory_space<smem>>
    %392 = vector.broadcast %391 : f32 to vector<8x222xf32>
    %393 = arith.mulf %390, %392 : vector<8x222xf32>
    %394 = arith.addf %389, %393 : vector<8x222xf32>
    %395 = vector.extract_strided_slice %225 {offsets = [0, 33], sizes = [8, 222], strides = [1, 1]} : vector<8x256xf32> to vector<8x222xf32>
    %c0_121 = arith.constant 0 : index
    %c34 = arith.constant 34 : index
    %396 = memref.load %arg4[%c0_121, %c34] : memref<8x36xf32, #tpu.memory_space<smem>>
    %397 = vector.broadcast %396 : f32 to vector<8x222xf32>
    %398 = arith.mulf %395, %397 : vector<8x222xf32>
    %399 = arith.addf %394, %398 : vector<8x222xf32>
    %400 = vector.extract_strided_slice %225 {offsets = [0, 34], sizes = [8, 222], strides = [1, 1]} : vector<8x256xf32> to vector<8x222xf32>
    %c0_122 = arith.constant 0 : index
    %c35 = arith.constant 35 : index
    %401 = memref.load %arg4[%c0_122, %c35] : memref<8x36xf32, #tpu.memory_space<smem>>
    %402 = vector.broadcast %401 : f32 to vector<8x222xf32>
    %403 = arith.mulf %400, %402 : vector<8x222xf32>
    %404 = arith.addf %399, %403 : vector<8x222xf32>
    %c0_123 = arith.constant 0 : index
    %405 = memref.load %arg5[%c0_123] : memref<8xf32, #tpu.memory_space<smem>>
    %406 = vector.broadcast %405 : f32 to vector<8x222xf32>
    %407 = arith.addf %404, %406 : vector<8x222xf32>
    %cst_124 = arith.constant 0.000000e+00 : f32
    %408 = vector.broadcast %cst_124 : f32 to vector<8x222xf32>
    %409 = arith.maximumf %407, %408 : vector<8x222xf32>
    %410 = vector.extract_strided_slice %204 {offsets = [0, 0], sizes = [8, 222], strides = [1, 1]} : vector<8x256xf32> to vector<8x222xf32>
    %c1_125 = arith.constant 1 : index
    %c0_126 = arith.constant 0 : index
    %411 = memref.load %arg4[%c1_125, %c0_126] : memref<8x36xf32, #tpu.memory_space<smem>>
    %412 = vector.broadcast %411 : f32 to vector<8x222xf32>
    %413 = arith.mulf %410, %412 : vector<8x222xf32>
    %414 = vector.extract_strided_slice %204 {offsets = [0, 1], sizes = [8, 222], strides = [1, 1]} : vector<8x256xf32> to vector<8x222xf32>
    %c1_127 = arith.constant 1 : index
    %c1_128 = arith.constant 1 : index
    %415 = memref.load %arg4[%c1_127, %c1_128] : memref<8x36xf32, #tpu.memory_space<smem>>
    %416 = vector.broadcast %415 : f32 to vector<8x222xf32>
    %417 = arith.mulf %414, %416 : vector<8x222xf32>
    %418 = arith.addf %413, %417 : vector<8x222xf32>
    %419 = vector.extract_strided_slice %204 {offsets = [0, 2], sizes = [8, 222], strides = [1, 1]} : vector<8x256xf32> to vector<8x222xf32>
    %c1_129 = arith.constant 1 : index
    %c2_130 = arith.constant 2 : index
    %420 = memref.load %arg4[%c1_129, %c2_130] : memref<8x36xf32, #tpu.memory_space<smem>>
    %421 = vector.broadcast %420 : f32 to vector<8x222xf32>
    %422 = arith.mulf %419, %421 : vector<8x222xf32>
    %423 = arith.addf %418, %422 : vector<8x222xf32>
    %424 = vector.extract_strided_slice %204 {offsets = [0, 16], sizes = [8, 222], strides = [1, 1]} : vector<8x256xf32> to vector<8x222xf32>
    %c1_131 = arith.constant 1 : index
    %c3_132 = arith.constant 3 : index
    %425 = memref.load %arg4[%c1_131, %c3_132] : memref<8x36xf32, #tpu.memory_space<smem>>
    %426 = vector.broadcast %425 : f32 to vector<8x222xf32>
    %427 = arith.mulf %424, %426 : vector<8x222xf32>
    %428 = arith.addf %423, %427 : vector<8x222xf32>
    %429 = vector.extract_strided_slice %204 {offsets = [0, 17], sizes = [8, 222], strides = [1, 1]} : vector<8x256xf32> to vector<8x222xf32>
    %c1_133 = arith.constant 1 : index
    %c4_134 = arith.constant 4 : index
    %430 = memref.load %arg4[%c1_133, %c4_134] : memref<8x36xf32, #tpu.memory_space<smem>>
    %431 = vector.broadcast %430 : f32 to vector<8x222xf32>
    %432 = arith.mulf %429, %431 : vector<8x222xf32>
    %433 = arith.addf %428, %432 : vector<8x222xf32>
    %434 = vector.extract_strided_slice %204 {offsets = [0, 18], sizes = [8, 222], strides = [1, 1]} : vector<8x256xf32> to vector<8x222xf32>
    %c1_135 = arith.constant 1 : index
    %c5_136 = arith.constant 5 : index
    %435 = memref.load %arg4[%c1_135, %c5_136] : memref<8x36xf32, #tpu.memory_space<smem>>
    %436 = vector.broadcast %435 : f32 to vector<8x222xf32>
    %437 = arith.mulf %434, %436 : vector<8x222xf32>
    %438 = arith.addf %433, %437 : vector<8x222xf32>
    %439 = vector.extract_strided_slice %204 {offsets = [0, 32], sizes = [8, 222], strides = [1, 1]} : vector<8x256xf32> to vector<8x222xf32>
    %c1_137 = arith.constant 1 : index
    %c6_138 = arith.constant 6 : index
    %440 = memref.load %arg4[%c1_137, %c6_138] : memref<8x36xf32, #tpu.memory_space<smem>>
    %441 = vector.broadcast %440 : f32 to vector<8x222xf32>
    %442 = arith.mulf %439, %441 : vector<8x222xf32>
    %443 = arith.addf %438, %442 : vector<8x222xf32>
    %444 = vector.extract_strided_slice %204 {offsets = [0, 33], sizes = [8, 222], strides = [1, 1]} : vector<8x256xf32> to vector<8x222xf32>
    %c1_139 = arith.constant 1 : index
    %c7_140 = arith.constant 7 : index
    %445 = memref.load %arg4[%c1_139, %c7_140] : memref<8x36xf32, #tpu.memory_space<smem>>
    %446 = vector.broadcast %445 : f32 to vector<8x222xf32>
    %447 = arith.mulf %444, %446 : vector<8x222xf32>
    %448 = arith.addf %443, %447 : vector<8x222xf32>
    %449 = vector.extract_strided_slice %204 {offsets = [0, 34], sizes = [8, 222], strides = [1, 1]} : vector<8x256xf32> to vector<8x222xf32>
    %c1_141 = arith.constant 1 : index
    %c8_142 = arith.constant 8 : index
    %450 = memref.load %arg4[%c1_141, %c8_142] : memref<8x36xf32, #tpu.memory_space<smem>>
    %451 = vector.broadcast %450 : f32 to vector<8x222xf32>
    %452 = arith.mulf %449, %451 : vector<8x222xf32>
    %453 = arith.addf %448, %452 : vector<8x222xf32>
    %454 = vector.extract_strided_slice %211 {offsets = [0, 0], sizes = [8, 222], strides = [1, 1]} : vector<8x256xf32> to vector<8x222xf32>
    %c1_143 = arith.constant 1 : index
    %c9_144 = arith.constant 9 : index
    %455 = memref.load %arg4[%c1_143, %c9_144] : memref<8x36xf32, #tpu.memory_space<smem>>
    %456 = vector.broadcast %455 : f32 to vector<8x222xf32>
    %457 = arith.mulf %454, %456 : vector<8x222xf32>
    %458 = arith.addf %453, %457 : vector<8x222xf32>
    %459 = vector.extract_strided_slice %211 {offsets = [0, 1], sizes = [8, 222], strides = [1, 1]} : vector<8x256xf32> to vector<8x222xf32>
    %c1_145 = arith.constant 1 : index
    %c10_146 = arith.constant 10 : index
    %460 = memref.load %arg4[%c1_145, %c10_146] : memref<8x36xf32, #tpu.memory_space<smem>>
    %461 = vector.broadcast %460 : f32 to vector<8x222xf32>
    %462 = arith.mulf %459, %461 : vector<8x222xf32>
    %463 = arith.addf %458, %462 : vector<8x222xf32>
    %464 = vector.extract_strided_slice %211 {offsets = [0, 2], sizes = [8, 222], strides = [1, 1]} : vector<8x256xf32> to vector<8x222xf32>
    %c1_147 = arith.constant 1 : index
    %c11_148 = arith.constant 11 : index
    %465 = memref.load %arg4[%c1_147, %c11_148] : memref<8x36xf32, #tpu.memory_space<smem>>
    %466 = vector.broadcast %465 : f32 to vector<8x222xf32>
    %467 = arith.mulf %464, %466 : vector<8x222xf32>
    %468 = arith.addf %463, %467 : vector<8x222xf32>
    %469 = vector.extract_strided_slice %211 {offsets = [0, 16], sizes = [8, 222], strides = [1, 1]} : vector<8x256xf32> to vector<8x222xf32>
    %c1_149 = arith.constant 1 : index
    %c12_150 = arith.constant 12 : index
    %470 = memref.load %arg4[%c1_149, %c12_150] : memref<8x36xf32, #tpu.memory_space<smem>>
    %471 = vector.broadcast %470 : f32 to vector<8x222xf32>
    %472 = arith.mulf %469, %471 : vector<8x222xf32>
    %473 = arith.addf %468, %472 : vector<8x222xf32>
    %474 = vector.extract_strided_slice %211 {offsets = [0, 17], sizes = [8, 222], strides = [1, 1]} : vector<8x256xf32> to vector<8x222xf32>
    %c1_151 = arith.constant 1 : index
    %c13_152 = arith.constant 13 : index
    %475 = memref.load %arg4[%c1_151, %c13_152] : memref<8x36xf32, #tpu.memory_space<smem>>
    %476 = vector.broadcast %475 : f32 to vector<8x222xf32>
    %477 = arith.mulf %474, %476 : vector<8x222xf32>
    %478 = arith.addf %473, %477 : vector<8x222xf32>
    %479 = vector.extract_strided_slice %211 {offsets = [0, 18], sizes = [8, 222], strides = [1, 1]} : vector<8x256xf32> to vector<8x222xf32>
    %c1_153 = arith.constant 1 : index
    %c14_154 = arith.constant 14 : index
    %480 = memref.load %arg4[%c1_153, %c14_154] : memref<8x36xf32, #tpu.memory_space<smem>>
    %481 = vector.broadcast %480 : f32 to vector<8x222xf32>
    %482 = arith.mulf %479, %481 : vector<8x222xf32>
    %483 = arith.addf %478, %482 : vector<8x222xf32>
    %484 = vector.extract_strided_slice %211 {offsets = [0, 32], sizes = [8, 222], strides = [1, 1]} : vector<8x256xf32> to vector<8x222xf32>
    %c1_155 = arith.constant 1 : index
    %c15_156 = arith.constant 15 : index
    %485 = memref.load %arg4[%c1_155, %c15_156] : memref<8x36xf32, #tpu.memory_space<smem>>
    %486 = vector.broadcast %485 : f32 to vector<8x222xf32>
    %487 = arith.mulf %484, %486 : vector<8x222xf32>
    %488 = arith.addf %483, %487 : vector<8x222xf32>
    %489 = vector.extract_strided_slice %211 {offsets = [0, 33], sizes = [8, 222], strides = [1, 1]} : vector<8x256xf32> to vector<8x222xf32>
    %c1_157 = arith.constant 1 : index
    %c16_158 = arith.constant 16 : index
    %490 = memref.load %arg4[%c1_157, %c16_158] : memref<8x36xf32, #tpu.memory_space<smem>>
    %491 = vector.broadcast %490 : f32 to vector<8x222xf32>
    %492 = arith.mulf %489, %491 : vector<8x222xf32>
    %493 = arith.addf %488, %492 : vector<8x222xf32>
    %494 = vector.extract_strided_slice %211 {offsets = [0, 34], sizes = [8, 222], strides = [1, 1]} : vector<8x256xf32> to vector<8x222xf32>
    %c1_159 = arith.constant 1 : index
    %c17_160 = arith.constant 17 : index
    %495 = memref.load %arg4[%c1_159, %c17_160] : memref<8x36xf32, #tpu.memory_space<smem>>
    %496 = vector.broadcast %495 : f32 to vector<8x222xf32>
    %497 = arith.mulf %494, %496 : vector<8x222xf32>
    %498 = arith.addf %493, %497 : vector<8x222xf32>
    %499 = vector.extract_strided_slice %218 {offsets = [0, 0], sizes = [8, 222], strides = [1, 1]} : vector<8x256xf32> to vector<8x222xf32>
    %c1_161 = arith.constant 1 : index
    %c18_162 = arith.constant 18 : index
    %500 = memref.load %arg4[%c1_161, %c18_162] : memref<8x36xf32, #tpu.memory_space<smem>>
    %501 = vector.broadcast %500 : f32 to vector<8x222xf32>
    %502 = arith.mulf %499, %501 : vector<8x222xf32>
    %503 = arith.addf %498, %502 : vector<8x222xf32>
    %504 = vector.extract_strided_slice %218 {offsets = [0, 1], sizes = [8, 222], strides = [1, 1]} : vector<8x256xf32> to vector<8x222xf32>
    %c1_163 = arith.constant 1 : index
    %c19_164 = arith.constant 19 : index
    %505 = memref.load %arg4[%c1_163, %c19_164] : memref<8x36xf32, #tpu.memory_space<smem>>
    %506 = vector.broadcast %505 : f32 to vector<8x222xf32>
    %507 = arith.mulf %504, %506 : vector<8x222xf32>
    %508 = arith.addf %503, %507 : vector<8x222xf32>
    %509 = vector.extract_strided_slice %218 {offsets = [0, 2], sizes = [8, 222], strides = [1, 1]} : vector<8x256xf32> to vector<8x222xf32>
    %c1_165 = arith.constant 1 : index
    %c20_166 = arith.constant 20 : index
    %510 = memref.load %arg4[%c1_165, %c20_166] : memref<8x36xf32, #tpu.memory_space<smem>>
    %511 = vector.broadcast %510 : f32 to vector<8x222xf32>
    %512 = arith.mulf %509, %511 : vector<8x222xf32>
    %513 = arith.addf %508, %512 : vector<8x222xf32>
    %514 = vector.extract_strided_slice %218 {offsets = [0, 16], sizes = [8, 222], strides = [1, 1]} : vector<8x256xf32> to vector<8x222xf32>
    %c1_167 = arith.constant 1 : index
    %c21_168 = arith.constant 21 : index
    %515 = memref.load %arg4[%c1_167, %c21_168] : memref<8x36xf32, #tpu.memory_space<smem>>
    %516 = vector.broadcast %515 : f32 to vector<8x222xf32>
    %517 = arith.mulf %514, %516 : vector<8x222xf32>
    %518 = arith.addf %513, %517 : vector<8x222xf32>
    %519 = vector.extract_strided_slice %218 {offsets = [0, 17], sizes = [8, 222], strides = [1, 1]} : vector<8x256xf32> to vector<8x222xf32>
    %c1_169 = arith.constant 1 : index
    %c22_170 = arith.constant 22 : index
    %520 = memref.load %arg4[%c1_169, %c22_170] : memref<8x36xf32, #tpu.memory_space<smem>>
    %521 = vector.broadcast %520 : f32 to vector<8x222xf32>
    %522 = arith.mulf %519, %521 : vector<8x222xf32>
    %523 = arith.addf %518, %522 : vector<8x222xf32>
    %524 = vector.extract_strided_slice %218 {offsets = [0, 18], sizes = [8, 222], strides = [1, 1]} : vector<8x256xf32> to vector<8x222xf32>
    %c1_171 = arith.constant 1 : index
    %c23_172 = arith.constant 23 : index
    %525 = memref.load %arg4[%c1_171, %c23_172] : memref<8x36xf32, #tpu.memory_space<smem>>
    %526 = vector.broadcast %525 : f32 to vector<8x222xf32>
    %527 = arith.mulf %524, %526 : vector<8x222xf32>
    %528 = arith.addf %523, %527 : vector<8x222xf32>
    %529 = vector.extract_strided_slice %218 {offsets = [0, 32], sizes = [8, 222], strides = [1, 1]} : vector<8x256xf32> to vector<8x222xf32>
    %c1_173 = arith.constant 1 : index
    %c24_174 = arith.constant 24 : index
    %530 = memref.load %arg4[%c1_173, %c24_174] : memref<8x36xf32, #tpu.memory_space<smem>>
    %531 = vector.broadcast %530 : f32 to vector<8x222xf32>
    %532 = arith.mulf %529, %531 : vector<8x222xf32>
    %533 = arith.addf %528, %532 : vector<8x222xf32>
    %534 = vector.extract_strided_slice %218 {offsets = [0, 33], sizes = [8, 222], strides = [1, 1]} : vector<8x256xf32> to vector<8x222xf32>
    %c1_175 = arith.constant 1 : index
    %c25_176 = arith.constant 25 : index
    %535 = memref.load %arg4[%c1_175, %c25_176] : memref<8x36xf32, #tpu.memory_space<smem>>
    %536 = vector.broadcast %535 : f32 to vector<8x222xf32>
    %537 = arith.mulf %534, %536 : vector<8x222xf32>
    %538 = arith.addf %533, %537 : vector<8x222xf32>
    %539 = vector.extract_strided_slice %218 {offsets = [0, 34], sizes = [8, 222], strides = [1, 1]} : vector<8x256xf32> to vector<8x222xf32>
    %c1_177 = arith.constant 1 : index
    %c26_178 = arith.constant 26 : index
    %540 = memref.load %arg4[%c1_177, %c26_178] : memref<8x36xf32, #tpu.memory_space<smem>>
    %541 = vector.broadcast %540 : f32 to vector<8x222xf32>
    %542 = arith.mulf %539, %541 : vector<8x222xf32>
    %543 = arith.addf %538, %542 : vector<8x222xf32>
    %544 = vector.extract_strided_slice %225 {offsets = [0, 0], sizes = [8, 222], strides = [1, 1]} : vector<8x256xf32> to vector<8x222xf32>
    %c1_179 = arith.constant 1 : index
    %c27_180 = arith.constant 27 : index
    %545 = memref.load %arg4[%c1_179, %c27_180] : memref<8x36xf32, #tpu.memory_space<smem>>
    %546 = vector.broadcast %545 : f32 to vector<8x222xf32>
    %547 = arith.mulf %544, %546 : vector<8x222xf32>
    %548 = arith.addf %543, %547 : vector<8x222xf32>
    %549 = vector.extract_strided_slice %225 {offsets = [0, 1], sizes = [8, 222], strides = [1, 1]} : vector<8x256xf32> to vector<8x222xf32>
    %c1_181 = arith.constant 1 : index
    %c28_182 = arith.constant 28 : index
    %550 = memref.load %arg4[%c1_181, %c28_182] : memref<8x36xf32, #tpu.memory_space<smem>>
    %551 = vector.broadcast %550 : f32 to vector<8x222xf32>
    %552 = arith.mulf %549, %551 : vector<8x222xf32>
    %553 = arith.addf %548, %552 : vector<8x222xf32>
    %554 = vector.extract_strided_slice %225 {offsets = [0, 2], sizes = [8, 222], strides = [1, 1]} : vector<8x256xf32> to vector<8x222xf32>
    %c1_183 = arith.constant 1 : index
    %c29_184 = arith.constant 29 : index
    %555 = memref.load %arg4[%c1_183, %c29_184] : memref<8x36xf32, #tpu.memory_space<smem>>
    %556 = vector.broadcast %555 : f32 to vector<8x222xf32>
    %557 = arith.mulf %554, %556 : vector<8x222xf32>
    %558 = arith.addf %553, %557 : vector<8x222xf32>
    %559 = vector.extract_strided_slice %225 {offsets = [0, 16], sizes = [8, 222], strides = [1, 1]} : vector<8x256xf32> to vector<8x222xf32>
    %c1_185 = arith.constant 1 : index
    %c30_186 = arith.constant 30 : index
    %560 = memref.load %arg4[%c1_185, %c30_186] : memref<8x36xf32, #tpu.memory_space<smem>>
    %561 = vector.broadcast %560 : f32 to vector<8x222xf32>
    %562 = arith.mulf %559, %561 : vector<8x222xf32>
    %563 = arith.addf %558, %562 : vector<8x222xf32>
    %564 = vector.extract_strided_slice %225 {offsets = [0, 17], sizes = [8, 222], strides = [1, 1]} : vector<8x256xf32> to vector<8x222xf32>
    %c1_187 = arith.constant 1 : index
    %c31_188 = arith.constant 31 : index
    %565 = memref.load %arg4[%c1_187, %c31_188] : memref<8x36xf32, #tpu.memory_space<smem>>
    %566 = vector.broadcast %565 : f32 to vector<8x222xf32>
    %567 = arith.mulf %564, %566 : vector<8x222xf32>
    %568 = arith.addf %563, %567 : vector<8x222xf32>
    %569 = vector.extract_strided_slice %225 {offsets = [0, 18], sizes = [8, 222], strides = [1, 1]} : vector<8x256xf32> to vector<8x222xf32>
    %c1_189 = arith.constant 1 : index
    %c32_190 = arith.constant 32 : index
    %570 = memref.load %arg4[%c1_189, %c32_190] : memref<8x36xf32, #tpu.memory_space<smem>>
    %571 = vector.broadcast %570 : f32 to vector<8x222xf32>
    %572 = arith.mulf %569, %571 : vector<8x222xf32>
    %573 = arith.addf %568, %572 : vector<8x222xf32>
    %574 = vector.extract_strided_slice %225 {offsets = [0, 32], sizes = [8, 222], strides = [1, 1]} : vector<8x256xf32> to vector<8x222xf32>
    %c1_191 = arith.constant 1 : index
    %c33_192 = arith.constant 33 : index
    %575 = memref.load %arg4[%c1_191, %c33_192] : memref<8x36xf32, #tpu.memory_space<smem>>
    %576 = vector.broadcast %575 : f32 to vector<8x222xf32>
    %577 = arith.mulf %574, %576 : vector<8x222xf32>
    %578 = arith.addf %573, %577 : vector<8x222xf32>
    %579 = vector.extract_strided_slice %225 {offsets = [0, 33], sizes = [8, 222], strides = [1, 1]} : vector<8x256xf32> to vector<8x222xf32>
    %c1_193 = arith.constant 1 : index
    %c34_194 = arith.constant 34 : index
    %580 = memref.load %arg4[%c1_193, %c34_194] : memref<8x36xf32, #tpu.memory_space<smem>>
    %581 = vector.broadcast %580 : f32 to vector<8x222xf32>
    %582 = arith.mulf %579, %581 : vector<8x222xf32>
    %583 = arith.addf %578, %582 : vector<8x222xf32>
    %584 = vector.extract_strided_slice %225 {offsets = [0, 34], sizes = [8, 222], strides = [1, 1]} : vector<8x256xf32> to vector<8x222xf32>
    %c1_195 = arith.constant 1 : index
    %c35_196 = arith.constant 35 : index
    %585 = memref.load %arg4[%c1_195, %c35_196] : memref<8x36xf32, #tpu.memory_space<smem>>
    %586 = vector.broadcast %585 : f32 to vector<8x222xf32>
    %587 = arith.mulf %584, %586 : vector<8x222xf32>
    %588 = arith.addf %583, %587 : vector<8x222xf32>
    %c1_197 = arith.constant 1 : index
    %589 = memref.load %arg5[%c1_197] : memref<8xf32, #tpu.memory_space<smem>>
    %590 = vector.broadcast %589 : f32 to vector<8x222xf32>
    %591 = arith.addf %588, %590 : vector<8x222xf32>
    %cst_198 = arith.constant 0.000000e+00 : f32
    %592 = vector.broadcast %cst_198 : f32 to vector<8x222xf32>
    %593 = arith.maximumf %591, %592 : vector<8x222xf32>
    %594 = vector.extract_strided_slice %204 {offsets = [0, 0], sizes = [8, 222], strides = [1, 1]} : vector<8x256xf32> to vector<8x222xf32>
    %c2_199 = arith.constant 2 : index
    %c0_200 = arith.constant 0 : index
    %595 = memref.load %arg4[%c2_199, %c0_200] : memref<8x36xf32, #tpu.memory_space<smem>>
    %596 = vector.broadcast %595 : f32 to vector<8x222xf32>
    %597 = arith.mulf %594, %596 : vector<8x222xf32>
    %598 = vector.extract_strided_slice %204 {offsets = [0, 1], sizes = [8, 222], strides = [1, 1]} : vector<8x256xf32> to vector<8x222xf32>
    %c2_201 = arith.constant 2 : index
    %c1_202 = arith.constant 1 : index
    %599 = memref.load %arg4[%c2_201, %c1_202] : memref<8x36xf32, #tpu.memory_space<smem>>
    %600 = vector.broadcast %599 : f32 to vector<8x222xf32>
    %601 = arith.mulf %598, %600 : vector<8x222xf32>
    %602 = arith.addf %597, %601 : vector<8x222xf32>
    %603 = vector.extract_strided_slice %204 {offsets = [0, 2], sizes = [8, 222], strides = [1, 1]} : vector<8x256xf32> to vector<8x222xf32>
    %c2_203 = arith.constant 2 : index
    %c2_204 = arith.constant 2 : index
    %604 = memref.load %arg4[%c2_203, %c2_204] : memref<8x36xf32, #tpu.memory_space<smem>>
    %605 = vector.broadcast %604 : f32 to vector<8x222xf32>
    %606 = arith.mulf %603, %605 : vector<8x222xf32>
    %607 = arith.addf %602, %606 : vector<8x222xf32>
    %608 = vector.extract_strided_slice %204 {offsets = [0, 16], sizes = [8, 222], strides = [1, 1]} : vector<8x256xf32> to vector<8x222xf32>
    %c2_205 = arith.constant 2 : index
    %c3_206 = arith.constant 3 : index
    %609 = memref.load %arg4[%c2_205, %c3_206] : memref<8x36xf32, #tpu.memory_space<smem>>
    %610 = vector.broadcast %609 : f32 to vector<8x222xf32>
    %611 = arith.mulf %608, %610 : vector<8x222xf32>
    %612 = arith.addf %607, %611 : vector<8x222xf32>
    %613 = vector.extract_strided_slice %204 {offsets = [0, 17], sizes = [8, 222], strides = [1, 1]} : vector<8x256xf32> to vector<8x222xf32>
    %c2_207 = arith.constant 2 : index
    %c4_208 = arith.constant 4 : index
    %614 = memref.load %arg4[%c2_207, %c4_208] : memref<8x36xf32, #tpu.memory_space<smem>>
    %615 = vector.broadcast %614 : f32 to vector<8x222xf32>
    %616 = arith.mulf %613, %615 : vector<8x222xf32>
    %617 = arith.addf %612, %616 : vector<8x222xf32>
    %618 = vector.extract_strided_slice %204 {offsets = [0, 18], sizes = [8, 222], strides = [1, 1]} : vector<8x256xf32> to vector<8x222xf32>
    %c2_209 = arith.constant 2 : index
    %c5_210 = arith.constant 5 : index
    %619 = memref.load %arg4[%c2_209, %c5_210] : memref<8x36xf32, #tpu.memory_space<smem>>
    %620 = vector.broadcast %619 : f32 to vector<8x222xf32>
    %621 = arith.mulf %618, %620 : vector<8x222xf32>
    %622 = arith.addf %617, %621 : vector<8x222xf32>
    %623 = vector.extract_strided_slice %204 {offsets = [0, 32], sizes = [8, 222], strides = [1, 1]} : vector<8x256xf32> to vector<8x222xf32>
    %c2_211 = arith.constant 2 : index
    %c6_212 = arith.constant 6 : index
    %624 = memref.load %arg4[%c2_211, %c6_212] : memref<8x36xf32, #tpu.memory_space<smem>>
    %625 = vector.broadcast %624 : f32 to vector<8x222xf32>
    %626 = arith.mulf %623, %625 : vector<8x222xf32>
    %627 = arith.addf %622, %626 : vector<8x222xf32>
    %628 = vector.extract_strided_slice %204 {offsets = [0, 33], sizes = [8, 222], strides = [1, 1]} : vector<8x256xf32> to vector<8x222xf32>
    %c2_213 = arith.constant 2 : index
    %c7_214 = arith.constant 7 : index
    %629 = memref.load %arg4[%c2_213, %c7_214] : memref<8x36xf32, #tpu.memory_space<smem>>
    %630 = vector.broadcast %629 : f32 to vector<8x222xf32>
    %631 = arith.mulf %628, %630 : vector<8x222xf32>
    %632 = arith.addf %627, %631 : vector<8x222xf32>
    %633 = vector.extract_strided_slice %204 {offsets = [0, 34], sizes = [8, 222], strides = [1, 1]} : vector<8x256xf32> to vector<8x222xf32>
    %c2_215 = arith.constant 2 : index
    %c8_216 = arith.constant 8 : index
    %634 = memref.load %arg4[%c2_215, %c8_216] : memref<8x36xf32, #tpu.memory_space<smem>>
    %635 = vector.broadcast %634 : f32 to vector<8x222xf32>
    %636 = arith.mulf %633, %635 : vector<8x222xf32>
    %637 = arith.addf %632, %636 : vector<8x222xf32>
    %638 = vector.extract_strided_slice %211 {offsets = [0, 0], sizes = [8, 222], strides = [1, 1]} : vector<8x256xf32> to vector<8x222xf32>
    %c2_217 = arith.constant 2 : index
    %c9_218 = arith.constant 9 : index
    %639 = memref.load %arg4[%c2_217, %c9_218] : memref<8x36xf32, #tpu.memory_space<smem>>
    %640 = vector.broadcast %639 : f32 to vector<8x222xf32>
    %641 = arith.mulf %638, %640 : vector<8x222xf32>
    %642 = arith.addf %637, %641 : vector<8x222xf32>
    %643 = vector.extract_strided_slice %211 {offsets = [0, 1], sizes = [8, 222], strides = [1, 1]} : vector<8x256xf32> to vector<8x222xf32>
    %c2_219 = arith.constant 2 : index
    %c10_220 = arith.constant 10 : index
    %644 = memref.load %arg4[%c2_219, %c10_220] : memref<8x36xf32, #tpu.memory_space<smem>>
    %645 = vector.broadcast %644 : f32 to vector<8x222xf32>
    %646 = arith.mulf %643, %645 : vector<8x222xf32>
    %647 = arith.addf %642, %646 : vector<8x222xf32>
    %648 = vector.extract_strided_slice %211 {offsets = [0, 2], sizes = [8, 222], strides = [1, 1]} : vector<8x256xf32> to vector<8x222xf32>
    %c2_221 = arith.constant 2 : index
    %c11_222 = arith.constant 11 : index
    %649 = memref.load %arg4[%c2_221, %c11_222] : memref<8x36xf32, #tpu.memory_space<smem>>
    %650 = vector.broadcast %649 : f32 to vector<8x222xf32>
    %651 = arith.mulf %648, %650 : vector<8x222xf32>
    %652 = arith.addf %647, %651 : vector<8x222xf32>
    %653 = vector.extract_strided_slice %211 {offsets = [0, 16], sizes = [8, 222], strides = [1, 1]} : vector<8x256xf32> to vector<8x222xf32>
    %c2_223 = arith.constant 2 : index
    %c12_224 = arith.constant 12 : index
    %654 = memref.load %arg4[%c2_223, %c12_224] : memref<8x36xf32, #tpu.memory_space<smem>>
    %655 = vector.broadcast %654 : f32 to vector<8x222xf32>
    %656 = arith.mulf %653, %655 : vector<8x222xf32>
    %657 = arith.addf %652, %656 : vector<8x222xf32>
    %658 = vector.extract_strided_slice %211 {offsets = [0, 17], sizes = [8, 222], strides = [1, 1]} : vector<8x256xf32> to vector<8x222xf32>
    %c2_225 = arith.constant 2 : index
    %c13_226 = arith.constant 13 : index
    %659 = memref.load %arg4[%c2_225, %c13_226] : memref<8x36xf32, #tpu.memory_space<smem>>
    %660 = vector.broadcast %659 : f32 to vector<8x222xf32>
    %661 = arith.mulf %658, %660 : vector<8x222xf32>
    %662 = arith.addf %657, %661 : vector<8x222xf32>
    %663 = vector.extract_strided_slice %211 {offsets = [0, 18], sizes = [8, 222], strides = [1, 1]} : vector<8x256xf32> to vector<8x222xf32>
    %c2_227 = arith.constant 2 : index
    %c14_228 = arith.constant 14 : index
    %664 = memref.load %arg4[%c2_227, %c14_228] : memref<8x36xf32, #tpu.memory_space<smem>>
    %665 = vector.broadcast %664 : f32 to vector<8x222xf32>
    %666 = arith.mulf %663, %665 : vector<8x222xf32>
    %667 = arith.addf %662, %666 : vector<8x222xf32>
    %668 = vector.extract_strided_slice %211 {offsets = [0, 32], sizes = [8, 222], strides = [1, 1]} : vector<8x256xf32> to vector<8x222xf32>
    %c2_229 = arith.constant 2 : index
    %c15_230 = arith.constant 15 : index
    %669 = memref.load %arg4[%c2_229, %c15_230] : memref<8x36xf32, #tpu.memory_space<smem>>
    %670 = vector.broadcast %669 : f32 to vector<8x222xf32>
    %671 = arith.mulf %668, %670 : vector<8x222xf32>
    %672 = arith.addf %667, %671 : vector<8x222xf32>
    %673 = vector.extract_strided_slice %211 {offsets = [0, 33], sizes = [8, 222], strides = [1, 1]} : vector<8x256xf32> to vector<8x222xf32>
    %c2_231 = arith.constant 2 : index
    %c16_232 = arith.constant 16 : index
    %674 = memref.load %arg4[%c2_231, %c16_232] : memref<8x36xf32, #tpu.memory_space<smem>>
    %675 = vector.broadcast %674 : f32 to vector<8x222xf32>
    %676 = arith.mulf %673, %675 : vector<8x222xf32>
    %677 = arith.addf %672, %676 : vector<8x222xf32>
    %678 = vector.extract_strided_slice %211 {offsets = [0, 34], sizes = [8, 222], strides = [1, 1]} : vector<8x256xf32> to vector<8x222xf32>
    %c2_233 = arith.constant 2 : index
    %c17_234 = arith.constant 17 : index
    %679 = memref.load %arg4[%c2_233, %c17_234] : memref<8x36xf32, #tpu.memory_space<smem>>
    %680 = vector.broadcast %679 : f32 to vector<8x222xf32>
    %681 = arith.mulf %678, %680 : vector<8x222xf32>
    %682 = arith.addf %677, %681 : vector<8x222xf32>
    %683 = vector.extract_strided_slice %218 {offsets = [0, 0], sizes = [8, 222], strides = [1, 1]} : vector<8x256xf32> to vector<8x222xf32>
    %c2_235 = arith.constant 2 : index
    %c18_236 = arith.constant 18 : index
    %684 = memref.load %arg4[%c2_235, %c18_236] : memref<8x36xf32, #tpu.memory_space<smem>>
    %685 = vector.broadcast %684 : f32 to vector<8x222xf32>
    %686 = arith.mulf %683, %685 : vector<8x222xf32>
    %687 = arith.addf %682, %686 : vector<8x222xf32>
    %688 = vector.extract_strided_slice %218 {offsets = [0, 1], sizes = [8, 222], strides = [1, 1]} : vector<8x256xf32> to vector<8x222xf32>
    %c2_237 = arith.constant 2 : index
    %c19_238 = arith.constant 19 : index
    %689 = memref.load %arg4[%c2_237, %c19_238] : memref<8x36xf32, #tpu.memory_space<smem>>
    %690 = vector.broadcast %689 : f32 to vector<8x222xf32>
    %691 = arith.mulf %688, %690 : vector<8x222xf32>
    %692 = arith.addf %687, %691 : vector<8x222xf32>
    %693 = vector.extract_strided_slice %218 {offsets = [0, 2], sizes = [8, 222], strides = [1, 1]} : vector<8x256xf32> to vector<8x222xf32>
    %c2_239 = arith.constant 2 : index
    %c20_240 = arith.constant 20 : index
    %694 = memref.load %arg4[%c2_239, %c20_240] : memref<8x36xf32, #tpu.memory_space<smem>>
    %695 = vector.broadcast %694 : f32 to vector<8x222xf32>
    %696 = arith.mulf %693, %695 : vector<8x222xf32>
    %697 = arith.addf %692, %696 : vector<8x222xf32>
    %698 = vector.extract_strided_slice %218 {offsets = [0, 16], sizes = [8, 222], strides = [1, 1]} : vector<8x256xf32> to vector<8x222xf32>
    %c2_241 = arith.constant 2 : index
    %c21_242 = arith.constant 21 : index
    %699 = memref.load %arg4[%c2_241, %c21_242] : memref<8x36xf32, #tpu.memory_space<smem>>
    %700 = vector.broadcast %699 : f32 to vector<8x222xf32>
    %701 = arith.mulf %698, %700 : vector<8x222xf32>
    %702 = arith.addf %697, %701 : vector<8x222xf32>
    %703 = vector.extract_strided_slice %218 {offsets = [0, 17], sizes = [8, 222], strides = [1, 1]} : vector<8x256xf32> to vector<8x222xf32>
    %c2_243 = arith.constant 2 : index
    %c22_244 = arith.constant 22 : index
    %704 = memref.load %arg4[%c2_243, %c22_244] : memref<8x36xf32, #tpu.memory_space<smem>>
    %705 = vector.broadcast %704 : f32 to vector<8x222xf32>
    %706 = arith.mulf %703, %705 : vector<8x222xf32>
    %707 = arith.addf %702, %706 : vector<8x222xf32>
    %708 = vector.extract_strided_slice %218 {offsets = [0, 18], sizes = [8, 222], strides = [1, 1]} : vector<8x256xf32> to vector<8x222xf32>
    %c2_245 = arith.constant 2 : index
    %c23_246 = arith.constant 23 : index
    %709 = memref.load %arg4[%c2_245, %c23_246] : memref<8x36xf32, #tpu.memory_space<smem>>
    %710 = vector.broadcast %709 : f32 to vector<8x222xf32>
    %711 = arith.mulf %708, %710 : vector<8x222xf32>
    %712 = arith.addf %707, %711 : vector<8x222xf32>
    %713 = vector.extract_strided_slice %218 {offsets = [0, 32], sizes = [8, 222], strides = [1, 1]} : vector<8x256xf32> to vector<8x222xf32>
    %c2_247 = arith.constant 2 : index
    %c24_248 = arith.constant 24 : index
    %714 = memref.load %arg4[%c2_247, %c24_248] : memref<8x36xf32, #tpu.memory_space<smem>>
    %715 = vector.broadcast %714 : f32 to vector<8x222xf32>
    %716 = arith.mulf %713, %715 : vector<8x222xf32>
    %717 = arith.addf %712, %716 : vector<8x222xf32>
    %718 = vector.extract_strided_slice %218 {offsets = [0, 33], sizes = [8, 222], strides = [1, 1]} : vector<8x256xf32> to vector<8x222xf32>
    %c2_249 = arith.constant 2 : index
    %c25_250 = arith.constant 25 : index
    %719 = memref.load %arg4[%c2_249, %c25_250] : memref<8x36xf32, #tpu.memory_space<smem>>
    %720 = vector.broadcast %719 : f32 to vector<8x222xf32>
    %721 = arith.mulf %718, %720 : vector<8x222xf32>
    %722 = arith.addf %717, %721 : vector<8x222xf32>
    %723 = vector.extract_strided_slice %218 {offsets = [0, 34], sizes = [8, 222], strides = [1, 1]} : vector<8x256xf32> to vector<8x222xf32>
    %c2_251 = arith.constant 2 : index
    %c26_252 = arith.constant 26 : index
    %724 = memref.load %arg4[%c2_251, %c26_252] : memref<8x36xf32, #tpu.memory_space<smem>>
    %725 = vector.broadcast %724 : f32 to vector<8x222xf32>
    %726 = arith.mulf %723, %725 : vector<8x222xf32>
    %727 = arith.addf %722, %726 : vector<8x222xf32>
    %728 = vector.extract_strided_slice %225 {offsets = [0, 0], sizes = [8, 222], strides = [1, 1]} : vector<8x256xf32> to vector<8x222xf32>
    %c2_253 = arith.constant 2 : index
    %c27_254 = arith.constant 27 : index
    %729 = memref.load %arg4[%c2_253, %c27_254] : memref<8x36xf32, #tpu.memory_space<smem>>
    %730 = vector.broadcast %729 : f32 to vector<8x222xf32>
    %731 = arith.mulf %728, %730 : vector<8x222xf32>
    %732 = arith.addf %727, %731 : vector<8x222xf32>
    %733 = vector.extract_strided_slice %225 {offsets = [0, 1], sizes = [8, 222], strides = [1, 1]} : vector<8x256xf32> to vector<8x222xf32>
    %c2_255 = arith.constant 2 : index
    %c28_256 = arith.constant 28 : index
    %734 = memref.load %arg4[%c2_255, %c28_256] : memref<8x36xf32, #tpu.memory_space<smem>>
    %735 = vector.broadcast %734 : f32 to vector<8x222xf32>
    %736 = arith.mulf %733, %735 : vector<8x222xf32>
    %737 = arith.addf %732, %736 : vector<8x222xf32>
    %738 = vector.extract_strided_slice %225 {offsets = [0, 2], sizes = [8, 222], strides = [1, 1]} : vector<8x256xf32> to vector<8x222xf32>
    %c2_257 = arith.constant 2 : index
    %c29_258 = arith.constant 29 : index
    %739 = memref.load %arg4[%c2_257, %c29_258] : memref<8x36xf32, #tpu.memory_space<smem>>
    %740 = vector.broadcast %739 : f32 to vector<8x222xf32>
    %741 = arith.mulf %738, %740 : vector<8x222xf32>
    %742 = arith.addf %737, %741 : vector<8x222xf32>
    %743 = vector.extract_strided_slice %225 {offsets = [0, 16], sizes = [8, 222], strides = [1, 1]} : vector<8x256xf32> to vector<8x222xf32>
    %c2_259 = arith.constant 2 : index
    %c30_260 = arith.constant 30 : index
    %744 = memref.load %arg4[%c2_259, %c30_260] : memref<8x36xf32, #tpu.memory_space<smem>>
    %745 = vector.broadcast %744 : f32 to vector<8x222xf32>
    %746 = arith.mulf %743, %745 : vector<8x222xf32>
    %747 = arith.addf %742, %746 : vector<8x222xf32>
    %748 = vector.extract_strided_slice %225 {offsets = [0, 17], sizes = [8, 222], strides = [1, 1]} : vector<8x256xf32> to vector<8x222xf32>
    %c2_261 = arith.constant 2 : index
    %c31_262 = arith.constant 31 : index
    %749 = memref.load %arg4[%c2_261, %c31_262] : memref<8x36xf32, #tpu.memory_space<smem>>
    %750 = vector.broadcast %749 : f32 to vector<8x222xf32>
    %751 = arith.mulf %748, %750 : vector<8x222xf32>
    %752 = arith.addf %747, %751 : vector<8x222xf32>
    %753 = vector.extract_strided_slice %225 {offsets = [0, 18], sizes = [8, 222], strides = [1, 1]} : vector<8x256xf32> to vector<8x222xf32>
    %c2_263 = arith.constant 2 : index
    %c32_264 = arith.constant 32 : index
    %754 = memref.load %arg4[%c2_263, %c32_264] : memref<8x36xf32, #tpu.memory_space<smem>>
    %755 = vector.broadcast %754 : f32 to vector<8x222xf32>
    %756 = arith.mulf %753, %755 : vector<8x222xf32>
    %757 = arith.addf %752, %756 : vector<8x222xf32>
    %758 = vector.extract_strided_slice %225 {offsets = [0, 32], sizes = [8, 222], strides = [1, 1]} : vector<8x256xf32> to vector<8x222xf32>
    %c2_265 = arith.constant 2 : index
    %c33_266 = arith.constant 33 : index
    %759 = memref.load %arg4[%c2_265, %c33_266] : memref<8x36xf32, #tpu.memory_space<smem>>
    %760 = vector.broadcast %759 : f32 to vector<8x222xf32>
    %761 = arith.mulf %758, %760 : vector<8x222xf32>
    %762 = arith.addf %757, %761 : vector<8x222xf32>
    %763 = vector.extract_strided_slice %225 {offsets = [0, 33], sizes = [8, 222], strides = [1, 1]} : vector<8x256xf32> to vector<8x222xf32>
    %c2_267 = arith.constant 2 : index
    %c34_268 = arith.constant 34 : index
    %764 = memref.load %arg4[%c2_267, %c34_268] : memref<8x36xf32, #tpu.memory_space<smem>>
    %765 = vector.broadcast %764 : f32 to vector<8x222xf32>
    %766 = arith.mulf %763, %765 : vector<8x222xf32>
    %767 = arith.addf %762, %766 : vector<8x222xf32>
    %768 = vector.extract_strided_slice %225 {offsets = [0, 34], sizes = [8, 222], strides = [1, 1]} : vector<8x256xf32> to vector<8x222xf32>
    %c2_269 = arith.constant 2 : index
    %c35_270 = arith.constant 35 : index
    %769 = memref.load %arg4[%c2_269, %c35_270] : memref<8x36xf32, #tpu.memory_space<smem>>
    %770 = vector.broadcast %769 : f32 to vector<8x222xf32>
    %771 = arith.mulf %768, %770 : vector<8x222xf32>
    %772 = arith.addf %767, %771 : vector<8x222xf32>
    %c2_271 = arith.constant 2 : index
    %773 = memref.load %arg5[%c2_271] : memref<8xf32, #tpu.memory_space<smem>>
    %774 = vector.broadcast %773 : f32 to vector<8x222xf32>
    %775 = arith.addf %772, %774 : vector<8x222xf32>
    %cst_272 = arith.constant 0.000000e+00 : f32
    %776 = vector.broadcast %cst_272 : f32 to vector<8x222xf32>
    %777 = arith.maximumf %775, %776 : vector<8x222xf32>
    %778 = vector.extract_strided_slice %204 {offsets = [0, 0], sizes = [8, 222], strides = [1, 1]} : vector<8x256xf32> to vector<8x222xf32>
    %c3_273 = arith.constant 3 : index
    %c0_274 = arith.constant 0 : index
    %779 = memref.load %arg4[%c3_273, %c0_274] : memref<8x36xf32, #tpu.memory_space<smem>>
    %780 = vector.broadcast %779 : f32 to vector<8x222xf32>
    %781 = arith.mulf %778, %780 : vector<8x222xf32>
    %782 = vector.extract_strided_slice %204 {offsets = [0, 1], sizes = [8, 222], strides = [1, 1]} : vector<8x256xf32> to vector<8x222xf32>
    %c3_275 = arith.constant 3 : index
    %c1_276 = arith.constant 1 : index
    %783 = memref.load %arg4[%c3_275, %c1_276] : memref<8x36xf32, #tpu.memory_space<smem>>
    %784 = vector.broadcast %783 : f32 to vector<8x222xf32>
    %785 = arith.mulf %782, %784 : vector<8x222xf32>
    %786 = arith.addf %781, %785 : vector<8x222xf32>
    %787 = vector.extract_strided_slice %204 {offsets = [0, 2], sizes = [8, 222], strides = [1, 1]} : vector<8x256xf32> to vector<8x222xf32>
    %c3_277 = arith.constant 3 : index
    %c2_278 = arith.constant 2 : index
    %788 = memref.load %arg4[%c3_277, %c2_278] : memref<8x36xf32, #tpu.memory_space<smem>>
    %789 = vector.broadcast %788 : f32 to vector<8x222xf32>
    %790 = arith.mulf %787, %789 : vector<8x222xf32>
    %791 = arith.addf %786, %790 : vector<8x222xf32>
    %792 = vector.extract_strided_slice %204 {offsets = [0, 16], sizes = [8, 222], strides = [1, 1]} : vector<8x256xf32> to vector<8x222xf32>
    %c3_279 = arith.constant 3 : index
    %c3_280 = arith.constant 3 : index
    %793 = memref.load %arg4[%c3_279, %c3_280] : memref<8x36xf32, #tpu.memory_space<smem>>
    %794 = vector.broadcast %793 : f32 to vector<8x222xf32>
    %795 = arith.mulf %792, %794 : vector<8x222xf32>
    %796 = arith.addf %791, %795 : vector<8x222xf32>
    %797 = vector.extract_strided_slice %204 {offsets = [0, 17], sizes = [8, 222], strides = [1, 1]} : vector<8x256xf32> to vector<8x222xf32>
    %c3_281 = arith.constant 3 : index
    %c4_282 = arith.constant 4 : index
    %798 = memref.load %arg4[%c3_281, %c4_282] : memref<8x36xf32, #tpu.memory_space<smem>>
    %799 = vector.broadcast %798 : f32 to vector<8x222xf32>
    %800 = arith.mulf %797, %799 : vector<8x222xf32>
    %801 = arith.addf %796, %800 : vector<8x222xf32>
    %802 = vector.extract_strided_slice %204 {offsets = [0, 18], sizes = [8, 222], strides = [1, 1]} : vector<8x256xf32> to vector<8x222xf32>
    %c3_283 = arith.constant 3 : index
    %c5_284 = arith.constant 5 : index
    %803 = memref.load %arg4[%c3_283, %c5_284] : memref<8x36xf32, #tpu.memory_space<smem>>
    %804 = vector.broadcast %803 : f32 to vector<8x222xf32>
    %805 = arith.mulf %802, %804 : vector<8x222xf32>
    %806 = arith.addf %801, %805 : vector<8x222xf32>
    %807 = vector.extract_strided_slice %204 {offsets = [0, 32], sizes = [8, 222], strides = [1, 1]} : vector<8x256xf32> to vector<8x222xf32>
    %c3_285 = arith.constant 3 : index
    %c6_286 = arith.constant 6 : index
    %808 = memref.load %arg4[%c3_285, %c6_286] : memref<8x36xf32, #tpu.memory_space<smem>>
    %809 = vector.broadcast %808 : f32 to vector<8x222xf32>
    %810 = arith.mulf %807, %809 : vector<8x222xf32>
    %811 = arith.addf %806, %810 : vector<8x222xf32>
    %812 = vector.extract_strided_slice %204 {offsets = [0, 33], sizes = [8, 222], strides = [1, 1]} : vector<8x256xf32> to vector<8x222xf32>
    %c3_287 = arith.constant 3 : index
    %c7_288 = arith.constant 7 : index
    %813 = memref.load %arg4[%c3_287, %c7_288] : memref<8x36xf32, #tpu.memory_space<smem>>
    %814 = vector.broadcast %813 : f32 to vector<8x222xf32>
    %815 = arith.mulf %812, %814 : vector<8x222xf32>
    %816 = arith.addf %811, %815 : vector<8x222xf32>
    %817 = vector.extract_strided_slice %204 {offsets = [0, 34], sizes = [8, 222], strides = [1, 1]} : vector<8x256xf32> to vector<8x222xf32>
    %c3_289 = arith.constant 3 : index
    %c8_290 = arith.constant 8 : index
    %818 = memref.load %arg4[%c3_289, %c8_290] : memref<8x36xf32, #tpu.memory_space<smem>>
    %819 = vector.broadcast %818 : f32 to vector<8x222xf32>
    %820 = arith.mulf %817, %819 : vector<8x222xf32>
    %821 = arith.addf %816, %820 : vector<8x222xf32>
    %822 = vector.extract_strided_slice %211 {offsets = [0, 0], sizes = [8, 222], strides = [1, 1]} : vector<8x256xf32> to vector<8x222xf32>
    %c3_291 = arith.constant 3 : index
    %c9_292 = arith.constant 9 : index
    %823 = memref.load %arg4[%c3_291, %c9_292] : memref<8x36xf32, #tpu.memory_space<smem>>
    %824 = vector.broadcast %823 : f32 to vector<8x222xf32>
    %825 = arith.mulf %822, %824 : vector<8x222xf32>
    %826 = arith.addf %821, %825 : vector<8x222xf32>
    %827 = vector.extract_strided_slice %211 {offsets = [0, 1], sizes = [8, 222], strides = [1, 1]} : vector<8x256xf32> to vector<8x222xf32>
    %c3_293 = arith.constant 3 : index
    %c10_294 = arith.constant 10 : index
    %828 = memref.load %arg4[%c3_293, %c10_294] : memref<8x36xf32, #tpu.memory_space<smem>>
    %829 = vector.broadcast %828 : f32 to vector<8x222xf32>
    %830 = arith.mulf %827, %829 : vector<8x222xf32>
    %831 = arith.addf %826, %830 : vector<8x222xf32>
    %832 = vector.extract_strided_slice %211 {offsets = [0, 2], sizes = [8, 222], strides = [1, 1]} : vector<8x256xf32> to vector<8x222xf32>
    %c3_295 = arith.constant 3 : index
    %c11_296 = arith.constant 11 : index
    %833 = memref.load %arg4[%c3_295, %c11_296] : memref<8x36xf32, #tpu.memory_space<smem>>
    %834 = vector.broadcast %833 : f32 to vector<8x222xf32>
    %835 = arith.mulf %832, %834 : vector<8x222xf32>
    %836 = arith.addf %831, %835 : vector<8x222xf32>
    %837 = vector.extract_strided_slice %211 {offsets = [0, 16], sizes = [8, 222], strides = [1, 1]} : vector<8x256xf32> to vector<8x222xf32>
    %c3_297 = arith.constant 3 : index
    %c12_298 = arith.constant 12 : index
    %838 = memref.load %arg4[%c3_297, %c12_298] : memref<8x36xf32, #tpu.memory_space<smem>>
    %839 = vector.broadcast %838 : f32 to vector<8x222xf32>
    %840 = arith.mulf %837, %839 : vector<8x222xf32>
    %841 = arith.addf %836, %840 : vector<8x222xf32>
    %842 = vector.extract_strided_slice %211 {offsets = [0, 17], sizes = [8, 222], strides = [1, 1]} : vector<8x256xf32> to vector<8x222xf32>
    %c3_299 = arith.constant 3 : index
    %c13_300 = arith.constant 13 : index
    %843 = memref.load %arg4[%c3_299, %c13_300] : memref<8x36xf32, #tpu.memory_space<smem>>
    %844 = vector.broadcast %843 : f32 to vector<8x222xf32>
    %845 = arith.mulf %842, %844 : vector<8x222xf32>
    %846 = arith.addf %841, %845 : vector<8x222xf32>
    %847 = vector.extract_strided_slice %211 {offsets = [0, 18], sizes = [8, 222], strides = [1, 1]} : vector<8x256xf32> to vector<8x222xf32>
    %c3_301 = arith.constant 3 : index
    %c14_302 = arith.constant 14 : index
    %848 = memref.load %arg4[%c3_301, %c14_302] : memref<8x36xf32, #tpu.memory_space<smem>>
    %849 = vector.broadcast %848 : f32 to vector<8x222xf32>
    %850 = arith.mulf %847, %849 : vector<8x222xf32>
    %851 = arith.addf %846, %850 : vector<8x222xf32>
    %852 = vector.extract_strided_slice %211 {offsets = [0, 32], sizes = [8, 222], strides = [1, 1]} : vector<8x256xf32> to vector<8x222xf32>
    %c3_303 = arith.constant 3 : index
    %c15_304 = arith.constant 15 : index
    %853 = memref.load %arg4[%c3_303, %c15_304] : memref<8x36xf32, #tpu.memory_space<smem>>
    %854 = vector.broadcast %853 : f32 to vector<8x222xf32>
    %855 = arith.mulf %852, %854 : vector<8x222xf32>
    %856 = arith.addf %851, %855 : vector<8x222xf32>
    %857 = vector.extract_strided_slice %211 {offsets = [0, 33], sizes = [8, 222], strides = [1, 1]} : vector<8x256xf32> to vector<8x222xf32>
    %c3_305 = arith.constant 3 : index
    %c16_306 = arith.constant 16 : index
    %858 = memref.load %arg4[%c3_305, %c16_306] : memref<8x36xf32, #tpu.memory_space<smem>>
    %859 = vector.broadcast %858 : f32 to vector<8x222xf32>
    %860 = arith.mulf %857, %859 : vector<8x222xf32>
    %861 = arith.addf %856, %860 : vector<8x222xf32>
    %862 = vector.extract_strided_slice %211 {offsets = [0, 34], sizes = [8, 222], strides = [1, 1]} : vector<8x256xf32> to vector<8x222xf32>
    %c3_307 = arith.constant 3 : index
    %c17_308 = arith.constant 17 : index
    %863 = memref.load %arg4[%c3_307, %c17_308] : memref<8x36xf32, #tpu.memory_space<smem>>
    %864 = vector.broadcast %863 : f32 to vector<8x222xf32>
    %865 = arith.mulf %862, %864 : vector<8x222xf32>
    %866 = arith.addf %861, %865 : vector<8x222xf32>
    %867 = vector.extract_strided_slice %218 {offsets = [0, 0], sizes = [8, 222], strides = [1, 1]} : vector<8x256xf32> to vector<8x222xf32>
    %c3_309 = arith.constant 3 : index
    %c18_310 = arith.constant 18 : index
    %868 = memref.load %arg4[%c3_309, %c18_310] : memref<8x36xf32, #tpu.memory_space<smem>>
    %869 = vector.broadcast %868 : f32 to vector<8x222xf32>
    %870 = arith.mulf %867, %869 : vector<8x222xf32>
    %871 = arith.addf %866, %870 : vector<8x222xf32>
    %872 = vector.extract_strided_slice %218 {offsets = [0, 1], sizes = [8, 222], strides = [1, 1]} : vector<8x256xf32> to vector<8x222xf32>
    %c3_311 = arith.constant 3 : index
    %c19_312 = arith.constant 19 : index
    %873 = memref.load %arg4[%c3_311, %c19_312] : memref<8x36xf32, #tpu.memory_space<smem>>
    %874 = vector.broadcast %873 : f32 to vector<8x222xf32>
    %875 = arith.mulf %872, %874 : vector<8x222xf32>
    %876 = arith.addf %871, %875 : vector<8x222xf32>
    %877 = vector.extract_strided_slice %218 {offsets = [0, 2], sizes = [8, 222], strides = [1, 1]} : vector<8x256xf32> to vector<8x222xf32>
    %c3_313 = arith.constant 3 : index
    %c20_314 = arith.constant 20 : index
    %878 = memref.load %arg4[%c3_313, %c20_314] : memref<8x36xf32, #tpu.memory_space<smem>>
    %879 = vector.broadcast %878 : f32 to vector<8x222xf32>
    %880 = arith.mulf %877, %879 : vector<8x222xf32>
    %881 = arith.addf %876, %880 : vector<8x222xf32>
    %882 = vector.extract_strided_slice %218 {offsets = [0, 16], sizes = [8, 222], strides = [1, 1]} : vector<8x256xf32> to vector<8x222xf32>
    %c3_315 = arith.constant 3 : index
    %c21_316 = arith.constant 21 : index
    %883 = memref.load %arg4[%c3_315, %c21_316] : memref<8x36xf32, #tpu.memory_space<smem>>
    %884 = vector.broadcast %883 : f32 to vector<8x222xf32>
    %885 = arith.mulf %882, %884 : vector<8x222xf32>
    %886 = arith.addf %881, %885 : vector<8x222xf32>
    %887 = vector.extract_strided_slice %218 {offsets = [0, 17], sizes = [8, 222], strides = [1, 1]} : vector<8x256xf32> to vector<8x222xf32>
    %c3_317 = arith.constant 3 : index
    %c22_318 = arith.constant 22 : index
    %888 = memref.load %arg4[%c3_317, %c22_318] : memref<8x36xf32, #tpu.memory_space<smem>>
    %889 = vector.broadcast %888 : f32 to vector<8x222xf32>
    %890 = arith.mulf %887, %889 : vector<8x222xf32>
    %891 = arith.addf %886, %890 : vector<8x222xf32>
    %892 = vector.extract_strided_slice %218 {offsets = [0, 18], sizes = [8, 222], strides = [1, 1]} : vector<8x256xf32> to vector<8x222xf32>
    %c3_319 = arith.constant 3 : index
    %c23_320 = arith.constant 23 : index
    %893 = memref.load %arg4[%c3_319, %c23_320] : memref<8x36xf32, #tpu.memory_space<smem>>
    %894 = vector.broadcast %893 : f32 to vector<8x222xf32>
    %895 = arith.mulf %892, %894 : vector<8x222xf32>
    %896 = arith.addf %891, %895 : vector<8x222xf32>
    %897 = vector.extract_strided_slice %218 {offsets = [0, 32], sizes = [8, 222], strides = [1, 1]} : vector<8x256xf32> to vector<8x222xf32>
    %c3_321 = arith.constant 3 : index
    %c24_322 = arith.constant 24 : index
    %898 = memref.load %arg4[%c3_321, %c24_322] : memref<8x36xf32, #tpu.memory_space<smem>>
    %899 = vector.broadcast %898 : f32 to vector<8x222xf32>
    %900 = arith.mulf %897, %899 : vector<8x222xf32>
    %901 = arith.addf %896, %900 : vector<8x222xf32>
    %902 = vector.extract_strided_slice %218 {offsets = [0, 33], sizes = [8, 222], strides = [1, 1]} : vector<8x256xf32> to vector<8x222xf32>
    %c3_323 = arith.constant 3 : index
    %c25_324 = arith.constant 25 : index
    %903 = memref.load %arg4[%c3_323, %c25_324] : memref<8x36xf32, #tpu.memory_space<smem>>
    %904 = vector.broadcast %903 : f32 to vector<8x222xf32>
    %905 = arith.mulf %902, %904 : vector<8x222xf32>
    %906 = arith.addf %901, %905 : vector<8x222xf32>
    %907 = vector.extract_strided_slice %218 {offsets = [0, 34], sizes = [8, 222], strides = [1, 1]} : vector<8x256xf32> to vector<8x222xf32>
    %c3_325 = arith.constant 3 : index
    %c26_326 = arith.constant 26 : index
    %908 = memref.load %arg4[%c3_325, %c26_326] : memref<8x36xf32, #tpu.memory_space<smem>>
    %909 = vector.broadcast %908 : f32 to vector<8x222xf32>
    %910 = arith.mulf %907, %909 : vector<8x222xf32>
    %911 = arith.addf %906, %910 : vector<8x222xf32>
    %912 = vector.extract_strided_slice %225 {offsets = [0, 0], sizes = [8, 222], strides = [1, 1]} : vector<8x256xf32> to vector<8x222xf32>
    %c3_327 = arith.constant 3 : index
    %c27_328 = arith.constant 27 : index
    %913 = memref.load %arg4[%c3_327, %c27_328] : memref<8x36xf32, #tpu.memory_space<smem>>
    %914 = vector.broadcast %913 : f32 to vector<8x222xf32>
    %915 = arith.mulf %912, %914 : vector<8x222xf32>
    %916 = arith.addf %911, %915 : vector<8x222xf32>
    %917 = vector.extract_strided_slice %225 {offsets = [0, 1], sizes = [8, 222], strides = [1, 1]} : vector<8x256xf32> to vector<8x222xf32>
    %c3_329 = arith.constant 3 : index
    %c28_330 = arith.constant 28 : index
    %918 = memref.load %arg4[%c3_329, %c28_330] : memref<8x36xf32, #tpu.memory_space<smem>>
    %919 = vector.broadcast %918 : f32 to vector<8x222xf32>
    %920 = arith.mulf %917, %919 : vector<8x222xf32>
    %921 = arith.addf %916, %920 : vector<8x222xf32>
    %922 = vector.extract_strided_slice %225 {offsets = [0, 2], sizes = [8, 222], strides = [1, 1]} : vector<8x256xf32> to vector<8x222xf32>
    %c3_331 = arith.constant 3 : index
    %c29_332 = arith.constant 29 : index
    %923 = memref.load %arg4[%c3_331, %c29_332] : memref<8x36xf32, #tpu.memory_space<smem>>
    %924 = vector.broadcast %923 : f32 to vector<8x222xf32>
    %925 = arith.mulf %922, %924 : vector<8x222xf32>
    %926 = arith.addf %921, %925 : vector<8x222xf32>
    %927 = vector.extract_strided_slice %225 {offsets = [0, 16], sizes = [8, 222], strides = [1, 1]} : vector<8x256xf32> to vector<8x222xf32>
    %c3_333 = arith.constant 3 : index
    %c30_334 = arith.constant 30 : index
    %928 = memref.load %arg4[%c3_333, %c30_334] : memref<8x36xf32, #tpu.memory_space<smem>>
    %929 = vector.broadcast %928 : f32 to vector<8x222xf32>
    %930 = arith.mulf %927, %929 : vector<8x222xf32>
    %931 = arith.addf %926, %930 : vector<8x222xf32>
    %932 = vector.extract_strided_slice %225 {offsets = [0, 17], sizes = [8, 222], strides = [1, 1]} : vector<8x256xf32> to vector<8x222xf32>
    %c3_335 = arith.constant 3 : index
    %c31_336 = arith.constant 31 : index
    %933 = memref.load %arg4[%c3_335, %c31_336] : memref<8x36xf32, #tpu.memory_space<smem>>
    %934 = vector.broadcast %933 : f32 to vector<8x222xf32>
    %935 = arith.mulf %932, %934 : vector<8x222xf32>
    %936 = arith.addf %931, %935 : vector<8x222xf32>
    %937 = vector.extract_strided_slice %225 {offsets = [0, 18], sizes = [8, 222], strides = [1, 1]} : vector<8x256xf32> to vector<8x222xf32>
    %c3_337 = arith.constant 3 : index
    %c32_338 = arith.constant 32 : index
    %938 = memref.load %arg4[%c3_337, %c32_338] : memref<8x36xf32, #tpu.memory_space<smem>>
    %939 = vector.broadcast %938 : f32 to vector<8x222xf32>
    %940 = arith.mulf %937, %939 : vector<8x222xf32>
    %941 = arith.addf %936, %940 : vector<8x222xf32>
    %942 = vector.extract_strided_slice %225 {offsets = [0, 32], sizes = [8, 222], strides = [1, 1]} : vector<8x256xf32> to vector<8x222xf32>
    %c3_339 = arith.constant 3 : index
    %c33_340 = arith.constant 33 : index
    %943 = memref.load %arg4[%c3_339, %c33_340] : memref<8x36xf32, #tpu.memory_space<smem>>
    %944 = vector.broadcast %943 : f32 to vector<8x222xf32>
    %945 = arith.mulf %942, %944 : vector<8x222xf32>
    %946 = arith.addf %941, %945 : vector<8x222xf32>
    %947 = vector.extract_strided_slice %225 {offsets = [0, 33], sizes = [8, 222], strides = [1, 1]} : vector<8x256xf32> to vector<8x222xf32>
    %c3_341 = arith.constant 3 : index
    %c34_342 = arith.constant 34 : index
    %948 = memref.load %arg4[%c3_341, %c34_342] : memref<8x36xf32, #tpu.memory_space<smem>>
    %949 = vector.broadcast %948 : f32 to vector<8x222xf32>
    %950 = arith.mulf %947, %949 : vector<8x222xf32>
    %951 = arith.addf %946, %950 : vector<8x222xf32>
    %952 = vector.extract_strided_slice %225 {offsets = [0, 34], sizes = [8, 222], strides = [1, 1]} : vector<8x256xf32> to vector<8x222xf32>
    %c3_343 = arith.constant 3 : index
    %c35_344 = arith.constant 35 : index
    %953 = memref.load %arg4[%c3_343, %c35_344] : memref<8x36xf32, #tpu.memory_space<smem>>
    %954 = vector.broadcast %953 : f32 to vector<8x222xf32>
    %955 = arith.mulf %952, %954 : vector<8x222xf32>
    %956 = arith.addf %951, %955 : vector<8x222xf32>
    %c3_345 = arith.constant 3 : index
    %957 = memref.load %arg5[%c3_345] : memref<8xf32, #tpu.memory_space<smem>>
    %958 = vector.broadcast %957 : f32 to vector<8x222xf32>
    %959 = arith.addf %956, %958 : vector<8x222xf32>
    %cst_346 = arith.constant 0.000000e+00 : f32
    %960 = vector.broadcast %cst_346 : f32 to vector<8x222xf32>
    %961 = arith.maximumf %959, %960 : vector<8x222xf32>
    %962 = vector.extract_strided_slice %204 {offsets = [0, 0], sizes = [8, 222], strides = [1, 1]} : vector<8x256xf32> to vector<8x222xf32>
    %c4_347 = arith.constant 4 : index
    %c0_348 = arith.constant 0 : index
    %963 = memref.load %arg4[%c4_347, %c0_348] : memref<8x36xf32, #tpu.memory_space<smem>>
    %964 = vector.broadcast %963 : f32 to vector<8x222xf32>
    %965 = arith.mulf %962, %964 : vector<8x222xf32>
    %966 = vector.extract_strided_slice %204 {offsets = [0, 1], sizes = [8, 222], strides = [1, 1]} : vector<8x256xf32> to vector<8x222xf32>
    %c4_349 = arith.constant 4 : index
    %c1_350 = arith.constant 1 : index
    %967 = memref.load %arg4[%c4_349, %c1_350] : memref<8x36xf32, #tpu.memory_space<smem>>
    %968 = vector.broadcast %967 : f32 to vector<8x222xf32>
    %969 = arith.mulf %966, %968 : vector<8x222xf32>
    %970 = arith.addf %965, %969 : vector<8x222xf32>
    %971 = vector.extract_strided_slice %204 {offsets = [0, 2], sizes = [8, 222], strides = [1, 1]} : vector<8x256xf32> to vector<8x222xf32>
    %c4_351 = arith.constant 4 : index
    %c2_352 = arith.constant 2 : index
    %972 = memref.load %arg4[%c4_351, %c2_352] : memref<8x36xf32, #tpu.memory_space<smem>>
    %973 = vector.broadcast %972 : f32 to vector<8x222xf32>
    %974 = arith.mulf %971, %973 : vector<8x222xf32>
    %975 = arith.addf %970, %974 : vector<8x222xf32>
    %976 = vector.extract_strided_slice %204 {offsets = [0, 16], sizes = [8, 222], strides = [1, 1]} : vector<8x256xf32> to vector<8x222xf32>
    %c4_353 = arith.constant 4 : index
    %c3_354 = arith.constant 3 : index
    %977 = memref.load %arg4[%c4_353, %c3_354] : memref<8x36xf32, #tpu.memory_space<smem>>
    %978 = vector.broadcast %977 : f32 to vector<8x222xf32>
    %979 = arith.mulf %976, %978 : vector<8x222xf32>
    %980 = arith.addf %975, %979 : vector<8x222xf32>
    %981 = vector.extract_strided_slice %204 {offsets = [0, 17], sizes = [8, 222], strides = [1, 1]} : vector<8x256xf32> to vector<8x222xf32>
    %c4_355 = arith.constant 4 : index
    %c4_356 = arith.constant 4 : index
    %982 = memref.load %arg4[%c4_355, %c4_356] : memref<8x36xf32, #tpu.memory_space<smem>>
    %983 = vector.broadcast %982 : f32 to vector<8x222xf32>
    %984 = arith.mulf %981, %983 : vector<8x222xf32>
    %985 = arith.addf %980, %984 : vector<8x222xf32>
    %986 = vector.extract_strided_slice %204 {offsets = [0, 18], sizes = [8, 222], strides = [1, 1]} : vector<8x256xf32> to vector<8x222xf32>
    %c4_357 = arith.constant 4 : index
    %c5_358 = arith.constant 5 : index
    %987 = memref.load %arg4[%c4_357, %c5_358] : memref<8x36xf32, #tpu.memory_space<smem>>
    %988 = vector.broadcast %987 : f32 to vector<8x222xf32>
    %989 = arith.mulf %986, %988 : vector<8x222xf32>
    %990 = arith.addf %985, %989 : vector<8x222xf32>
    %991 = vector.extract_strided_slice %204 {offsets = [0, 32], sizes = [8, 222], strides = [1, 1]} : vector<8x256xf32> to vector<8x222xf32>
    %c4_359 = arith.constant 4 : index
    %c6_360 = arith.constant 6 : index
    %992 = memref.load %arg4[%c4_359, %c6_360] : memref<8x36xf32, #tpu.memory_space<smem>>
    %993 = vector.broadcast %992 : f32 to vector<8x222xf32>
    %994 = arith.mulf %991, %993 : vector<8x222xf32>
    %995 = arith.addf %990, %994 : vector<8x222xf32>
    %996 = vector.extract_strided_slice %204 {offsets = [0, 33], sizes = [8, 222], strides = [1, 1]} : vector<8x256xf32> to vector<8x222xf32>
    %c4_361 = arith.constant 4 : index
    %c7_362 = arith.constant 7 : index
    %997 = memref.load %arg4[%c4_361, %c7_362] : memref<8x36xf32, #tpu.memory_space<smem>>
    %998 = vector.broadcast %997 : f32 to vector<8x222xf32>
    %999 = arith.mulf %996, %998 : vector<8x222xf32>
    %1000 = arith.addf %995, %999 : vector<8x222xf32>
    %1001 = vector.extract_strided_slice %204 {offsets = [0, 34], sizes = [8, 222], strides = [1, 1]} : vector<8x256xf32> to vector<8x222xf32>
    %c4_363 = arith.constant 4 : index
    %c8_364 = arith.constant 8 : index
    %1002 = memref.load %arg4[%c4_363, %c8_364] : memref<8x36xf32, #tpu.memory_space<smem>>
    %1003 = vector.broadcast %1002 : f32 to vector<8x222xf32>
    %1004 = arith.mulf %1001, %1003 : vector<8x222xf32>
    %1005 = arith.addf %1000, %1004 : vector<8x222xf32>
    %1006 = vector.extract_strided_slice %211 {offsets = [0, 0], sizes = [8, 222], strides = [1, 1]} : vector<8x256xf32> to vector<8x222xf32>
    %c4_365 = arith.constant 4 : index
    %c9_366 = arith.constant 9 : index
    %1007 = memref.load %arg4[%c4_365, %c9_366] : memref<8x36xf32, #tpu.memory_space<smem>>
    %1008 = vector.broadcast %1007 : f32 to vector<8x222xf32>
    %1009 = arith.mulf %1006, %1008 : vector<8x222xf32>
    %1010 = arith.addf %1005, %1009 : vector<8x222xf32>
    %1011 = vector.extract_strided_slice %211 {offsets = [0, 1], sizes = [8, 222], strides = [1, 1]} : vector<8x256xf32> to vector<8x222xf32>
    %c4_367 = arith.constant 4 : index
    %c10_368 = arith.constant 10 : index
    %1012 = memref.load %arg4[%c4_367, %c10_368] : memref<8x36xf32, #tpu.memory_space<smem>>
    %1013 = vector.broadcast %1012 : f32 to vector<8x222xf32>
    %1014 = arith.mulf %1011, %1013 : vector<8x222xf32>
    %1015 = arith.addf %1010, %1014 : vector<8x222xf32>
    %1016 = vector.extract_strided_slice %211 {offsets = [0, 2], sizes = [8, 222], strides = [1, 1]} : vector<8x256xf32> to vector<8x222xf32>
    %c4_369 = arith.constant 4 : index
    %c11_370 = arith.constant 11 : index
    %1017 = memref.load %arg4[%c4_369, %c11_370] : memref<8x36xf32, #tpu.memory_space<smem>>
    %1018 = vector.broadcast %1017 : f32 to vector<8x222xf32>
    %1019 = arith.mulf %1016, %1018 : vector<8x222xf32>
    %1020 = arith.addf %1015, %1019 : vector<8x222xf32>
    %1021 = vector.extract_strided_slice %211 {offsets = [0, 16], sizes = [8, 222], strides = [1, 1]} : vector<8x256xf32> to vector<8x222xf32>
    %c4_371 = arith.constant 4 : index
    %c12_372 = arith.constant 12 : index
    %1022 = memref.load %arg4[%c4_371, %c12_372] : memref<8x36xf32, #tpu.memory_space<smem>>
    %1023 = vector.broadcast %1022 : f32 to vector<8x222xf32>
    %1024 = arith.mulf %1021, %1023 : vector<8x222xf32>
    %1025 = arith.addf %1020, %1024 : vector<8x222xf32>
    %1026 = vector.extract_strided_slice %211 {offsets = [0, 17], sizes = [8, 222], strides = [1, 1]} : vector<8x256xf32> to vector<8x222xf32>
    %c4_373 = arith.constant 4 : index
    %c13_374 = arith.constant 13 : index
    %1027 = memref.load %arg4[%c4_373, %c13_374] : memref<8x36xf32, #tpu.memory_space<smem>>
    %1028 = vector.broadcast %1027 : f32 to vector<8x222xf32>
    %1029 = arith.mulf %1026, %1028 : vector<8x222xf32>
    %1030 = arith.addf %1025, %1029 : vector<8x222xf32>
    %1031 = vector.extract_strided_slice %211 {offsets = [0, 18], sizes = [8, 222], strides = [1, 1]} : vector<8x256xf32> to vector<8x222xf32>
    %c4_375 = arith.constant 4 : index
    %c14_376 = arith.constant 14 : index
    %1032 = memref.load %arg4[%c4_375, %c14_376] : memref<8x36xf32, #tpu.memory_space<smem>>
    %1033 = vector.broadcast %1032 : f32 to vector<8x222xf32>
    %1034 = arith.mulf %1031, %1033 : vector<8x222xf32>
    %1035 = arith.addf %1030, %1034 : vector<8x222xf32>
    %1036 = vector.extract_strided_slice %211 {offsets = [0, 32], sizes = [8, 222], strides = [1, 1]} : vector<8x256xf32> to vector<8x222xf32>
    %c4_377 = arith.constant 4 : index
    %c15_378 = arith.constant 15 : index
    %1037 = memref.load %arg4[%c4_377, %c15_378] : memref<8x36xf32, #tpu.memory_space<smem>>
    %1038 = vector.broadcast %1037 : f32 to vector<8x222xf32>
    %1039 = arith.mulf %1036, %1038 : vector<8x222xf32>
    %1040 = arith.addf %1035, %1039 : vector<8x222xf32>
    %1041 = vector.extract_strided_slice %211 {offsets = [0, 33], sizes = [8, 222], strides = [1, 1]} : vector<8x256xf32> to vector<8x222xf32>
    %c4_379 = arith.constant 4 : index
    %c16_380 = arith.constant 16 : index
    %1042 = memref.load %arg4[%c4_379, %c16_380] : memref<8x36xf32, #tpu.memory_space<smem>>
    %1043 = vector.broadcast %1042 : f32 to vector<8x222xf32>
    %1044 = arith.mulf %1041, %1043 : vector<8x222xf32>
    %1045 = arith.addf %1040, %1044 : vector<8x222xf32>
    %1046 = vector.extract_strided_slice %211 {offsets = [0, 34], sizes = [8, 222], strides = [1, 1]} : vector<8x256xf32> to vector<8x222xf32>
    %c4_381 = arith.constant 4 : index
    %c17_382 = arith.constant 17 : index
    %1047 = memref.load %arg4[%c4_381, %c17_382] : memref<8x36xf32, #tpu.memory_space<smem>>
    %1048 = vector.broadcast %1047 : f32 to vector<8x222xf32>
    %1049 = arith.mulf %1046, %1048 : vector<8x222xf32>
    %1050 = arith.addf %1045, %1049 : vector<8x222xf32>
    %1051 = vector.extract_strided_slice %218 {offsets = [0, 0], sizes = [8, 222], strides = [1, 1]} : vector<8x256xf32> to vector<8x222xf32>
    %c4_383 = arith.constant 4 : index
    %c18_384 = arith.constant 18 : index
    %1052 = memref.load %arg4[%c4_383, %c18_384] : memref<8x36xf32, #tpu.memory_space<smem>>
    %1053 = vector.broadcast %1052 : f32 to vector<8x222xf32>
    %1054 = arith.mulf %1051, %1053 : vector<8x222xf32>
    %1055 = arith.addf %1050, %1054 : vector<8x222xf32>
    %1056 = vector.extract_strided_slice %218 {offsets = [0, 1], sizes = [8, 222], strides = [1, 1]} : vector<8x256xf32> to vector<8x222xf32>
    %c4_385 = arith.constant 4 : index
    %c19_386 = arith.constant 19 : index
    %1057 = memref.load %arg4[%c4_385, %c19_386] : memref<8x36xf32, #tpu.memory_space<smem>>
    %1058 = vector.broadcast %1057 : f32 to vector<8x222xf32>
    %1059 = arith.mulf %1056, %1058 : vector<8x222xf32>
    %1060 = arith.addf %1055, %1059 : vector<8x222xf32>
    %1061 = vector.extract_strided_slice %218 {offsets = [0, 2], sizes = [8, 222], strides = [1, 1]} : vector<8x256xf32> to vector<8x222xf32>
    %c4_387 = arith.constant 4 : index
    %c20_388 = arith.constant 20 : index
    %1062 = memref.load %arg4[%c4_387, %c20_388] : memref<8x36xf32, #tpu.memory_space<smem>>
    %1063 = vector.broadcast %1062 : f32 to vector<8x222xf32>
    %1064 = arith.mulf %1061, %1063 : vector<8x222xf32>
    %1065 = arith.addf %1060, %1064 : vector<8x222xf32>
    %1066 = vector.extract_strided_slice %218 {offsets = [0, 16], sizes = [8, 222], strides = [1, 1]} : vector<8x256xf32> to vector<8x222xf32>
    %c4_389 = arith.constant 4 : index
    %c21_390 = arith.constant 21 : index
    %1067 = memref.load %arg4[%c4_389, %c21_390] : memref<8x36xf32, #tpu.memory_space<smem>>
    %1068 = vector.broadcast %1067 : f32 to vector<8x222xf32>
    %1069 = arith.mulf %1066, %1068 : vector<8x222xf32>
    %1070 = arith.addf %1065, %1069 : vector<8x222xf32>
    %1071 = vector.extract_strided_slice %218 {offsets = [0, 17], sizes = [8, 222], strides = [1, 1]} : vector<8x256xf32> to vector<8x222xf32>
    %c4_391 = arith.constant 4 : index
    %c22_392 = arith.constant 22 : index
    %1072 = memref.load %arg4[%c4_391, %c22_392] : memref<8x36xf32, #tpu.memory_space<smem>>
    %1073 = vector.broadcast %1072 : f32 to vector<8x222xf32>
    %1074 = arith.mulf %1071, %1073 : vector<8x222xf32>
    %1075 = arith.addf %1070, %1074 : vector<8x222xf32>
    %1076 = vector.extract_strided_slice %218 {offsets = [0, 18], sizes = [8, 222], strides = [1, 1]} : vector<8x256xf32> to vector<8x222xf32>
    %c4_393 = arith.constant 4 : index
    %c23_394 = arith.constant 23 : index
    %1077 = memref.load %arg4[%c4_393, %c23_394] : memref<8x36xf32, #tpu.memory_space<smem>>
    %1078 = vector.broadcast %1077 : f32 to vector<8x222xf32>
    %1079 = arith.mulf %1076, %1078 : vector<8x222xf32>
    %1080 = arith.addf %1075, %1079 : vector<8x222xf32>
    %1081 = vector.extract_strided_slice %218 {offsets = [0, 32], sizes = [8, 222], strides = [1, 1]} : vector<8x256xf32> to vector<8x222xf32>
    %c4_395 = arith.constant 4 : index
    %c24_396 = arith.constant 24 : index
    %1082 = memref.load %arg4[%c4_395, %c24_396] : memref<8x36xf32, #tpu.memory_space<smem>>
    %1083 = vector.broadcast %1082 : f32 to vector<8x222xf32>
    %1084 = arith.mulf %1081, %1083 : vector<8x222xf32>
    %1085 = arith.addf %1080, %1084 : vector<8x222xf32>
    %1086 = vector.extract_strided_slice %218 {offsets = [0, 33], sizes = [8, 222], strides = [1, 1]} : vector<8x256xf32> to vector<8x222xf32>
    %c4_397 = arith.constant 4 : index
    %c25_398 = arith.constant 25 : index
    %1087 = memref.load %arg4[%c4_397, %c25_398] : memref<8x36xf32, #tpu.memory_space<smem>>
    %1088 = vector.broadcast %1087 : f32 to vector<8x222xf32>
    %1089 = arith.mulf %1086, %1088 : vector<8x222xf32>
    %1090 = arith.addf %1085, %1089 : vector<8x222xf32>
    %1091 = vector.extract_strided_slice %218 {offsets = [0, 34], sizes = [8, 222], strides = [1, 1]} : vector<8x256xf32> to vector<8x222xf32>
    %c4_399 = arith.constant 4 : index
    %c26_400 = arith.constant 26 : index
    %1092 = memref.load %arg4[%c4_399, %c26_400] : memref<8x36xf32, #tpu.memory_space<smem>>
    %1093 = vector.broadcast %1092 : f32 to vector<8x222xf32>
    %1094 = arith.mulf %1091, %1093 : vector<8x222xf32>
    %1095 = arith.addf %1090, %1094 : vector<8x222xf32>
    %1096 = vector.extract_strided_slice %225 {offsets = [0, 0], sizes = [8, 222], strides = [1, 1]} : vector<8x256xf32> to vector<8x222xf32>
    %c4_401 = arith.constant 4 : index
    %c27_402 = arith.constant 27 : index
    %1097 = memref.load %arg4[%c4_401, %c27_402] : memref<8x36xf32, #tpu.memory_space<smem>>
    %1098 = vector.broadcast %1097 : f32 to vector<8x222xf32>
    %1099 = arith.mulf %1096, %1098 : vector<8x222xf32>
    %1100 = arith.addf %1095, %1099 : vector<8x222xf32>
    %1101 = vector.extract_strided_slice %225 {offsets = [0, 1], sizes = [8, 222], strides = [1, 1]} : vector<8x256xf32> to vector<8x222xf32>
    %c4_403 = arith.constant 4 : index
    %c28_404 = arith.constant 28 : index
    %1102 = memref.load %arg4[%c4_403, %c28_404] : memref<8x36xf32, #tpu.memory_space<smem>>
    %1103 = vector.broadcast %1102 : f32 to vector<8x222xf32>
    %1104 = arith.mulf %1101, %1103 : vector<8x222xf32>
    %1105 = arith.addf %1100, %1104 : vector<8x222xf32>
    %1106 = vector.extract_strided_slice %225 {offsets = [0, 2], sizes = [8, 222], strides = [1, 1]} : vector<8x256xf32> to vector<8x222xf32>
    %c4_405 = arith.constant 4 : index
    %c29_406 = arith.constant 29 : index
    %1107 = memref.load %arg4[%c4_405, %c29_406] : memref<8x36xf32, #tpu.memory_space<smem>>
    %1108 = vector.broadcast %1107 : f32 to vector<8x222xf32>
    %1109 = arith.mulf %1106, %1108 : vector<8x222xf32>
    %1110 = arith.addf %1105, %1109 : vector<8x222xf32>
    %1111 = vector.extract_strided_slice %225 {offsets = [0, 16], sizes = [8, 222], strides = [1, 1]} : vector<8x256xf32> to vector<8x222xf32>
    %c4_407 = arith.constant 4 : index
    %c30_408 = arith.constant 30 : index
    %1112 = memref.load %arg4[%c4_407, %c30_408] : memref<8x36xf32, #tpu.memory_space<smem>>
    %1113 = vector.broadcast %1112 : f32 to vector<8x222xf32>
    %1114 = arith.mulf %1111, %1113 : vector<8x222xf32>
    %1115 = arith.addf %1110, %1114 : vector<8x222xf32>
    %1116 = vector.extract_strided_slice %225 {offsets = [0, 17], sizes = [8, 222], strides = [1, 1]} : vector<8x256xf32> to vector<8x222xf32>
    %c4_409 = arith.constant 4 : index
    %c31_410 = arith.constant 31 : index
    %1117 = memref.load %arg4[%c4_409, %c31_410] : memref<8x36xf32, #tpu.memory_space<smem>>
    %1118 = vector.broadcast %1117 : f32 to vector<8x222xf32>
    %1119 = arith.mulf %1116, %1118 : vector<8x222xf32>
    %1120 = arith.addf %1115, %1119 : vector<8x222xf32>
    %1121 = vector.extract_strided_slice %225 {offsets = [0, 18], sizes = [8, 222], strides = [1, 1]} : vector<8x256xf32> to vector<8x222xf32>
    %c4_411 = arith.constant 4 : index
    %c32_412 = arith.constant 32 : index
    %1122 = memref.load %arg4[%c4_411, %c32_412] : memref<8x36xf32, #tpu.memory_space<smem>>
    %1123 = vector.broadcast %1122 : f32 to vector<8x222xf32>
    %1124 = arith.mulf %1121, %1123 : vector<8x222xf32>
    %1125 = arith.addf %1120, %1124 : vector<8x222xf32>
    %1126 = vector.extract_strided_slice %225 {offsets = [0, 32], sizes = [8, 222], strides = [1, 1]} : vector<8x256xf32> to vector<8x222xf32>
    %c4_413 = arith.constant 4 : index
    %c33_414 = arith.constant 33 : index
    %1127 = memref.load %arg4[%c4_413, %c33_414] : memref<8x36xf32, #tpu.memory_space<smem>>
    %1128 = vector.broadcast %1127 : f32 to vector<8x222xf32>
    %1129 = arith.mulf %1126, %1128 : vector<8x222xf32>
    %1130 = arith.addf %1125, %1129 : vector<8x222xf32>
    %1131 = vector.extract_strided_slice %225 {offsets = [0, 33], sizes = [8, 222], strides = [1, 1]} : vector<8x256xf32> to vector<8x222xf32>
    %c4_415 = arith.constant 4 : index
    %c34_416 = arith.constant 34 : index
    %1132 = memref.load %arg4[%c4_415, %c34_416] : memref<8x36xf32, #tpu.memory_space<smem>>
    %1133 = vector.broadcast %1132 : f32 to vector<8x222xf32>
    %1134 = arith.mulf %1131, %1133 : vector<8x222xf32>
    %1135 = arith.addf %1130, %1134 : vector<8x222xf32>
    %1136 = vector.extract_strided_slice %225 {offsets = [0, 34], sizes = [8, 222], strides = [1, 1]} : vector<8x256xf32> to vector<8x222xf32>
    %c4_417 = arith.constant 4 : index
    %c35_418 = arith.constant 35 : index
    %1137 = memref.load %arg4[%c4_417, %c35_418] : memref<8x36xf32, #tpu.memory_space<smem>>
    %1138 = vector.broadcast %1137 : f32 to vector<8x222xf32>
    %1139 = arith.mulf %1136, %1138 : vector<8x222xf32>
    %1140 = arith.addf %1135, %1139 : vector<8x222xf32>
    %c4_419 = arith.constant 4 : index
    %1141 = memref.load %arg5[%c4_419] : memref<8xf32, #tpu.memory_space<smem>>
    %1142 = vector.broadcast %1141 : f32 to vector<8x222xf32>
    %1143 = arith.addf %1140, %1142 : vector<8x222xf32>
    %cst_420 = arith.constant 0.000000e+00 : f32
    %1144 = vector.broadcast %cst_420 : f32 to vector<8x222xf32>
    %1145 = arith.maximumf %1143, %1144 : vector<8x222xf32>
    %1146 = vector.extract_strided_slice %204 {offsets = [0, 0], sizes = [8, 222], strides = [1, 1]} : vector<8x256xf32> to vector<8x222xf32>
    %c5_421 = arith.constant 5 : index
    %c0_422 = arith.constant 0 : index
    %1147 = memref.load %arg4[%c5_421, %c0_422] : memref<8x36xf32, #tpu.memory_space<smem>>
    %1148 = vector.broadcast %1147 : f32 to vector<8x222xf32>
    %1149 = arith.mulf %1146, %1148 : vector<8x222xf32>
    %1150 = vector.extract_strided_slice %204 {offsets = [0, 1], sizes = [8, 222], strides = [1, 1]} : vector<8x256xf32> to vector<8x222xf32>
    %c5_423 = arith.constant 5 : index
    %c1_424 = arith.constant 1 : index
    %1151 = memref.load %arg4[%c5_423, %c1_424] : memref<8x36xf32, #tpu.memory_space<smem>>
    %1152 = vector.broadcast %1151 : f32 to vector<8x222xf32>
    %1153 = arith.mulf %1150, %1152 : vector<8x222xf32>
    %1154 = arith.addf %1149, %1153 : vector<8x222xf32>
    %1155 = vector.extract_strided_slice %204 {offsets = [0, 2], sizes = [8, 222], strides = [1, 1]} : vector<8x256xf32> to vector<8x222xf32>
    %c5_425 = arith.constant 5 : index
    %c2_426 = arith.constant 2 : index
    %1156 = memref.load %arg4[%c5_425, %c2_426] : memref<8x36xf32, #tpu.memory_space<smem>>
    %1157 = vector.broadcast %1156 : f32 to vector<8x222xf32>
    %1158 = arith.mulf %1155, %1157 : vector<8x222xf32>
    %1159 = arith.addf %1154, %1158 : vector<8x222xf32>
    %1160 = vector.extract_strided_slice %204 {offsets = [0, 16], sizes = [8, 222], strides = [1, 1]} : vector<8x256xf32> to vector<8x222xf32>
    %c5_427 = arith.constant 5 : index
    %c3_428 = arith.constant 3 : index
    %1161 = memref.load %arg4[%c5_427, %c3_428] : memref<8x36xf32, #tpu.memory_space<smem>>
    %1162 = vector.broadcast %1161 : f32 to vector<8x222xf32>
    %1163 = arith.mulf %1160, %1162 : vector<8x222xf32>
    %1164 = arith.addf %1159, %1163 : vector<8x222xf32>
    %1165 = vector.extract_strided_slice %204 {offsets = [0, 17], sizes = [8, 222], strides = [1, 1]} : vector<8x256xf32> to vector<8x222xf32>
    %c5_429 = arith.constant 5 : index
    %c4_430 = arith.constant 4 : index
    %1166 = memref.load %arg4[%c5_429, %c4_430] : memref<8x36xf32, #tpu.memory_space<smem>>
    %1167 = vector.broadcast %1166 : f32 to vector<8x222xf32>
    %1168 = arith.mulf %1165, %1167 : vector<8x222xf32>
    %1169 = arith.addf %1164, %1168 : vector<8x222xf32>
    %1170 = vector.extract_strided_slice %204 {offsets = [0, 18], sizes = [8, 222], strides = [1, 1]} : vector<8x256xf32> to vector<8x222xf32>
    %c5_431 = arith.constant 5 : index
    %c5_432 = arith.constant 5 : index
    %1171 = memref.load %arg4[%c5_431, %c5_432] : memref<8x36xf32, #tpu.memory_space<smem>>
    %1172 = vector.broadcast %1171 : f32 to vector<8x222xf32>
    %1173 = arith.mulf %1170, %1172 : vector<8x222xf32>
    %1174 = arith.addf %1169, %1173 : vector<8x222xf32>
    %1175 = vector.extract_strided_slice %204 {offsets = [0, 32], sizes = [8, 222], strides = [1, 1]} : vector<8x256xf32> to vector<8x222xf32>
    %c5_433 = arith.constant 5 : index
    %c6_434 = arith.constant 6 : index
    %1176 = memref.load %arg4[%c5_433, %c6_434] : memref<8x36xf32, #tpu.memory_space<smem>>
    %1177 = vector.broadcast %1176 : f32 to vector<8x222xf32>
    %1178 = arith.mulf %1175, %1177 : vector<8x222xf32>
    %1179 = arith.addf %1174, %1178 : vector<8x222xf32>
    %1180 = vector.extract_strided_slice %204 {offsets = [0, 33], sizes = [8, 222], strides = [1, 1]} : vector<8x256xf32> to vector<8x222xf32>
    %c5_435 = arith.constant 5 : index
    %c7_436 = arith.constant 7 : index
    %1181 = memref.load %arg4[%c5_435, %c7_436] : memref<8x36xf32, #tpu.memory_space<smem>>
    %1182 = vector.broadcast %1181 : f32 to vector<8x222xf32>
    %1183 = arith.mulf %1180, %1182 : vector<8x222xf32>
    %1184 = arith.addf %1179, %1183 : vector<8x222xf32>
    %1185 = vector.extract_strided_slice %204 {offsets = [0, 34], sizes = [8, 222], strides = [1, 1]} : vector<8x256xf32> to vector<8x222xf32>
    %c5_437 = arith.constant 5 : index
    %c8_438 = arith.constant 8 : index
    %1186 = memref.load %arg4[%c5_437, %c8_438] : memref<8x36xf32, #tpu.memory_space<smem>>
    %1187 = vector.broadcast %1186 : f32 to vector<8x222xf32>
    %1188 = arith.mulf %1185, %1187 : vector<8x222xf32>
    %1189 = arith.addf %1184, %1188 : vector<8x222xf32>
    %1190 = vector.extract_strided_slice %211 {offsets = [0, 0], sizes = [8, 222], strides = [1, 1]} : vector<8x256xf32> to vector<8x222xf32>
    %c5_439 = arith.constant 5 : index
    %c9_440 = arith.constant 9 : index
    %1191 = memref.load %arg4[%c5_439, %c9_440] : memref<8x36xf32, #tpu.memory_space<smem>>
    %1192 = vector.broadcast %1191 : f32 to vector<8x222xf32>
    %1193 = arith.mulf %1190, %1192 : vector<8x222xf32>
    %1194 = arith.addf %1189, %1193 : vector<8x222xf32>
    %1195 = vector.extract_strided_slice %211 {offsets = [0, 1], sizes = [8, 222], strides = [1, 1]} : vector<8x256xf32> to vector<8x222xf32>
    %c5_441 = arith.constant 5 : index
    %c10_442 = arith.constant 10 : index
    %1196 = memref.load %arg4[%c5_441, %c10_442] : memref<8x36xf32, #tpu.memory_space<smem>>
    %1197 = vector.broadcast %1196 : f32 to vector<8x222xf32>
    %1198 = arith.mulf %1195, %1197 : vector<8x222xf32>
    %1199 = arith.addf %1194, %1198 : vector<8x222xf32>
    %1200 = vector.extract_strided_slice %211 {offsets = [0, 2], sizes = [8, 222], strides = [1, 1]} : vector<8x256xf32> to vector<8x222xf32>
    %c5_443 = arith.constant 5 : index
    %c11_444 = arith.constant 11 : index
    %1201 = memref.load %arg4[%c5_443, %c11_444] : memref<8x36xf32, #tpu.memory_space<smem>>
    %1202 = vector.broadcast %1201 : f32 to vector<8x222xf32>
    %1203 = arith.mulf %1200, %1202 : vector<8x222xf32>
    %1204 = arith.addf %1199, %1203 : vector<8x222xf32>
    %1205 = vector.extract_strided_slice %211 {offsets = [0, 16], sizes = [8, 222], strides = [1, 1]} : vector<8x256xf32> to vector<8x222xf32>
    %c5_445 = arith.constant 5 : index
    %c12_446 = arith.constant 12 : index
    %1206 = memref.load %arg4[%c5_445, %c12_446] : memref<8x36xf32, #tpu.memory_space<smem>>
    %1207 = vector.broadcast %1206 : f32 to vector<8x222xf32>
    %1208 = arith.mulf %1205, %1207 : vector<8x222xf32>
    %1209 = arith.addf %1204, %1208 : vector<8x222xf32>
    %1210 = vector.extract_strided_slice %211 {offsets = [0, 17], sizes = [8, 222], strides = [1, 1]} : vector<8x256xf32> to vector<8x222xf32>
    %c5_447 = arith.constant 5 : index
    %c13_448 = arith.constant 13 : index
    %1211 = memref.load %arg4[%c5_447, %c13_448] : memref<8x36xf32, #tpu.memory_space<smem>>
    %1212 = vector.broadcast %1211 : f32 to vector<8x222xf32>
    %1213 = arith.mulf %1210, %1212 : vector<8x222xf32>
    %1214 = arith.addf %1209, %1213 : vector<8x222xf32>
    %1215 = vector.extract_strided_slice %211 {offsets = [0, 18], sizes = [8, 222], strides = [1, 1]} : vector<8x256xf32> to vector<8x222xf32>
    %c5_449 = arith.constant 5 : index
    %c14_450 = arith.constant 14 : index
    %1216 = memref.load %arg4[%c5_449, %c14_450] : memref<8x36xf32, #tpu.memory_space<smem>>
    %1217 = vector.broadcast %1216 : f32 to vector<8x222xf32>
    %1218 = arith.mulf %1215, %1217 : vector<8x222xf32>
    %1219 = arith.addf %1214, %1218 : vector<8x222xf32>
    %1220 = vector.extract_strided_slice %211 {offsets = [0, 32], sizes = [8, 222], strides = [1, 1]} : vector<8x256xf32> to vector<8x222xf32>
    %c5_451 = arith.constant 5 : index
    %c15_452 = arith.constant 15 : index
    %1221 = memref.load %arg4[%c5_451, %c15_452] : memref<8x36xf32, #tpu.memory_space<smem>>
    %1222 = vector.broadcast %1221 : f32 to vector<8x222xf32>
    %1223 = arith.mulf %1220, %1222 : vector<8x222xf32>
    %1224 = arith.addf %1219, %1223 : vector<8x222xf32>
    %1225 = vector.extract_strided_slice %211 {offsets = [0, 33], sizes = [8, 222], strides = [1, 1]} : vector<8x256xf32> to vector<8x222xf32>
    %c5_453 = arith.constant 5 : index
    %c16_454 = arith.constant 16 : index
    %1226 = memref.load %arg4[%c5_453, %c16_454] : memref<8x36xf32, #tpu.memory_space<smem>>
    %1227 = vector.broadcast %1226 : f32 to vector<8x222xf32>
    %1228 = arith.mulf %1225, %1227 : vector<8x222xf32>
    %1229 = arith.addf %1224, %1228 : vector<8x222xf32>
    %1230 = vector.extract_strided_slice %211 {offsets = [0, 34], sizes = [8, 222], strides = [1, 1]} : vector<8x256xf32> to vector<8x222xf32>
    %c5_455 = arith.constant 5 : index
    %c17_456 = arith.constant 17 : index
    %1231 = memref.load %arg4[%c5_455, %c17_456] : memref<8x36xf32, #tpu.memory_space<smem>>
    %1232 = vector.broadcast %1231 : f32 to vector<8x222xf32>
    %1233 = arith.mulf %1230, %1232 : vector<8x222xf32>
    %1234 = arith.addf %1229, %1233 : vector<8x222xf32>
    %1235 = vector.extract_strided_slice %218 {offsets = [0, 0], sizes = [8, 222], strides = [1, 1]} : vector<8x256xf32> to vector<8x222xf32>
    %c5_457 = arith.constant 5 : index
    %c18_458 = arith.constant 18 : index
    %1236 = memref.load %arg4[%c5_457, %c18_458] : memref<8x36xf32, #tpu.memory_space<smem>>
    %1237 = vector.broadcast %1236 : f32 to vector<8x222xf32>
    %1238 = arith.mulf %1235, %1237 : vector<8x222xf32>
    %1239 = arith.addf %1234, %1238 : vector<8x222xf32>
    %1240 = vector.extract_strided_slice %218 {offsets = [0, 1], sizes = [8, 222], strides = [1, 1]} : vector<8x256xf32> to vector<8x222xf32>
    %c5_459 = arith.constant 5 : index
    %c19_460 = arith.constant 19 : index
    %1241 = memref.load %arg4[%c5_459, %c19_460] : memref<8x36xf32, #tpu.memory_space<smem>>
    %1242 = vector.broadcast %1241 : f32 to vector<8x222xf32>
    %1243 = arith.mulf %1240, %1242 : vector<8x222xf32>
    %1244 = arith.addf %1239, %1243 : vector<8x222xf32>
    %1245 = vector.extract_strided_slice %218 {offsets = [0, 2], sizes = [8, 222], strides = [1, 1]} : vector<8x256xf32> to vector<8x222xf32>
    %c5_461 = arith.constant 5 : index
    %c20_462 = arith.constant 20 : index
    %1246 = memref.load %arg4[%c5_461, %c20_462] : memref<8x36xf32, #tpu.memory_space<smem>>
    %1247 = vector.broadcast %1246 : f32 to vector<8x222xf32>
    %1248 = arith.mulf %1245, %1247 : vector<8x222xf32>
    %1249 = arith.addf %1244, %1248 : vector<8x222xf32>
    %1250 = vector.extract_strided_slice %218 {offsets = [0, 16], sizes = [8, 222], strides = [1, 1]} : vector<8x256xf32> to vector<8x222xf32>
    %c5_463 = arith.constant 5 : index
    %c21_464 = arith.constant 21 : index
    %1251 = memref.load %arg4[%c5_463, %c21_464] : memref<8x36xf32, #tpu.memory_space<smem>>
    %1252 = vector.broadcast %1251 : f32 to vector<8x222xf32>
    %1253 = arith.mulf %1250, %1252 : vector<8x222xf32>
    %1254 = arith.addf %1249, %1253 : vector<8x222xf32>
    %1255 = vector.extract_strided_slice %218 {offsets = [0, 17], sizes = [8, 222], strides = [1, 1]} : vector<8x256xf32> to vector<8x222xf32>
    %c5_465 = arith.constant 5 : index
    %c22_466 = arith.constant 22 : index
    %1256 = memref.load %arg4[%c5_465, %c22_466] : memref<8x36xf32, #tpu.memory_space<smem>>
    %1257 = vector.broadcast %1256 : f32 to vector<8x222xf32>
    %1258 = arith.mulf %1255, %1257 : vector<8x222xf32>
    %1259 = arith.addf %1254, %1258 : vector<8x222xf32>
    %1260 = vector.extract_strided_slice %218 {offsets = [0, 18], sizes = [8, 222], strides = [1, 1]} : vector<8x256xf32> to vector<8x222xf32>
    %c5_467 = arith.constant 5 : index
    %c23_468 = arith.constant 23 : index
    %1261 = memref.load %arg4[%c5_467, %c23_468] : memref<8x36xf32, #tpu.memory_space<smem>>
    %1262 = vector.broadcast %1261 : f32 to vector<8x222xf32>
    %1263 = arith.mulf %1260, %1262 : vector<8x222xf32>
    %1264 = arith.addf %1259, %1263 : vector<8x222xf32>
    %1265 = vector.extract_strided_slice %218 {offsets = [0, 32], sizes = [8, 222], strides = [1, 1]} : vector<8x256xf32> to vector<8x222xf32>
    %c5_469 = arith.constant 5 : index
    %c24_470 = arith.constant 24 : index
    %1266 = memref.load %arg4[%c5_469, %c24_470] : memref<8x36xf32, #tpu.memory_space<smem>>
    %1267 = vector.broadcast %1266 : f32 to vector<8x222xf32>
    %1268 = arith.mulf %1265, %1267 : vector<8x222xf32>
    %1269 = arith.addf %1264, %1268 : vector<8x222xf32>
    %1270 = vector.extract_strided_slice %218 {offsets = [0, 33], sizes = [8, 222], strides = [1, 1]} : vector<8x256xf32> to vector<8x222xf32>
    %c5_471 = arith.constant 5 : index
    %c25_472 = arith.constant 25 : index
    %1271 = memref.load %arg4[%c5_471, %c25_472] : memref<8x36xf32, #tpu.memory_space<smem>>
    %1272 = vector.broadcast %1271 : f32 to vector<8x222xf32>
    %1273 = arith.mulf %1270, %1272 : vector<8x222xf32>
    %1274 = arith.addf %1269, %1273 : vector<8x222xf32>
    %1275 = vector.extract_strided_slice %218 {offsets = [0, 34], sizes = [8, 222], strides = [1, 1]} : vector<8x256xf32> to vector<8x222xf32>
    %c5_473 = arith.constant 5 : index
    %c26_474 = arith.constant 26 : index
    %1276 = memref.load %arg4[%c5_473, %c26_474] : memref<8x36xf32, #tpu.memory_space<smem>>
    %1277 = vector.broadcast %1276 : f32 to vector<8x222xf32>
    %1278 = arith.mulf %1275, %1277 : vector<8x222xf32>
    %1279 = arith.addf %1274, %1278 : vector<8x222xf32>
    %1280 = vector.extract_strided_slice %225 {offsets = [0, 0], sizes = [8, 222], strides = [1, 1]} : vector<8x256xf32> to vector<8x222xf32>
    %c5_475 = arith.constant 5 : index
    %c27_476 = arith.constant 27 : index
    %1281 = memref.load %arg4[%c5_475, %c27_476] : memref<8x36xf32, #tpu.memory_space<smem>>
    %1282 = vector.broadcast %1281 : f32 to vector<8x222xf32>
    %1283 = arith.mulf %1280, %1282 : vector<8x222xf32>
    %1284 = arith.addf %1279, %1283 : vector<8x222xf32>
    %1285 = vector.extract_strided_slice %225 {offsets = [0, 1], sizes = [8, 222], strides = [1, 1]} : vector<8x256xf32> to vector<8x222xf32>
    %c5_477 = arith.constant 5 : index
    %c28_478 = arith.constant 28 : index
    %1286 = memref.load %arg4[%c5_477, %c28_478] : memref<8x36xf32, #tpu.memory_space<smem>>
    %1287 = vector.broadcast %1286 : f32 to vector<8x222xf32>
    %1288 = arith.mulf %1285, %1287 : vector<8x222xf32>
    %1289 = arith.addf %1284, %1288 : vector<8x222xf32>
    %1290 = vector.extract_strided_slice %225 {offsets = [0, 2], sizes = [8, 222], strides = [1, 1]} : vector<8x256xf32> to vector<8x222xf32>
    %c5_479 = arith.constant 5 : index
    %c29_480 = arith.constant 29 : index
    %1291 = memref.load %arg4[%c5_479, %c29_480] : memref<8x36xf32, #tpu.memory_space<smem>>
    %1292 = vector.broadcast %1291 : f32 to vector<8x222xf32>
    %1293 = arith.mulf %1290, %1292 : vector<8x222xf32>
    %1294 = arith.addf %1289, %1293 : vector<8x222xf32>
    %1295 = vector.extract_strided_slice %225 {offsets = [0, 16], sizes = [8, 222], strides = [1, 1]} : vector<8x256xf32> to vector<8x222xf32>
    %c5_481 = arith.constant 5 : index
    %c30_482 = arith.constant 30 : index
    %1296 = memref.load %arg4[%c5_481, %c30_482] : memref<8x36xf32, #tpu.memory_space<smem>>
    %1297 = vector.broadcast %1296 : f32 to vector<8x222xf32>
    %1298 = arith.mulf %1295, %1297 : vector<8x222xf32>
    %1299 = arith.addf %1294, %1298 : vector<8x222xf32>
    %1300 = vector.extract_strided_slice %225 {offsets = [0, 17], sizes = [8, 222], strides = [1, 1]} : vector<8x256xf32> to vector<8x222xf32>
    %c5_483 = arith.constant 5 : index
    %c31_484 = arith.constant 31 : index
    %1301 = memref.load %arg4[%c5_483, %c31_484] : memref<8x36xf32, #tpu.memory_space<smem>>
    %1302 = vector.broadcast %1301 : f32 to vector<8x222xf32>
    %1303 = arith.mulf %1300, %1302 : vector<8x222xf32>
    %1304 = arith.addf %1299, %1303 : vector<8x222xf32>
    %1305 = vector.extract_strided_slice %225 {offsets = [0, 18], sizes = [8, 222], strides = [1, 1]} : vector<8x256xf32> to vector<8x222xf32>
    %c5_485 = arith.constant 5 : index
    %c32_486 = arith.constant 32 : index
    %1306 = memref.load %arg4[%c5_485, %c32_486] : memref<8x36xf32, #tpu.memory_space<smem>>
    %1307 = vector.broadcast %1306 : f32 to vector<8x222xf32>
    %1308 = arith.mulf %1305, %1307 : vector<8x222xf32>
    %1309 = arith.addf %1304, %1308 : vector<8x222xf32>
    %1310 = vector.extract_strided_slice %225 {offsets = [0, 32], sizes = [8, 222], strides = [1, 1]} : vector<8x256xf32> to vector<8x222xf32>
    %c5_487 = arith.constant 5 : index
    %c33_488 = arith.constant 33 : index
    %1311 = memref.load %arg4[%c5_487, %c33_488] : memref<8x36xf32, #tpu.memory_space<smem>>
    %1312 = vector.broadcast %1311 : f32 to vector<8x222xf32>
    %1313 = arith.mulf %1310, %1312 : vector<8x222xf32>
    %1314 = arith.addf %1309, %1313 : vector<8x222xf32>
    %1315 = vector.extract_strided_slice %225 {offsets = [0, 33], sizes = [8, 222], strides = [1, 1]} : vector<8x256xf32> to vector<8x222xf32>
    %c5_489 = arith.constant 5 : index
    %c34_490 = arith.constant 34 : index
    %1316 = memref.load %arg4[%c5_489, %c34_490] : memref<8x36xf32, #tpu.memory_space<smem>>
    %1317 = vector.broadcast %1316 : f32 to vector<8x222xf32>
    %1318 = arith.mulf %1315, %1317 : vector<8x222xf32>
    %1319 = arith.addf %1314, %1318 : vector<8x222xf32>
    %1320 = vector.extract_strided_slice %225 {offsets = [0, 34], sizes = [8, 222], strides = [1, 1]} : vector<8x256xf32> to vector<8x222xf32>
    %c5_491 = arith.constant 5 : index
    %c35_492 = arith.constant 35 : index
    %1321 = memref.load %arg4[%c5_491, %c35_492] : memref<8x36xf32, #tpu.memory_space<smem>>
    %1322 = vector.broadcast %1321 : f32 to vector<8x222xf32>
    %1323 = arith.mulf %1320, %1322 : vector<8x222xf32>
    %1324 = arith.addf %1319, %1323 : vector<8x222xf32>
    %c5_493 = arith.constant 5 : index
    %1325 = memref.load %arg5[%c5_493] : memref<8xf32, #tpu.memory_space<smem>>
    %1326 = vector.broadcast %1325 : f32 to vector<8x222xf32>
    %1327 = arith.addf %1324, %1326 : vector<8x222xf32>
    %cst_494 = arith.constant 0.000000e+00 : f32
    %1328 = vector.broadcast %cst_494 : f32 to vector<8x222xf32>
    %1329 = arith.maximumf %1327, %1328 : vector<8x222xf32>
    %1330 = vector.extract_strided_slice %204 {offsets = [0, 0], sizes = [8, 222], strides = [1, 1]} : vector<8x256xf32> to vector<8x222xf32>
    %c6_495 = arith.constant 6 : index
    %c0_496 = arith.constant 0 : index
    %1331 = memref.load %arg4[%c6_495, %c0_496] : memref<8x36xf32, #tpu.memory_space<smem>>
    %1332 = vector.broadcast %1331 : f32 to vector<8x222xf32>
    %1333 = arith.mulf %1330, %1332 : vector<8x222xf32>
    %1334 = vector.extract_strided_slice %204 {offsets = [0, 1], sizes = [8, 222], strides = [1, 1]} : vector<8x256xf32> to vector<8x222xf32>
    %c6_497 = arith.constant 6 : index
    %c1_498 = arith.constant 1 : index
    %1335 = memref.load %arg4[%c6_497, %c1_498] : memref<8x36xf32, #tpu.memory_space<smem>>
    %1336 = vector.broadcast %1335 : f32 to vector<8x222xf32>
    %1337 = arith.mulf %1334, %1336 : vector<8x222xf32>
    %1338 = arith.addf %1333, %1337 : vector<8x222xf32>
    %1339 = vector.extract_strided_slice %204 {offsets = [0, 2], sizes = [8, 222], strides = [1, 1]} : vector<8x256xf32> to vector<8x222xf32>
    %c6_499 = arith.constant 6 : index
    %c2_500 = arith.constant 2 : index
    %1340 = memref.load %arg4[%c6_499, %c2_500] : memref<8x36xf32, #tpu.memory_space<smem>>
    %1341 = vector.broadcast %1340 : f32 to vector<8x222xf32>
    %1342 = arith.mulf %1339, %1341 : vector<8x222xf32>
    %1343 = arith.addf %1338, %1342 : vector<8x222xf32>
    %1344 = vector.extract_strided_slice %204 {offsets = [0, 16], sizes = [8, 222], strides = [1, 1]} : vector<8x256xf32> to vector<8x222xf32>
    %c6_501 = arith.constant 6 : index
    %c3_502 = arith.constant 3 : index
    %1345 = memref.load %arg4[%c6_501, %c3_502] : memref<8x36xf32, #tpu.memory_space<smem>>
    %1346 = vector.broadcast %1345 : f32 to vector<8x222xf32>
    %1347 = arith.mulf %1344, %1346 : vector<8x222xf32>
    %1348 = arith.addf %1343, %1347 : vector<8x222xf32>
    %1349 = vector.extract_strided_slice %204 {offsets = [0, 17], sizes = [8, 222], strides = [1, 1]} : vector<8x256xf32> to vector<8x222xf32>
    %c6_503 = arith.constant 6 : index
    %c4_504 = arith.constant 4 : index
    %1350 = memref.load %arg4[%c6_503, %c4_504] : memref<8x36xf32, #tpu.memory_space<smem>>
    %1351 = vector.broadcast %1350 : f32 to vector<8x222xf32>
    %1352 = arith.mulf %1349, %1351 : vector<8x222xf32>
    %1353 = arith.addf %1348, %1352 : vector<8x222xf32>
    %1354 = vector.extract_strided_slice %204 {offsets = [0, 18], sizes = [8, 222], strides = [1, 1]} : vector<8x256xf32> to vector<8x222xf32>
    %c6_505 = arith.constant 6 : index
    %c5_506 = arith.constant 5 : index
    %1355 = memref.load %arg4[%c6_505, %c5_506] : memref<8x36xf32, #tpu.memory_space<smem>>
    %1356 = vector.broadcast %1355 : f32 to vector<8x222xf32>
    %1357 = arith.mulf %1354, %1356 : vector<8x222xf32>
    %1358 = arith.addf %1353, %1357 : vector<8x222xf32>
    %1359 = vector.extract_strided_slice %204 {offsets = [0, 32], sizes = [8, 222], strides = [1, 1]} : vector<8x256xf32> to vector<8x222xf32>
    %c6_507 = arith.constant 6 : index
    %c6_508 = arith.constant 6 : index
    %1360 = memref.load %arg4[%c6_507, %c6_508] : memref<8x36xf32, #tpu.memory_space<smem>>
    %1361 = vector.broadcast %1360 : f32 to vector<8x222xf32>
    %1362 = arith.mulf %1359, %1361 : vector<8x222xf32>
    %1363 = arith.addf %1358, %1362 : vector<8x222xf32>
    %1364 = vector.extract_strided_slice %204 {offsets = [0, 33], sizes = [8, 222], strides = [1, 1]} : vector<8x256xf32> to vector<8x222xf32>
    %c6_509 = arith.constant 6 : index
    %c7_510 = arith.constant 7 : index
    %1365 = memref.load %arg4[%c6_509, %c7_510] : memref<8x36xf32, #tpu.memory_space<smem>>
    %1366 = vector.broadcast %1365 : f32 to vector<8x222xf32>
    %1367 = arith.mulf %1364, %1366 : vector<8x222xf32>
    %1368 = arith.addf %1363, %1367 : vector<8x222xf32>
    %1369 = vector.extract_strided_slice %204 {offsets = [0, 34], sizes = [8, 222], strides = [1, 1]} : vector<8x256xf32> to vector<8x222xf32>
    %c6_511 = arith.constant 6 : index
    %c8_512 = arith.constant 8 : index
    %1370 = memref.load %arg4[%c6_511, %c8_512] : memref<8x36xf32, #tpu.memory_space<smem>>
    %1371 = vector.broadcast %1370 : f32 to vector<8x222xf32>
    %1372 = arith.mulf %1369, %1371 : vector<8x222xf32>
    %1373 = arith.addf %1368, %1372 : vector<8x222xf32>
    %1374 = vector.extract_strided_slice %211 {offsets = [0, 0], sizes = [8, 222], strides = [1, 1]} : vector<8x256xf32> to vector<8x222xf32>
    %c6_513 = arith.constant 6 : index
    %c9_514 = arith.constant 9 : index
    %1375 = memref.load %arg4[%c6_513, %c9_514] : memref<8x36xf32, #tpu.memory_space<smem>>
    %1376 = vector.broadcast %1375 : f32 to vector<8x222xf32>
    %1377 = arith.mulf %1374, %1376 : vector<8x222xf32>
    %1378 = arith.addf %1373, %1377 : vector<8x222xf32>
    %1379 = vector.extract_strided_slice %211 {offsets = [0, 1], sizes = [8, 222], strides = [1, 1]} : vector<8x256xf32> to vector<8x222xf32>
    %c6_515 = arith.constant 6 : index
    %c10_516 = arith.constant 10 : index
    %1380 = memref.load %arg4[%c6_515, %c10_516] : memref<8x36xf32, #tpu.memory_space<smem>>
    %1381 = vector.broadcast %1380 : f32 to vector<8x222xf32>
    %1382 = arith.mulf %1379, %1381 : vector<8x222xf32>
    %1383 = arith.addf %1378, %1382 : vector<8x222xf32>
    %1384 = vector.extract_strided_slice %211 {offsets = [0, 2], sizes = [8, 222], strides = [1, 1]} : vector<8x256xf32> to vector<8x222xf32>
    %c6_517 = arith.constant 6 : index
    %c11_518 = arith.constant 11 : index
    %1385 = memref.load %arg4[%c6_517, %c11_518] : memref<8x36xf32, #tpu.memory_space<smem>>
    %1386 = vector.broadcast %1385 : f32 to vector<8x222xf32>
    %1387 = arith.mulf %1384, %1386 : vector<8x222xf32>
    %1388 = arith.addf %1383, %1387 : vector<8x222xf32>
    %1389 = vector.extract_strided_slice %211 {offsets = [0, 16], sizes = [8, 222], strides = [1, 1]} : vector<8x256xf32> to vector<8x222xf32>
    %c6_519 = arith.constant 6 : index
    %c12_520 = arith.constant 12 : index
    %1390 = memref.load %arg4[%c6_519, %c12_520] : memref<8x36xf32, #tpu.memory_space<smem>>
    %1391 = vector.broadcast %1390 : f32 to vector<8x222xf32>
    %1392 = arith.mulf %1389, %1391 : vector<8x222xf32>
    %1393 = arith.addf %1388, %1392 : vector<8x222xf32>
    %1394 = vector.extract_strided_slice %211 {offsets = [0, 17], sizes = [8, 222], strides = [1, 1]} : vector<8x256xf32> to vector<8x222xf32>
    %c6_521 = arith.constant 6 : index
    %c13_522 = arith.constant 13 : index
    %1395 = memref.load %arg4[%c6_521, %c13_522] : memref<8x36xf32, #tpu.memory_space<smem>>
    %1396 = vector.broadcast %1395 : f32 to vector<8x222xf32>
    %1397 = arith.mulf %1394, %1396 : vector<8x222xf32>
    %1398 = arith.addf %1393, %1397 : vector<8x222xf32>
    %1399 = vector.extract_strided_slice %211 {offsets = [0, 18], sizes = [8, 222], strides = [1, 1]} : vector<8x256xf32> to vector<8x222xf32>
    %c6_523 = arith.constant 6 : index
    %c14_524 = arith.constant 14 : index
    %1400 = memref.load %arg4[%c6_523, %c14_524] : memref<8x36xf32, #tpu.memory_space<smem>>
    %1401 = vector.broadcast %1400 : f32 to vector<8x222xf32>
    %1402 = arith.mulf %1399, %1401 : vector<8x222xf32>
    %1403 = arith.addf %1398, %1402 : vector<8x222xf32>
    %1404 = vector.extract_strided_slice %211 {offsets = [0, 32], sizes = [8, 222], strides = [1, 1]} : vector<8x256xf32> to vector<8x222xf32>
    %c6_525 = arith.constant 6 : index
    %c15_526 = arith.constant 15 : index
    %1405 = memref.load %arg4[%c6_525, %c15_526] : memref<8x36xf32, #tpu.memory_space<smem>>
    %1406 = vector.broadcast %1405 : f32 to vector<8x222xf32>
    %1407 = arith.mulf %1404, %1406 : vector<8x222xf32>
    %1408 = arith.addf %1403, %1407 : vector<8x222xf32>
    %1409 = vector.extract_strided_slice %211 {offsets = [0, 33], sizes = [8, 222], strides = [1, 1]} : vector<8x256xf32> to vector<8x222xf32>
    %c6_527 = arith.constant 6 : index
    %c16_528 = arith.constant 16 : index
    %1410 = memref.load %arg4[%c6_527, %c16_528] : memref<8x36xf32, #tpu.memory_space<smem>>
    %1411 = vector.broadcast %1410 : f32 to vector<8x222xf32>
    %1412 = arith.mulf %1409, %1411 : vector<8x222xf32>
    %1413 = arith.addf %1408, %1412 : vector<8x222xf32>
    %1414 = vector.extract_strided_slice %211 {offsets = [0, 34], sizes = [8, 222], strides = [1, 1]} : vector<8x256xf32> to vector<8x222xf32>
    %c6_529 = arith.constant 6 : index
    %c17_530 = arith.constant 17 : index
    %1415 = memref.load %arg4[%c6_529, %c17_530] : memref<8x36xf32, #tpu.memory_space<smem>>
    %1416 = vector.broadcast %1415 : f32 to vector<8x222xf32>
    %1417 = arith.mulf %1414, %1416 : vector<8x222xf32>
    %1418 = arith.addf %1413, %1417 : vector<8x222xf32>
    %1419 = vector.extract_strided_slice %218 {offsets = [0, 0], sizes = [8, 222], strides = [1, 1]} : vector<8x256xf32> to vector<8x222xf32>
    %c6_531 = arith.constant 6 : index
    %c18_532 = arith.constant 18 : index
    %1420 = memref.load %arg4[%c6_531, %c18_532] : memref<8x36xf32, #tpu.memory_space<smem>>
    %1421 = vector.broadcast %1420 : f32 to vector<8x222xf32>
    %1422 = arith.mulf %1419, %1421 : vector<8x222xf32>
    %1423 = arith.addf %1418, %1422 : vector<8x222xf32>
    %1424 = vector.extract_strided_slice %218 {offsets = [0, 1], sizes = [8, 222], strides = [1, 1]} : vector<8x256xf32> to vector<8x222xf32>
    %c6_533 = arith.constant 6 : index
    %c19_534 = arith.constant 19 : index
    %1425 = memref.load %arg4[%c6_533, %c19_534] : memref<8x36xf32, #tpu.memory_space<smem>>
    %1426 = vector.broadcast %1425 : f32 to vector<8x222xf32>
    %1427 = arith.mulf %1424, %1426 : vector<8x222xf32>
    %1428 = arith.addf %1423, %1427 : vector<8x222xf32>
    %1429 = vector.extract_strided_slice %218 {offsets = [0, 2], sizes = [8, 222], strides = [1, 1]} : vector<8x256xf32> to vector<8x222xf32>
    %c6_535 = arith.constant 6 : index
    %c20_536 = arith.constant 20 : index
    %1430 = memref.load %arg4[%c6_535, %c20_536] : memref<8x36xf32, #tpu.memory_space<smem>>
    %1431 = vector.broadcast %1430 : f32 to vector<8x222xf32>
    %1432 = arith.mulf %1429, %1431 : vector<8x222xf32>
    %1433 = arith.addf %1428, %1432 : vector<8x222xf32>
    %1434 = vector.extract_strided_slice %218 {offsets = [0, 16], sizes = [8, 222], strides = [1, 1]} : vector<8x256xf32> to vector<8x222xf32>
    %c6_537 = arith.constant 6 : index
    %c21_538 = arith.constant 21 : index
    %1435 = memref.load %arg4[%c6_537, %c21_538] : memref<8x36xf32, #tpu.memory_space<smem>>
    %1436 = vector.broadcast %1435 : f32 to vector<8x222xf32>
    %1437 = arith.mulf %1434, %1436 : vector<8x222xf32>
    %1438 = arith.addf %1433, %1437 : vector<8x222xf32>
    %1439 = vector.extract_strided_slice %218 {offsets = [0, 17], sizes = [8, 222], strides = [1, 1]} : vector<8x256xf32> to vector<8x222xf32>
    %c6_539 = arith.constant 6 : index
    %c22_540 = arith.constant 22 : index
    %1440 = memref.load %arg4[%c6_539, %c22_540] : memref<8x36xf32, #tpu.memory_space<smem>>
    %1441 = vector.broadcast %1440 : f32 to vector<8x222xf32>
    %1442 = arith.mulf %1439, %1441 : vector<8x222xf32>
    %1443 = arith.addf %1438, %1442 : vector<8x222xf32>
    %1444 = vector.extract_strided_slice %218 {offsets = [0, 18], sizes = [8, 222], strides = [1, 1]} : vector<8x256xf32> to vector<8x222xf32>
    %c6_541 = arith.constant 6 : index
    %c23_542 = arith.constant 23 : index
    %1445 = memref.load %arg4[%c6_541, %c23_542] : memref<8x36xf32, #tpu.memory_space<smem>>
    %1446 = vector.broadcast %1445 : f32 to vector<8x222xf32>
    %1447 = arith.mulf %1444, %1446 : vector<8x222xf32>
    %1448 = arith.addf %1443, %1447 : vector<8x222xf32>
    %1449 = vector.extract_strided_slice %218 {offsets = [0, 32], sizes = [8, 222], strides = [1, 1]} : vector<8x256xf32> to vector<8x222xf32>
    %c6_543 = arith.constant 6 : index
    %c24_544 = arith.constant 24 : index
    %1450 = memref.load %arg4[%c6_543, %c24_544] : memref<8x36xf32, #tpu.memory_space<smem>>
    %1451 = vector.broadcast %1450 : f32 to vector<8x222xf32>
    %1452 = arith.mulf %1449, %1451 : vector<8x222xf32>
    %1453 = arith.addf %1448, %1452 : vector<8x222xf32>
    %1454 = vector.extract_strided_slice %218 {offsets = [0, 33], sizes = [8, 222], strides = [1, 1]} : vector<8x256xf32> to vector<8x222xf32>
    %c6_545 = arith.constant 6 : index
    %c25_546 = arith.constant 25 : index
    %1455 = memref.load %arg4[%c6_545, %c25_546] : memref<8x36xf32, #tpu.memory_space<smem>>
    %1456 = vector.broadcast %1455 : f32 to vector<8x222xf32>
    %1457 = arith.mulf %1454, %1456 : vector<8x222xf32>
    %1458 = arith.addf %1453, %1457 : vector<8x222xf32>
    %1459 = vector.extract_strided_slice %218 {offsets = [0, 34], sizes = [8, 222], strides = [1, 1]} : vector<8x256xf32> to vector<8x222xf32>
    %c6_547 = arith.constant 6 : index
    %c26_548 = arith.constant 26 : index
    %1460 = memref.load %arg4[%c6_547, %c26_548] : memref<8x36xf32, #tpu.memory_space<smem>>
    %1461 = vector.broadcast %1460 : f32 to vector<8x222xf32>
    %1462 = arith.mulf %1459, %1461 : vector<8x222xf32>
    %1463 = arith.addf %1458, %1462 : vector<8x222xf32>
    %1464 = vector.extract_strided_slice %225 {offsets = [0, 0], sizes = [8, 222], strides = [1, 1]} : vector<8x256xf32> to vector<8x222xf32>
    %c6_549 = arith.constant 6 : index
    %c27_550 = arith.constant 27 : index
    %1465 = memref.load %arg4[%c6_549, %c27_550] : memref<8x36xf32, #tpu.memory_space<smem>>
    %1466 = vector.broadcast %1465 : f32 to vector<8x222xf32>
    %1467 = arith.mulf %1464, %1466 : vector<8x222xf32>
    %1468 = arith.addf %1463, %1467 : vector<8x222xf32>
    %1469 = vector.extract_strided_slice %225 {offsets = [0, 1], sizes = [8, 222], strides = [1, 1]} : vector<8x256xf32> to vector<8x222xf32>
    %c6_551 = arith.constant 6 : index
    %c28_552 = arith.constant 28 : index
    %1470 = memref.load %arg4[%c6_551, %c28_552] : memref<8x36xf32, #tpu.memory_space<smem>>
    %1471 = vector.broadcast %1470 : f32 to vector<8x222xf32>
    %1472 = arith.mulf %1469, %1471 : vector<8x222xf32>
    %1473 = arith.addf %1468, %1472 : vector<8x222xf32>
    %1474 = vector.extract_strided_slice %225 {offsets = [0, 2], sizes = [8, 222], strides = [1, 1]} : vector<8x256xf32> to vector<8x222xf32>
    %c6_553 = arith.constant 6 : index
    %c29_554 = arith.constant 29 : index
    %1475 = memref.load %arg4[%c6_553, %c29_554] : memref<8x36xf32, #tpu.memory_space<smem>>
    %1476 = vector.broadcast %1475 : f32 to vector<8x222xf32>
    %1477 = arith.mulf %1474, %1476 : vector<8x222xf32>
    %1478 = arith.addf %1473, %1477 : vector<8x222xf32>
    %1479 = vector.extract_strided_slice %225 {offsets = [0, 16], sizes = [8, 222], strides = [1, 1]} : vector<8x256xf32> to vector<8x222xf32>
    %c6_555 = arith.constant 6 : index
    %c30_556 = arith.constant 30 : index
    %1480 = memref.load %arg4[%c6_555, %c30_556] : memref<8x36xf32, #tpu.memory_space<smem>>
    %1481 = vector.broadcast %1480 : f32 to vector<8x222xf32>
    %1482 = arith.mulf %1479, %1481 : vector<8x222xf32>
    %1483 = arith.addf %1478, %1482 : vector<8x222xf32>
    %1484 = vector.extract_strided_slice %225 {offsets = [0, 17], sizes = [8, 222], strides = [1, 1]} : vector<8x256xf32> to vector<8x222xf32>
    %c6_557 = arith.constant 6 : index
    %c31_558 = arith.constant 31 : index
    %1485 = memref.load %arg4[%c6_557, %c31_558] : memref<8x36xf32, #tpu.memory_space<smem>>
    %1486 = vector.broadcast %1485 : f32 to vector<8x222xf32>
    %1487 = arith.mulf %1484, %1486 : vector<8x222xf32>
    %1488 = arith.addf %1483, %1487 : vector<8x222xf32>
    %1489 = vector.extract_strided_slice %225 {offsets = [0, 18], sizes = [8, 222], strides = [1, 1]} : vector<8x256xf32> to vector<8x222xf32>
    %c6_559 = arith.constant 6 : index
    %c32_560 = arith.constant 32 : index
    %1490 = memref.load %arg4[%c6_559, %c32_560] : memref<8x36xf32, #tpu.memory_space<smem>>
    %1491 = vector.broadcast %1490 : f32 to vector<8x222xf32>
    %1492 = arith.mulf %1489, %1491 : vector<8x222xf32>
    %1493 = arith.addf %1488, %1492 : vector<8x222xf32>
    %1494 = vector.extract_strided_slice %225 {offsets = [0, 32], sizes = [8, 222], strides = [1, 1]} : vector<8x256xf32> to vector<8x222xf32>
    %c6_561 = arith.constant 6 : index
    %c33_562 = arith.constant 33 : index
    %1495 = memref.load %arg4[%c6_561, %c33_562] : memref<8x36xf32, #tpu.memory_space<smem>>
    %1496 = vector.broadcast %1495 : f32 to vector<8x222xf32>
    %1497 = arith.mulf %1494, %1496 : vector<8x222xf32>
    %1498 = arith.addf %1493, %1497 : vector<8x222xf32>
    %1499 = vector.extract_strided_slice %225 {offsets = [0, 33], sizes = [8, 222], strides = [1, 1]} : vector<8x256xf32> to vector<8x222xf32>
    %c6_563 = arith.constant 6 : index
    %c34_564 = arith.constant 34 : index
    %1500 = memref.load %arg4[%c6_563, %c34_564] : memref<8x36xf32, #tpu.memory_space<smem>>
    %1501 = vector.broadcast %1500 : f32 to vector<8x222xf32>
    %1502 = arith.mulf %1499, %1501 : vector<8x222xf32>
    %1503 = arith.addf %1498, %1502 : vector<8x222xf32>
    %1504 = vector.extract_strided_slice %225 {offsets = [0, 34], sizes = [8, 222], strides = [1, 1]} : vector<8x256xf32> to vector<8x222xf32>
    %c6_565 = arith.constant 6 : index
    %c35_566 = arith.constant 35 : index
    %1505 = memref.load %arg4[%c6_565, %c35_566] : memref<8x36xf32, #tpu.memory_space<smem>>
    %1506 = vector.broadcast %1505 : f32 to vector<8x222xf32>
    %1507 = arith.mulf %1504, %1506 : vector<8x222xf32>
    %1508 = arith.addf %1503, %1507 : vector<8x222xf32>
    %c6_567 = arith.constant 6 : index
    %1509 = memref.load %arg5[%c6_567] : memref<8xf32, #tpu.memory_space<smem>>
    %1510 = vector.broadcast %1509 : f32 to vector<8x222xf32>
    %1511 = arith.addf %1508, %1510 : vector<8x222xf32>
    %cst_568 = arith.constant 0.000000e+00 : f32
    %1512 = vector.broadcast %cst_568 : f32 to vector<8x222xf32>
    %1513 = arith.maximumf %1511, %1512 : vector<8x222xf32>
    %1514 = vector.extract_strided_slice %204 {offsets = [0, 0], sizes = [8, 222], strides = [1, 1]} : vector<8x256xf32> to vector<8x222xf32>
    %c7_569 = arith.constant 7 : index
    %c0_570 = arith.constant 0 : index
    %1515 = memref.load %arg4[%c7_569, %c0_570] : memref<8x36xf32, #tpu.memory_space<smem>>
    %1516 = vector.broadcast %1515 : f32 to vector<8x222xf32>
    %1517 = arith.mulf %1514, %1516 : vector<8x222xf32>
    %1518 = vector.extract_strided_slice %204 {offsets = [0, 1], sizes = [8, 222], strides = [1, 1]} : vector<8x256xf32> to vector<8x222xf32>
    %c7_571 = arith.constant 7 : index
    %c1_572 = arith.constant 1 : index
    %1519 = memref.load %arg4[%c7_571, %c1_572] : memref<8x36xf32, #tpu.memory_space<smem>>
    %1520 = vector.broadcast %1519 : f32 to vector<8x222xf32>
    %1521 = arith.mulf %1518, %1520 : vector<8x222xf32>
    %1522 = arith.addf %1517, %1521 : vector<8x222xf32>
    %1523 = vector.extract_strided_slice %204 {offsets = [0, 2], sizes = [8, 222], strides = [1, 1]} : vector<8x256xf32> to vector<8x222xf32>
    %c7_573 = arith.constant 7 : index
    %c2_574 = arith.constant 2 : index
    %1524 = memref.load %arg4[%c7_573, %c2_574] : memref<8x36xf32, #tpu.memory_space<smem>>
    %1525 = vector.broadcast %1524 : f32 to vector<8x222xf32>
    %1526 = arith.mulf %1523, %1525 : vector<8x222xf32>
    %1527 = arith.addf %1522, %1526 : vector<8x222xf32>
    %1528 = vector.extract_strided_slice %204 {offsets = [0, 16], sizes = [8, 222], strides = [1, 1]} : vector<8x256xf32> to vector<8x222xf32>
    %c7_575 = arith.constant 7 : index
    %c3_576 = arith.constant 3 : index
    %1529 = memref.load %arg4[%c7_575, %c3_576] : memref<8x36xf32, #tpu.memory_space<smem>>
    %1530 = vector.broadcast %1529 : f32 to vector<8x222xf32>
    %1531 = arith.mulf %1528, %1530 : vector<8x222xf32>
    %1532 = arith.addf %1527, %1531 : vector<8x222xf32>
    %1533 = vector.extract_strided_slice %204 {offsets = [0, 17], sizes = [8, 222], strides = [1, 1]} : vector<8x256xf32> to vector<8x222xf32>
    %c7_577 = arith.constant 7 : index
    %c4_578 = arith.constant 4 : index
    %1534 = memref.load %arg4[%c7_577, %c4_578] : memref<8x36xf32, #tpu.memory_space<smem>>
    %1535 = vector.broadcast %1534 : f32 to vector<8x222xf32>
    %1536 = arith.mulf %1533, %1535 : vector<8x222xf32>
    %1537 = arith.addf %1532, %1536 : vector<8x222xf32>
    %1538 = vector.extract_strided_slice %204 {offsets = [0, 18], sizes = [8, 222], strides = [1, 1]} : vector<8x256xf32> to vector<8x222xf32>
    %c7_579 = arith.constant 7 : index
    %c5_580 = arith.constant 5 : index
    %1539 = memref.load %arg4[%c7_579, %c5_580] : memref<8x36xf32, #tpu.memory_space<smem>>
    %1540 = vector.broadcast %1539 : f32 to vector<8x222xf32>
    %1541 = arith.mulf %1538, %1540 : vector<8x222xf32>
    %1542 = arith.addf %1537, %1541 : vector<8x222xf32>
    %1543 = vector.extract_strided_slice %204 {offsets = [0, 32], sizes = [8, 222], strides = [1, 1]} : vector<8x256xf32> to vector<8x222xf32>
    %c7_581 = arith.constant 7 : index
    %c6_582 = arith.constant 6 : index
    %1544 = memref.load %arg4[%c7_581, %c6_582] : memref<8x36xf32, #tpu.memory_space<smem>>
    %1545 = vector.broadcast %1544 : f32 to vector<8x222xf32>
    %1546 = arith.mulf %1543, %1545 : vector<8x222xf32>
    %1547 = arith.addf %1542, %1546 : vector<8x222xf32>
    %1548 = vector.extract_strided_slice %204 {offsets = [0, 33], sizes = [8, 222], strides = [1, 1]} : vector<8x256xf32> to vector<8x222xf32>
    %c7_583 = arith.constant 7 : index
    %c7_584 = arith.constant 7 : index
    %1549 = memref.load %arg4[%c7_583, %c7_584] : memref<8x36xf32, #tpu.memory_space<smem>>
    %1550 = vector.broadcast %1549 : f32 to vector<8x222xf32>
    %1551 = arith.mulf %1548, %1550 : vector<8x222xf32>
    %1552 = arith.addf %1547, %1551 : vector<8x222xf32>
    %1553 = vector.extract_strided_slice %204 {offsets = [0, 34], sizes = [8, 222], strides = [1, 1]} : vector<8x256xf32> to vector<8x222xf32>
    %c7_585 = arith.constant 7 : index
    %c8_586 = arith.constant 8 : index
    %1554 = memref.load %arg4[%c7_585, %c8_586] : memref<8x36xf32, #tpu.memory_space<smem>>
    %1555 = vector.broadcast %1554 : f32 to vector<8x222xf32>
    %1556 = arith.mulf %1553, %1555 : vector<8x222xf32>
    %1557 = arith.addf %1552, %1556 : vector<8x222xf32>
    %1558 = vector.extract_strided_slice %211 {offsets = [0, 0], sizes = [8, 222], strides = [1, 1]} : vector<8x256xf32> to vector<8x222xf32>
    %c7_587 = arith.constant 7 : index
    %c9_588 = arith.constant 9 : index
    %1559 = memref.load %arg4[%c7_587, %c9_588] : memref<8x36xf32, #tpu.memory_space<smem>>
    %1560 = vector.broadcast %1559 : f32 to vector<8x222xf32>
    %1561 = arith.mulf %1558, %1560 : vector<8x222xf32>
    %1562 = arith.addf %1557, %1561 : vector<8x222xf32>
    %1563 = vector.extract_strided_slice %211 {offsets = [0, 1], sizes = [8, 222], strides = [1, 1]} : vector<8x256xf32> to vector<8x222xf32>
    %c7_589 = arith.constant 7 : index
    %c10_590 = arith.constant 10 : index
    %1564 = memref.load %arg4[%c7_589, %c10_590] : memref<8x36xf32, #tpu.memory_space<smem>>
    %1565 = vector.broadcast %1564 : f32 to vector<8x222xf32>
    %1566 = arith.mulf %1563, %1565 : vector<8x222xf32>
    %1567 = arith.addf %1562, %1566 : vector<8x222xf32>
    %1568 = vector.extract_strided_slice %211 {offsets = [0, 2], sizes = [8, 222], strides = [1, 1]} : vector<8x256xf32> to vector<8x222xf32>
    %c7_591 = arith.constant 7 : index
    %c11_592 = arith.constant 11 : index
    %1569 = memref.load %arg4[%c7_591, %c11_592] : memref<8x36xf32, #tpu.memory_space<smem>>
    %1570 = vector.broadcast %1569 : f32 to vector<8x222xf32>
    %1571 = arith.mulf %1568, %1570 : vector<8x222xf32>
    %1572 = arith.addf %1567, %1571 : vector<8x222xf32>
    %1573 = vector.extract_strided_slice %211 {offsets = [0, 16], sizes = [8, 222], strides = [1, 1]} : vector<8x256xf32> to vector<8x222xf32>
    %c7_593 = arith.constant 7 : index
    %c12_594 = arith.constant 12 : index
    %1574 = memref.load %arg4[%c7_593, %c12_594] : memref<8x36xf32, #tpu.memory_space<smem>>
    %1575 = vector.broadcast %1574 : f32 to vector<8x222xf32>
    %1576 = arith.mulf %1573, %1575 : vector<8x222xf32>
    %1577 = arith.addf %1572, %1576 : vector<8x222xf32>
    %1578 = vector.extract_strided_slice %211 {offsets = [0, 17], sizes = [8, 222], strides = [1, 1]} : vector<8x256xf32> to vector<8x222xf32>
    %c7_595 = arith.constant 7 : index
    %c13_596 = arith.constant 13 : index
    %1579 = memref.load %arg4[%c7_595, %c13_596] : memref<8x36xf32, #tpu.memory_space<smem>>
    %1580 = vector.broadcast %1579 : f32 to vector<8x222xf32>
    %1581 = arith.mulf %1578, %1580 : vector<8x222xf32>
    %1582 = arith.addf %1577, %1581 : vector<8x222xf32>
    %1583 = vector.extract_strided_slice %211 {offsets = [0, 18], sizes = [8, 222], strides = [1, 1]} : vector<8x256xf32> to vector<8x222xf32>
    %c7_597 = arith.constant 7 : index
    %c14_598 = arith.constant 14 : index
    %1584 = memref.load %arg4[%c7_597, %c14_598] : memref<8x36xf32, #tpu.memory_space<smem>>
    %1585 = vector.broadcast %1584 : f32 to vector<8x222xf32>
    %1586 = arith.mulf %1583, %1585 : vector<8x222xf32>
    %1587 = arith.addf %1582, %1586 : vector<8x222xf32>
    %1588 = vector.extract_strided_slice %211 {offsets = [0, 32], sizes = [8, 222], strides = [1, 1]} : vector<8x256xf32> to vector<8x222xf32>
    %c7_599 = arith.constant 7 : index
    %c15_600 = arith.constant 15 : index
    %1589 = memref.load %arg4[%c7_599, %c15_600] : memref<8x36xf32, #tpu.memory_space<smem>>
    %1590 = vector.broadcast %1589 : f32 to vector<8x222xf32>
    %1591 = arith.mulf %1588, %1590 : vector<8x222xf32>
    %1592 = arith.addf %1587, %1591 : vector<8x222xf32>
    %1593 = vector.extract_strided_slice %211 {offsets = [0, 33], sizes = [8, 222], strides = [1, 1]} : vector<8x256xf32> to vector<8x222xf32>
    %c7_601 = arith.constant 7 : index
    %c16_602 = arith.constant 16 : index
    %1594 = memref.load %arg4[%c7_601, %c16_602] : memref<8x36xf32, #tpu.memory_space<smem>>
    %1595 = vector.broadcast %1594 : f32 to vector<8x222xf32>
    %1596 = arith.mulf %1593, %1595 : vector<8x222xf32>
    %1597 = arith.addf %1592, %1596 : vector<8x222xf32>
    %1598 = vector.extract_strided_slice %211 {offsets = [0, 34], sizes = [8, 222], strides = [1, 1]} : vector<8x256xf32> to vector<8x222xf32>
    %c7_603 = arith.constant 7 : index
    %c17_604 = arith.constant 17 : index
    %1599 = memref.load %arg4[%c7_603, %c17_604] : memref<8x36xf32, #tpu.memory_space<smem>>
    %1600 = vector.broadcast %1599 : f32 to vector<8x222xf32>
    %1601 = arith.mulf %1598, %1600 : vector<8x222xf32>
    %1602 = arith.addf %1597, %1601 : vector<8x222xf32>
    %1603 = vector.extract_strided_slice %218 {offsets = [0, 0], sizes = [8, 222], strides = [1, 1]} : vector<8x256xf32> to vector<8x222xf32>
    %c7_605 = arith.constant 7 : index
    %c18_606 = arith.constant 18 : index
    %1604 = memref.load %arg4[%c7_605, %c18_606] : memref<8x36xf32, #tpu.memory_space<smem>>
    %1605 = vector.broadcast %1604 : f32 to vector<8x222xf32>
    %1606 = arith.mulf %1603, %1605 : vector<8x222xf32>
    %1607 = arith.addf %1602, %1606 : vector<8x222xf32>
    %1608 = vector.extract_strided_slice %218 {offsets = [0, 1], sizes = [8, 222], strides = [1, 1]} : vector<8x256xf32> to vector<8x222xf32>
    %c7_607 = arith.constant 7 : index
    %c19_608 = arith.constant 19 : index
    %1609 = memref.load %arg4[%c7_607, %c19_608] : memref<8x36xf32, #tpu.memory_space<smem>>
    %1610 = vector.broadcast %1609 : f32 to vector<8x222xf32>
    %1611 = arith.mulf %1608, %1610 : vector<8x222xf32>
    %1612 = arith.addf %1607, %1611 : vector<8x222xf32>
    %1613 = vector.extract_strided_slice %218 {offsets = [0, 2], sizes = [8, 222], strides = [1, 1]} : vector<8x256xf32> to vector<8x222xf32>
    %c7_609 = arith.constant 7 : index
    %c20_610 = arith.constant 20 : index
    %1614 = memref.load %arg4[%c7_609, %c20_610] : memref<8x36xf32, #tpu.memory_space<smem>>
    %1615 = vector.broadcast %1614 : f32 to vector<8x222xf32>
    %1616 = arith.mulf %1613, %1615 : vector<8x222xf32>
    %1617 = arith.addf %1612, %1616 : vector<8x222xf32>
    %1618 = vector.extract_strided_slice %218 {offsets = [0, 16], sizes = [8, 222], strides = [1, 1]} : vector<8x256xf32> to vector<8x222xf32>
    %c7_611 = arith.constant 7 : index
    %c21_612 = arith.constant 21 : index
    %1619 = memref.load %arg4[%c7_611, %c21_612] : memref<8x36xf32, #tpu.memory_space<smem>>
    %1620 = vector.broadcast %1619 : f32 to vector<8x222xf32>
    %1621 = arith.mulf %1618, %1620 : vector<8x222xf32>
    %1622 = arith.addf %1617, %1621 : vector<8x222xf32>
    %1623 = vector.extract_strided_slice %218 {offsets = [0, 17], sizes = [8, 222], strides = [1, 1]} : vector<8x256xf32> to vector<8x222xf32>
    %c7_613 = arith.constant 7 : index
    %c22_614 = arith.constant 22 : index
    %1624 = memref.load %arg4[%c7_613, %c22_614] : memref<8x36xf32, #tpu.memory_space<smem>>
    %1625 = vector.broadcast %1624 : f32 to vector<8x222xf32>
    %1626 = arith.mulf %1623, %1625 : vector<8x222xf32>
    %1627 = arith.addf %1622, %1626 : vector<8x222xf32>
    %1628 = vector.extract_strided_slice %218 {offsets = [0, 18], sizes = [8, 222], strides = [1, 1]} : vector<8x256xf32> to vector<8x222xf32>
    %c7_615 = arith.constant 7 : index
    %c23_616 = arith.constant 23 : index
    %1629 = memref.load %arg4[%c7_615, %c23_616] : memref<8x36xf32, #tpu.memory_space<smem>>
    %1630 = vector.broadcast %1629 : f32 to vector<8x222xf32>
    %1631 = arith.mulf %1628, %1630 : vector<8x222xf32>
    %1632 = arith.addf %1627, %1631 : vector<8x222xf32>
    %1633 = vector.extract_strided_slice %218 {offsets = [0, 32], sizes = [8, 222], strides = [1, 1]} : vector<8x256xf32> to vector<8x222xf32>
    %c7_617 = arith.constant 7 : index
    %c24_618 = arith.constant 24 : index
    %1634 = memref.load %arg4[%c7_617, %c24_618] : memref<8x36xf32, #tpu.memory_space<smem>>
    %1635 = vector.broadcast %1634 : f32 to vector<8x222xf32>
    %1636 = arith.mulf %1633, %1635 : vector<8x222xf32>
    %1637 = arith.addf %1632, %1636 : vector<8x222xf32>
    %1638 = vector.extract_strided_slice %218 {offsets = [0, 33], sizes = [8, 222], strides = [1, 1]} : vector<8x256xf32> to vector<8x222xf32>
    %c7_619 = arith.constant 7 : index
    %c25_620 = arith.constant 25 : index
    %1639 = memref.load %arg4[%c7_619, %c25_620] : memref<8x36xf32, #tpu.memory_space<smem>>
    %1640 = vector.broadcast %1639 : f32 to vector<8x222xf32>
    %1641 = arith.mulf %1638, %1640 : vector<8x222xf32>
    %1642 = arith.addf %1637, %1641 : vector<8x222xf32>
    %1643 = vector.extract_strided_slice %218 {offsets = [0, 34], sizes = [8, 222], strides = [1, 1]} : vector<8x256xf32> to vector<8x222xf32>
    %c7_621 = arith.constant 7 : index
    %c26_622 = arith.constant 26 : index
    %1644 = memref.load %arg4[%c7_621, %c26_622] : memref<8x36xf32, #tpu.memory_space<smem>>
    %1645 = vector.broadcast %1644 : f32 to vector<8x222xf32>
    %1646 = arith.mulf %1643, %1645 : vector<8x222xf32>
    %1647 = arith.addf %1642, %1646 : vector<8x222xf32>
    %1648 = vector.extract_strided_slice %225 {offsets = [0, 0], sizes = [8, 222], strides = [1, 1]} : vector<8x256xf32> to vector<8x222xf32>
    %c7_623 = arith.constant 7 : index
    %c27_624 = arith.constant 27 : index
    %1649 = memref.load %arg4[%c7_623, %c27_624] : memref<8x36xf32, #tpu.memory_space<smem>>
    %1650 = vector.broadcast %1649 : f32 to vector<8x222xf32>
    %1651 = arith.mulf %1648, %1650 : vector<8x222xf32>
    %1652 = arith.addf %1647, %1651 : vector<8x222xf32>
    %1653 = vector.extract_strided_slice %225 {offsets = [0, 1], sizes = [8, 222], strides = [1, 1]} : vector<8x256xf32> to vector<8x222xf32>
    %c7_625 = arith.constant 7 : index
    %c28_626 = arith.constant 28 : index
    %1654 = memref.load %arg4[%c7_625, %c28_626] : memref<8x36xf32, #tpu.memory_space<smem>>
    %1655 = vector.broadcast %1654 : f32 to vector<8x222xf32>
    %1656 = arith.mulf %1653, %1655 : vector<8x222xf32>
    %1657 = arith.addf %1652, %1656 : vector<8x222xf32>
    %1658 = vector.extract_strided_slice %225 {offsets = [0, 2], sizes = [8, 222], strides = [1, 1]} : vector<8x256xf32> to vector<8x222xf32>
    %c7_627 = arith.constant 7 : index
    %c29_628 = arith.constant 29 : index
    %1659 = memref.load %arg4[%c7_627, %c29_628] : memref<8x36xf32, #tpu.memory_space<smem>>
    %1660 = vector.broadcast %1659 : f32 to vector<8x222xf32>
    %1661 = arith.mulf %1658, %1660 : vector<8x222xf32>
    %1662 = arith.addf %1657, %1661 : vector<8x222xf32>
    %1663 = vector.extract_strided_slice %225 {offsets = [0, 16], sizes = [8, 222], strides = [1, 1]} : vector<8x256xf32> to vector<8x222xf32>
    %c7_629 = arith.constant 7 : index
    %c30_630 = arith.constant 30 : index
    %1664 = memref.load %arg4[%c7_629, %c30_630] : memref<8x36xf32, #tpu.memory_space<smem>>
    %1665 = vector.broadcast %1664 : f32 to vector<8x222xf32>
    %1666 = arith.mulf %1663, %1665 : vector<8x222xf32>
    %1667 = arith.addf %1662, %1666 : vector<8x222xf32>
    %1668 = vector.extract_strided_slice %225 {offsets = [0, 17], sizes = [8, 222], strides = [1, 1]} : vector<8x256xf32> to vector<8x222xf32>
    %c7_631 = arith.constant 7 : index
    %c31_632 = arith.constant 31 : index
    %1669 = memref.load %arg4[%c7_631, %c31_632] : memref<8x36xf32, #tpu.memory_space<smem>>
    %1670 = vector.broadcast %1669 : f32 to vector<8x222xf32>
    %1671 = arith.mulf %1668, %1670 : vector<8x222xf32>
    %1672 = arith.addf %1667, %1671 : vector<8x222xf32>
    %1673 = vector.extract_strided_slice %225 {offsets = [0, 18], sizes = [8, 222], strides = [1, 1]} : vector<8x256xf32> to vector<8x222xf32>
    %c7_633 = arith.constant 7 : index
    %c32_634 = arith.constant 32 : index
    %1674 = memref.load %arg4[%c7_633, %c32_634] : memref<8x36xf32, #tpu.memory_space<smem>>
    %1675 = vector.broadcast %1674 : f32 to vector<8x222xf32>
    %1676 = arith.mulf %1673, %1675 : vector<8x222xf32>
    %1677 = arith.addf %1672, %1676 : vector<8x222xf32>
    %1678 = vector.extract_strided_slice %225 {offsets = [0, 32], sizes = [8, 222], strides = [1, 1]} : vector<8x256xf32> to vector<8x222xf32>
    %c7_635 = arith.constant 7 : index
    %c33_636 = arith.constant 33 : index
    %1679 = memref.load %arg4[%c7_635, %c33_636] : memref<8x36xf32, #tpu.memory_space<smem>>
    %1680 = vector.broadcast %1679 : f32 to vector<8x222xf32>
    %1681 = arith.mulf %1678, %1680 : vector<8x222xf32>
    %1682 = arith.addf %1677, %1681 : vector<8x222xf32>
    %1683 = vector.extract_strided_slice %225 {offsets = [0, 33], sizes = [8, 222], strides = [1, 1]} : vector<8x256xf32> to vector<8x222xf32>
    %c7_637 = arith.constant 7 : index
    %c34_638 = arith.constant 34 : index
    %1684 = memref.load %arg4[%c7_637, %c34_638] : memref<8x36xf32, #tpu.memory_space<smem>>
    %1685 = vector.broadcast %1684 : f32 to vector<8x222xf32>
    %1686 = arith.mulf %1683, %1685 : vector<8x222xf32>
    %1687 = arith.addf %1682, %1686 : vector<8x222xf32>
    %1688 = vector.extract_strided_slice %225 {offsets = [0, 34], sizes = [8, 222], strides = [1, 1]} : vector<8x256xf32> to vector<8x222xf32>
    %c7_639 = arith.constant 7 : index
    %c35_640 = arith.constant 35 : index
    %1689 = memref.load %arg4[%c7_639, %c35_640] : memref<8x36xf32, #tpu.memory_space<smem>>
    %1690 = vector.broadcast %1689 : f32 to vector<8x222xf32>
    %1691 = arith.mulf %1688, %1690 : vector<8x222xf32>
    %1692 = arith.addf %1687, %1691 : vector<8x222xf32>
    %c7_641 = arith.constant 7 : index
    %1693 = memref.load %arg5[%c7_641] : memref<8xf32, #tpu.memory_space<smem>>
    %1694 = vector.broadcast %1693 : f32 to vector<8x222xf32>
    %1695 = arith.addf %1692, %1694 : vector<8x222xf32>
    %cst_642 = arith.constant 0.000000e+00 : f32
    %1696 = vector.broadcast %cst_642 : f32 to vector<8x222xf32>
    %1697 = arith.maximumf %1695, %1696 : vector<8x222xf32>
    %1698 = vector.extract_strided_slice %409 {offsets = [0, 0], sizes = [8, 221], strides = [1, 1]} : vector<8x222xf32> to vector<8x221xf32>
    %1699 = vector.extract_strided_slice %409 {offsets = [0, 1], sizes = [8, 221], strides = [1, 1]} : vector<8x222xf32> to vector<8x221xf32>
    %1700 = arith.maximumf %1698, %1699 : vector<8x221xf32>
    %1701 = vector.extract_strided_slice %1700 {offsets = [0, 0], sizes = [8, 205], strides = [1, 1]} : vector<8x221xf32> to vector<8x205xf32>
    %1702 = vector.extract_strided_slice %1700 {offsets = [0, 16], sizes = [8, 205], strides = [1, 1]} : vector<8x221xf32> to vector<8x205xf32>
    %1703 = arith.maximumf %1701, %1702 : vector<8x205xf32>
    %c0_643 = arith.constant 0 : index
    %c0_644 = arith.constant 0 : index
    %c0_645 = arith.constant 0 : index
    %1704 = vector.load %arg7[%c0_643, %c0_644, %c0_645] : memref<8x205x32xf32, #tpu.memory_space<vmem>>, vector<1x205x32xf32>
    %1705 = vector.shape_cast %1704 : vector<1x205x32xf32> to vector<205x32xf32>
    %cst_646 = arith.constant dense<0.000000e+00> : vector<8x32xf32>
    %1706 = tpu.matmul %1703, %1705, %cst_646 {dimension_numbers = #tpu.dot_dimension_numbers<[1], [0], [0], [1], [0, 0, 1, 1], [], []>} : vector<8x205xf32>, vector<205x32xf32>, vector<8x32xf32> -> vector<8x32xf32>
    %1707 = vector.extract_strided_slice %593 {offsets = [0, 0], sizes = [8, 221], strides = [1, 1]} : vector<8x222xf32> to vector<8x221xf32>
    %1708 = vector.extract_strided_slice %593 {offsets = [0, 1], sizes = [8, 221], strides = [1, 1]} : vector<8x222xf32> to vector<8x221xf32>
    %1709 = arith.maximumf %1707, %1708 : vector<8x221xf32>
    %1710 = vector.extract_strided_slice %1709 {offsets = [0, 0], sizes = [8, 205], strides = [1, 1]} : vector<8x221xf32> to vector<8x205xf32>
    %1711 = vector.extract_strided_slice %1709 {offsets = [0, 16], sizes = [8, 205], strides = [1, 1]} : vector<8x221xf32> to vector<8x205xf32>
    %1712 = arith.maximumf %1710, %1711 : vector<8x205xf32>
    %c1_647 = arith.constant 1 : index
    %c0_648 = arith.constant 0 : index
    %c0_649 = arith.constant 0 : index
    %1713 = vector.load %arg7[%c1_647, %c0_648, %c0_649] : memref<8x205x32xf32, #tpu.memory_space<vmem>>, vector<1x205x32xf32>
    %1714 = vector.shape_cast %1713 : vector<1x205x32xf32> to vector<205x32xf32>
    %cst_650 = arith.constant dense<0.000000e+00> : vector<8x32xf32>
    %1715 = tpu.matmul %1712, %1714, %cst_650 {dimension_numbers = #tpu.dot_dimension_numbers<[1], [0], [0], [1], [0, 0, 1, 1], [], []>} : vector<8x205xf32>, vector<205x32xf32>, vector<8x32xf32> -> vector<8x32xf32>
    %1716 = arith.addf %1706, %1715 : vector<8x32xf32>
    %1717 = vector.extract_strided_slice %777 {offsets = [0, 0], sizes = [8, 221], strides = [1, 1]} : vector<8x222xf32> to vector<8x221xf32>
    %1718 = vector.extract_strided_slice %777 {offsets = [0, 1], sizes = [8, 221], strides = [1, 1]} : vector<8x222xf32> to vector<8x221xf32>
    %1719 = arith.maximumf %1717, %1718 : vector<8x221xf32>
    %1720 = vector.extract_strided_slice %1719 {offsets = [0, 0], sizes = [8, 205], strides = [1, 1]} : vector<8x221xf32> to vector<8x205xf32>
    %1721 = vector.extract_strided_slice %1719 {offsets = [0, 16], sizes = [8, 205], strides = [1, 1]} : vector<8x221xf32> to vector<8x205xf32>
    %1722 = arith.maximumf %1720, %1721 : vector<8x205xf32>
    %c2_651 = arith.constant 2 : index
    %c0_652 = arith.constant 0 : index
    %c0_653 = arith.constant 0 : index
    %1723 = vector.load %arg7[%c2_651, %c0_652, %c0_653] : memref<8x205x32xf32, #tpu.memory_space<vmem>>, vector<1x205x32xf32>
    %1724 = vector.shape_cast %1723 : vector<1x205x32xf32> to vector<205x32xf32>
    %cst_654 = arith.constant dense<0.000000e+00> : vector<8x32xf32>
    %1725 = tpu.matmul %1722, %1724, %cst_654 {dimension_numbers = #tpu.dot_dimension_numbers<[1], [0], [0], [1], [0, 0, 1, 1], [], []>} : vector<8x205xf32>, vector<205x32xf32>, vector<8x32xf32> -> vector<8x32xf32>
    %1726 = arith.addf %1716, %1725 : vector<8x32xf32>
    %1727 = vector.extract_strided_slice %961 {offsets = [0, 0], sizes = [8, 221], strides = [1, 1]} : vector<8x222xf32> to vector<8x221xf32>
    %1728 = vector.extract_strided_slice %961 {offsets = [0, 1], sizes = [8, 221], strides = [1, 1]} : vector<8x222xf32> to vector<8x221xf32>
    %1729 = arith.maximumf %1727, %1728 : vector<8x221xf32>
    %1730 = vector.extract_strided_slice %1729 {offsets = [0, 0], sizes = [8, 205], strides = [1, 1]} : vector<8x221xf32> to vector<8x205xf32>
    %1731 = vector.extract_strided_slice %1729 {offsets = [0, 16], sizes = [8, 205], strides = [1, 1]} : vector<8x221xf32> to vector<8x205xf32>
    %1732 = arith.maximumf %1730, %1731 : vector<8x205xf32>
    %c3_655 = arith.constant 3 : index
    %c0_656 = arith.constant 0 : index
    %c0_657 = arith.constant 0 : index
    %1733 = vector.load %arg7[%c3_655, %c0_656, %c0_657] : memref<8x205x32xf32, #tpu.memory_space<vmem>>, vector<1x205x32xf32>
    %1734 = vector.shape_cast %1733 : vector<1x205x32xf32> to vector<205x32xf32>
    %cst_658 = arith.constant dense<0.000000e+00> : vector<8x32xf32>
    %1735 = tpu.matmul %1732, %1734, %cst_658 {dimension_numbers = #tpu.dot_dimension_numbers<[1], [0], [0], [1], [0, 0, 1, 1], [], []>} : vector<8x205xf32>, vector<205x32xf32>, vector<8x32xf32> -> vector<8x32xf32>
    %1736 = arith.addf %1726, %1735 : vector<8x32xf32>
    %1737 = vector.extract_strided_slice %1145 {offsets = [0, 0], sizes = [8, 221], strides = [1, 1]} : vector<8x222xf32> to vector<8x221xf32>
    %1738 = vector.extract_strided_slice %1145 {offsets = [0, 1], sizes = [8, 221], strides = [1, 1]} : vector<8x222xf32> to vector<8x221xf32>
    %1739 = arith.maximumf %1737, %1738 : vector<8x221xf32>
    %1740 = vector.extract_strided_slice %1739 {offsets = [0, 0], sizes = [8, 205], strides = [1, 1]} : vector<8x221xf32> to vector<8x205xf32>
    %1741 = vector.extract_strided_slice %1739 {offsets = [0, 16], sizes = [8, 205], strides = [1, 1]} : vector<8x221xf32> to vector<8x205xf32>
    %1742 = arith.maximumf %1740, %1741 : vector<8x205xf32>
    %c4_659 = arith.constant 4 : index
    %c0_660 = arith.constant 0 : index
    %c0_661 = arith.constant 0 : index
    %1743 = vector.load %arg7[%c4_659, %c0_660, %c0_661] : memref<8x205x32xf32, #tpu.memory_space<vmem>>, vector<1x205x32xf32>
    %1744 = vector.shape_cast %1743 : vector<1x205x32xf32> to vector<205x32xf32>
    %cst_662 = arith.constant dense<0.000000e+00> : vector<8x32xf32>
    %1745 = tpu.matmul %1742, %1744, %cst_662 {dimension_numbers = #tpu.dot_dimension_numbers<[1], [0], [0], [1], [0, 0, 1, 1], [], []>} : vector<8x205xf32>, vector<205x32xf32>, vector<8x32xf32> -> vector<8x32xf32>
    %1746 = arith.addf %1736, %1745 : vector<8x32xf32>
    %1747 = vector.extract_strided_slice %1329 {offsets = [0, 0], sizes = [8, 221], strides = [1, 1]} : vector<8x222xf32> to vector<8x221xf32>
    %1748 = vector.extract_strided_slice %1329 {offsets = [0, 1], sizes = [8, 221], strides = [1, 1]} : vector<8x222xf32> to vector<8x221xf32>
    %1749 = arith.maximumf %1747, %1748 : vector<8x221xf32>
    %1750 = vector.extract_strided_slice %1749 {offsets = [0, 0], sizes = [8, 205], strides = [1, 1]} : vector<8x221xf32> to vector<8x205xf32>
    %1751 = vector.extract_strided_slice %1749 {offsets = [0, 16], sizes = [8, 205], strides = [1, 1]} : vector<8x221xf32> to vector<8x205xf32>
    %1752 = arith.maximumf %1750, %1751 : vector<8x205xf32>
    %c5_663 = arith.constant 5 : index
    %c0_664 = arith.constant 0 : index
    %c0_665 = arith.constant 0 : index
    %1753 = vector.load %arg7[%c5_663, %c0_664, %c0_665] : memref<8x205x32xf32, #tpu.memory_space<vmem>>, vector<1x205x32xf32>
    %1754 = vector.shape_cast %1753 : vector<1x205x32xf32> to vector<205x32xf32>
    %cst_666 = arith.constant dense<0.000000e+00> : vector<8x32xf32>
    %1755 = tpu.matmul %1752, %1754, %cst_666 {dimension_numbers = #tpu.dot_dimension_numbers<[1], [0], [0], [1], [0, 0, 1, 1], [], []>} : vector<8x205xf32>, vector<205x32xf32>, vector<8x32xf32> -> vector<8x32xf32>
    %1756 = arith.addf %1746, %1755 : vector<8x32xf32>
    %1757 = vector.extract_strided_slice %1513 {offsets = [0, 0], sizes = [8, 221], strides = [1, 1]} : vector<8x222xf32> to vector<8x221xf32>
    %1758 = vector.extract_strided_slice %1513 {offsets = [0, 1], sizes = [8, 221], strides = [1, 1]} : vector<8x222xf32> to vector<8x221xf32>
    %1759 = arith.maximumf %1757, %1758 : vector<8x221xf32>
    %1760 = vector.extract_strided_slice %1759 {offsets = [0, 0], sizes = [8, 205], strides = [1, 1]} : vector<8x221xf32> to vector<8x205xf32>
    %1761 = vector.extract_strided_slice %1759 {offsets = [0, 16], sizes = [8, 205], strides = [1, 1]} : vector<8x221xf32> to vector<8x205xf32>
    %1762 = arith.maximumf %1760, %1761 : vector<8x205xf32>
    %c6_667 = arith.constant 6 : index
    %c0_668 = arith.constant 0 : index
    %c0_669 = arith.constant 0 : index
    %1763 = vector.load %arg7[%c6_667, %c0_668, %c0_669] : memref<8x205x32xf32, #tpu.memory_space<vmem>>, vector<1x205x32xf32>
    %1764 = vector.shape_cast %1763 : vector<1x205x32xf32> to vector<205x32xf32>
    %cst_670 = arith.constant dense<0.000000e+00> : vector<8x32xf32>
    %1765 = tpu.matmul %1762, %1764, %cst_670 {dimension_numbers = #tpu.dot_dimension_numbers<[1], [0], [0], [1], [0, 0, 1, 1], [], []>} : vector<8x205xf32>, vector<205x32xf32>, vector<8x32xf32> -> vector<8x32xf32>
    %1766 = arith.addf %1756, %1765 : vector<8x32xf32>
    %1767 = vector.extract_strided_slice %1697 {offsets = [0, 0], sizes = [8, 221], strides = [1, 1]} : vector<8x222xf32> to vector<8x221xf32>
    %1768 = vector.extract_strided_slice %1697 {offsets = [0, 1], sizes = [8, 221], strides = [1, 1]} : vector<8x222xf32> to vector<8x221xf32>
    %1769 = arith.maximumf %1767, %1768 : vector<8x221xf32>
    %1770 = vector.extract_strided_slice %1769 {offsets = [0, 0], sizes = [8, 205], strides = [1, 1]} : vector<8x221xf32> to vector<8x205xf32>
    %1771 = vector.extract_strided_slice %1769 {offsets = [0, 16], sizes = [8, 205], strides = [1, 1]} : vector<8x221xf32> to vector<8x205xf32>
    %1772 = arith.maximumf %1770, %1771 : vector<8x205xf32>
    %c7_671 = arith.constant 7 : index
    %c0_672 = arith.constant 0 : index
    %c0_673 = arith.constant 0 : index
    %1773 = vector.load %arg7[%c7_671, %c0_672, %c0_673] : memref<8x205x32xf32, #tpu.memory_space<vmem>>, vector<1x205x32xf32>
    %1774 = vector.shape_cast %1773 : vector<1x205x32xf32> to vector<205x32xf32>
    %cst_674 = arith.constant dense<0.000000e+00> : vector<8x32xf32>
    %1775 = tpu.matmul %1772, %1774, %cst_674 {dimension_numbers = #tpu.dot_dimension_numbers<[1], [0], [0], [1], [0, 0, 1, 1], [], []>} : vector<8x205xf32>, vector<205x32xf32>, vector<8x32xf32> -> vector<8x32xf32>
    %1776 = arith.addf %1766, %1775 : vector<8x32xf32>
    %c0_675 = arith.constant 0 : index
    %c0_676 = arith.constant 0 : index
    %1777 = vector.load %arg8[%c0_675, %c0_676] : memref<1x32xf32, #tpu.memory_space<vmem>>, vector<1x32xf32>
    %1778 = vector.broadcast %1777 : vector<1x32xf32> to vector<8x32xf32>
    %1779 = arith.addf %1776, %1778 : vector<8x32xf32>
    %cst_677 = arith.constant 0.000000e+00 : f32
    %1780 = vector.broadcast %cst_677 : f32 to vector<8x32xf32>
    %1781 = arith.maximumf %1779, %1780 : vector<8x32xf32>
    %c0_678 = arith.constant 0 : index
    %c0_679 = arith.constant 0 : index
    %1782 = vector.load %arg9[%c0_678, %c0_679] : memref<32x10xf32, #tpu.memory_space<vmem>>, vector<32x10xf32>
    %cst_680 = arith.constant dense<0.000000e+00> : vector<8x10xf32>
    %1783 = tpu.matmul %1781, %1782, %cst_680 {dimension_numbers = #tpu.dot_dimension_numbers<[1], [0], [0], [1], [0, 0, 1, 1], [], []>} : vector<8x32xf32>, vector<32x10xf32>, vector<8x10xf32> -> vector<8x10xf32>
    %c0_681 = arith.constant 0 : index
    %c0_682 = arith.constant 0 : index
    %1784 = vector.load %arg10[%c0_681, %c0_682] : memref<1x10xf32, #tpu.memory_space<vmem>>, vector<1x10xf32>
    %1785 = vector.broadcast %1784 : vector<1x10xf32> to vector<8x10xf32>
    %1786 = arith.addf %1783, %1785 : vector<8x10xf32>
    %c0_683 = arith.constant 0 : index
    %c0_684 = arith.constant 0 : index
    %1787 = vector.load %arg11[%c0_683, %c0_684] : memref<8x10xf32, #tpu.memory_space<vmem>>, vector<8x10xf32>
    tpu.vector_store %arg11[%c0_683, %c0_684], %1786 {strides = array<i32>} : memref<8x10xf32, #tpu.memory_space<vmem>>, vector<8x10xf32>,
    return
  }
  func.func @transform_0(%arg0: i32) -> (i32, i32) {
    %c0_i32 = arith.constant 0 : i32
    %c0_i32_0 = arith.constant 0 : i32
    return %arg0, %c0_i32 : i32, i32
  }
  func.func @transform_1(%arg0: i32) -> (i32, i32) {
    %c0_i32 = arith.constant 0 : i32
    %c0_i32_0 = arith.constant 0 : i32
    %c0_i32_1 = arith.constant 0 : i32
    return %c0_i32, %c0_i32_0 : i32, i32
  }
  func.func @transform_2(%arg0: i32) -> i32 {
    %c0_i32 = arith.constant 0 : i32
    %c0_i32_0 = arith.constant 0 : i32
    return %c0_i32 : i32
  }
  func.func @transform_3(%arg0: i32) -> (i32, i32) {
    %c0_i32 = arith.constant 0 : i32
    %c0_i32_0 = arith.constant 0 : i32
    %c0_i32_1 = arith.constant 0 : i32
    return %c0_i32, %c0_i32_0 : i32, i32
  }
  func.func @transform_4(%arg0: i32) -> i32 {
    %c0_i32 = arith.constant 0 : i32
    %c0_i32_0 = arith.constant 0 : i32
    return %c0_i32 : i32
  }
  func.func @transform_5(%arg0: i32) -> (i32, i32) {
    %c0_i32 = arith.constant 0 : i32
    %c0_i32_0 = arith.constant 0 : i32
    %c0_i32_1 = arith.constant 0 : i32
    return %c0_i32, %c0_i32_0 : i32, i32
  }
  func.func @transform_6(%arg0: i32) -> (i32, i32, i32) {
    %c0_i32 = arith.constant 0 : i32
    %c0_i32_0 = arith.constant 0 : i32
    %c0_i32_1 = arith.constant 0 : i32
    %c0_i32_2 = arith.constant 0 : i32
    return %c0_i32, %c0_i32_0, %c0_i32_1 : i32, i32, i32
  }
  func.func @transform_7(%arg0: i32) -> (i32, i32) {
    %c0_i32 = arith.constant 0 : i32
    %c0_i32_0 = arith.constant 0 : i32
    %c0_i32_1 = arith.constant 0 : i32
    return %c0_i32, %c0_i32_0 : i32, i32
  }
  func.func @transform_8(%arg0: i32) -> (i32, i32) {
    %c0_i32 = arith.constant 0 : i32
    %c0_i32_0 = arith.constant 0 : i32
    %c0_i32_1 = arith.constant 0 : i32
    return %c0_i32, %c0_i32_0 : i32, i32
  }
  func.func @transform_9(%arg0: i32) -> (i32, i32) {
    %c0_i32 = arith.constant 0 : i32
    %c0_i32_0 = arith.constant 0 : i32
    %c0_i32_1 = arith.constant 0 : i32
    return %c0_i32, %c0_i32_0 : i32, i32
  }
  func.func @transform_10(%arg0: i32) -> (i32, i32) {
    %c0_i32 = arith.constant 0 : i32
    %c0_i32_0 = arith.constant 0 : i32
    return %arg0, %c0_i32 : i32, i32
  }
}

</mosaic_0001>

<llo_original>
// kernel: net_forward.1
$region0: #{net_forward.1}
  #allocation0 [shape = 'u32[]', space=smem, size = 0x4, offset = 0x4, fixed_abs, tag = 'smem constant byte address 0x4 - core index']
  #allocation1 [shape = 'u32[144,128]{1,0:T(1,128)}', space=vmem, size = 0x12000, scoped, tag = 'internal scratch']
  %s0 = inlined_call_operand.vmem [shape: f32[8,900], index: 0, kind: input, shape index: {}]
  %s1 = inlined_call_operand.vmem [shape: f32[4,9], index: 1, kind: input, shape index: {}]
  %s2 = inlined_call_operand.vmem [shape: f32[4], index: 2, kind: input, shape index: {}]
  %s3 = inlined_call_operand.vmem [shape: f32[8,36], index: 3, kind: input, shape index: {}]
  %s4 = inlined_call_operand.vmem [shape: f32[8], index: 4, kind: input, shape index: {}]
  %s5 = inlined_call_operand.vmem [shape: f32[807,256], index: 5, kind: input, shape index: {}]
  %s6 = inlined_call_operand.vmem [shape: f32[8,205,32], index: 6, kind: input, shape index: {}]
  %s7 = inlined_call_operand.vmem [shape: f32[1,32], index: 7, kind: input, shape index: {}]
  %s8 = inlined_call_operand.vmem [shape: f32[32,10], index: 8, kind: input, shape index: {}]
  %s9 = inlined_call_operand.vmem [shape: f32[1,10], index: 9, kind: input, shape index: {}]
  %s10 = inlined_call_operand.vmem [shape: f32[8,10], index: 10, kind: output, shape index: {}]
  %s11 = sld [smem:[#allocation0]]
  $region66: #{net_forward.1} parent=0
    _
  %s13 = ssub.s32 1, %s11
  %s14 = scalar_select 0, %s13, %s11
  $region1: #{net_forward.1} parent=0
    #allocation2 [shape = 'u8[2048]{0}', space=smem, size = 0x800, scoped, tag = 'input window, operand 1, single buffered']
    #allocation3 [shape = 's32[1]{0}', space=sflag, size = 0x4, scoped, tag = 'scoped memory for net_forward.1']
    #allocation4 [shape = 'u8[512]{0}', space=smem, size = 0x200, scoped, tag = 'input window, operand 2, single buffered']
    #allocation5 [shape = 's32[1]{0}', space=sflag, size = 0x4, scoped, tag = 'scoped memory for net_forward.1']
    #allocation6 [shape = 'u8[4096]{0}', space=smem, size = 0x1000, scoped, tag = 'input window, operand 3, single buffered']
    #allocation7 [shape = 'u8[512]{0}', space=smem, size = 0x200, scoped, tag = 'input window, operand 4, single buffered']
    #allocation8 [shape = 's32[1]{0}', space=sflag, size = 0x4, scoped, tag = 'scoped memory for net_forward.1']
    %15 = vsyncpa [#allocation3], 0
    %16 = vsyncpa [#allocation5], 0
    %17 = vsyncpa [#allocation8], 0
    // Predicated region
    $region2: #{net_forward.1} parent=1 // pred_check
      _
    $region3: #{net_forward.1} parent=1 // pred_check_branch
      %19 = sbr.rel (0) target = $region5
    $region4: #{net_forward.1} parent=1 // pred_region
      _
    $region5: #{net_forward.1} parent=1 // pred_fallthru
      _
    // Predicated region
    $region6: #{net_forward.1} parent=1 // pred_check
      _
    $region7: #{net_forward.1} parent=1 // pred_check_branch
      %21 = sbr.rel (0) target = $region9
    $region8: #{net_forward.1} parent=1 // pred_region
      %s23 = ssub.s32 64, 64
      %24 = vsyncadd [#allocation3], %s23
      %s26 = sshll.u32 %s1, 4
      %s27 = int_to_ptr.vmem [resolvable:$true] %s26
      %29 = dma.vmem_to_smem %s27, 64, [#allocation2], [#allocation3]
    $region9: #{net_forward.1} parent=1 // pred_fallthru
      _
    // Predicated region
    $region10: #{net_forward.1} parent=1 // pred_check
      _
    $region11: #{net_forward.1} parent=1 // pred_check_branch
      %31 = sbr.rel (0) target = $region13
    $region12: #{net_forward.1} parent=1 // pred_region
      %s33 = ssub.s32 16, 16
      %34 = vsyncadd [#allocation5], %s33
      %s36 = sshll.u32 %s2, 4
      %s37 = int_to_ptr.vmem [resolvable:$true] %s36
      %39 = dma.vmem_to_smem %s37, 16, [#allocation4], [#allocation5]
    $region13: #{net_forward.1} parent=1 // pred_fallthru
      _
    // Predicated region
    $region14: #{net_forward.1} parent=1 // pred_check
      _
    $region15: #{net_forward.1} parent=1 // pred_check_branch
      %41 = sbr.rel (0) target = $region17
    $region16: #{net_forward.1} parent=1 // pred_region
      %s43 = ssub.s32 128, 128
      %44 = vsyncadd [#allocation5], %s43
      %s46 = sshll.u32 %s3, 4
      %s47 = int_to_ptr.vmem [resolvable:$true] %s46
      %49 = dma.vmem_to_smem %s47, 128, [#allocation6], [#allocation5]
    $region17: #{net_forward.1} parent=1 // pred_fallthru
      _
    // Predicated region
    $region18: #{net_forward.1} parent=1 // pred_check
      _
    $region19: #{net_forward.1} parent=1 // pred_check_branch
      %51 = sbr.rel (0) target = $region21
    $region20: #{net_forward.1} parent=1 // pred_region
      %s53 = ssub.s32 16, 16
      %54 = vsyncadd [#allocation8], %s53
      %s56 = sshll.u32 %s4, 4
      %s57 = int_to_ptr.vmem [resolvable:$true] %s56
      %59 = dma.vmem_to_smem %s57, 16, [#allocation7], [#allocation8]
    $region21: #{net_forward.1} parent=1 // pred_fallthru
      _
    // Predicated region
    $region22: #{net_forward.1} parent=1 // pred_check
      _
    $region23: #{net_forward.1} parent=1 // pred_check_branch
      %61 = sbr.rel (0) target = $region25
    $region24: #{net_forward.1} parent=1 // pred_region
      _
    $region25: #{net_forward.1} parent=1 // pred_fallthru
      _
    // Predicated region
    $region26: #{net_forward.1} parent=1 // pred_check
      _
    $region27: #{net_forward.1} parent=1 // pred_check_branch
      %63 = sbr.rel (0) target = $region29
    $region28: #{net_forward.1} parent=1 // pred_region
      _
    $region29: #{net_forward.1} parent=1 // pred_fallthru
      _
    // Predicated region
    $region30: #{net_forward.1} parent=1 // pred_check
      _
    $region31: #{net_forward.1} parent=1 // pred_check_branch
      %65 = sbr.rel (0) target = $region33
    $region32: #{net_forward.1} parent=1 // pred_region
      _
    $region33: #{net_forward.1} parent=1 // pred_fallthru
      _
    // Predicated region
    $region34: #{net_forward.1} parent=1 // pred_check
      _
    $region35: #{net_forward.1} parent=1 // pred_check_branch
      %67 = sbr.rel (0) target = $region37
    $region36: #{net_forward.1} parent=1 // pred_region
      _
    $region37: #{net_forward.1} parent=1 // pred_fallthru
      _
    // Predicated region
    $region38: #{net_forward.1} parent=1 // pred_check
      _
    $region39: #{net_forward.1} parent=1 // pred_check_branch
      %69 = sbr.rel (0) target = $region41
    $region40: #{net_forward.1} parent=1 // pred_region
      _
    $region41: #{net_forward.1} parent=1 // pred_fallthru
      _
    // Predicated region
    $region42: #{net_forward.1} parent=1 // pred_check
      _
    $region43: #{net_forward.1} parent=1 // pred_check_branch
      %71 = sbr.rel (0) target = $region45
    $region44: #{net_forward.1} parent=1 // pred_region
      %72 = dma.done [#allocation3], 64
    $region45: #{net_forward.1} parent=1 // pred_fallthru
      _
    // Predicated region
    $region46: #{net_forward.1} parent=1 // pred_check
      _
    $region47: #{net_forward.1} parent=1 // pred_check_branch
      %74 = sbr.rel (0) target = $region49
    $region48: #{net_forward.1} parent=1 // pred_region
      %75 = dma.done [#allocation5], 16
    $region49: #{net_forward.1} parent=1 // pred_fallthru
      _
    // Predicated region
    $region50: #{net_forward.1} parent=1 // pred_check
      _
    $region51: #{net_forward.1} parent=1 // pred_check_branch
      %77 = sbr.rel (0) target = $region53
    $region52: #{net_forward.1} parent=1 // pred_region
      %78 = dma.done [#allocation5], 128
    $region53: #{net_forward.1} parent=1 // pred_fallthru
      _
    // Predicated region
    $region54: #{net_forward.1} parent=1 // pred_check
      _
    $region55: #{net_forward.1} parent=1 // pred_check_branch
      %80 = sbr.rel (0) target = $region57
    $region56: #{net_forward.1} parent=1 // pred_region
      %81 = dma.done [#allocation8], 16
    $region57: #{net_forward.1} parent=1 // pred_fallthru
      _
    %82 = sfence
    %v83 = vld [vmem:[%s0] sm:$0xff]
    %v84 = vld [vmem:[%s0 + $0x8] sm:$0xff]
    %v85 = vld [vmem:[%s0 + $0x10] sm:$0xff]
    %v86 = vld [vmem:[%s0 + $0x18] sm:$0xff]
    %v87 = vld [vmem:[%s0 + $0x20] sm:$0xff]
    %v88 = vld [vmem:[%s0 + $0x28] sm:$0xff]
    %v89 = vld [vmem:[%s0 + $0x30] sm:$0xff]
    %v90 = vld [vmem:[%s0 + $0x38] sm:$0xff]
    %v91 = vld [vmem:[%s5] sm:$0xff]
    %v92 = vld [vmem:[%s5 + $0x8] sm:$0xff]
    %v93 = vld [vmem:[%s5 + $0x10] sm:$0xff]
    %v94 = vld [vmem:[%s5 + $0x18] sm:$0xff]
    %v95 = vld [vmem:[%s5 + $0x20] sm:$0xff]
    %v96 = vld [vmem:[%s5 + $0x28] sm:$0xff]
    %v97 = vld [vmem:[%s5 + $0x30] sm:$0xff]
    %v98 = vld [vmem:[%s5 + $0x38] sm:$0xff]
    %v99 = vld [vmem:[%s5 + $0x40] sm:$0xff]
    %v100 = vld [vmem:[%s5 + $0x48] sm:$0xff]
    %v101 = vld [vmem:[%s5 + $0x50] sm:$0xff]
    %v102 = vld [vmem:[%s5 + $0x58] sm:$0xff]
    %v103 = vld [vmem:[%s5 + $0x60] sm:$0xff]
    %v104 = vld [vmem:[%s5 + $0x68] sm:$0xff]
    %v105 = vld [vmem:[%s5 + $0x70] sm:$0xff]
    %v106 = vld [vmem:[%s5 + $0x78] sm:$0xff]
    %v107 = vld [vmem:[%s5 + $0x80] sm:$0xff]
    %v108 = vld [vmem:[%s5 + $0x88] sm:$0xff]
    %v109 = vld [vmem:[%s5 + $0x90] sm:$0xff]
    %v110 = vld [vmem:[%s5 + $0x98] sm:$0xff]
    %v111 = vld [vmem:[%s5 + $0xa0] sm:$0xff]
    %v112 = vld [vmem:[%s5 + $0xa8] sm:$0xff]
    %v113 = vld [vmem:[%s5 + $0xb0] sm:$0xff]
    %v114 = vld [vmem:[%s5 + $0xb8] sm:$0xff]
    %v115 = vld [vmem:[%s5 + $0xc0] sm:$0xff]
    %v116 = vld [vmem:[%s5 + $0xc8] sm:$0xff]
    %v117 = vld [vmem:[%s5 + $0xd0] sm:$0xff]
    %v118 = vld [vmem:[%s5 + $0xd8] sm:$0xff]
    %v119 = vld [vmem:[%s5 + $0xe0] sm:$0xff]
    %v120 = vld [vmem:[%s5 + $0xe8] sm:$0xff]
    %v121 = vld [vmem:[%s5 + $0xf0] sm:$0xff]
    %v122 = vld [vmem:[%s5 + $0xf8] sm:$0xff]
    %v123 = vld [vmem:[%s5 + $0x100] sm:$0xff]
    %v124 = vld [vmem:[%s5 + $0x108] sm:$0xff]
    %v125 = vld [vmem:[%s5 + $0x110] sm:$0xff]
    %v126 = vld [vmem:[%s5 + $0x118] sm:$0xff]
    %v127 = vld [vmem:[%s5 + $0x120] sm:$0xff]
    %v128 = vld [vmem:[%s5 + $0x128] sm:$0xff]
    %v129 = vld [vmem:[%s5 + $0x130] sm:$0xff]
    %v130 = vld [vmem:[%s5 + $0x138] sm:$0xff]
    %v131 = vld [vmem:[%s5 + $0x140] sm:$0xff]
    %v132 = vld [vmem:[%s5 + $0x148] sm:$0xff]
    %v133 = vld [vmem:[%s5 + $0x150] sm:$0xff]
    %v134 = vld [vmem:[%s5 + $0x158] sm:$0xff]
    %v135 = vld [vmem:[%s5 + $0x160] sm:$0xff]
    %v136 = vld [vmem:[%s5 + $0x168] sm:$0xff]
    %v137 = vld [vmem:[%s5 + $0x170] sm:$0xff]
    %v138 = vld [vmem:[%s5 + $0x178] sm:$0xff]
    %v139 = vld [vmem:[%s5 + $0x180] sm:$0xff]
    %v140 = vld [vmem:[%s5 + $0x188] sm:$0xff]
    %v141 = vld [vmem:[%s5 + $0x190] sm:$0xff]
    %v142 = vld [vmem:[%s5 + $0x198] sm:$0xff]
    %v143 = vld [vmem:[%s5 + $0x1a0] sm:$0xff]
    %v144 = vld [vmem:[%s5 + $0x1a8] sm:$0xff]
    %v145 = vld [vmem:[%s5 + $0x1b0] sm:$0xff]
    %v146 = vld [vmem:[%s5 + $0x1b8] sm:$0xff]
    %v147 = vld [vmem:[%s5 + $0x1c0] sm:$0xff]
    %v148 = vld [vmem:[%s5 + $0x1c8] sm:$0xff]
    %v149 = vld [vmem:[%s5 + $0x1d0] sm:$0xff]
    %v150 = vld [vmem:[%s5 + $0x1d8] sm:$0xff]
    %v151 = vld [vmem:[%s5 + $0x1e0] sm:$0xff]
    %v152 = vld [vmem:[%s5 + $0x1e8] sm:$0xff]
    %v153 = vld [vmem:[%s5 + $0x1f0] sm:$0xff]
    %v154 = vld [vmem:[%s5 + $0x1f8] sm:$0xff]
    %v155 = vld [vmem:[%s5 + $0x200] sm:$0xff]
    %v156 = vld [vmem:[%s5 + $0x208] sm:$0xff]
    %v157 = vld [vmem:[%s5 + $0x210] sm:$0xff]
    %v158 = vld [vmem:[%s5 + $0x218] sm:$0xff]
    %v159 = vld [vmem:[%s5 + $0x220] sm:$0xff]
    %v160 = vld [vmem:[%s5 + $0x228] sm:$0xff]
    %v161 = vld [vmem:[%s5 + $0x230] sm:$0xff]
    %v162 = vld [vmem:[%s5 + $0x238] sm:$0xff]
    %v163 = vld [vmem:[%s5 + $0x240] sm:$0xff]
    %v164 = vld [vmem:[%s5 + $0x248] sm:$0xff]
    %v165 = vld [vmem:[%s5 + $0x250] sm:$0xff]
    %v166 = vld [vmem:[%s5 + $0x258] sm:$0xff]
    %v167 = vld [vmem:[%s5 + $0x260] sm:$0xff]
    %v168 = vld [vmem:[%s5 + $0x268] sm:$0xff]
    %v169 = vld [vmem:[%s5 + $0x270] sm:$0xff]
    %v170 = vld [vmem:[%s5 + $0x278] sm:$0xff]
    %v171 = vld [vmem:[%s5 + $0x280] sm:$0xff]
    %v172 = vld [vmem:[%s5 + $0x288] sm:$0xff]
    %v173 = vld [vmem:[%s5 + $0x290] sm:$0xff]
    %v174 = vld [vmem:[%s5 + $0x298] sm:$0xff]
    %v175 = vld [vmem:[%s5 + $0x2a0] sm:$0xff]
    %v176 = vld [vmem:[%s5 + $0x2a8] sm:$0xff]
    %v177 = vld [vmem:[%s5 + $0x2b0] sm:$0xff]
    %v178 = vld [vmem:[%s5 + $0x2b8] sm:$0xff]
    %v179 = vld [vmem:[%s5 + $0x2c0] sm:$0xff]
    %v180 = vld [vmem:[%s5 + $0x2c8] sm:$0xff]
    %v181 = vld [vmem:[%s5 + $0x2d0] sm:$0xff]
    %v182 = vld [vmem:[%s5 + $0x2d8] sm:$0xff]
    %v183 = vld [vmem:[%s5 + $0x2e0] sm:$0xff]
    %v184 = vld [vmem:[%s5 + $0x2e8] sm:$0xff]
    %v185 = vld [vmem:[%s5 + $0x2f0] sm:$0xff]
    %v186 = vld [vmem:[%s5 + $0x2f8] sm:$0xff]
    %v187 = vld [vmem:[%s5 + $0x300] sm:$0xff]
    %v188 = vld [vmem:[%s5 + $0x308] sm:$0xff]
    %v189 = vld [vmem:[%s5 + $0x310] sm:$0xff]
    %v190 = vld [vmem:[%s5 + $0x318] sm:$0xff]
    %v191 = vld [vmem:[%s5 + $0x320] sm:$0xff]
    %v192 = vld [vmem:[%s5 + $0x328] sm:$0xff]
    %v193 = vld [vmem:[%s5 + $0x330] sm:$0xff]
    %v194 = vld [vmem:[%s5 + $0x338] sm:$0xff]
    %v195 = vld [vmem:[%s5 + $0x340] sm:$0xff]
    %v196 = vld [vmem:[%s5 + $0x348] sm:$0xff]
    %v197 = vld [vmem:[%s5 + $0x350] sm:$0xff]
    %v198 = vld [vmem:[%s5 + $0x358] sm:$0xff]
    %v199 = vld [vmem:[%s5 + $0x360] sm:$0xff]
    %v200 = vld [vmem:[%s5 + $0x368] sm:$0xff]
    %v201 = vld [vmem:[%s5 + $0x370] sm:$0xff]
    %v202 = vld [vmem:[%s5 + $0x378] sm:$0xff]
    %v203 = vld [vmem:[%s5 + $0x380] sm:$0xff]
    %v204 = vld [vmem:[%s5 + $0x388] sm:$0xff]
    %v205 = vld [vmem:[%s5 + $0x390] sm:$0xff]
    %v206 = vld [vmem:[%s5 + $0x398] sm:$0xff]
    %v207 = vld [vmem:[%s5 + $0x3a0] sm:$0xff]
    %v208 = vld [vmem:[%s5 + $0x3a8] sm:$0xff]
    %v209 = vld [vmem:[%s5 + $0x3b0] sm:$0xff]
    %v210 = vld [vmem:[%s5 + $0x3b8] sm:$0xff]
    %v211 = vld [vmem:[%s5 + $0x3c0] sm:$0xff]
    %v212 = vld [vmem:[%s5 + $0x3c8] sm:$0xff]
    %v213 = vld [vmem:[%s5 + $0x3d0] sm:$0xff]
    %v214 = vld [vmem:[%s5 + $0x3d8] sm:$0xff]
    %v215 = vld [vmem:[%s5 + $0x3e0] sm:$0xff]
    %v216 = vld [vmem:[%s5 + $0x3e8] sm:$0xff]
    %v217 = vld [vmem:[%s5 + $0x3f0] sm:$0xff]
    %v218 = vld [vmem:[%s5 + $0x3f8] sm:$0xff]
    %v219 = vld [vmem:[%s5 + $0x400] sm:$0xff]
    %v220 = vld [vmem:[%s5 + $0x408] sm:$0xff]
    %v221 = vld [vmem:[%s5 + $0x410] sm:$0xff]
    %v222 = vld [vmem:[%s5 + $0x418] sm:$0xff]
    %v223 = vld [vmem:[%s5 + $0x420] sm:$0xff]
    %v224 = vld [vmem:[%s5 + $0x428] sm:$0xff]
    %v225 = vld [vmem:[%s5 + $0x430] sm:$0xff]
    %v226 = vld [vmem:[%s5 + $0x438] sm:$0xff]
    %v227 = vld [vmem:[%s5 + $0x440] sm:$0xff]
    %v228 = vld [vmem:[%s5 + $0x448] sm:$0xff]
    %v229 = vld [vmem:[%s5 + $0x450] sm:$0xff]
    %v230 = vld [vmem:[%s5 + $0x458] sm:$0xff]
    %v231 = vld [vmem:[%s5 + $0x460] sm:$0xff]
    %v232 = vld [vmem:[%s5 + $0x468] sm:$0xff]
    %v233 = vld [vmem:[%s5 + $0x470] sm:$0xff]
    %v234 = vld [vmem:[%s5 + $0x478] sm:$0xff]
    %v235 = vld [vmem:[%s5 + $0x480] sm:$0xff]
    %v236 = vld [vmem:[%s5 + $0x488] sm:$0xff]
    %v237 = vld [vmem:[%s5 + $0x490] sm:$0xff]
    %v238 = vld [vmem:[%s5 + $0x498] sm:$0xff]
    %v239 = vld [vmem:[%s5 + $0x4a0] sm:$0xff]
    %v240 = vld [vmem:[%s5 + $0x4a8] sm:$0xff]
    %v241 = vld [vmem:[%s5 + $0x4b0] sm:$0xff]
    %v242 = vld [vmem:[%s5 + $0x4b8] sm:$0xff]
    %v243 = vld [vmem:[%s5 + $0x4c0] sm:$0xff]
    %v244 = vld [vmem:[%s5 + $0x4c8] sm:$0xff]
    %v245 = vld [vmem:[%s5 + $0x4d0] sm:$0xff]
    %v246 = vld [vmem:[%s5 + $0x4d8] sm:$0xff]
    %v247 = vld [vmem:[%s5 + $0x4e0] sm:$0xff]
    %v248 = vld [vmem:[%s5 + $0x4e8] sm:$0xff]
    %v249 = vld [vmem:[%s5 + $0x4f0] sm:$0xff]
    %v250 = vld [vmem:[%s5 + $0x4f8] sm:$0xff]
    %v251 = vld [vmem:[%s5 + $0x500] sm:$0xff]
    %v252 = vld [vmem:[%s5 + $0x508] sm:$0xff]
    %v253 = vld [vmem:[%s5 + $0x510] sm:$0xff]
    %v254 = vld [vmem:[%s5 + $0x518] sm:$0xff]
    %v255 = vld [vmem:[%s5 + $0x520] sm:$0xff]
    %v256 = vld [vmem:[%s5 + $0x528] sm:$0xff]
    %v257 = vld [vmem:[%s5 + $0x530] sm:$0xff]
    %v258 = vld [vmem:[%s5 + $0x538] sm:$0xff]
    %v259 = vld [vmem:[%s5 + $0x540] sm:$0xff]
    %v260 = vld [vmem:[%s5 + $0x548] sm:$0xff]
    %v261 = vld [vmem:[%s5 + $0x550] sm:$0xff]
    %v262 = vld [vmem:[%s5 + $0x558] sm:$0xff]
    %v263 = vld [vmem:[%s5 + $0x560] sm:$0xff]
    %v264 = vld [vmem:[%s5 + $0x568] sm:$0xff]
    %v265 = vld [vmem:[%s5 + $0x570] sm:$0xff]
    %v266 = vld [vmem:[%s5 + $0x578] sm:$0xff]
    %v267 = vld [vmem:[%s5 + $0x580] sm:$0xff]
    %v268 = vld [vmem:[%s5 + $0x588] sm:$0xff]
    %v269 = vld [vmem:[%s5 + $0x590] sm:$0xff]
    %v270 = vld [vmem:[%s5 + $0x598] sm:$0xff]
    %v271 = vld [vmem:[%s5 + $0x5a0] sm:$0xff]
    %v272 = vld [vmem:[%s5 + $0x5a8] sm:$0xff]
    %v273 = vld [vmem:[%s5 + $0x5b0] sm:$0xff]
    %v274 = vld [vmem:[%s5 + $0x5b8] sm:$0xff]
    %v275 = vld [vmem:[%s5 + $0x5c0] sm:$0xff]
    %v276 = vld [vmem:[%s5 + $0x5c8] sm:$0xff]
    %v277 = vld [vmem:[%s5 + $0x5d0] sm:$0xff]
    %v278 = vld [vmem:[%s5 + $0x5d8] sm:$0xff]
    %v279 = vld [vmem:[%s5 + $0x5e0] sm:$0xff]
    %v280 = vld [vmem:[%s5 + $0x5e8] sm:$0xff]
    %v281 = vld [vmem:[%s5 + $0x5f0] sm:$0xff]
    %v282 = vld [vmem:[%s5 + $0x5f8] sm:$0xff]
    %v283 = vld [vmem:[%s5 + $0x600] sm:$0xff]
    %v284 = vld [vmem:[%s5 + $0x608] sm:$0xff]
    %v285 = vld [vmem:[%s5 + $0x610] sm:$0xff]
    %v286 = vld [vmem:[%s5 + $0x618] sm:$0xff]
    %v287 = vld [vmem:[%s5 + $0x620] sm:$0xff]
    %v288 = vld [vmem:[%s5 + $0x628] sm:$0xff]
    %v289 = vld [vmem:[%s5 + $0x630] sm:$0xff]
    %v290 = vld [vmem:[%s5 + $0x638] sm:$0xff]
    %v291 = vld [vmem:[%s5 + $0x640] sm:$0x7f]
    %v292 = vld [vmem:[%s5 + $0x648] sm:$0x7f]
    %s293 = sld [smem:[#allocation2]]
    %v294 = vstv %s293
    %v295 = vmul.f32 %v83, %v294
    %v296 = vmul.f32 %v84, %v294
    %v297 = vmul.f32 %v85, %v294
    %v298 = vmul.f32 %v86, %v294
    %v299 = vmul.f32 %v87, %v294
    %v300 = vmul.f32 %v88, %v294
    %v301 = vmul.f32 %v89, %v294
    %s302 = sld [smem:[#allocation2 + $0x1]]
    %v303 = vstv %s302
    %v304 = vmul.f32 %v83, %v303
    %v305 = vmul.f32 %v84, %v303
    %v306 = vmul.f32 %v85, %v303
    %v307 = vmul.f32 %v86, %v303
    %v308 = vmul.f32 %v87, %v303
    %v309 = vmul.f32 %v88, %v303
    %v310 = vmul.f32 %v89, %v303
    %318 = vrot.lane.b32.xlu0 %v304, 127
    %v319 = vpop.permute.xlu0 %318
    %320 = vrot.lane.b32.xlu0 %v305, 127
    %v321 = vpop.permute.xlu0 %320
    %322 = vrot.lane.b32.xlu0 %v306, 127
    %v323 = vpop.permute.xlu0 %322
    %324 = vrot.lane.b32.xlu0 %v307, 127
    %v325 = vpop.permute.xlu0 %324
    %326 = vrot.lane.b32.xlu0 %v308, 127
    %v327 = vpop.permute.xlu0 %326
    %328 = vrot.lane.b32.xlu0 %v309, 127
    %v329 = vpop.permute.xlu0 %328
    %330 = vrot.lane.b32.xlu0 %v310, 127
    %v331 = vpop.permute.xlu0 %330
    %vm332 = vcmask 1039360
    %v333 = vsel %vm332, %v319, %v321
    %v334 = vsel %vm332, %v321, %v323
    %v335 = vsel %vm332, %v323, %v325
    %v336 = vsel %vm332, %v325, %v327
    %v337 = vsel %vm332, %v327, %v329
    %v338 = vsel %vm332, %v329, %v331
    %v346 = vadd.f32 %v295, %v333
    %v347 = vadd.f32 %v296, %v334
    %v348 = vadd.f32 %v297, %v335
    %v349 = vadd.f32 %v298, %v336
    %v350 = vadd.f32 %v299, %v337
    %v351 = vadd.f32 %v300, %v338
    %v352 = vadd.f32 %v301, %v331
    %s353 = sld [smem:[#allocation2 + $0x2]]
    %v354 = vstv %s353
    %v355 = vmul.f32 %v83, %v354
    %v356 = vmul.f32 %v84, %v354
    %v357 = vmul.f32 %v85, %v354
    %v358 = vmul.f32 %v86, %v354
    %v359 = vmul.f32 %v87, %v354
    %v360 = vmul.f32 %v88, %v354
    %v361 = vmul.f32 %v89, %v354
    %369 = vrot.lane.b32.xlu0 %v355, 126
    %v370 = vpop.permute.xlu0 %369
    %371 = vrot.lane.b32.xlu0 %v356, 126
    %v372 = vpop.permute.xlu0 %371
    %373 = vrot.lane.b32.xlu0 %v357, 126
    %v374 = vpop.permute.xlu0 %373
    %375 = vrot.lane.b32.xlu0 %v358, 126
    %v376 = vpop.permute.xlu0 %375
    %377 = vrot.lane.b32.xlu0 %v359, 126
    %v378 = vpop.permute.xlu0 %377
    %379 = vrot.lane.b32.xlu0 %v360, 126
    %v380 = vpop.permute.xlu0 %379
    %381 = vrot.lane.b32.xlu0 %v361, 126
    %v382 = vpop.permute.xlu0 %381
    %vm383 = vcmask 1031168
    %v384 = vsel %vm383, %v370, %v372
    %v385 = vsel %vm383, %v372, %v374
    %v386 = vsel %vm383, %v374, %v376
    %v387 = vsel %vm383, %v376, %v378
    %v388 = vsel %vm383, %v378, %v380
    %v389 = vsel %vm383, %v380, %v382
    %v397 = vadd.f32 %v346, %v384
    %v398 = vadd.f32 %v347, %v385
    %v399 = vadd.f32 %v348, %v386
    %v400 = vadd.f32 %v349, %v387
    %v401 = vadd.f32 %v350, %v388
    %v402 = vadd.f32 %v351, %v389
    %v403 = vadd.f32 %v352, %v382
    %s404 = sld [smem:[#allocation2 + $0x3]]
    %v405 = vstv %s404
    %v406 = vmul.f32 %v83, %v405
    %v407 = vmul.f32 %v84, %v405
    %v408 = vmul.f32 %v85, %v405
    %v409 = vmul.f32 %v86, %v405
    %v410 = vmul.f32 %v87, %v405
    %v411 = vmul.f32 %v88, %v405
    %v412 = vmul.f32 %v89, %v405
    %420 = vrot.lane.b32.xlu0 %v406, 98
    %v421 = vpop.permute.xlu0 %420
    %422 = vrot.lane.b32.xlu0 %v407, 98
    %v423 = vpop.permute.xlu0 %422
    %424 = vrot.lane.b32.xlu0 %v408, 98
    %v425 = vpop.permute.xlu0 %424
    %426 = vrot.lane.b32.xlu0 %v409, 98
    %v427 = vpop.permute.xlu0 %426
    %428 = vrot.lane.b32.xlu0 %v410, 98
    %v429 = vpop.permute.xlu0 %428
    %430 = vrot.lane.b32.xlu0 %v411, 98
    %v431 = vpop.permute.xlu0 %430
    %432 = vrot.lane.b32.xlu0 %v412, 98
    %v433 = vpop.permute.xlu0 %432
    %vm434 = vcmask 801792
    %v435 = vsel %vm434, %v421, %v423
    %v436 = vsel %vm434, %v423, %v425
    %v437 = vsel %vm434, %v425, %v427
    %v438 = vsel %vm434, %v427, %v429
    %v439 = vsel %vm434, %v429, %v431
    %v440 = vsel %vm434, %v431, %v433
    %v448 = vadd.f32 %v397, %v435
    %v449 = vadd.f32 %v398, %v436
    %v450 = vadd.f32 %v399, %v437
    %v451 = vadd.f32 %v400, %v438
    %v452 = vadd.f32 %v401, %v439
    %v453 = vadd.f32 %v402, %v440
    %v454 = vadd.f32 %v403, %v433
    %s455 = sld [smem:[#allocation2 + $0x4]]
    %v456 = vstv %s455
    %v457 = vmul.f32 %v83, %v456
    %v458 = vmul.f32 %v84, %v456
    %v459 = vmul.f32 %v85, %v456
    %v460 = vmul.f32 %v86, %v456
    %v461 = vmul.f32 %v87, %v456
    %v462 = vmul.f32 %v88, %v456
    %v463 = vmul.f32 %v89, %v456
    %471 = vrot.lane.b32.xlu0 %v457, 97
    %v472 = vpop.permute.xlu0 %471
    %473 = vrot.lane.b32.xlu0 %v458, 97
    %v474 = vpop.permute.xlu0 %473
    %475 = vrot.lane.b32.xlu0 %v459, 97
    %v476 = vpop.permute.xlu0 %475
    %477 = vrot.lane.b32.xlu0 %v460, 97
    %v478 = vpop.permute.xlu0 %477
    %479 = vrot.lane.b32.xlu0 %v461, 97
    %v480 = vpop.permute.xlu0 %479
    %481 = vrot.lane.b32.xlu0 %v462, 97
    %v482 = vpop.permute.xlu0 %481
    %483 = vrot.lane.b32.xlu0 %v463, 97
    %v484 = vpop.permute.xlu0 %483
    %vm485 = vcmask 793600
    %v486 = vsel %vm485, %v472, %v474
    %v487 = vsel %vm485, %v474, %v476
    %v488 = vsel %vm485, %v476, %v478
    %v489 = vsel %vm485, %v478, %v480
    %v490 = vsel %vm485, %v480, %v482
    %v491 = vsel %vm485, %v482, %v484
    %v499 = vadd.f32 %v448, %v486
    %v500 = vadd.f32 %v449, %v487
    %v501 = vadd.f32 %v450, %v488
    %v502 = vadd.f32 %v451, %v489
    %v503 = vadd.f32 %v452, %v490
    %v504 = vadd.f32 %v453, %v491
    %v505 = vadd.f32 %v454, %v484
    %s506 = sld [smem:[#allocation2 + $0x5]]
    %v507 = vstv %s506
    %v508 = vmul.f32 %v83, %v507
    %v509 = vmul.f32 %v84, %v507
    %v510 = vmul.f32 %v85, %v507
    %v511 = vmul.f32 %v86, %v507
    %v512 = vmul.f32 %v87, %v507
    %v513 = vmul.f32 %v88, %v507
    %v514 = vmul.f32 %v89, %v507
    %522 = vrot.lane.b32.xlu0 %v508, 96
    %v523 = vpop.permute.xlu0 %522
    %524 = vrot.lane.b32.xlu0 %v509, 96
    %v525 = vpop.permute.xlu0 %524
    %526 = vrot.lane.b32.xlu0 %v510, 96
    %v527 = vpop.permute.xlu0 %526
    %528 = vrot.lane.b32.xlu0 %v511, 96
    %v529 = vpop.permute.xlu0 %528
    %530 = vrot.lane.b32.xlu0 %v512, 96
    %v531 = vpop.permute.xlu0 %530
    %532 = vrot.lane.b32.xlu0 %v513, 96
    %v533 = vpop.permute.xlu0 %532
    %534 = vrot.lane.b32.xlu0 %v514, 96
    %v535 = vpop.permute.xlu0 %534
    %vm536 = vcmask 785408
    %v537 = vsel %vm536, %v523, %v525
    %v538 = vsel %vm536, %v525, %v527
    %v539 = vsel %vm536, %v527, %v529
    %v540 = vsel %vm536, %v529, %v531
    %v541 = vsel %vm536, %v531, %v533
    %v542 = vsel %vm536, %v533, %v535
    %v550 = vadd.f32 %v499, %v537
    %v551 = vadd.f32 %v500, %v538
    %v552 = vadd.f32 %v501, %v539
    %v553 = vadd.f32 %v502, %v540
    %v554 = vadd.f32 %v503, %v541
    %v555 = vadd.f32 %v504, %v542
    %v556 = vadd.f32 %v505, %v535
    %s557 = sld [smem:[#allocation2 + $0x6]]
    %v558 = vstv %s557
    %v559 = vmul.f32 %v83, %v558
    %v560 = vmul.f32 %v84, %v558
    %v561 = vmul.f32 %v85, %v558
    %v562 = vmul.f32 %v86, %v558
    %v563 = vmul.f32 %v87, %v558
    %v564 = vmul.f32 %v88, %v558
    %v565 = vmul.f32 %v89, %v558
    %v566 = vmul.f32 %v90, %v558
    %575 = vrot.lane.b32.xlu0 %v559, 68
    %v576 = vpop.permute.xlu0 %575
    %577 = vrot.lane.b32.xlu0 %v560, 68
    %v578 = vpop.permute.xlu0 %577
    %579 = vrot.lane.b32.xlu0 %v561, 68
    %v580 = vpop.permute.xlu0 %579
    %581 = vrot.lane.b32.xlu0 %v562, 68
    %v582 = vpop.permute.xlu0 %581
    %583 = vrot.lane.b32.xlu0 %v563, 68
    %v584 = vpop.permute.xlu0 %583
    %585 = vrot.lane.b32.xlu0 %v564, 68
    %v586 = vpop.permute.xlu0 %585
    %587 = vrot.lane.b32.xlu0 %v565, 68
    %v588 = vpop.permute.xlu0 %587
    %589 = vrot.lane.b32.xlu0 %v566, 68
    %v590 = vpop.permute.xlu0 %589
    %vm591 = vcmask 556032
    %v592 = vsel %vm591, %v576, %v578
    %v593 = vsel %vm591, %v578, %v580
    %v594 = vsel %vm591, %v580, %v582
    %v595 = vsel %vm591, %v582, %v584
    %v596 = vsel %vm591, %v584, %v586
    %v597 = vsel %vm591, %v586, %v588
    %v598 = vsel %vm591, %v588, %v590
    %v606 = vadd.f32 %v550, %v592
    %v607 = vadd.f32 %v551, %v593
    %v608 = vadd.f32 %v552, %v594
    %v609 = vadd.f32 %v553, %v595
    %v610 = vadd.f32 %v554, %v596
    %v611 = vadd.f32 %v555, %v597
    %v612 = vadd.f32 %v556, %v598
    %s613 = sld [smem:[#allocation2 + $0x7]]
    %v614 = vstv %s613
    %v615 = vmul.f32 %v83, %v614
    %v616 = vmul.f32 %v84, %v614
    %v617 = vmul.f32 %v85, %v614
    %v618 = vmul.f32 %v86, %v614
    %v619 = vmul.f32 %v87, %v614
    %v620 = vmul.f32 %v88, %v614
    %v621 = vmul.f32 %v89, %v614
    %v622 = vmul.f32 %v90, %v614
    %631 = vrot.lane.b32.xlu0 %v615, 67
    %v632 = vpop.permute.xlu0 %631
    %633 = vrot.lane.b32.xlu0 %v616, 67
    %v634 = vpop.permute.xlu0 %633
    %635 = vrot.lane.b32.xlu0 %v617, 67
    %v636 = vpop.permute.xlu0 %635
    %637 = vrot.lane.b32.xlu0 %v618, 67
    %v638 = vpop.permute.xlu0 %637
    %639 = vrot.lane.b32.xlu0 %v619, 67
    %v640 = vpop.permute.xlu0 %639
    %641 = vrot.lane.b32.xlu0 %v620, 67
    %v642 = vpop.permute.xlu0 %641
    %643 = vrot.lane.b32.xlu0 %v621, 67
    %v644 = vpop.permute.xlu0 %643
    %645 = vrot.lane.b32.xlu0 %v622, 67
    %v646 = vpop.permute.xlu0 %645
    %vm647 = vcmask 547840
    %v648 = vsel %vm647, %v632, %v634
    %v649 = vsel %vm647, %v634, %v636
    %v650 = vsel %vm647, %v636, %v638
    %v651 = vsel %vm647, %v638, %v640
    %v652 = vsel %vm647, %v640, %v642
    %v653 = vsel %vm647, %v642, %v644
    %v654 = vsel %vm647, %v644, %v646
    %v662 = vadd.f32 %v606, %v648
    %v663 = vadd.f32 %v607, %v649
    %v664 = vadd.f32 %v608, %v650
    %v665 = vadd.f32 %v609, %v651
    %v666 = vadd.f32 %v610, %v652
    %v667 = vadd.f32 %v611, %v653
    %v668 = vadd.f32 %v612, %v654
    %s669 = sld [smem:[#allocation2 + $0x8]]
    %v670 = vstv %s669
    %v671 = vmul.f32 %v83, %v670
    %v672 = vmul.f32 %v84, %v670
    %v673 = vmul.f32 %v85, %v670
    %v674 = vmul.f32 %v86, %v670
    %v675 = vmul.f32 %v87, %v670
    %v676 = vmul.f32 %v88, %v670
    %v677 = vmul.f32 %v89, %v670
    %v678 = vmul.f32 %v90, %v670
    %687 = vrot.lane.b32.xlu0 %v671, 66
    %v688 = vpop.permute.xlu0 %687
    %689 = vrot.lane.b32.xlu0 %v672, 66
    %v690 = vpop.permute.xlu0 %689
    %691 = vrot.lane.b32.xlu0 %v673, 66
    %v692 = vpop.permute.xlu0 %691
    %693 = vrot.lane.b32.xlu0 %v674, 66
    %v694 = vpop.permute.xlu0 %693
    %695 = vrot.lane.b32.xlu0 %v675, 66
    %v696 = vpop.permute.xlu0 %695
    %697 = vrot.lane.b32.xlu0 %v676, 66
    %v698 = vpop.permute.xlu0 %697
    %699 = vrot.lane.b32.xlu0 %v677, 66
    %v700 = vpop.permute.xlu0 %699
    %701 = vrot.lane.b32.xlu0 %v678, 66
    %v702 = vpop.permute.xlu0 %701
    %vm703 = vcmask 539648
    %v704 = vsel %vm703, %v688, %v690
    %v705 = vsel %vm703, %v690, %v692
    %v706 = vsel %vm703, %v692, %v694
    %v707 = vsel %vm703, %v694, %v696
    %v708 = vsel %vm703, %v696, %v698
    %v709 = vsel %vm703, %v698, %v700
    %v710 = vsel %vm703, %v700, %v702
    %v718 = vadd.f32 %v662, %v704
    %v719 = vadd.f32 %v663, %v705
    %v720 = vadd.f32 %v664, %v706
    %v721 = vadd.f32 %v665, %v707
    %v722 = vadd.f32 %v666, %v708
    %v723 = vadd.f32 %v667, %v709
    %v724 = vadd.f32 %v668, %v710
    %s725 = sld [smem:[#allocation4]]
    %v726 = vstv %s725
    %v727 = vadd.f32 %v718, %v726
    %v728 = vadd.f32 %v719, %v726
    %v729 = vadd.f32 %v720, %v726
    %v730 = vadd.f32 %v721, %v726
    %v731 = vadd.f32 %v722, %v726
    %v732 = vadd.f32 %v723, %v726
    %v733 = vadd.f32 %v724, %v726
    %v734 = vmax.f32 %v727, 0.0
    %v735 = vmax.f32 %v728, 0.0
    %v736 = vmax.f32 %v729, 0.0
    %v737 = vmax.f32 %v730, 0.0
    %v738 = vmax.f32 %v731, 0.0
    %v739 = vmax.f32 %v732, 0.0
    %v740 = vmax.f32 %v733, 0.0
    %s741 = sld [smem:[#allocation2 + $0x80]]
    %v742 = vstv %s741
    %v743 = vmul.f32 %v83, %v742
    %v744 = vmul.f32 %v84, %v742
    %v745 = vmul.f32 %v85, %v742
    %v746 = vmul.f32 %v86, %v742
    %v747 = vmul.f32 %v87, %v742
    %v748 = vmul.f32 %v88, %v742
    %v749 = vmul.f32 %v89, %v742
    %s750 = sld [smem:[#allocation2 + $0x81]]
    %v751 = vstv %s750
    %v752 = vmul.f32 %v83, %v751
    %v753 = vmul.f32 %v84, %v751
    %v754 = vmul.f32 %v85, %v751
    %v755 = vmul.f32 %v86, %v751
    %v756 = vmul.f32 %v87, %v751
    %v757 = vmul.f32 %v88, %v751
    %v758 = vmul.f32 %v89, %v751
    %766 = vrot.lane.b32.xlu0 %v752, 127
    %v767 = vpop.permute.xlu0 %766
    %768 = vrot.lane.b32.xlu0 %v753, 127
    %v769 = vpop.permute.xlu0 %768
    %770 = vrot.lane.b32.xlu0 %v754, 127
    %v771 = vpop.permute.xlu0 %770
    %772 = vrot.lane.b32.xlu0 %v755, 127
    %v773 = vpop.permute.xlu0 %772
    %774 = vrot.lane.b32.xlu0 %v756, 127
    %v775 = vpop.permute.xlu0 %774
    %776 = vrot.lane.b32.xlu0 %v757, 127
    %v777 = vpop.permute.xlu0 %776
    %778 = vrot.lane.b32.xlu0 %v758, 127
    %v779 = vpop.permute.xlu0 %778
    %v780 = vsel %vm332, %v767, %v769
    %v781 = vsel %vm332, %v769, %v771
    %v782 = vsel %vm332, %v771, %v773
    %v783 = vsel %vm332, %v773, %v775
    %v784 = vsel %vm332, %v775, %v777
    %v785 = vsel %vm332, %v777, %v779
    %v793 = vadd.f32 %v743, %v780
    %v794 = vadd.f32 %v744, %v781
    %v795 = vadd.f32 %v745, %v782
    %v796 = vadd.f32 %v746, %v783
    %v797 = vadd.f32 %v747, %v784
    %v798 = vadd.f32 %v748, %v785
    %v799 = vadd.f32 %v749, %v779
    %s800 = sld [smem:[#allocation2 + $0x82]]
    %v801 = vstv %s800
    %v802 = vmul.f32 %v83, %v801
    %v803 = vmul.f32 %v84, %v801
    %v804 = vmul.f32 %v85, %v801
    %v805 = vmul.f32 %v86, %v801
    %v806 = vmul.f32 %v87, %v801
    %v807 = vmul.f32 %v88, %v801
    %v808 = vmul.f32 %v89, %v801
    %816 = vrot.lane.b32.xlu0 %v802, 126
    %v817 = vpop.permute.xlu0 %816
    %818 = vrot.lane.b32.xlu0 %v803, 126
    %v819 = vpop.permute.xlu0 %818
    %820 = vrot.lane.b32.xlu0 %v804, 126
    %v821 = vpop.permute.xlu0 %820
    %822 = vrot.lane.b32.xlu0 %v805, 126
    %v823 = vpop.permute.xlu0 %822
    %824 = vrot.lane.b32.xlu0 %v806, 126
    %v825 = vpop.permute.xlu0 %824
    %826 = vrot.lane.b32.xlu0 %v807, 126
    %v827 = vpop.permute.xlu0 %826
    %828 = vrot.lane.b32.xlu0 %v808, 126
    %v829 = vpop.permute.xlu0 %828
    %v830 = vsel %vm383, %v817, %v819
    %v831 = vsel %vm383, %v819, %v821
    %v832 = vsel %vm383, %v821, %v823
    %v833 = vsel %vm383, %v823, %v825
    %v834 = vsel %vm383, %v825, %v827
    %v835 = vsel %vm383, %v827, %v829
    %v843 = vadd.f32 %v793, %v830
    %v844 = vadd.f32 %v794, %v831
    %v845 = vadd.f32 %v795, %v832
    %v846 = vadd.f32 %v796, %v833
    %v847 = vadd.f32 %v797, %v834
    %v848 = vadd.f32 %v798, %v835
    %v849 = vadd.f32 %v799, %v829
    %s850 = sld [smem:[#allocation2 + $0x83]]
    %v851 = vstv %s850
    %v852 = vmul.f32 %v83, %v851
    %v853 = vmul.f32 %v84, %v851
    %v854 = vmul.f32 %v85, %v851
    %v855 = vmul.f32 %v86, %v851
    %v856 = vmul.f32 %v87, %v851
    %v857 = vmul.f32 %v88, %v851
    %v858 = vmul.f32 %v89, %v851
    %866 = vrot.lane.b32.xlu0 %v852, 98
    %v867 = vpop.permute.xlu0 %866
    %868 = vrot.lane.b32.xlu0 %v853, 98
    %v869 = vpop.permute.xlu0 %868
    %870 = vrot.lane.b32.xlu0 %v854, 98
    %v871 = vpop.permute.xlu0 %870
    %872 = vrot.lane.b32.xlu0 %v855, 98
    %v873 = vpop.permute.xlu0 %872
    %874 = vrot.lane.b32.xlu0 %v856, 98
    %v875 = vpop.permute.xlu0 %874
    %876 = vrot.lane.b32.xlu0 %v857, 98
    %v877 = vpop.permute.xlu0 %876
    %878 = vrot.lane.b32.xlu0 %v858, 98
    %v879 = vpop.permute.xlu0 %878
    %v880 = vsel %vm434, %v867, %v869
    %v881 = vsel %vm434, %v869, %v871
    %v882 = vsel %vm434, %v871, %v873
    %v883 = vsel %vm434, %v873, %v875
    %v884 = vsel %vm434, %v875, %v877
    %v885 = vsel %vm434, %v877, %v879
    %v893 = vadd.f32 %v843, %v880
    %v894 = vadd.f32 %v844, %v881
    %v895 = vadd.f32 %v845, %v882
    %v896 = vadd.f32 %v846, %v883
    %v897 = vadd.f32 %v847, %v884
    %v898 = vadd.f32 %v848, %v885
    %v899 = vadd.f32 %v849, %v879
    %s900 = sld [smem:[#allocation2 + $0x84]]
    %v901 = vstv %s900
    %v902 = vmul.f32 %v83, %v901
    %v903 = vmul.f32 %v84, %v901
    %v904 = vmul.f32 %v85, %v901
    %v905 = vmul.f32 %v86, %v901
    %v906 = vmul.f32 %v87, %v901
    %v907 = vmul.f32 %v88, %v901
    %v908 = vmul.f32 %v89, %v901
    %916 = vrot.lane.b32.xlu0 %v902, 97
    %v917 = vpop.permute.xlu0 %916
    %918 = vrot.lane.b32.xlu0 %v903, 97
    %v919 = vpop.permute.xlu0 %918
    %920 = vrot.lane.b32.xlu0 %v904, 97
    %v921 = vpop.permute.xlu0 %920
    %922 = vrot.lane.b32.xlu0 %v905, 97
    %v923 = vpop.permute.xlu0 %922
    %924 = vrot.lane.b32.xlu0 %v906, 97
    %v925 = vpop.permute.xlu0 %924
    %926 = vrot.lane.b32.xlu0 %v907, 97
    %v927 = vpop.permute.xlu0 %926
    %928 = vrot.lane.b32.xlu0 %v908, 97
    %v929 = vpop.permute.xlu0 %928
    %v930 = vsel %vm485, %v917, %v919
    %v931 = vsel %vm485, %v919, %v921
    %v932 = vsel %vm485, %v921, %v923
    %v933 = vsel %vm485, %v923, %v925
    %v934 = vsel %vm485, %v925, %v927
    %v935 = vsel %vm485, %v927, %v929
    %v943 = vadd.f32 %v893, %v930
    %v944 = vadd.f32 %v894, %v931
    %v945 = vadd.f32 %v895, %v932
    %v946 = vadd.f32 %v896, %v933
    %v947 = vadd.f32 %v897, %v934
    %v948 = vadd.f32 %v898, %v935
    %v949 = vadd.f32 %v899, %v929
    %s950 = sld [smem:[#allocation2 + $0x85]]
    %v951 = vstv %s950
    %v952 = vmul.f32 %v83, %v951
    %v953 = vmul.f32 %v84, %v951
    %v954 = vmul.f32 %v85, %v951
    %v955 = vmul.f32 %v86, %v951
    %v956 = vmul.f32 %v87, %v951
    %v957 = vmul.f32 %v88, %v951
    %v958 = vmul.f32 %v89, %v951
    %966 = vrot.lane.b32.xlu0 %v952, 96
    %v967 = vpop.permute.xlu0 %966
    %968 = vrot.lane.b32.xlu0 %v953, 96
    %v969 = vpop.permute.xlu0 %968
    %970 = vrot.lane.b32.xlu0 %v954, 96
    %v971 = vpop.permute.xlu0 %970
    %972 = vrot.lane.b32.xlu0 %v955, 96
    %v973 = vpop.permute.xlu0 %972
    %974 = vrot.lane.b32.xlu0 %v956, 96
    %v975 = vpop.permute.xlu0 %974
    %976 = vrot.lane.b32.xlu0 %v957, 96
    %v977 = vpop.permute.xlu0 %976
    %978 = vrot.lane.b32.xlu0 %v958, 96
    %v979 = vpop.permute.xlu0 %978
    %v980 = vsel %vm536, %v967, %v969
    %v981 = vsel %vm536, %v969, %v971
    %v982 = vsel %vm536, %v971, %v973
    %v983 = vsel %vm536, %v973, %v975
    %v984 = vsel %vm536, %v975, %v977
    %v985 = vsel %vm536, %v977, %v979
    %v993 = vadd.f32 %v943, %v980
    %v994 = vadd.f32 %v944, %v981
    %v995 = vadd.f32 %v945, %v982
    %v996 = vadd.f32 %v946, %v983
    %v997 = vadd.f32 %v947, %v984
    %v998 = vadd.f32 %v948, %v985
    %v999 = vadd.f32 %v949, %v979
    %s1000 = sld [smem:[#allocation2 + $0x86]]
    %v1001 = vstv %s1000
    %v1002 = vmul.f32 %v83, %v1001
    %v1003 = vmul.f32 %v84, %v1001
    %v1004 = vmul.f32 %v85, %v1001
    %v1005 = vmul.f32 %v86, %v1001
    %v1006 = vmul.f32 %v87, %v1001
    %v1007 = vmul.f32 %v88, %v1001
    %v1008 = vmul.f32 %v89, %v1001
    %v1009 = vmul.f32 %v90, %v1001
    %1018 = vrot.lane.b32.xlu0 %v1002, 68
    %v1019 = vpop.permute.xlu0 %1018
    %1020 = vrot.lane.b32.xlu0 %v1003, 68
    %v1021 = vpop.permute.xlu0 %1020
    %1022 = vrot.lane.b32.xlu0 %v1004, 68
    %v1023 = vpop.permute.xlu0 %1022
    %1024 = vrot.lane.b32.xlu0 %v1005, 68
    %v1025 = vpop.permute.xlu0 %1024
    %1026 = vrot.lane.b32.xlu0 %v1006, 68
    %v1027 = vpop.permute.xlu0 %1026
    %1028 = vrot.lane.b32.xlu0 %v1007, 68
    %v1029 = vpop.permute.xlu0 %1028
    %1030 = vrot.lane.b32.xlu0 %v1008, 68
    %v1031 = vpop.permute.xlu0 %1030
    %1032 = vrot.lane.b32.xlu0 %v1009, 68
    %v1033 = vpop.permute.xlu0 %1032
    %v1034 = vsel %vm591, %v1019, %v1021
    %v1035 = vsel %vm591, %v1021, %v1023
    %v1036 = vsel %vm591, %v1023, %v1025
    %v1037 = vsel %vm591, %v1025, %v1027
    %v1038 = vsel %vm591, %v1027, %v1029
    %v1039 = vsel %vm591, %v1029, %v1031
    %v1040 = vsel %vm591, %v1031, %v1033
    %v1048 = vadd.f32 %v993, %v1034
    %v1049 = vadd.f32 %v994, %v1035
    %v1050 = vadd.f32 %v995, %v1036
    %v1051 = vadd.f32 %v996, %v1037
    %v1052 = vadd.f32 %v997, %v1038
    %v1053 = vadd.f32 %v998, %v1039
    %v1054 = vadd.f32 %v999, %v1040
    %s1055 = sld [smem:[#allocation2 + $0x87]]
    %v1056 = vstv %s1055
    %v1057 = vmul.f32 %v83, %v1056
    %v1058 = vmul.f32 %v84, %v1056
    %v1059 = vmul.f32 %v85, %v1056
    %v1060 = vmul.f32 %v86, %v1056
    %v1061 = vmul.f32 %v87, %v1056
    %v1062 = vmul.f32 %v88, %v1056
    %v1063 = vmul.f32 %v89, %v1056
    %v1064 = vmul.f32 %v90, %v1056
    %1073 = vrot.lane.b32.xlu0 %v1057, 67
    %v1074 = vpop.permute.xlu0 %1073
    %1075 = vrot.lane.b32.xlu0 %v1058, 67
    %v1076 = vpop.permute.xlu0 %1075
    %1077 = vrot.lane.b32.xlu0 %v1059, 67
    %v1078 = vpop.permute.xlu0 %1077
    %1079 = vrot.lane.b32.xlu0 %v1060, 67
    %v1080 = vpop.permute.xlu0 %1079
    %1081 = vrot.lane.b32.xlu0 %v1061, 67
    %v1082 = vpop.permute.xlu0 %1081
    %1083 = vrot.lane.b32.xlu0 %v1062, 67
    %v1084 = vpop.permute.xlu0 %1083
    %1085 = vrot.lane.b32.xlu0 %v1063, 67
    %v1086 = vpop.permute.xlu0 %1085
    %1087 = vrot.lane.b32.xlu0 %v1064, 67
    %v1088 = vpop.permute.xlu0 %1087
    %v1089 = vsel %vm647, %v1074, %v1076
    %v1090 = vsel %vm647, %v1076, %v1078
    %v1091 = vsel %vm647, %v1078, %v1080
    %v1092 = vsel %vm647, %v1080, %v1082
    %v1093 = vsel %vm647, %v1082, %v1084
    %v1094 = vsel %vm647, %v1084, %v1086
    %v1095 = vsel %vm647, %v1086, %v1088
    %v1103 = vadd.f32 %v1048, %v1089
    %v1104 = vadd.f32 %v1049, %v1090
    %v1105 = vadd.f32 %v1050, %v1091
    %v1106 = vadd.f32 %v1051, %v1092
    %v1107 = vadd.f32 %v1052, %v1093
    %v1108 = vadd.f32 %v1053, %v1094
    %v1109 = vadd.f32 %v1054, %v1095
    %s1110 = sld [smem:[#allocation2 + $0x88]]
    %v1111 = vstv %s1110
    %v1112 = vmul.f32 %v83, %v1111
    %v1113 = vmul.f32 %v84, %v1111
    %v1114 = vmul.f32 %v85, %v1111
    %v1115 = vmul.f32 %v86, %v1111
    %v1116 = vmul.f32 %v87, %v1111
    %v1117 = vmul.f32 %v88, %v1111
    %v1118 = vmul.f32 %v89, %v1111
    %v1119 = vmul.f32 %v90, %v1111
    %1128 = vrot.lane.b32.xlu0 %v1112, 66
    %v1129 = vpop.permute.xlu0 %1128
    %1130 = vrot.lane.b32.xlu0 %v1113, 66
    %v1131 = vpop.permute.xlu0 %1130
    %1132 = vrot.lane.b32.xlu0 %v1114, 66
    %v1133 = vpop.permute.xlu0 %1132
    %1134 = vrot.lane.b32.xlu0 %v1115, 66
    %v1135 = vpop.permute.xlu0 %1134
    %1136 = vrot.lane.b32.xlu0 %v1116, 66
    %v1137 = vpop.permute.xlu0 %1136
    %1138 = vrot.lane.b32.xlu0 %v1117, 66
    %v1139 = vpop.permute.xlu0 %1138
    %1140 = vrot.lane.b32.xlu0 %v1118, 66
    %v1141 = vpop.permute.xlu0 %1140
    %1142 = vrot.lane.b32.xlu0 %v1119, 66
    %v1143 = vpop.permute.xlu0 %1142
    %v1144 = vsel %vm703, %v1129, %v1131
    %v1145 = vsel %vm703, %v1131, %v1133
    %v1146 = vsel %vm703, %v1133, %v1135
    %v1147 = vsel %vm703, %v1135, %v1137
    %v1148 = vsel %vm703, %v1137, %v1139
    %v1149 = vsel %vm703, %v1139, %v1141
    %v1150 = vsel %vm703, %v1141, %v1143
    %v1158 = vadd.f32 %v1103, %v1144
    %v1159 = vadd.f32 %v1104, %v1145
    %v1160 = vadd.f32 %v1105, %v1146
    %v1161 = vadd.f32 %v1106, %v1147
    %v1162 = vadd.f32 %v1107, %v1148
    %v1163 = vadd.f32 %v1108, %v1149
    %v1164 = vadd.f32 %v1109, %v1150
    %s1165 = sld [smem:[#allocation4 + $0x1]]
    %v1166 = vstv %s1165
    %v1167 = vadd.f32 %v1158, %v1166
    %v1168 = vadd.f32 %v1159, %v1166
    %v1169 = vadd.f32 %v1160, %v1166
    %v1170 = vadd.f32 %v1161, %v1166
    %v1171 = vadd.f32 %v1162, %v1166
    %v1172 = vadd.f32 %v1163, %v1166
    %v1173 = vadd.f32 %v1164, %v1166
    %v1174 = vmax.f32 %v1167, 0.0
    %v1175 = vmax.f32 %v1168, 0.0
    %v1176 = vmax.f32 %v1169, 0.0
    %v1177 = vmax.f32 %v1170, 0.0
    %v1178 = vmax.f32 %v1171, 0.0
    %v1179 = vmax.f32 %v1172, 0.0
    %v1180 = vmax.f32 %v1173, 0.0
    %s1181 = sld [smem:[#allocation2 + $0x100]]
    %v1182 = vstv %s1181
    %v1183 = vmul.f32 %v83, %v1182
    %v1184 = vmul.f32 %v84, %v1182
    %v1185 = vmul.f32 %v85, %v1182
    %v1186 = vmul.f32 %v86, %v1182
    %v1187 = vmul.f32 %v87, %v1182
    %v1188 = vmul.f32 %v88, %v1182
    %v1189 = vmul.f32 %v89, %v1182
    %s1190 = sld [smem:[#allocation2 + $0x101]]
    %v1191 = vstv %s1190
    %v1192 = vmul.f32 %v83, %v1191
    %v1193 = vmul.f32 %v84, %v1191
    %v1194 = vmul.f32 %v85, %v1191
    %v1195 = vmul.f32 %v86, %v1191
    %v1196 = vmul.f32 %v87, %v1191
    %v1197 = vmul.f32 %v88, %v1191
    %v1198 = vmul.f32 %v89, %v1191
    %1206 = vrot.lane.b32.xlu0 %v1192, 127
    %v1207 = vpop.permute.xlu0 %1206
    %1208 = vrot.lane.b32.xlu0 %v1193, 127
    %v1209 = vpop.permute.xlu0 %1208
    %1210 = vrot.lane.b32.xlu0 %v1194, 127
    %v1211 = vpop.permute.xlu0 %1210
    %1212 = vrot.lane.b32.xlu0 %v1195, 127
    %v1213 = vpop.permute.xlu0 %1212
    %1214 = vrot.lane.b32.xlu0 %v1196, 127
    %v1215 = vpop.permute.xlu0 %1214
    %1216 = vrot.lane.b32.xlu0 %v1197, 127
    %v1217 = vpop.permute.xlu0 %1216
    %1218 = vrot.lane.b32.xlu0 %v1198, 127
    %v1219 = vpop.permute.xlu0 %1218
    %v1220 = vsel %vm332, %v1207, %v1209
    %v1221 = vsel %vm332, %v1209, %v1211
    %v1222 = vsel %vm332, %v1211, %v1213
    %v1223 = vsel %vm332, %v1213, %v1215
    %v1224 = vsel %vm332, %v1215, %v1217
    %v1225 = vsel %vm332, %v1217, %v1219
    %v1233 = vadd.f32 %v1183, %v1220
    %v1234 = vadd.f32 %v1184, %v1221
    %v1235 = vadd.f32 %v1185, %v1222
    %v1236 = vadd.f32 %v1186, %v1223
    %v1237 = vadd.f32 %v1187, %v1224
    %v1238 = vadd.f32 %v1188, %v1225
    %v1239 = vadd.f32 %v1189, %v1219
    %s1240 = sld [smem:[#allocation2 + $0x102]]
    %v1241 = vstv %s1240
    %v1242 = vmul.f32 %v83, %v1241
    %v1243 = vmul.f32 %v84, %v1241
    %v1244 = vmul.f32 %v85, %v1241
    %v1245 = vmul.f32 %v86, %v1241
    %v1246 = vmul.f32 %v87, %v1241
    %v1247 = vmul.f32 %v88, %v1241
    %v1248 = vmul.f32 %v89, %v1241
    %1256 = vrot.lane.b32.xlu0 %v1242, 126
    %v1257 = vpop.permute.xlu0 %1256
    %1258 = vrot.lane.b32.xlu0 %v1243, 126
    %v1259 = vpop.permute.xlu0 %1258
    %1260 = vrot.lane.b32.xlu0 %v1244, 126
    %v1261 = vpop.permute.xlu0 %1260
    %1262 = vrot.lane.b32.xlu0 %v1245, 126
    %v1263 = vpop.permute.xlu0 %1262
    %1264 = vrot.lane.b32.xlu0 %v1246, 126
    %v1265 = vpop.permute.xlu0 %1264
    %1266 = vrot.lane.b32.xlu0 %v1247, 126
    %v1267 = vpop.permute.xlu0 %1266
    %1268 = vrot.lane.b32.xlu0 %v1248, 126
    %v1269 = vpop.permute.xlu0 %1268
    %v1270 = vsel %vm383, %v1257, %v1259
    %v1271 = vsel %vm383, %v1259, %v1261
    %v1272 = vsel %vm383, %v1261, %v1263
    %v1273 = vsel %vm383, %v1263, %v1265
    %v1274 = vsel %vm383, %v1265, %v1267
    %v1275 = vsel %vm383, %v1267, %v1269
    %v1283 = vadd.f32 %v1233, %v1270
    %v1284 = vadd.f32 %v1234, %v1271
    %v1285 = vadd.f32 %v1235, %v1272
    %v1286 = vadd.f32 %v1236, %v1273
    %v1287 = vadd.f32 %v1237, %v1274
    %v1288 = vadd.f32 %v1238, %v1275
    %v1289 = vadd.f32 %v1239, %v1269
    %s1290 = sld [smem:[#allocation2 + $0x103]]
    %v1291 = vstv %s1290
    %v1292 = vmul.f32 %v83, %v1291
    %v1293 = vmul.f32 %v84, %v1291
    %v1294 = vmul.f32 %v85, %v1291
    %v1295 = vmul.f32 %v86, %v1291
    %v1296 = vmul.f32 %v87, %v1291
    %v1297 = vmul.f32 %v88, %v1291
    %v1298 = vmul.f32 %v89, %v1291
    %1306 = vrot.lane.b32.xlu0 %v1292, 98
    %v1307 = vpop.permute.xlu0 %1306
    %1308 = vrot.lane.b32.xlu0 %v1293, 98
    %v1309 = vpop.permute.xlu0 %1308
    %1310 = vrot.lane.b32.xlu0 %v1294, 98
    %v1311 = vpop.permute.xlu0 %1310
    %1312 = vrot.lane.b32.xlu0 %v1295, 98
    %v1313 = vpop.permute.xlu0 %1312
    %1314 = vrot.lane.b32.xlu0 %v1296, 98
    %v1315 = vpop.permute.xlu0 %1314
    %1316 = vrot.lane.b32.xlu0 %v1297, 98
    %v1317 = vpop.permute.xlu0 %1316
    %1318 = vrot.lane.b32.xlu0 %v1298, 98
    %v1319 = vpop.permute.xlu0 %1318
    %v1320 = vsel %vm434, %v1307, %v1309
    %v1321 = vsel %vm434, %v1309, %v1311
    %v1322 = vsel %vm434, %v1311, %v1313
    %v1323 = vsel %vm434, %v1313, %v1315
    %v1324 = vsel %vm434, %v1315, %v1317
    %v1325 = vsel %vm434, %v1317, %v1319
    %v1333 = vadd.f32 %v1283, %v1320
    %v1334 = vadd.f32 %v1284, %v1321
    %v1335 = vadd.f32 %v1285, %v1322
    %v1336 = vadd.f32 %v1286, %v1323
    %v1337 = vadd.f32 %v1287, %v1324
    %v1338 = vadd.f32 %v1288, %v1325
    %v1339 = vadd.f32 %v1289, %v1319
    %s1340 = sld [smem:[#allocation2 + $0x104]]
    %v1341 = vstv %s1340
    %v1342 = vmul.f32 %v83, %v1341
    %v1343 = vmul.f32 %v84, %v1341
    %v1344 = vmul.f32 %v85, %v1341
    %v1345 = vmul.f32 %v86, %v1341
    %v1346 = vmul.f32 %v87, %v1341
    %v1347 = vmul.f32 %v88, %v1341
    %v1348 = vmul.f32 %v89, %v1341
    %1356 = vrot.lane.b32.xlu0 %v1342, 97
    %v1357 = vpop.permute.xlu0 %1356
    %1358 = vrot.lane.b32.xlu0 %v1343, 97
    %v1359 = vpop.permute.xlu0 %1358
    %1360 = vrot.lane.b32.xlu0 %v1344, 97
    %v1361 = vpop.permute.xlu0 %1360
    %1362 = vrot.lane.b32.xlu0 %v1345, 97
    %v1363 = vpop.permute.xlu0 %1362
    %1364 = vrot.lane.b32.xlu0 %v1346, 97
    %v1365 = vpop.permute.xlu0 %1364
    %1366 = vrot.lane.b32.xlu0 %v1347, 97
    %v1367 = vpop.permute.xlu0 %1366
    %1368 = vrot.lane.b32.xlu0 %v1348, 97
    %v1369 = vpop.permute.xlu0 %1368
    %v1370 = vsel %vm485, %v1357, %v1359
    %v1371 = vsel %vm485, %v1359, %v1361
    %v1372 = vsel %vm485, %v1361, %v1363
    %v1373 = vsel %vm485, %v1363, %v1365
    %v1374 = vsel %vm485, %v1365, %v1367
    %v1375 = vsel %vm485, %v1367, %v1369
    %v1383 = vadd.f32 %v1333, %v1370
    %v1384 = vadd.f32 %v1334, %v1371
    %v1385 = vadd.f32 %v1335, %v1372
    %v1386 = vadd.f32 %v1336, %v1373
    %v1387 = vadd.f32 %v1337, %v1374
    %v1388 = vadd.f32 %v1338, %v1375
    %v1389 = vadd.f32 %v1339, %v1369
    %s1390 = sld [smem:[#allocation2 + $0x105]]
    %v1391 = vstv %s1390
    %v1392 = vmul.f32 %v83, %v1391
    %v1393 = vmul.f32 %v84, %v1391
    %v1394 = vmul.f32 %v85, %v1391
    %v1395 = vmul.f32 %v86, %v1391
    %v1396 = vmul.f32 %v87, %v1391
    %v1397 = vmul.f32 %v88, %v1391
    %v1398 = vmul.f32 %v89, %v1391
    %1406 = vrot.lane.b32.xlu0 %v1392, 96
    %v1407 = vpop.permute.xlu0 %1406
    %1408 = vrot.lane.b32.xlu0 %v1393, 96
    %v1409 = vpop.permute.xlu0 %1408
    %1410 = vrot.lane.b32.xlu0 %v1394, 96
    %v1411 = vpop.permute.xlu0 %1410
    %1412 = vrot.lane.b32.xlu0 %v1395, 96
    %v1413 = vpop.permute.xlu0 %1412
    %1414 = vrot.lane.b32.xlu0 %v1396, 96
    %v1415 = vpop.permute.xlu0 %1414
    %1416 = vrot.lane.b32.xlu0 %v1397, 96
    %v1417 = vpop.permute.xlu0 %1416
    %1418 = vrot.lane.b32.xlu0 %v1398, 96
    %v1419 = vpop.permute.xlu0 %1418
    %v1420 = vsel %vm536, %v1407, %v1409
    %v1421 = vsel %vm536, %v1409, %v1411
    %v1422 = vsel %vm536, %v1411, %v1413
    %v1423 = vsel %vm536, %v1413, %v1415
    %v1424 = vsel %vm536, %v1415, %v1417
    %v1425 = vsel %vm536, %v1417, %v1419
    %v1433 = vadd.f32 %v1383, %v1420
    %v1434 = vadd.f32 %v1384, %v1421
    %v1435 = vadd.f32 %v1385, %v1422
    %v1436 = vadd.f32 %v1386, %v1423
    %v1437 = vadd.f32 %v1387, %v1424
    %v1438 = vadd.f32 %v1388, %v1425
    %v1439 = vadd.f32 %v1389, %v1419
    %s1440 = sld [smem:[#allocation2 + $0x106]]
    %v1441 = vstv %s1440
    %v1442 = vmul.f32 %v83, %v1441
    %v1443 = vmul.f32 %v84, %v1441
    %v1444 = vmul.f32 %v85, %v1441
    %v1445 = vmul.f32 %v86, %v1441
    %v1446 = vmul.f32 %v87, %v1441
    %v1447 = vmul.f32 %v88, %v1441
    %v1448 = vmul.f32 %v89, %v1441
    %v1449 = vmul.f32 %v90, %v1441
    %1458 = vrot.lane.b32.xlu0 %v1442, 68
    %v1459 = vpop.permute.xlu0 %1458
    %1460 = vrot.lane.b32.xlu0 %v1443, 68
    %v1461 = vpop.permute.xlu0 %1460
    %1462 = vrot.lane.b32.xlu0 %v1444, 68
    %v1463 = vpop.permute.xlu0 %1462
    %1464 = vrot.lane.b32.xlu0 %v1445, 68
    %v1465 = vpop.permute.xlu0 %1464
    %1466 = vrot.lane.b32.xlu0 %v1446, 68
    %v1467 = vpop.permute.xlu0 %1466
    %1468 = vrot.lane.b32.xlu0 %v1447, 68
    %v1469 = vpop.permute.xlu0 %1468
    %1470 = vrot.lane.b32.xlu0 %v1448, 68
    %v1471 = vpop.permute.xlu0 %1470
    %1472 = vrot.lane.b32.xlu0 %v1449, 68
    %v1473 = vpop.permute.xlu0 %1472
    %v1474 = vsel %vm591, %v1459, %v1461
    %v1475 = vsel %vm591, %v1461, %v1463
    %v1476 = vsel %vm591, %v1463, %v1465
    %v1477 = vsel %vm591, %v1465, %v1467
    %v1478 = vsel %vm591, %v1467, %v1469
    %v1479 = vsel %vm591, %v1469, %v1471
    %v1480 = vsel %vm591, %v1471, %v1473
    %v1488 = vadd.f32 %v1433, %v1474
    %v1489 = vadd.f32 %v1434, %v1475
    %v1490 = vadd.f32 %v1435, %v1476
    %v1491 = vadd.f32 %v1436, %v1477
    %v1492 = vadd.f32 %v1437, %v1478
    %v1493 = vadd.f32 %v1438, %v1479
    %v1494 = vadd.f32 %v1439, %v1480
    %s1495 = sld [smem:[#allocation2 + $0x107]]
    %v1496 = vstv %s1495
    %v1497 = vmul.f32 %v83, %v1496
    %v1498 = vmul.f32 %v84, %v1496
    %v1499 = vmul.f32 %v85, %v1496
    %v1500 = vmul.f32 %v86, %v1496
    %v1501 = vmul.f32 %v87, %v1496
    %v1502 = vmul.f32 %v88, %v1496
    %v1503 = vmul.f32 %v89, %v1496
    %v1504 = vmul.f32 %v90, %v1496
    %1513 = vrot.lane.b32.xlu0 %v1497, 67
    %v1514 = vpop.permute.xlu0 %1513
    %1515 = vrot.lane.b32.xlu0 %v1498, 67
    %v1516 = vpop.permute.xlu0 %1515
    %1517 = vrot.lane.b32.xlu0 %v1499, 67
    %v1518 = vpop.permute.xlu0 %1517
    %1519 = vrot.lane.b32.xlu0 %v1500, 67
    %v1520 = vpop.permute.xlu0 %1519
    %1521 = vrot.lane.b32.xlu0 %v1501, 67
    %v1522 = vpop.permute.xlu0 %1521
    %1523 = vrot.lane.b32.xlu0 %v1502, 67
    %v1524 = vpop.permute.xlu0 %1523
    %1525 = vrot.lane.b32.xlu0 %v1503, 67
    %v1526 = vpop.permute.xlu0 %1525
    %1527 = vrot.lane.b32.xlu0 %v1504, 67
    %v1528 = vpop.permute.xlu0 %1527
    %v1529 = vsel %vm647, %v1514, %v1516
    %v1530 = vsel %vm647, %v1516, %v1518
    %v1531 = vsel %vm647, %v1518, %v1520
    %v1532 = vsel %vm647, %v1520, %v1522
    %v1533 = vsel %vm647, %v1522, %v1524
    %v1534 = vsel %vm647, %v1524, %v1526
    %v1535 = vsel %vm647, %v1526, %v1528
    %v1543 = vadd.f32 %v1488, %v1529
    %v1544 = vadd.f32 %v1489, %v1530
    %v1545 = vadd.f32 %v1490, %v1531
    %v1546 = vadd.f32 %v1491, %v1532
    %v1547 = vadd.f32 %v1492, %v1533
    %v1548 = vadd.f32 %v1493, %v1534
    %v1549 = vadd.f32 %v1494, %v1535
    %s1550 = sld [smem:[#allocation2 + $0x108]]
    %v1551 = vstv %s1550
    %v1552 = vmul.f32 %v83, %v1551
    %v1553 = vmul.f32 %v84, %v1551
    %v1554 = vmul.f32 %v85, %v1551
    %v1555 = vmul.f32 %v86, %v1551
    %v1556 = vmul.f32 %v87, %v1551
    %v1557 = vmul.f32 %v88, %v1551
    %v1558 = vmul.f32 %v89, %v1551
    %v1559 = vmul.f32 %v90, %v1551
    %1568 = vrot.lane.b32.xlu0 %v1552, 66
    %v1569 = vpop.permute.xlu0 %1568
    %1570 = vrot.lane.b32.xlu0 %v1553, 66
    %v1571 = vpop.permute.xlu0 %1570
    %1572 = vrot.lane.b32.xlu0 %v1554, 66
    %v1573 = vpop.permute.xlu0 %1572
    %1574 = vrot.lane.b32.xlu0 %v1555, 66
    %v1575 = vpop.permute.xlu0 %1574
    %1576 = vrot.lane.b32.xlu0 %v1556, 66
    %v1577 = vpop.permute.xlu0 %1576
    %1578 = vrot.lane.b32.xlu0 %v1557, 66
    %v1579 = vpop.permute.xlu0 %1578
    %1580 = vrot.lane.b32.xlu0 %v1558, 66
    %v1581 = vpop.permute.xlu0 %1580
    %1582 = vrot.lane.b32.xlu0 %v1559, 66
    %v1583 = vpop.permute.xlu0 %1582
    %v1584 = vsel %vm703, %v1569, %v1571
    %v1585 = vsel %vm703, %v1571, %v1573
    %v1586 = vsel %vm703, %v1573, %v1575
    %v1587 = vsel %vm703, %v1575, %v1577
    %v1588 = vsel %vm703, %v1577, %v1579
    %v1589 = vsel %vm703, %v1579, %v1581
    %v1590 = vsel %vm703, %v1581, %v1583
    %v1598 = vadd.f32 %v1543, %v1584
    %v1599 = vadd.f32 %v1544, %v1585
    %v1600 = vadd.f32 %v1545, %v1586
    %v1601 = vadd.f32 %v1546, %v1587
    %v1602 = vadd.f32 %v1547, %v1588
    %v1603 = vadd.f32 %v1548, %v1589
    %v1604 = vadd.f32 %v1549, %v1590
    %s1605 = sld [smem:[#allocation4 + $0x2]]
    %v1606 = vstv %s1605
    %v1607 = vadd.f32 %v1598, %v1606
    %v1608 = vadd.f32 %v1599, %v1606
    %v1609 = vadd.f32 %v1600, %v1606
    %v1610 = vadd.f32 %v1601, %v1606
    %v1611 = vadd.f32 %v1602, %v1606
    %v1612 = vadd.f32 %v1603, %v1606
    %v1613 = vadd.f32 %v1604, %v1606
    %v1614 = vmax.f32 %v1607, 0.0
    %v1615 = vmax.f32 %v1608, 0.0
    %v1616 = vmax.f32 %v1609, 0.0
    %v1617 = vmax.f32 %v1610, 0.0
    %v1618 = vmax.f32 %v1611, 0.0
    %v1619 = vmax.f32 %v1612, 0.0
    %v1620 = vmax.f32 %v1613, 0.0
    %s1621 = sld [smem:[#allocation2 + $0x180]]
    %v1622 = vstv %s1621
    %v1623 = vmul.f32 %v83, %v1622
    %v1624 = vmul.f32 %v84, %v1622
    %v1625 = vmul.f32 %v85, %v1622
    %v1626 = vmul.f32 %v86, %v1622
    %v1627 = vmul.f32 %v87, %v1622
    %v1628 = vmul.f32 %v88, %v1622
    %v1629 = vmul.f32 %v89, %v1622
    %s1630 = sld [smem:[#allocation2 + $0x181]]
    %v1631 = vstv %s1630
    %v1632 = vmul.f32 %v83, %v1631
    %v1633 = vmul.f32 %v84, %v1631
    %v1634 = vmul.f32 %v85, %v1631
    %v1635 = vmul.f32 %v86, %v1631
    %v1636 = vmul.f32 %v87, %v1631
    %v1637 = vmul.f32 %v88, %v1631
    %v1638 = vmul.f32 %v89, %v1631
    %1646 = vrot.lane.b32.xlu0 %v1632, 127
    %v1647 = vpop.permute.xlu0 %1646
    %1648 = vrot.lane.b32.xlu0 %v1633, 127
    %v1649 = vpop.permute.xlu0 %1648
    %1650 = vrot.lane.b32.xlu0 %v1634, 127
    %v1651 = vpop.permute.xlu0 %1650
    %1652 = vrot.lane.b32.xlu0 %v1635, 127
    %v1653 = vpop.permute.xlu0 %1652
    %1654 = vrot.lane.b32.xlu0 %v1636, 127
    %v1655 = vpop.permute.xlu0 %1654
    %1656 = vrot.lane.b32.xlu0 %v1637, 127
    %v1657 = vpop.permute.xlu0 %1656
    %1658 = vrot.lane.b32.xlu0 %v1638, 127
    %v1659 = vpop.permute.xlu0 %1658
    %v1660 = vsel %vm332, %v1647, %v1649
    %v1661 = vsel %vm332, %v1649, %v1651
    %v1662 = vsel %vm332, %v1651, %v1653
    %v1663 = vsel %vm332, %v1653, %v1655
    %v1664 = vsel %vm332, %v1655, %v1657
    %v1665 = vsel %vm332, %v1657, %v1659
    %v1673 = vadd.f32 %v1623, %v1660
    %v1674 = vadd.f32 %v1624, %v1661
    %v1675 = vadd.f32 %v1625, %v1662
    %v1676 = vadd.f32 %v1626, %v1663
    %v1677 = vadd.f32 %v1627, %v1664
    %v1678 = vadd.f32 %v1628, %v1665
    %v1679 = vadd.f32 %v1629, %v1659
    %s1680 = sld [smem:[#allocation2 + $0x182]]
    %v1681 = vstv %s1680
    %v1682 = vmul.f32 %v83, %v1681
    %v1683 = vmul.f32 %v84, %v1681
    %v1684 = vmul.f32 %v85, %v1681
    %v1685 = vmul.f32 %v86, %v1681
    %v1686 = vmul.f32 %v87, %v1681
    %v1687 = vmul.f32 %v88, %v1681
    %v1688 = vmul.f32 %v89, %v1681
    %1696 = vrot.lane.b32.xlu0 %v1682, 126
    %v1697 = vpop.permute.xlu0 %1696
    %1698 = vrot.lane.b32.xlu0 %v1683, 126
    %v1699 = vpop.permute.xlu0 %1698
    %1700 = vrot.lane.b32.xlu0 %v1684, 126
    %v1701 = vpop.permute.xlu0 %1700
    %1702 = vrot.lane.b32.xlu0 %v1685, 126
    %v1703 = vpop.permute.xlu0 %1702
    %1704 = vrot.lane.b32.xlu0 %v1686, 126
    %v1705 = vpop.permute.xlu0 %1704
    %1706 = vrot.lane.b32.xlu0 %v1687, 126
    %v1707 = vpop.permute.xlu0 %1706
    %1708 = vrot.lane.b32.xlu0 %v1688, 126
    %v1709 = vpop.permute.xlu0 %1708
    %v1710 = vsel %vm383, %v1697, %v1699
    %v1711 = vsel %vm383, %v1699, %v1701
    %v1712 = vsel %vm383, %v1701, %v1703
    %v1713 = vsel %vm383, %v1703, %v1705
    %v1714 = vsel %vm383, %v1705, %v1707
    %v1715 = vsel %vm383, %v1707, %v1709
    %v1723 = vadd.f32 %v1673, %v1710
    %v1724 = vadd.f32 %v1674, %v1711
    %v1725 = vadd.f32 %v1675, %v1712
    %v1726 = vadd.f32 %v1676, %v1713
    %v1727 = vadd.f32 %v1677, %v1714
    %v1728 = vadd.f32 %v1678, %v1715
    %v1729 = vadd.f32 %v1679, %v1709
    %s1730 = sld [smem:[#allocation2 + $0x183]]
    %v1731 = vstv %s1730
    %v1732 = vmul.f32 %v83, %v1731
    %v1733 = vmul.f32 %v84, %v1731
    %v1734 = vmul.f32 %v85, %v1731
    %v1735 = vmul.f32 %v86, %v1731
    %v1736 = vmul.f32 %v87, %v1731
    %v1737 = vmul.f32 %v88, %v1731
    %v1738 = vmul.f32 %v89, %v1731
    %1746 = vrot.lane.b32.xlu0 %v1732, 98
    %v1747 = vpop.permute.xlu0 %1746
    %1748 = vrot.lane.b32.xlu0 %v1733, 98
    %v1749 = vpop.permute.xlu0 %1748
    %1750 = vrot.lane.b32.xlu0 %v1734, 98
    %v1751 = vpop.permute.xlu0 %1750
    %1752 = vrot.lane.b32.xlu0 %v1735, 98
    %v1753 = vpop.permute.xlu0 %1752
    %1754 = vrot.lane.b32.xlu0 %v1736, 98
    %v1755 = vpop.permute.xlu0 %1754
    %1756 = vrot.lane.b32.xlu0 %v1737, 98
    %v1757 = vpop.permute.xlu0 %1756
    %1758 = vrot.lane.b32.xlu0 %v1738, 98
    %v1759 = vpop.permute.xlu0 %1758
    %v1760 = vsel %vm434, %v1747, %v1749
    %v1761 = vsel %vm434, %v1749, %v1751
    %v1762 = vsel %vm434, %v1751, %v1753
    %v1763 = vsel %vm434, %v1753, %v1755
    %v1764 = vsel %vm434, %v1755, %v1757
    %v1765 = vsel %vm434, %v1757, %v1759
    %v1773 = vadd.f32 %v1723, %v1760
    %v1774 = vadd.f32 %v1724, %v1761
    %v1775 = vadd.f32 %v1725, %v1762
    %v1776 = vadd.f32 %v1726, %v1763
    %v1777 = vadd.f32 %v1727, %v1764
    %v1778 = vadd.f32 %v1728, %v1765
    %v1779 = vadd.f32 %v1729, %v1759
    %s1780 = sld [smem:[#allocation2 + $0x184]]
    %v1781 = vstv %s1780
    %v1782 = vmul.f32 %v83, %v1781
    %v1783 = vmul.f32 %v84, %v1781
    %v1784 = vmul.f32 %v85, %v1781
    %v1785 = vmul.f32 %v86, %v1781
    %v1786 = vmul.f32 %v87, %v1781
    %v1787 = vmul.f32 %v88, %v1781
    %v1788 = vmul.f32 %v89, %v1781
    %1796 = vrot.lane.b32.xlu0 %v1782, 97
    %v1797 = vpop.permute.xlu0 %1796
    %1798 = vrot.lane.b32.xlu0 %v1783, 97
    %v1799 = vpop.permute.xlu0 %1798
    %1800 = vrot.lane.b32.xlu0 %v1784, 97
    %v1801 = vpop.permute.xlu0 %1800
    %1802 = vrot.lane.b32.xlu0 %v1785, 97
    %v1803 = vpop.permute.xlu0 %1802
    %1804 = vrot.lane.b32.xlu0 %v1786, 97
    %v1805 = vpop.permute.xlu0 %1804
    %1806 = vrot.lane.b32.xlu0 %v1787, 97
    %v1807 = vpop.permute.xlu0 %1806
    %1808 = vrot.lane.b32.xlu0 %v1788, 97
    %v1809 = vpop.permute.xlu0 %1808
    %v1810 = vsel %vm485, %v1797, %v1799
    %v1811 = vsel %vm485, %v1799, %v1801
    %v1812 = vsel %vm485, %v1801, %v1803
    %v1813 = vsel %vm485, %v1803, %v1805
    %v1814 = vsel %vm485, %v1805, %v1807
    %v1815 = vsel %vm485, %v1807, %v1809
    %v1823 = vadd.f32 %v1773, %v1810
    %v1824 = vadd.f32 %v1774, %v1811
    %v1825 = vadd.f32 %v1775, %v1812
    %v1826 = vadd.f32 %v1776, %v1813
    %v1827 = vadd.f32 %v1777, %v1814
    %v1828 = vadd.f32 %v1778, %v1815
    %v1829 = vadd.f32 %v1779, %v1809
    %s1830 = sld [smem:[#allocation2 + $0x185]]
    %v1831 = vstv %s1830
    %v1832 = vmul.f32 %v83, %v1831
    %v1833 = vmul.f32 %v84, %v1831
    %v1834 = vmul.f32 %v85, %v1831
    %v1835 = vmul.f32 %v86, %v1831
    %v1836 = vmul.f32 %v87, %v1831
    %v1837 = vmul.f32 %v88, %v1831
    %v1838 = vmul.f32 %v89, %v1831
    %1846 = vrot.lane.b32.xlu0 %v1832, 96
    %v1847 = vpop.permute.xlu0 %1846
    %1848 = vrot.lane.b32.xlu0 %v1833, 96
    %v1849 = vpop.permute.xlu0 %1848
    %1850 = vrot.lane.b32.xlu0 %v1834, 96
    %v1851 = vpop.permute.xlu0 %1850
    %1852 = vrot.lane.b32.xlu0 %v1835, 96
    %v1853 = vpop.permute.xlu0 %1852
    %1854 = vrot.lane.b32.xlu0 %v1836, 96
    %v1855 = vpop.permute.xlu0 %1854
    %1856 = vrot.lane.b32.xlu0 %v1837, 96
    %v1857 = vpop.permute.xlu0 %1856
    %1858 = vrot.lane.b32.xlu0 %v1838, 96
    %v1859 = vpop.permute.xlu0 %1858
    %v1860 = vsel %vm536, %v1847, %v1849
    %v1861 = vsel %vm536, %v1849, %v1851
    %v1862 = vsel %vm536, %v1851, %v1853
    %v1863 = vsel %vm536, %v1853, %v1855
    %v1864 = vsel %vm536, %v1855, %v1857
    %v1865 = vsel %vm536, %v1857, %v1859
    %v1873 = vadd.f32 %v1823, %v1860
    %v1874 = vadd.f32 %v1824, %v1861
    %v1875 = vadd.f32 %v1825, %v1862
    %v1876 = vadd.f32 %v1826, %v1863
    %v1877 = vadd.f32 %v1827, %v1864
    %v1878 = vadd.f32 %v1828, %v1865
    %v1879 = vadd.f32 %v1829, %v1859
    %s1880 = sld [smem:[#allocation2 + $0x186]]
    %v1881 = vstv %s1880
    %v1882 = vmul.f32 %v83, %v1881
    %v1883 = vmul.f32 %v84, %v1881
    %v1884 = vmul.f32 %v85, %v1881
    %v1885 = vmul.f32 %v86, %v1881
    %v1886 = vmul.f32 %v87, %v1881
    %v1887 = vmul.f32 %v88, %v1881
    %v1888 = vmul.f32 %v89, %v1881
    %v1889 = vmul.f32 %v90, %v1881
    %1898 = vrot.lane.b32.xlu0 %v1882, 68
    %v1899 = vpop.permute.xlu0 %1898
    %1900 = vrot.lane.b32.xlu0 %v1883, 68
    %v1901 = vpop.permute.xlu0 %1900
    %1902 = vrot.lane.b32.xlu0 %v1884, 68
    %v1903 = vpop.permute.xlu0 %1902
    %1904 = vrot.lane.b32.xlu0 %v1885, 68
    %v1905 = vpop.permute.xlu0 %1904
    %1906 = vrot.lane.b32.xlu0 %v1886, 68
    %v1907 = vpop.permute.xlu0 %1906
    %1908 = vrot.lane.b32.xlu0 %v1887, 68
    %v1909 = vpop.permute.xlu0 %1908
    %1910 = vrot.lane.b32.xlu0 %v1888, 68
    %v1911 = vpop.permute.xlu0 %1910
    %1912 = vrot.lane.b32.xlu0 %v1889, 68
    %v1913 = vpop.permute.xlu0 %1912
    %v1914 = vsel %vm591, %v1899, %v1901
    %v1915 = vsel %vm591, %v1901, %v1903
    %v1916 = vsel %vm591, %v1903, %v1905
    %v1917 = vsel %vm591, %v1905, %v1907
    %v1918 = vsel %vm591, %v1907, %v1909
    %v1919 = vsel %vm591, %v1909, %v1911
    %v1920 = vsel %vm591, %v1911, %v1913
    %v1928 = vadd.f32 %v1873, %v1914
    %v1929 = vadd.f32 %v1874, %v1915
    %v1930 = vadd.f32 %v1875, %v1916
    %v1931 = vadd.f32 %v1876, %v1917
    %v1932 = vadd.f32 %v1877, %v1918
    %v1933 = vadd.f32 %v1878, %v1919
    %v1934 = vadd.f32 %v1879, %v1920
    %s1935 = sld [smem:[#allocation2 + $0x187]]
    %v1936 = vstv %s1935
    %v1937 = vmul.f32 %v83, %v1936
    %v1938 = vmul.f32 %v84, %v1936
    %v1939 = vmul.f32 %v85, %v1936
    %v1940 = vmul.f32 %v86, %v1936
    %v1941 = vmul.f32 %v87, %v1936
    %v1942 = vmul.f32 %v88, %v1936
    %v1943 = vmul.f32 %v89, %v1936
    %v1944 = vmul.f32 %v90, %v1936
    %1953 = vrot.lane.b32.xlu0 %v1937, 67
    %v1954 = vpop.permute.xlu0 %1953
    %1955 = vrot.lane.b32.xlu0 %v1938, 67
    %v1956 = vpop.permute.xlu0 %1955
    %1957 = vrot.lane.b32.xlu0 %v1939, 67
    %v1958 = vpop.permute.xlu0 %1957
    %1959 = vrot.lane.b32.xlu0 %v1940, 67
    %v1960 = vpop.permute.xlu0 %1959
    %1961 = vrot.lane.b32.xlu0 %v1941, 67
    %v1962 = vpop.permute.xlu0 %1961
    %1963 = vrot.lane.b32.xlu0 %v1942, 67
    %v1964 = vpop.permute.xlu0 %1963
    %1965 = vrot.lane.b32.xlu0 %v1943, 67
    %v1966 = vpop.permute.xlu0 %1965
    %1967 = vrot.lane.b32.xlu0 %v1944, 67
    %v1968 = vpop.permute.xlu0 %1967
    %v1969 = vsel %vm647, %v1954, %v1956
    %v1970 = vsel %vm647, %v1956, %v1958
    %v1971 = vsel %vm647, %v1958, %v1960
    %v1972 = vsel %vm647, %v1960, %v1962
    %v1973 = vsel %vm647, %v1962, %v1964
    %v1974 = vsel %vm647, %v1964, %v1966
    %v1975 = vsel %vm647, %v1966, %v1968
    %v1983 = vadd.f32 %v1928, %v1969
    %v1984 = vadd.f32 %v1929, %v1970
    %v1985 = vadd.f32 %v1930, %v1971
    %v1986 = vadd.f32 %v1931, %v1972
    %v1987 = vadd.f32 %v1932, %v1973
    %v1988 = vadd.f32 %v1933, %v1974
    %v1989 = vadd.f32 %v1934, %v1975
    %s1990 = sld [smem:[#allocation2 + $0x188]]
    %v1991 = vstv %s1990
    %v1992 = vmul.f32 %v83, %v1991
    %v1993 = vmul.f32 %v84, %v1991
    %v1994 = vmul.f32 %v85, %v1991
    %v1995 = vmul.f32 %v86, %v1991
    %v1996 = vmul.f32 %v87, %v1991
    %v1997 = vmul.f32 %v88, %v1991
    %v1998 = vmul.f32 %v89, %v1991
    %v1999 = vmul.f32 %v90, %v1991
    %2008 = vrot.lane.b32.xlu0 %v1992, 66
    %v2009 = vpop.permute.xlu0 %2008
    %2010 = vrot.lane.b32.xlu0 %v1993, 66
    %v2011 = vpop.permute.xlu0 %2010
    %2012 = vrot.lane.b32.xlu0 %v1994, 66
    %v2013 = vpop.permute.xlu0 %2012
    %2014 = vrot.lane.b32.xlu0 %v1995, 66
    %v2015 = vpop.permute.xlu0 %2014
    %2016 = vrot.lane.b32.xlu0 %v1996, 66
    %v2017 = vpop.permute.xlu0 %2016
    %2018 = vrot.lane.b32.xlu0 %v1997, 66
    %v2019 = vpop.permute.xlu0 %2018
    %2020 = vrot.lane.b32.xlu0 %v1998, 66
    %v2021 = vpop.permute.xlu0 %2020
    %2022 = vrot.lane.b32.xlu0 %v1999, 66
    %v2023 = vpop.permute.xlu0 %2022
    %v2024 = vsel %vm703, %v2009, %v2011
    %v2025 = vsel %vm703, %v2011, %v2013
    %v2026 = vsel %vm703, %v2013, %v2015
    %v2027 = vsel %vm703, %v2015, %v2017
    %v2028 = vsel %vm703, %v2017, %v2019
    %v2029 = vsel %vm703, %v2019, %v2021
    %v2030 = vsel %vm703, %v2021, %v2023
    %v2038 = vadd.f32 %v1983, %v2024
    %v2039 = vadd.f32 %v1984, %v2025
    %v2040 = vadd.f32 %v1985, %v2026
    %v2041 = vadd.f32 %v1986, %v2027
    %v2042 = vadd.f32 %v1987, %v2028
    %v2043 = vadd.f32 %v1988, %v2029
    %v2044 = vadd.f32 %v1989, %v2030
    %s2045 = sld [smem:[#allocation4 + $0x3]]
    %v2046 = vstv %s2045
    %v2047 = vadd.f32 %v2038, %v2046
    %v2048 = vadd.f32 %v2039, %v2046
    %v2049 = vadd.f32 %v2040, %v2046
    %v2050 = vadd.f32 %v2041, %v2046
    %v2051 = vadd.f32 %v2042, %v2046
    %v2052 = vadd.f32 %v2043, %v2046
    %v2053 = vadd.f32 %v2044, %v2046
    %v2054 = vmax.f32 %v2047, 0.0
    %v2055 = vmax.f32 %v2048, 0.0
    %v2056 = vmax.f32 %v2049, 0.0
    %v2057 = vmax.f32 %v2050, 0.0
    %v2058 = vmax.f32 %v2051, 0.0
    %v2059 = vmax.f32 %v2052, 0.0
    %v2060 = vmax.f32 %v2053, 0.0
    %2068 = vrot.lane.b32.xlu0 %v734, 127
    %v2069 = vpop.permute.xlu0 %2068
    %2070 = vrot.lane.b32.xlu0 %v735, 127
    %v2071 = vpop.permute.xlu0 %2070
    %2072 = vrot.lane.b32.xlu0 %v736, 127
    %v2073 = vpop.permute.xlu0 %2072
    %2074 = vrot.lane.b32.xlu0 %v737, 127
    %v2075 = vpop.permute.xlu0 %2074
    %2076 = vrot.lane.b32.xlu0 %v738, 127
    %v2077 = vpop.permute.xlu0 %2076
    %2078 = vrot.lane.b32.xlu0 %v739, 127
    %v2079 = vpop.permute.xlu0 %2078
    %2080 = vrot.lane.b32.xlu0 %v740, 127
    %v2081 = vpop.permute.xlu0 %2080
    %v2082 = vsel %vm332, %v2069, %v2071
    %v2083 = vsel %vm332, %v2071, %v2073
    %v2084 = vsel %vm332, %v2073, %v2075
    %v2085 = vsel %vm332, %v2075, %v2077
    %v2086 = vsel %vm332, %v2077, %v2079
    %v2087 = vsel %vm332, %v2079, %v2081
    %v2095 = vmax.f32 %v734, %v2082
    %v2096 = vmax.f32 %v735, %v2083
    %v2097 = vmax.f32 %v736, %v2084
    %v2098 = vmax.f32 %v737, %v2085
    %v2099 = vmax.f32 %v738, %v2086
    %v2100 = vmax.f32 %v739, %v2087
    %v2101 = vmax.f32 %v740, %v2081
    %2109 = vrot.lane.b32.xlu0 %v2095, 98
    %v2110 = vpop.permute.xlu0 %2109
    %2111 = vrot.lane.b32.xlu0 %v2096, 98
    %v2112 = vpop.permute.xlu0 %2111
    %2113 = vrot.lane.b32.xlu0 %v2097, 98
    %v2114 = vpop.permute.xlu0 %2113
    %2115 = vrot.lane.b32.xlu0 %v2098, 98
    %v2116 = vpop.permute.xlu0 %2115
    %2117 = vrot.lane.b32.xlu0 %v2099, 98
    %v2118 = vpop.permute.xlu0 %2117
    %2119 = vrot.lane.b32.xlu0 %v2100, 98
    %v2120 = vpop.permute.xlu0 %2119
    %2121 = vrot.lane.b32.xlu0 %v2101, 98
    %v2122 = vpop.permute.xlu0 %2121
    %v2123 = vsel %vm434, %v2110, %v2112
    %v2124 = vsel %vm434, %v2112, %v2114
    %v2125 = vsel %vm434, %v2114, %v2116
    %v2126 = vsel %vm434, %v2116, %v2118
    %v2127 = vsel %vm434, %v2118, %v2120
    %v2128 = vsel %vm434, %v2120, %v2122
    %v2136 = vmax.f32 %v2095, %v2123
    %v2137 = vmax.f32 %v2096, %v2124
    %v2138 = vmax.f32 %v2097, %v2125
    %v2139 = vmax.f32 %v2098, %v2126
    %v2140 = vmax.f32 %v2099, %v2127
    %v2141 = vmax.f32 %v2100, %v2128
    %v2142 = vmax.f32 %v2101, %v2122
    %vm2143 = vcmask 318464
    %v2145 = vsel %vm2143, %v2142, 0
    %vm2147 = vcmask 1046528
    %v2149 = vsel %vm2147, %v291, 0
    %v2152 = vsel %vm2147, %v292, 0
    %2154 = vmatprep.subr.mxu0 %v92
    %2155 = vmatpush1.msra.mxu0 %v91
    %2156 = vmatprep.subr.mxu0 %v94
    %2157 = vmatpush1.msra.mxu0 %v93
    %2158 = vmatprep.subr.mxu0 %v96
    %2159 = vmatpush1.msra.mxu0 %v95
    %2160 = vmatprep.subr.mxu0 %v98
    %2161 = vmatpush1.msra.mxu0 %v97
    %2162 = vmatprep.subr.mxu0 %v100
    %2163 = vmatpush1.msra.mxu0 %v99
    %2164 = vmatprep.subr.mxu0 %v102
    %2165 = vmatpush1.msra.mxu0 %v101
    %2166 = vmatprep.subr.mxu0 %v104
    %2167 = vmatpush1.msra.mxu0 %v103
    %2168 = vmatprep.subr.mxu0 %v106
    %2169 = vmatpush1.msra.mxu0 %v105
    %2170 = vmatprep.subr.mxu0 %v108
    %2171 = vmatpush1.msra.mxu0 %v107
    %2172 = vmatprep.subr.mxu0 %v110
    %2173 = vmatpush1.msra.mxu0 %v109
    %2174 = vmatprep.subr.mxu0 %v112
    %2175 = vmatpush1.msra.mxu0 %v111
    %2176 = vmatprep.subr.mxu0 %v114
    %2177 = vmatpush1.msra.mxu0 %v113
    %2178 = vmatprep.subr.mxu0 %v116
    %2179 = vmatpush1.msra.mxu0 %v115
    %2180 = vmatprep.subr.mxu0 %v118
    %2181 = vmatpush1.msra.mxu0 %v117
    %2182 = vmatprep.subr.mxu0 %v120
    %2183 = vmatpush1.msra.mxu0 %v119
    %2184 = vmatprep.subr.mxu0 %v122
    %2185 = vmatpush1.msra.mxu0 %v121
    %2186 = vmatprep.subr.mxu0 %v124
    %2187 = vmatpush1.msra.mxu0 %v123
    %2188 = vmatprep.subr.mxu0 %v126
    %2189 = vmatpush1.msra.mxu0 %v125
    %2190 = vmatprep.subr.mxu0 %v128
    %2191 = vmatpush1.msra.mxu0 %v127
    %2192 = vmatprep.subr.mxu0 %v130
    %2193 = vmatpush1.msra.mxu0 %v129
    %2194 = vmatprep.subr.mxu0 %v132
    %2195 = vmatpush1.msra.mxu0 %v131
    %2196 = vmatprep.subr.mxu0 %v134
    %2197 = vmatpush1.msra.mxu0 %v133
    %2198 = vmatprep.subr.mxu0 %v136
    %2199 = vmatpush1.msra.mxu0 %v135
    %2200 = vmatprep.subr.mxu0 %v138
    %2201 = vmatpush1.msra.mxu0 %v137
    %2202 = vmatprep.subr.mxu0 %v140
    %2203 = vmatpush1.msra.mxu0 %v139
    %2204 = vmatprep.subr.mxu0 %v142
    %2205 = vmatpush1.msra.mxu0 %v141
    %2206 = vmatprep.subr.mxu0 %v144
    %2207 = vmatpush1.msra.mxu0 %v143
    %2208 = vmatprep.subr.mxu0 %v146
    %2209 = vmatpush1.msra.mxu0 %v145
    %2210 = vmatprep.subr.mxu0 %v148
    %2211 = vmatpush1.msra.mxu0 %v147
    %2212 = vmatprep.subr.mxu0 %v150
    %2213 = vmatpush1.msra.mxu0 %v149
    %2214 = vmatprep.subr.mxu0 %v152
    %2215 = vmatpush1.msra.mxu0 %v151
    %2216 = vmatprep.subr.mxu0 %v154
    %2217 = vmatpush1.msra.mxu0 %v153
    %2218 = vmatprep.mubr.f32.mxu0 %v2137
    %2219 = vmatmul.mubr.f32.gmra.mrb[0].mxu0 %v2136
    %v2220 = vpop.f32.mrb[0].mxu0
    %v2221 = vadd.f32 0.0, %v2220
    %v2222 = vpop.f32.mrb[0].mxu0
    %v2223 = vadd.f32 0.0, %v2222
    %2224 = vdwg.mxu0
    %2225 = vmatprep.subr.mxu0 %v156
    %2226 = vmatpush1.msra.mxu0 %v155
    %2227 = vmatprep.subr.mxu0 %v158
    %2228 = vmatpush1.msra.mxu0 %v157
    %2229 = vmatprep.subr.mxu0 %v160
    %2230 = vmatpush1.msra.mxu0 %v159
    %2231 = vmatprep.subr.mxu0 %v162
    %2232 = vmatpush1.msra.mxu0 %v161
    %2233 = vmatprep.subr.mxu0 %v164
    %2234 = vmatpush1.msra.mxu0 %v163
    %2235 = vmatprep.subr.mxu0 %v166
    %2236 = vmatpush1.msra.mxu0 %v165
    %2237 = vmatprep.subr.mxu0 %v168
    %2238 = vmatpush1.msra.mxu0 %v167
    %2239 = vmatprep.subr.mxu0 %v170
    %2240 = vmatpush1.msra.mxu0 %v169
    %2241 = vmatprep.subr.mxu0 %v172
    %2242 = vmatpush1.msra.mxu0 %v171
    %2243 = vmatprep.subr.mxu0 %v174
    %2244 = vmatpush1.msra.mxu0 %v173
    %2245 = vmatprep.subr.mxu0 %v176
    %2246 = vmatpush1.msra.mxu0 %v175
    %2247 = vmatprep.subr.mxu0 %v178
    %2248 = vmatpush1.msra.mxu0 %v177
    %2249 = vmatprep.subr.mxu0 %v180
    %2250 = vmatpush1.msra.mxu0 %v179
    %2251 = vmatprep.subr.mxu0 %v182
    %2252 = vmatpush1.msra.mxu0 %v181
    %2253 = vmatprep.subr.mxu0 %v184
    %2254 = vmatpush1.msra.mxu0 %v183
    %2255 = vmatprep.subr.mxu0 %v186
    %2256 = vmatpush1.msra.mxu0 %v185
    %2257 = vmatprep.subr.mxu0 %v188
    %2258 = vmatpush1.msra.mxu0 %v187
    %2259 = vmatprep.subr.mxu0 %v190
    %2260 = vmatpush1.msra.mxu0 %v189
    %2261 = vmatprep.subr.mxu0 %v192
    %2262 = vmatpush1.msra.mxu0 %v191
    %2263 = vmatprep.subr.mxu0 %v194
    %2264 = vmatpush1.msra.mxu0 %v193
    %2265 = vmatprep.subr.mxu0 %v196
    %2266 = vmatpush1.msra.mxu0 %v195
    %2267 = vmatprep.subr.mxu0 %v198
    %2268 = vmatpush1.msra.mxu0 %v197
    %2269 = vmatprep.subr.mxu0 %v200
    %2270 = vmatpush1.msra.mxu0 %v199
    %2271 = vmatprep.subr.mxu0 %v202
    %2272 = vmatpush1.msra.mxu0 %v201
    %2273 = vmatprep.subr.mxu0 %v204
    %2274 = vmatpush1.msra.mxu0 %v203
    %2275 = vmatprep.subr.mxu0 %v206
    %2276 = vmatpush1.msra.mxu0 %v205
    %2277 = vmatprep.subr.mxu0 %v208
    %2278 = vmatpush1.msra.mxu0 %v207
    %2279 = vmatprep.subr.mxu0 %v210
    %2280 = vmatpush1.msra.mxu0 %v209
    %2281 = vmatprep.subr.mxu0 %v212
    %2282 = vmatpush1.msra.mxu0 %v211
    %2283 = vmatprep.subr.mxu0 %v214
    %2284 = vmatpush1.msra.mxu0 %v213
    %2285 = vmatprep.subr.mxu0 %v216
    %2286 = vmatpush1.msra.mxu0 %v215
    %2287 = vmatprep.subr.mxu0 %v218
    %2288 = vmatpush1.msra.mxu0 %v217
    %2289 = vmatprep.mubr.f32.mxu0 %v2139
    %2290 = vmatmul.mubr.f32.gmra.mrb[0].mxu0 %v2138
    %v2291 = vpop.f32.mrb[0].mxu0
    %v2292 = vadd.f32 %v2221, %v2291
    %v2293 = vpop.f32.mrb[0].mxu0
    %v2294 = vadd.f32 %v2223, %v2293
    %2295 = vdwg.mxu0
    %2296 = vmatprep.subr.mxu0 %v220
    %2297 = vmatpush1.msra.mxu0 %v219
    %2298 = vmatprep.subr.mxu0 %v222
    %2299 = vmatpush1.msra.mxu0 %v221
    %2300 = vmatprep.subr.mxu0 %v224
    %2301 = vmatpush1.msra.mxu0 %v223
    %2302 = vmatprep.subr.mxu0 %v226
    %2303 = vmatpush1.msra.mxu0 %v225
    %2304 = vmatprep.subr.mxu0 %v228
    %2305 = vmatpush1.msra.mxu0 %v227
    %2306 = vmatprep.subr.mxu0 %v230
    %2307 = vmatpush1.msra.mxu0 %v229
    %2308 = vmatprep.subr.mxu0 %v232
    %2309 = vmatpush1.msra.mxu0 %v231
    %2310 = vmatprep.subr.mxu0 %v234
    %2311 = vmatpush1.msra.mxu0 %v233
    %2312 = vmatprep.subr.mxu0 %v236
    %2313 = vmatpush1.msra.mxu0 %v235
    %2314 = vmatprep.subr.mxu0 %v238
    %2315 = vmatpush1.msra.mxu0 %v237
    %2316 = vmatprep.subr.mxu0 %v240
    %2317 = vmatpush1.msra.mxu0 %v239
    %2318 = vmatprep.subr.mxu0 %v242
    %2319 = vmatpush1.msra.mxu0 %v241
    %2320 = vmatprep.subr.mxu0 %v244
    %2321 = vmatpush1.msra.mxu0 %v243
    %2322 = vmatprep.subr.mxu0 %v246
    %2323 = vmatpush1.msra.mxu0 %v245
    %2324 = vmatprep.subr.mxu0 %v248
    %2325 = vmatpush1.msra.mxu0 %v247
    %2326 = vmatprep.subr.mxu0 %v250
    %2327 = vmatpush1.msra.mxu0 %v249
    %2328 = vmatprep.subr.mxu0 %v252
    %2329 = vmatpush1.msra.mxu0 %v251
    %2330 = vmatprep.subr.mxu0 %v254
    %2331 = vmatpush1.msra.mxu0 %v253
    %2332 = vmatprep.subr.mxu0 %v256
    %2333 = vmatpush1.msra.mxu0 %v255
    %2334 = vmatprep.subr.mxu0 %v258
    %2335 = vmatpush1.msra.mxu0 %v257
    %2336 = vmatprep.subr.mxu0 %v260
    %2337 = vmatpush1.msra.mxu0 %v259
    %2338 = vmatprep.subr.mxu0 %v262
    %2339 = vmatpush1.msra.mxu0 %v261
    %2340 = vmatprep.subr.mxu0 %v264
    %2341 = vmatpush1.msra.mxu0 %v263
    %2342 = vmatprep.subr.mxu0 %v266
    %2343 = vmatpush1.msra.mxu0 %v265
    %2344 = vmatprep.subr.mxu0 %v268
    %2345 = vmatpush1.msra.mxu0 %v267
    %2346 = vmatprep.subr.mxu0 %v270
    %2347 = vmatpush1.msra.mxu0 %v269
    %2348 = vmatprep.subr.mxu0 %v272
    %2349 = vmatpush1.msra.mxu0 %v271
    %2350 = vmatprep.subr.mxu0 %v274
    %2351 = vmatpush1.msra.mxu0 %v273
    %2352 = vmatprep.subr.mxu0 %v276
    %2353 = vmatpush1.msra.mxu0 %v275
    %2354 = vmatprep.subr.mxu0 %v278
    %2355 = vmatpush1.msra.mxu0 %v277
    %2356 = vmatprep.subr.mxu0 %v280
    %2357 = vmatpush1.msra.mxu0 %v279
    %2358 = vmatprep.subr.mxu0 %v282
    %2359 = vmatpush1.msra.mxu0 %v281
    %2360 = vmatprep.mubr.f32.mxu0 %v2141
    %2361 = vmatmul.mubr.f32.gmra.mrb[0].mxu0 %v2140
    %v2362 = vpop.f32.mrb[0].mxu0
    %v2363 = vadd.f32 %v2292, %v2362
    %v2364 = vpop.f32.mrb[0].mxu0
    %v2365 = vadd.f32 %v2294, %v2364
    %2366 = vdwg.mxu0
    %2367 = vmatprep.subr.mxu0 %v284
    %2368 = vmatpush1.msra.mxu0 %v283
    %2369 = vmatprep.subr.mxu0 %v286
    %2370 = vmatpush1.msra.mxu0 %v285
    %2371 = vmatprep.subr.mxu0 %v288
    %2372 = vmatpush1.msra.mxu0 %v287
    %2373 = vmatprep.subr.mxu0 %v290
    %2374 = vmatpush1.msra.mxu0 %v289
    %2375 = vmatprep.subr.mxu0 %v2152
    %2376 = vmatpush1.msra.mxu0 %v2149
    %2377 = vmatprep.subr.mxu0 0.0
    %2378 = vmatpush1.msra.mxu0 0.0
    %2379 = vmatprep.subr.mxu0 0.0
    %2380 = vmatpush1.msra.mxu0 0.0
    %2381 = vmatprep.subr.mxu0 0.0
    %2382 = vmatpush1.msra.mxu0 0.0
    %2383 = vmatprep.subr.mxu0 0.0
    %2384 = vmatpush1.msra.mxu0 0.0
    %2385 = vmatprep.subr.mxu0 0.0
    %2386 = vmatpush1.msra.mxu0 0.0
    %2387 = vmatprep.subr.mxu0 0.0
    %2388 = vmatpush1.msra.mxu0 0.0
    %2389 = vmatprep.subr.mxu0 0.0
    %2390 = vmatpush1.msra.mxu0 0.0
    %2391 = vmatprep.subr.mxu0 0.0
    %2392 = vmatpush1.msra.mxu0 0.0
    %2393 = vmatprep.subr.mxu0 0.0
    %2394 = vmatpush1.msra.mxu0 0.0
    %2395 = vmatprep.subr.mxu0 0.0
    %2396 = vmatpush1.msra.mxu0 0.0
    %2397 = vmatprep.subr.mxu0 0.0
    %2398 = vmatpush1.msra.mxu0 0.0
    %2399 = vmatprep.subr.mxu0 0.0
    %2400 = vmatpush1.msra.mxu0 0.0
    %2401 = vmatprep.subr.mxu0 0.0
    %2402 = vmatpush1.msra.mxu0 0.0
    %2403 = vmatprep.subr.mxu0 0.0
    %2404 = vmatpush1.msra.mxu0 0.0
    %2405 = vmatprep.subr.mxu0 0.0
    %2406 = vmatpush1.msra.mxu0 0.0
    %2407 = vmatprep.subr.mxu0 0.0
    %2408 = vmatpush1.msra.mxu0 0.0
    %2409 = vmatprep.subr.mxu0 0.0
    %2410 = vmatpush1.msra.mxu0 0.0
    %2411 = vmatprep.subr.mxu0 0.0
    %2412 = vmatpush1.msra.mxu0 0.0
    %2413 = vmatprep.subr.mxu0 0.0
    %2414 = vmatpush1.msra.mxu0 0.0
    %2415 = vmatprep.subr.mxu0 0.0
    %2416 = vmatpush1.msra.mxu0 0.0
    %2417 = vmatprep.subr.mxu0 0.0
    %2418 = vmatpush1.msra.mxu0 0.0
    %2419 = vmatprep.subr.mxu0 0.0
    %2420 = vmatpush1.msra.mxu0 0.0
    %2421 = vmatprep.subr.mxu0 0.0
    %2422 = vmatpush1.msra.mxu0 0.0
    %2423 = vmatprep.subr.mxu0 0.0
    %2424 = vmatpush1.msra.mxu0 0.0
    %2425 = vmatprep.subr.mxu0 0.0
    %2426 = vmatpush1.msra.mxu0 0.0
    %2427 = vmatprep.subr.mxu0 0.0
    %2428 = vmatpush1.msra.mxu0 0.0
    %2429 = vmatprep.subr.mxu0 0.0
    %2430 = vmatpush1.msra.mxu0 0.0
    %2431 = vmatprep.mubr.f32.mxu0 0.0
    %2432 = vmatmul.mubr.f32.gmra.mrb[0].mxu0 %v2145
    %v2433 = vpop.f32.mrb[0].mxu0
    %v2434 = vadd.f32 %v2363, %v2433
    %v2435 = vpop.f32.mrb[0].mxu0
    %v2436 = vadd.f32 %v2365, %v2435
    %2437 = vdwg.mxu0
    %2445 = vrot.lane.b32.xlu0 %v1174, 127
    %v2446 = vpop.permute.xlu0 %2445
    %2447 = vrot.lane.b32.xlu0 %v1175, 127
    %v2448 = vpop.permute.xlu0 %2447
    %2449 = vrot.lane.b32.xlu0 %v1176, 127
    %v2450 = vpop.permute.xlu0 %2449
    %2451 = vrot.lane.b32.xlu0 %v1177, 127
    %v2452 = vpop.permute.xlu0 %2451
    %2453 = vrot.lane.b32.xlu0 %v1178, 127
    %v2454 = vpop.permute.xlu0 %2453
    %2455 = vrot.lane.b32.xlu0 %v1179, 127
    %v2456 = vpop.permute.xlu0 %2455
    %2457 = vrot.lane.b32.xlu0 %v1180, 127
    %v2458 = vpop.permute.xlu0 %2457
    %v2459 = vsel %vm332, %v2446, %v2448
    %v2460 = vsel %vm332, %v2448, %v2450
    %v2461 = vsel %vm332, %v2450, %v2452
    %v2462 = vsel %vm332, %v2452, %v2454
    %v2463 = vsel %vm332, %v2454, %v2456
    %v2464 = vsel %vm332, %v2456, %v2458
    %v2472 = vmax.f32 %v1174, %v2459
    %v2473 = vmax.f32 %v1175, %v2460
    %v2474 = vmax.f32 %v1176, %v2461
    %v2475 = vmax.f32 %v1177, %v2462
    %v2476 = vmax.f32 %v1178, %v2463
    %v2477 = vmax.f32 %v1179, %v2464
    %v2478 = vmax.f32 %v1180, %v2458
    %2486 = vrot.lane.b32.xlu0 %v2472, 98
    %v2487 = vpop.permute.xlu0 %2486
    %2488 = vrot.lane.b32.xlu0 %v2473, 98
    %v2489 = vpop.permute.xlu0 %2488
    %2490 = vrot.lane.b32.xlu0 %v2474, 98
    %v2491 = vpop.permute.xlu0 %2490
    %2492 = vrot.lane.b32.xlu0 %v2475, 98
    %v2493 = vpop.permute.xlu0 %2492
    %2494 = vrot.lane.b32.xlu0 %v2476, 98
    %v2495 = vpop.permute.xlu0 %2494
    %2496 = vrot.lane.b32.xlu0 %v2477, 98
    %v2497 = vpop.permute.xlu0 %2496
    %2498 = vrot.lane.b32.xlu0 %v2478, 98
    %v2499 = vpop.permute.xlu0 %2498
    %v2500 = vsel %vm434, %v2487, %v2489
    %v2501 = vsel %vm434, %v2489, %v2491
    %v2502 = vsel %vm434, %v2491, %v2493
    %v2503 = vsel %vm434, %v2493, %v2495
    %v2504 = vsel %vm434, %v2495, %v2497
    %v2505 = vsel %vm434, %v2497, %v2499
    %v2513 = vmax.f32 %v2472, %v2500
    %v2514 = vmax.f32 %v2473, %v2501
    %v2515 = vmax.f32 %v2474, %v2502
    %v2516 = vmax.f32 %v2475, %v2503
    %v2517 = vmax.f32 %v2476, %v2504
    %v2518 = vmax.f32 %v2477, %v2505
    %v2519 = vmax.f32 %v2478, %v2499
    %v2521 = vsel %vm2143, %v2519, 0
    %2523 = vmatprep.subr.mxu0 %v92
    %2524 = vmatpush1.msra.mxu0 %v91
    %2525 = vmatprep.subr.mxu0 %v94
    %2526 = vmatpush1.msra.mxu0 %v93
    %2527 = vmatprep.subr.mxu0 %v96
    %2528 = vmatpush1.msra.mxu0 %v95
    %2529 = vmatprep.subr.mxu0 %v98
    %2530 = vmatpush1.msra.mxu0 %v97
    %2531 = vmatprep.subr.mxu0 %v100
    %2532 = vmatpush1.msra.mxu0 %v99
    %2533 = vmatprep.subr.mxu0 %v102
    %2534 = vmatpush1.msra.mxu0 %v101
    %2535 = vmatprep.subr.mxu0 %v104
    %2536 = vmatpush1.msra.mxu0 %v103
    %2537 = vmatprep.subr.mxu0 %v106
    %2538 = vmatpush1.msra.mxu0 %v105
    %2539 = vmatprep.subr.mxu0 %v108
    %2540 = vmatpush1.msra.mxu0 %v107
    %2541 = vmatprep.subr.mxu0 %v110
    %2542 = vmatpush1.msra.mxu0 %v109
    %2543 = vmatprep.subr.mxu0 %v112
    %2544 = vmatpush1.msra.mxu0 %v111
    %2545 = vmatprep.subr.mxu0 %v114
    %2546 = vmatpush1.msra.mxu0 %v113
    %2547 = vmatprep.subr.mxu0 %v116
    %2548 = vmatpush1.msra.mxu0 %v115
    %2549 = vmatprep.subr.mxu0 %v118
    %2550 = vmatpush1.msra.mxu0 %v117
    %2551 = vmatprep.subr.mxu0 %v120
    %2552 = vmatpush1.msra.mxu0 %v119
    %2553 = vmatprep.subr.mxu0 %v122
    %2554 = vmatpush1.msra.mxu0 %v121
    %2555 = vmatprep.subr.mxu0 %v124
    %2556 = vmatpush1.msra.mxu0 %v123
    %2557 = vmatprep.subr.mxu0 %v126
    %2558 = vmatpush1.msra.mxu0 %v125
    %2559 = vmatprep.subr.mxu0 %v128
    %2560 = vmatpush1.msra.mxu0 %v127
    %2561 = vmatprep.subr.mxu0 %v130
    %2562 = vmatpush1.msra.mxu0 %v129
    %2563 = vmatprep.subr.mxu0 %v132
    %2564 = vmatpush1.msra.mxu0 %v131
    %2565 = vmatprep.subr.mxu0 %v134
    %2566 = vmatpush1.msra.mxu0 %v133
    %2567 = vmatprep.subr.mxu0 %v136
    %2568 = vmatpush1.msra.mxu0 %v135
    %2569 = vmatprep.subr.mxu0 %v138
    %2570 = vmatpush1.msra.mxu0 %v137
    %2571 = vmatprep.subr.mxu0 %v140
    %2572 = vmatpush1.msra.mxu0 %v139
    %2573 = vmatprep.subr.mxu0 %v142
    %2574 = vmatpush1.msra.mxu0 %v141
    %2575 = vmatprep.subr.mxu0 %v144
    %2576 = vmatpush1.msra.mxu0 %v143
    %2577 = vmatprep.subr.mxu0 %v146
    %2578 = vmatpush1.msra.mxu0 %v145
    %2579 = vmatprep.subr.mxu0 %v148
    %2580 = vmatpush1.msra.mxu0 %v147
    %2581 = vmatprep.subr.mxu0 %v150
    %2582 = vmatpush1.msra.mxu0 %v149
    %2583 = vmatprep.subr.mxu0 %v152
    %2584 = vmatpush1.msra.mxu0 %v151
    %2585 = vmatprep.subr.mxu0 %v154
    %2586 = vmatpush1.msra.mxu0 %v153
    %2587 = vmatprep.mubr.f32.mxu0 %v2514
    %2588 = vmatmul.mubr.f32.gmra.mrb[0].mxu0 %v2513
    %v2589 = vpop.f32.mrb[0].mxu0
    %v2590 = vadd.f32 0.0, %v2589
    %v2591 = vpop.f32.mrb[0].mxu0
    %v2592 = vadd.f32 0.0, %v2591
    %2593 = vdwg.mxu0
    %2594 = vmatprep.subr.mxu0 %v156
    %2595 = vmatpush1.msra.mxu0 %v155
    %2596 = vmatprep.subr.mxu0 %v158
    %2597 = vmatpush1.msra.mxu0 %v157
    %2598 = vmatprep.subr.mxu0 %v160
    %2599 = vmatpush1.msra.mxu0 %v159
    %2600 = vmatprep.subr.mxu0 %v162
    %2601 = vmatpush1.msra.mxu0 %v161
    %2602 = vmatprep.subr.mxu0 %v164
    %2603 = vmatpush1.msra.mxu0 %v163
    %2604 = vmatprep.subr.mxu0 %v166
    %2605 = vmatpush1.msra.mxu0 %v165
    %2606 = vmatprep.subr.mxu0 %v168
    %2607 = vmatpush1.msra.mxu0 %v167
    %2608 = vmatprep.subr.mxu0 %v170
    %2609 = vmatpush1.msra.mxu0 %v169
    %2610 = vmatprep.subr.mxu0 %v172
    %2611 = vmatpush1.msra.mxu0 %v171
    %2612 = vmatprep.subr.mxu0 %v174
    %2613 = vmatpush1.msra.mxu0 %v173
    %2614 = vmatprep.subr.mxu0 %v176
    %2615 = vmatpush1.msra.mxu0 %v175
    %2616 = vmatprep.subr.mxu0 %v178
    %2617 = vmatpush1.msra.mxu0 %v177
    %2618 = vmatprep.subr.mxu0 %v180
    %2619 = vmatpush1.msra.mxu0 %v179
    %2620 = vmatprep.subr.mxu0 %v182
    %2621 = vmatpush1.msra.mxu0 %v181
    %2622 = vmatprep.subr.mxu0 %v184
    %2623 = vmatpush1.msra.mxu0 %v183
    %2624 = vmatprep.subr.mxu0 %v186
    %2625 = vmatpush1.msra.mxu0 %v185
    %2626 = vmatprep.subr.mxu0 %v188
    %2627 = vmatpush1.msra.mxu0 %v187
    %2628 = vmatprep.subr.mxu0 %v190
    %2629 = vmatpush1.msra.mxu0 %v189
    %2630 = vmatprep.subr.mxu0 %v192
    %2631 = vmatpush1.msra.mxu0 %v191
    %2632 = vmatprep.subr.mxu0 %v194
    %2633 = vmatpush1.msra.mxu0 %v193
    %2634 = vmatprep.subr.mxu0 %v196
    %2635 = vmatpush1.msra.mxu0 %v195
    %2636 = vmatprep.subr.mxu0 %v198
    %2637 = vmatpush1.msra.mxu0 %v197
    %2638 = vmatprep.subr.mxu0 %v200
    %2639 = vmatpush1.msra.mxu0 %v199
    %2640 = vmatprep.subr.mxu0 %v202
    %2641 = vmatpush1.msra.mxu0 %v201
    %2642 = vmatprep.subr.mxu0 %v204
    %2643 = vmatpush1.msra.mxu0 %v203
    %2644 = vmatprep.subr.mxu0 %v206
    %2645 = vmatpush1.msra.mxu0 %v205
    %2646 = vmatprep.subr.mxu0 %v208
    %2647 = vmatpush1.msra.mxu0 %v207
    %2648 = vmatprep.subr.mxu0 %v210
    %2649 = vmatpush1.msra.mxu0 %v209
    %2650 = vmatprep.subr.mxu0 %v212
    %2651 = vmatpush1.msra.mxu0 %v211
    %2652 = vmatprep.subr.mxu0 %v214
    %2653 = vmatpush1.msra.mxu0 %v213
    %2654 = vmatprep.subr.mxu0 %v216
    %2655 = vmatpush1.msra.mxu0 %v215
    %2656 = vmatprep.subr.mxu0 %v218
    %2657 = vmatpush1.msra.mxu0 %v217
    %2658 = vmatprep.mubr.f32.mxu0 %v2516
    %2659 = vmatmul.mubr.f32.gmra.mrb[0].mxu0 %v2515
    %v2660 = vpop.f32.mrb[0].mxu0
    %v2661 = vadd.f32 %v2590, %v2660
    %v2662 = vpop.f32.mrb[0].mxu0
    %v2663 = vadd.f32 %v2592, %v2662
    %2664 = vdwg.mxu0
    %2665 = vmatprep.subr.mxu0 %v220
    %2666 = vmatpush1.msra.mxu0 %v219
    %2667 = vmatprep.subr.mxu0 %v222
    %2668 = vmatpush1.msra.mxu0 %v221
    %2669 = vmatprep.subr.mxu0 %v224
    %2670 = vmatpush1.msra.mxu0 %v223
    %2671 = vmatprep.subr.mxu0 %v226
    %2672 = vmatpush1.msra.mxu0 %v225
    %2673 = vmatprep.subr.mxu0 %v228
    %2674 = vmatpush1.msra.mxu0 %v227
    %2675 = vmatprep.subr.mxu0 %v230
    %2676 = vmatpush1.msra.mxu0 %v229
    %2677 = vmatprep.subr.mxu0 %v232
    %2678 = vmatpush1.msra.mxu0 %v231
    %2679 = vmatprep.subr.mxu0 %v234
    %2680 = vmatpush1.msra.mxu0 %v233
    %2681 = vmatprep.subr.mxu0 %v236
    %2682 = vmatpush1.msra.mxu0 %v235
    %2683 = vmatprep.subr.mxu0 %v238
    %2684 = vmatpush1.msra.mxu0 %v237
    %2685 = vmatprep.subr.mxu0 %v240
    %2686 = vmatpush1.msra.mxu0 %v239
    %2687 = vmatprep.subr.mxu0 %v242
    %2688 = vmatpush1.msra.mxu0 %v241
    %2689 = vmatprep.subr.mxu0 %v244
    %2690 = vmatpush1.msra.mxu0 %v243
    %2691 = vmatprep.subr.mxu0 %v246
    %2692 = vmatpush1.msra.mxu0 %v245
    %2693 = vmatprep.subr.mxu0 %v248
    %2694 = vmatpush1.msra.mxu0 %v247
    %2695 = vmatprep.subr.mxu0 %v250
    %2696 = vmatpush1.msra.mxu0 %v249
    %2697 = vmatprep.subr.mxu0 %v252
    %2698 = vmatpush1.msra.mxu0 %v251
    %2699 = vmatprep.subr.mxu0 %v254
    %2700 = vmatpush1.msra.mxu0 %v253
    %2701 = vmatprep.subr.mxu0 %v256
    %2702 = vmatpush1.msra.mxu0 %v255
    %2703 = vmatprep.subr.mxu0 %v258
    %2704 = vmatpush1.msra.mxu0 %v257
    %2705 = vmatprep.subr.mxu0 %v260
    %2706 = vmatpush1.msra.mxu0 %v259
    %2707 = vmatprep.subr.mxu0 %v262
    %2708 = vmatpush1.msra.mxu0 %v261
    %2709 = vmatprep.subr.mxu0 %v264
    %2710 = vmatpush1.msra.mxu0 %v263
    %2711 = vmatprep.subr.mxu0 %v266
    %2712 = vmatpush1.msra.mxu0 %v265
    %2713 = vmatprep.subr.mxu0 %v268
    %2714 = vmatpush1.msra.mxu0 %v267
    %2715 = vmatprep.subr.mxu0 %v270
    %2716 = vmatpush1.msra.mxu0 %v269
    %2717 = vmatprep.subr.mxu0 %v272
    %2718 = vmatpush1.msra.mxu0 %v271
    %2719 = vmatprep.subr.mxu0 %v274
    %2720 = vmatpush1.msra.mxu0 %v273
    %2721 = vmatprep.subr.mxu0 %v276
    %2722 = vmatpush1.msra.mxu0 %v275
    %2723 = vmatprep.subr.mxu0 %v278
    %2724 = vmatpush1.msra.mxu0 %v277
    %2725 = vmatprep.subr.mxu0 %v280
    %2726 = vmatpush1.msra.mxu0 %v279
    %2727 = vmatprep.subr.mxu0 %v282
    %2728 = vmatpush1.msra.mxu0 %v281
    %2729 = vmatprep.mubr.f32.mxu0 %v2518
    %2730 = vmatmul.mubr.f32.gmra.mrb[0].mxu0 %v2517
    %v2731 = vpop.f32.mrb[0].mxu0
    %v2732 = vadd.f32 %v2661, %v2731
    %v2733 = vpop.f32.mrb[0].mxu0
    %v2734 = vadd.f32 %v2663, %v2733
    %2735 = vdwg.mxu0
    %2736 = vmatprep.subr.mxu0 %v284
    %2737 = vmatpush1.msra.mxu0 %v283
    %2738 = vmatprep.subr.mxu0 %v286
    %2739 = vmatpush1.msra.mxu0 %v285
    %2740 = vmatprep.subr.mxu0 %v288
    %2741 = vmatpush1.msra.mxu0 %v287
    %2742 = vmatprep.subr.mxu0 %v290
    %2743 = vmatpush1.msra.mxu0 %v289
    %2744 = vmatprep.subr.mxu0 %v2152
    %2745 = vmatpush1.msra.mxu0 %v2149
    %2746 = vmatprep.subr.mxu0 0.0
    %2747 = vmatpush1.msra.mxu0 0.0
    %2748 = vmatprep.subr.mxu0 0.0
    %2749 = vmatpush1.msra.mxu0 0.0
    %2750 = vmatprep.subr.mxu0 0.0
    %2751 = vmatpush1.msra.mxu0 0.0
    %2752 = vmatprep.subr.mxu0 0.0
    %2753 = vmatpush1.msra.mxu0 0.0
    %2754 = vmatprep.subr.mxu0 0.0
    %2755 = vmatpush1.msra.mxu0 0.0
    %2756 = vmatprep.subr.mxu0 0.0
    %2757 = vmatpush1.msra.mxu0 0.0
    %2758 = vmatprep.subr.mxu0 0.0
    %2759 = vmatpush1.msra.mxu0 0.0
    %2760 = vmatprep.subr.mxu0 0.0
    %2761 = vmatpush1.msra.mxu0 0.0
    %2762 = vmatprep.subr.mxu0 0.0
    %2763 = vmatpush1.msra.mxu0 0.0
    %2764 = vmatprep.subr.mxu0 0.0
    %2765 = vmatpush1.msra.mxu0 0.0
    %2766 = vmatprep.subr.mxu0 0.0
    %2767 = vmatpush1.msra.mxu0 0.0
    %2768 = vmatprep.subr.mxu0 0.0
    %2769 = vmatpush1.msra.mxu0 0.0
    %2770 = vmatprep.subr.mxu0 0.0
    %2771 = vmatpush1.msra.mxu0 0.0
    %2772 = vmatprep.subr.mxu0 0.0
    %2773 = vmatpush1.msra.mxu0 0.0
    %2774 = vmatprep.subr.mxu0 0.0
    %2775 = vmatpush1.msra.mxu0 0.0
    %2776 = vmatprep.subr.mxu0 0.0
    %2777 = vmatpush1.msra.mxu0 0.0
    %2778 = vmatprep.subr.mxu0 0.0
    %2779 = vmatpush1.msra.mxu0 0.0
    %2780 = vmatprep.subr.mxu0 0.0
    %2781 = vmatpush1.msra.mxu0 0.0
    %2782 = vmatprep.subr.mxu0 0.0
    %2783 = vmatpush1.msra.mxu0 0.0
    %2784 = vmatprep.subr.mxu0 0.0
    %2785 = vmatpush1.msra.mxu0 0.0
    %2786 = vmatprep.subr.mxu0 0.0
    %2787 = vmatpush1.msra.mxu0 0.0
    %2788 = vmatprep.subr.mxu0 0.0
    %2789 = vmatpush1.msra.mxu0 0.0
    %2790 = vmatprep.subr.mxu0 0.0
    %2791 = vmatpush1.msra.mxu0 0.0
    %2792 = vmatprep.subr.mxu0 0.0
    %2793 = vmatpush1.msra.mxu0 0.0
    %2794 = vmatprep.subr.mxu0 0.0
    %2795 = vmatpush1.msra.mxu0 0.0
    %2796 = vmatprep.subr.mxu0 0.0
    %2797 = vmatpush1.msra.mxu0 0.0
    %2798 = vmatprep.subr.mxu0 0.0
    %2799 = vmatpush1.msra.mxu0 0.0
    %2800 = vmatprep.mubr.f32.mxu0 0.0
    %2801 = vmatmul.mubr.f32.gmra.mrb[0].mxu0 %v2521
    %v2802 = vpop.f32.mrb[0].mxu0
    %v2803 = vadd.f32 %v2732, %v2802
    %v2804 = vpop.f32.mrb[0].mxu0
    %v2805 = vadd.f32 %v2734, %v2804
    %2806 = vdwg.mxu0
    %2814 = vrot.lane.b32.xlu0 %v1614, 127
    %v2815 = vpop.permute.xlu0 %2814
    %2816 = vrot.lane.b32.xlu0 %v1615, 127
    %v2817 = vpop.permute.xlu0 %2816
    %2818 = vrot.lane.b32.xlu0 %v1616, 127
    %v2819 = vpop.permute.xlu0 %2818
    %2820 = vrot.lane.b32.xlu0 %v1617, 127
    %v2821 = vpop.permute.xlu0 %2820
    %2822 = vrot.lane.b32.xlu0 %v1618, 127
    %v2823 = vpop.permute.xlu0 %2822
    %2824 = vrot.lane.b32.xlu0 %v1619, 127
    %v2825 = vpop.permute.xlu0 %2824
    %2826 = vrot.lane.b32.xlu0 %v1620, 127
    %v2827 = vpop.permute.xlu0 %2826
    %v2828 = vsel %vm332, %v2815, %v2817
    %v2829 = vsel %vm332, %v2817, %v2819
    %v2830 = vsel %vm332, %v2819, %v2821
    %v2831 = vsel %vm332, %v2821, %v2823
    %v2832 = vsel %vm332, %v2823, %v2825
    %v2833 = vsel %vm332, %v2825, %v2827
    %v2841 = vmax.f32 %v1614, %v2828
    %v2842 = vmax.f32 %v1615, %v2829
    %v2843 = vmax.f32 %v1616, %v2830
    %v2844 = vmax.f32 %v1617, %v2831
    %v2845 = vmax.f32 %v1618, %v2832
    %v2846 = vmax.f32 %v1619, %v2833
    %v2847 = vmax.f32 %v1620, %v2827
    %2855 = vrot.lane.b32.xlu0 %v2841, 98
    %v2856 = vpop.permute.xlu0 %2855
    %2857 = vrot.lane.b32.xlu0 %v2842, 98
    %v2858 = vpop.permute.xlu0 %2857
    %2859 = vrot.lane.b32.xlu0 %v2843, 98
    %v2860 = vpop.permute.xlu0 %2859
    %2861 = vrot.lane.b32.xlu0 %v2844, 98
    %v2862 = vpop.permute.xlu0 %2861
    %2863 = vrot.lane.b32.xlu0 %v2845, 98
    %v2864 = vpop.permute.xlu0 %2863
    %2865 = vrot.lane.b32.xlu0 %v2846, 98
    %v2866 = vpop.permute.xlu0 %2865
    %2867 = vrot.lane.b32.xlu0 %v2847, 98
    %v2868 = vpop.permute.xlu0 %2867
    %v2869 = vsel %vm434, %v2856, %v2858
    %v2870 = vsel %vm434, %v2858, %v2860
    %v2871 = vsel %vm434, %v2860, %v2862
    %v2872 = vsel %vm434, %v2862, %v2864
    %v2873 = vsel %vm434, %v2864, %v2866
    %v2874 = vsel %vm434, %v2866, %v2868
    %v2882 = vmax.f32 %v2841, %v2869
    %v2883 = vmax.f32 %v2842, %v2870
    %v2884 = vmax.f32 %v2843, %v2871
    %v2885 = vmax.f32 %v2844, %v2872
    %v2886 = vmax.f32 %v2845, %v2873
    %v2887 = vmax.f32 %v2846, %v2874
    %v2888 = vmax.f32 %v2847, %v2868
    %v2890 = vsel %vm2143, %v2888, 0
    %2892 = vmatprep.subr.mxu0 %v92
    %2893 = vmatpush1.msra.mxu0 %v91
    %2894 = vmatprep.subr.mxu0 %v94
    %2895 = vmatpush1.msra.mxu0 %v93
    %2896 = vmatprep.subr.mxu0 %v96
    %2897 = vmatpush1.msra.mxu0 %v95
    %2898 = vmatprep.subr.mxu0 %v98
    %2899 = vmatpush1.msra.mxu0 %v97
    %2900 = vmatprep.subr.mxu0 %v100
    %2901 = vmatpush1.msra.mxu0 %v99
    %2902 = vmatprep.subr.mxu0 %v102
    %2903 = vmatpush1.msra.mxu0 %v101
    %2904 = vmatprep.subr.mxu0 %v104
    %2905 = vmatpush1.msra.mxu0 %v103
    %2906 = vmatprep.subr.mxu0 %v106
    %2907 = vmatpush1.msra.mxu0 %v105
    %2908 = vmatprep.subr.mxu0 %v108
    %2909 = vmatpush1.msra.mxu0 %v107
    %2910 = vmatprep.subr.mxu0 %v110
    %2911 = vmatpush1.msra.mxu0 %v109
    %2912 = vmatprep.subr.mxu0 %v112
    %2913 = vmatpush1.msra.mxu0 %v111
    %2914 = vmatprep.subr.mxu0 %v114
    %2915 = vmatpush1.msra.mxu0 %v113
    %2916 = vmatprep.subr.mxu0 %v116
    %2917 = vmatpush1.msra.mxu0 %v115
    %2918 = vmatprep.subr.mxu0 %v118
    %2919 = vmatpush1.msra.mxu0 %v117
    %2920 = vmatprep.subr.mxu0 %v120
    %2921 = vmatpush1.msra.mxu0 %v119
    %2922 = vmatprep.subr.mxu0 %v122
    %2923 = vmatpush1.msra.mxu0 %v121
    %2924 = vmatprep.subr.mxu0 %v124
    %2925 = vmatpush1.msra.mxu0 %v123
    %2926 = vmatprep.subr.mxu0 %v126
    %2927 = vmatpush1.msra.mxu0 %v125
    %2928 = vmatprep.subr.mxu0 %v128
    %2929 = vmatpush1.msra.mxu0 %v127
    %2930 = vmatprep.subr.mxu0 %v130
    %2931 = vmatpush1.msra.mxu0 %v129
    %2932 = vmatprep.subr.mxu0 %v132
    %2933 = vmatpush1.msra.mxu0 %v131
    %2934 = vmatprep.subr.mxu0 %v134
    %2935 = vmatpush1.msra.mxu0 %v133
    %2936 = vmatprep.subr.mxu0 %v136
    %2937 = vmatpush1.msra.mxu0 %v135
    %2938 = vmatprep.subr.mxu0 %v138
    %2939 = vmatpush1.msra.mxu0 %v137
    %2940 = vmatprep.subr.mxu0 %v140
    %2941 = vmatpush1.msra.mxu0 %v139
    %2942 = vmatprep.subr.mxu0 %v142
    %2943 = vmatpush1.msra.mxu0 %v141
    %2944 = vmatprep.subr.mxu0 %v144
    %2945 = vmatpush1.msra.mxu0 %v143
    %2946 = vmatprep.subr.mxu0 %v146
    %2947 = vmatpush1.msra.mxu0 %v145
    %2948 = vmatprep.subr.mxu0 %v148
    %2949 = vmatpush1.msra.mxu0 %v147
    %2950 = vmatprep.subr.mxu0 %v150
    %2951 = vmatpush1.msra.mxu0 %v149
    %2952 = vmatprep.subr.mxu0 %v152
    %2953 = vmatpush1.msra.mxu0 %v151
    %2954 = vmatprep.subr.mxu0 %v154
    %2955 = vmatpush1.msra.mxu0 %v153
    %2956 = vmatprep.mubr.f32.mxu0 %v2883
    %2957 = vmatmul.mubr.f32.gmra.mrb[0].mxu0 %v2882
    %v2958 = vpop.f32.mrb[0].mxu0
    %v2959 = vadd.f32 0.0, %v2958
    %v2960 = vpop.f32.mrb[0].mxu0
    %v2961 = vadd.f32 0.0, %v2960
    %2962 = vdwg.mxu0
    %2963 = vmatprep.subr.mxu0 %v156
    %2964 = vmatpush1.msra.mxu0 %v155
    %2965 = vmatprep.subr.mxu0 %v158
    %2966 = vmatpush1.msra.mxu0 %v157
    %2967 = vmatprep.subr.mxu0 %v160
    %2968 = vmatpush1.msra.mxu0 %v159
    %2969 = vmatprep.subr.mxu0 %v162
    %2970 = vmatpush1.msra.mxu0 %v161
    %2971 = vmatprep.subr.mxu0 %v164
    %2972 = vmatpush1.msra.mxu0 %v163
    %2973 = vmatprep.subr.mxu0 %v166
    %2974 = vmatpush1.msra.mxu0 %v165
    %2975 = vmatprep.subr.mxu0 %v168
    %2976 = vmatpush1.msra.mxu0 %v167
    %2977 = vmatprep.subr.mxu0 %v170
    %2978 = vmatpush1.msra.mxu0 %v169
    %2979 = vmatprep.subr.mxu0 %v172
    %2980 = vmatpush1.msra.mxu0 %v171
    %2981 = vmatprep.subr.mxu0 %v174
    %2982 = vmatpush1.msra.mxu0 %v173
    %2983 = vmatprep.subr.mxu0 %v176
    %2984 = vmatpush1.msra.mxu0 %v175
    %2985 = vmatprep.subr.mxu0 %v178
    %2986 = vmatpush1.msra.mxu0 %v177
    %2987 = vmatprep.subr.mxu0 %v180
    %2988 = vmatpush1.msra.mxu0 %v179
    %2989 = vmatprep.subr.mxu0 %v182
    %2990 = vmatpush1.msra.mxu0 %v181
    %2991 = vmatprep.subr.mxu0 %v184
    %2992 = vmatpush1.msra.mxu0 %v183
    %2993 = vmatprep.subr.mxu0 %v186
    %2994 = vmatpush1.msra.mxu0 %v185
    %2995 = vmatprep.subr.mxu0 %v188
    %2996 = vmatpush1.msra.mxu0 %v187
    %2997 = vmatprep.subr.mxu0 %v190
    %2998 = vmatpush1.msra.mxu0 %v189
    %2999 = vmatprep.subr.mxu0 %v192
    %3000 = vmatpush1.msra.mxu0 %v191
    %3001 = vmatprep.subr.mxu0 %v194
    %3002 = vmatpush1.msra.mxu0 %v193
    %3003 = vmatprep.subr.mxu0 %v196
    %3004 = vmatpush1.msra.mxu0 %v195
    %3005 = vmatprep.subr.mxu0 %v198
    %3006 = vmatpush1.msra.mxu0 %v197
    %3007 = vmatprep.subr.mxu0 %v200
    %3008 = vmatpush1.msra.mxu0 %v199
    %3009 = vmatprep.subr.mxu0 %v202
    %3010 = vmatpush1.msra.mxu0 %v201
    %3011 = vmatprep.subr.mxu0 %v204
    %3012 = vmatpush1.msra.mxu0 %v203
    %3013 = vmatprep.subr.mxu0 %v206
    %3014 = vmatpush1.msra.mxu0 %v205
    %3015 = vmatprep.subr.mxu0 %v208
    %3016 = vmatpush1.msra.mxu0 %v207
    %3017 = vmatprep.subr.mxu0 %v210
    %3018 = vmatpush1.msra.mxu0 %v209
    %3019 = vmatprep.subr.mxu0 %v212
    %3020 = vmatpush1.msra.mxu0 %v211
    %3021 = vmatprep.subr.mxu0 %v214
    %3022 = vmatpush1.msra.mxu0 %v213
    %3023 = vmatprep.subr.mxu0 %v216
    %3024 = vmatpush1.msra.mxu0 %v215
    %3025 = vmatprep.subr.mxu0 %v218
    %3026 = vmatpush1.msra.mxu0 %v217
    %3027 = vmatprep.mubr.f32.mxu0 %v2885
    %3028 = vmatmul.mubr.f32.gmra.mrb[0].mxu0 %v2884
    %v3029 = vpop.f32.mrb[0].mxu0
    %v3030 = vadd.f32 %v2959, %v3029
    %v3031 = vpop.f32.mrb[0].mxu0
    %v3032 = vadd.f32 %v2961, %v3031
    %3033 = vdwg.mxu0
    %3034 = vmatprep.subr.mxu0 %v220
    %3035 = vmatpush1.msra.mxu0 %v219
    %3036 = vmatprep.subr.mxu0 %v222
    %3037 = vmatpush1.msra.mxu0 %v221
    %3038 = vmatprep.subr.mxu0 %v224
    %3039 = vmatpush1.msra.mxu0 %v223
    %3040 = vmatprep.subr.mxu0 %v226
    %3041 = vmatpush1.msra.mxu0 %v225
    %3042 = vmatprep.subr.mxu0 %v228
    %3043 = vmatpush1.msra.mxu0 %v227
    %3044 = vmatprep.subr.mxu0 %v230
    %3045 = vmatpush1.msra.mxu0 %v229
    %3046 = vmatprep.subr.mxu0 %v232
    %3047 = vmatpush1.msra.mxu0 %v231
    %3048 = vmatprep.subr.mxu0 %v234
    %3049 = vmatpush1.msra.mxu0 %v233
    %3050 = vmatprep.subr.mxu0 %v236
    %3051 = vmatpush1.msra.mxu0 %v235
    %3052 = vmatprep.subr.mxu0 %v238
    %3053 = vmatpush1.msra.mxu0 %v237
    %3054 = vmatprep.subr.mxu0 %v240
    %3055 = vmatpush1.msra.mxu0 %v239
    %3056 = vmatprep.subr.mxu0 %v242
    %3057 = vmatpush1.msra.mxu0 %v241
    %3058 = vmatprep.subr.mxu0 %v244
    %3059 = vmatpush1.msra.mxu0 %v243
    %3060 = vmatprep.subr.mxu0 %v246
    %3061 = vmatpush1.msra.mxu0 %v245
    %3062 = vmatprep.subr.mxu0 %v248
    %3063 = vmatpush1.msra.mxu0 %v247
    %3064 = vmatprep.subr.mxu0 %v250
    %3065 = vmatpush1.msra.mxu0 %v249
    %3066 = vmatprep.subr.mxu0 %v252
    %3067 = vmatpush1.msra.mxu0 %v251
    %3068 = vmatprep.subr.mxu0 %v254
    %3069 = vmatpush1.msra.mxu0 %v253
    %3070 = vmatprep.subr.mxu0 %v256
    %3071 = vmatpush1.msra.mxu0 %v255
    %3072 = vmatprep.subr.mxu0 %v258
    %3073 = vmatpush1.msra.mxu0 %v257
    %3074 = vmatprep.subr.mxu0 %v260
    %3075 = vmatpush1.msra.mxu0 %v259
    %3076 = vmatprep.subr.mxu0 %v262
    %3077 = vmatpush1.msra.mxu0 %v261
    %3078 = vmatprep.subr.mxu0 %v264
    %3079 = vmatpush1.msra.mxu0 %v263
    %3080 = vmatprep.subr.mxu0 %v266
    %3081 = vmatpush1.msra.mxu0 %v265
    %3082 = vmatprep.subr.mxu0 %v268
    %3083 = vmatpush1.msra.mxu0 %v267
    %3084 = vmatprep.subr.mxu0 %v270
    %3085 = vmatpush1.msra.mxu0 %v269
    %3086 = vmatprep.subr.mxu0 %v272
    %3087 = vmatpush1.msra.mxu0 %v271
    %3088 = vmatprep.subr.mxu0 %v274
    %3089 = vmatpush1.msra.mxu0 %v273
    %3090 = vmatprep.subr.mxu0 %v276
    %3091 = vmatpush1.msra.mxu0 %v275
    %3092 = vmatprep.subr.mxu0 %v278
    %3093 = vmatpush1.msra.mxu0 %v277
    %3094 = vmatprep.subr.mxu0 %v280
    %3095 = vmatpush1.msra.mxu0 %v279
    %3096 = vmatprep.subr.mxu0 %v282
    %3097 = vmatpush1.msra.mxu0 %v281
    %3098 = vmatprep.mubr.f32.mxu0 %v2887
    %3099 = vmatmul.mubr.f32.gmra.mrb[0].mxu0 %v2886
    %v3100 = vpop.f32.mrb[0].mxu0
    %v3101 = vadd.f32 %v3030, %v3100
    %v3102 = vpop.f32.mrb[0].mxu0
    %v3103 = vadd.f32 %v3032, %v3102
    %3104 = vdwg.mxu0
    %3105 = vmatprep.subr.mxu0 %v284
    %3106 = vmatpush1.msra.mxu0 %v283
    %3107 = vmatprep.subr.mxu0 %v286
    %3108 = vmatpush1.msra.mxu0 %v285
    %3109 = vmatprep.subr.mxu0 %v288
    %3110 = vmatpush1.msra.mxu0 %v287
    %3111 = vmatprep.subr.mxu0 %v290
    %3112 = vmatpush1.msra.mxu0 %v289
    %3113 = vmatprep.subr.mxu0 %v2152
    %3114 = vmatpush1.msra.mxu0 %v2149
    %3115 = vmatprep.subr.mxu0 0.0
    %3116 = vmatpush1.msra.mxu0 0.0
    %3117 = vmatprep.subr.mxu0 0.0
    %3118 = vmatpush1.msra.mxu0 0.0
    %3119 = vmatprep.subr.mxu0 0.0
    %3120 = vmatpush1.msra.mxu0 0.0
    %3121 = vmatprep.subr.mxu0 0.0
    %3122 = vmatpush1.msra.mxu0 0.0
    %3123 = vmatprep.subr.mxu0 0.0
    %3124 = vmatpush1.msra.mxu0 0.0
    %3125 = vmatprep.subr.mxu0 0.0
    %3126 = vmatpush1.msra.mxu0 0.0
    %3127 = vmatprep.subr.mxu0 0.0
    %3128 = vmatpush1.msra.mxu0 0.0
    %3129 = vmatprep.subr.mxu0 0.0
    %3130 = vmatpush1.msra.mxu0 0.0
    %3131 = vmatprep.subr.mxu0 0.0
    %3132 = vmatpush1.msra.mxu0 0.0
    %3133 = vmatprep.subr.mxu0 0.0
    %3134 = vmatpush1.msra.mxu0 0.0
    %3135 = vmatprep.subr.mxu0 0.0
    %3136 = vmatpush1.msra.mxu0 0.0
    %3137 = vmatprep.subr.mxu0 0.0
    %3138 = vmatpush1.msra.mxu0 0.0
    %3139 = vmatprep.subr.mxu0 0.0
    %3140 = vmatpush1.msra.mxu0 0.0
    %3141 = vmatprep.subr.mxu0 0.0
    %3142 = vmatpush1.msra.mxu0 0.0
    %3143 = vmatprep.subr.mxu0 0.0
    %3144 = vmatpush1.msra.mxu0 0.0
    %3145 = vmatprep.subr.mxu0 0.0
    %3146 = vmatpush1.msra.mxu0 0.0
    %3147 = vmatprep.subr.mxu0 0.0
    %3148 = vmatpush1.msra.mxu0 0.0
    %3149 = vmatprep.subr.mxu0 0.0
    %3150 = vmatpush1.msra.mxu0 0.0
    %3151 = vmatprep.subr.mxu0 0.0
    %3152 = vmatpush1.msra.mxu0 0.0
    %3153 = vmatprep.subr.mxu0 0.0
    %3154 = vmatpush1.msra.mxu0 0.0
    %3155 = vmatprep.subr.mxu0 0.0
    %3156 = vmatpush1.msra.mxu0 0.0
    %3157 = vmatprep.subr.mxu0 0.0
    %3158 = vmatpush1.msra.mxu0 0.0
    %3159 = vmatprep.subr.mxu0 0.0
    %3160 = vmatpush1.msra.mxu0 0.0
    %3161 = vmatprep.subr.mxu0 0.0
    %3162 = vmatpush1.msra.mxu0 0.0
    %3163 = vmatprep.subr.mxu0 0.0
    %3164 = vmatpush1.msra.mxu0 0.0
    %3165 = vmatprep.subr.mxu0 0.0
    %3166 = vmatpush1.msra.mxu0 0.0
    %3167 = vmatprep.subr.mxu0 0.0
    %3168 = vmatpush1.msra.mxu0 0.0
    %3169 = vmatprep.mubr.f32.mxu0 0.0
    %3170 = vmatmul.mubr.f32.gmra.mrb[0].mxu0 %v2890
    %v3171 = vpop.f32.mrb[0].mxu0
    %v3172 = vadd.f32 %v3101, %v3171
    %v3173 = vpop.f32.mrb[0].mxu0
    %v3174 = vadd.f32 %v3103, %v3173
    %3175 = vdwg.mxu0
    %3183 = vrot.lane.b32.xlu0 %v2054, 127
    %v3184 = vpop.permute.xlu0 %3183
    %3185 = vrot.lane.b32.xlu0 %v2055, 127
    %v3186 = vpop.permute.xlu0 %3185
    %3187 = vrot.lane.b32.xlu0 %v2056, 127
    %v3188 = vpop.permute.xlu0 %3187
    %3189 = vrot.lane.b32.xlu0 %v2057, 127
    %v3190 = vpop.permute.xlu0 %3189
    %3191 = vrot.lane.b32.xlu0 %v2058, 127
    %v3192 = vpop.permute.xlu0 %3191
    %3193 = vrot.lane.b32.xlu0 %v2059, 127
    %v3194 = vpop.permute.xlu0 %3193
    %3195 = vrot.lane.b32.xlu0 %v2060, 127
    %v3196 = vpop.permute.xlu0 %3195
    %v3197 = vsel %vm332, %v3184, %v3186
    %v3198 = vsel %vm332, %v3186, %v3188
    %v3199 = vsel %vm332, %v3188, %v3190
    %v3200 = vsel %vm332, %v3190, %v3192
    %v3201 = vsel %vm332, %v3192, %v3194
    %v3202 = vsel %vm332, %v3194, %v3196
    %v3210 = vmax.f32 %v2054, %v3197
    %v3211 = vmax.f32 %v2055, %v3198
    %v3212 = vmax.f32 %v2056, %v3199
    %v3213 = vmax.f32 %v2057, %v3200
    %v3214 = vmax.f32 %v2058, %v3201
    %v3215 = vmax.f32 %v2059, %v3202
    %v3216 = vmax.f32 %v2060, %v3196
    %3224 = vrot.lane.b32.xlu0 %v3210, 98
    %v3225 = vpop.permute.xlu0 %3224
    %3226 = vrot.lane.b32.xlu0 %v3211, 98
    %v3227 = vpop.permute.xlu0 %3226
    %3228 = vrot.lane.b32.xlu0 %v3212, 98
    %v3229 = vpop.permute.xlu0 %3228
    %3230 = vrot.lane.b32.xlu0 %v3213, 98
    %v3231 = vpop.permute.xlu0 %3230
    %3232 = vrot.lane.b32.xlu0 %v3214, 98
    %v3233 = vpop.permute.xlu0 %3232
    %3234 = vrot.lane.b32.xlu0 %v3215, 98
    %v3235 = vpop.permute.xlu0 %3234
    %3236 = vrot.lane.b32.xlu0 %v3216, 98
    %v3237 = vpop.permute.xlu0 %3236
    %v3238 = vsel %vm434, %v3225, %v3227
    %v3239 = vsel %vm434, %v3227, %v3229
    %v3240 = vsel %vm434, %v3229, %v3231
    %v3241 = vsel %vm434, %v3231, %v3233
    %v3242 = vsel %vm434, %v3233, %v3235
    %v3243 = vsel %vm434, %v3235, %v3237
    %v3251 = vmax.f32 %v3210, %v3238
    %v3252 = vmax.f32 %v3211, %v3239
    %v3253 = vmax.f32 %v3212, %v3240
    %v3254 = vmax.f32 %v3213, %v3241
    %v3255 = vmax.f32 %v3214, %v3242
    %v3256 = vmax.f32 %v3215, %v3243
    %v3257 = vmax.f32 %v3216, %v3237
    %v3259 = vsel %vm2143, %v3257, 0
    %3261 = vmatprep.subr.mxu0 %v92
    %3262 = vmatpush1.msra.mxu0 %v91
    %3263 = vmatprep.subr.mxu0 %v94
    %3264 = vmatpush1.msra.mxu0 %v93
    %3265 = vmatprep.subr.mxu0 %v96
    %3266 = vmatpush1.msra.mxu0 %v95
    %3267 = vmatprep.subr.mxu0 %v98
    %3268 = vmatpush1.msra.mxu0 %v97
    %3269 = vmatprep.subr.mxu0 %v100
    %3270 = vmatpush1.msra.mxu0 %v99
    %3271 = vmatprep.subr.mxu0 %v102
    %3272 = vmatpush1.msra.mxu0 %v101
    %3273 = vmatprep.subr.mxu0 %v104
    %3274 = vmatpush1.msra.mxu0 %v103
    %3275 = vmatprep.subr.mxu0 %v106
    %3276 = vmatpush1.msra.mxu0 %v105
    %3277 = vmatprep.subr.mxu0 %v108
    %3278 = vmatpush1.msra.mxu0 %v107
    %3279 = vmatprep.subr.mxu0 %v110
    %3280 = vmatpush1.msra.mxu0 %v109
    %3281 = vmatprep.subr.mxu0 %v112
    %3282 = vmatpush1.msra.mxu0 %v111
    %3283 = vmatprep.subr.mxu0 %v114
    %3284 = vmatpush1.msra.mxu0 %v113
    %3285 = vmatprep.subr.mxu0 %v116
    %3286 = vmatpush1.msra.mxu0 %v115
    %3287 = vmatprep.subr.mxu0 %v118
    %3288 = vmatpush1.msra.mxu0 %v117
    %3289 = vmatprep.subr.mxu0 %v120
    %3290 = vmatpush1.msra.mxu0 %v119
    %3291 = vmatprep.subr.mxu0 %v122
    %3292 = vmatpush1.msra.mxu0 %v121
    %3293 = vmatprep.subr.mxu0 %v124
    %3294 = vmatpush1.msra.mxu0 %v123
    %3295 = vmatprep.subr.mxu0 %v126
    %3296 = vmatpush1.msra.mxu0 %v125
    %3297 = vmatprep.subr.mxu0 %v128
    %3298 = vmatpush1.msra.mxu0 %v127
    %3299 = vmatprep.subr.mxu0 %v130
    %3300 = vmatpush1.msra.mxu0 %v129
    %3301 = vmatprep.subr.mxu0 %v132
    %3302 = vmatpush1.msra.mxu0 %v131
    %3303 = vmatprep.subr.mxu0 %v134
    %3304 = vmatpush1.msra.mxu0 %v133
    %3305 = vmatprep.subr.mxu0 %v136
    %3306 = vmatpush1.msra.mxu0 %v135
    %3307 = vmatprep.subr.mxu0 %v138
    %3308 = vmatpush1.msra.mxu0 %v137
    %3309 = vmatprep.subr.mxu0 %v140
    %3310 = vmatpush1.msra.mxu0 %v139
    %3311 = vmatprep.subr.mxu0 %v142
    %3312 = vmatpush1.msra.mxu0 %v141
    %3313 = vmatprep.subr.mxu0 %v144
    %3314 = vmatpush1.msra.mxu0 %v143
    %3315 = vmatprep.subr.mxu0 %v146
    %3316 = vmatpush1.msra.mxu0 %v145
    %3317 = vmatprep.subr.mxu0 %v148
    %3318 = vmatpush1.msra.mxu0 %v147
    %3319 = vmatprep.subr.mxu0 %v150
    %3320 = vmatpush1.msra.mxu0 %v149
    %3321 = vmatprep.subr.mxu0 %v152
    %3322 = vmatpush1.msra.mxu0 %v151
    %3323 = vmatprep.subr.mxu0 %v154
    %3324 = vmatpush1.msra.mxu0 %v153
    %3325 = vmatprep.mubr.f32.mxu0 %v3252
    %3326 = vmatmul.mubr.f32.gmra.mrb[0].mxu0 %v3251
    %v3327 = vpop.f32.mrb[0].mxu0
    %v3328 = vadd.f32 0.0, %v3327
    %v3329 = vpop.f32.mrb[0].mxu0
    %v3330 = vadd.f32 0.0, %v3329
    %3331 = vdwg.mxu0
    %3332 = vmatprep.subr.mxu0 %v156
    %3333 = vmatpush1.msra.mxu0 %v155
    %3334 = vmatprep.subr.mxu0 %v158
    %3335 = vmatpush1.msra.mxu0 %v157
    %3336 = vmatprep.subr.mxu0 %v160
    %3337 = vmatpush1.msra.mxu0 %v159
    %3338 = vmatprep.subr.mxu0 %v162
    %3339 = vmatpush1.msra.mxu0 %v161
    %3340 = vmatprep.subr.mxu0 %v164
    %3341 = vmatpush1.msra.mxu0 %v163
    %3342 = vmatprep.subr.mxu0 %v166
    %3343 = vmatpush1.msra.mxu0 %v165
    %3344 = vmatprep.subr.mxu0 %v168
    %3345 = vmatpush1.msra.mxu0 %v167
    %3346 = vmatprep.subr.mxu0 %v170
    %3347 = vmatpush1.msra.mxu0 %v169
    %3348 = vmatprep.subr.mxu0 %v172
    %3349 = vmatpush1.msra.mxu0 %v171
    %3350 = vmatprep.subr.mxu0 %v174
    %3351 = vmatpush1.msra.mxu0 %v173
    %3352 = vmatprep.subr.mxu0 %v176
    %3353 = vmatpush1.msra.mxu0 %v175
    %3354 = vmatprep.subr.mxu0 %v178
    %3355 = vmatpush1.msra.mxu0 %v177
    %3356 = vmatprep.subr.mxu0 %v180
    %3357 = vmatpush1.msra.mxu0 %v179
    %3358 = vmatprep.subr.mxu0 %v182
    %3359 = vmatpush1.msra.mxu0 %v181
    %3360 = vmatprep.subr.mxu0 %v184
    %3361 = vmatpush1.msra.mxu0 %v183
    %3362 = vmatprep.subr.mxu0 %v186
    %3363 = vmatpush1.msra.mxu0 %v185
    %3364 = vmatprep.subr.mxu0 %v188
    %3365 = vmatpush1.msra.mxu0 %v187
    %3366 = vmatprep.subr.mxu0 %v190
    %3367 = vmatpush1.msra.mxu0 %v189
    %3368 = vmatprep.subr.mxu0 %v192
    %3369 = vmatpush1.msra.mxu0 %v191
    %3370 = vmatprep.subr.mxu0 %v194
    %3371 = vmatpush1.msra.mxu0 %v193
    %3372 = vmatprep.subr.mxu0 %v196
    %3373 = vmatpush1.msra.mxu0 %v195
    %3374 = vmatprep.subr.mxu0 %v198
    %3375 = vmatpush1.msra.mxu0 %v197
    %3376 = vmatprep.subr.mxu0 %v200
    %3377 = vmatpush1.msra.mxu0 %v199
    %3378 = vmatprep.subr.mxu0 %v202
    %3379 = vmatpush1.msra.mxu0 %v201
    %3380 = vmatprep.subr.mxu0 %v204
    %3381 = vmatpush1.msra.mxu0 %v203
    %3382 = vmatprep.subr.mxu0 %v206
    %3383 = vmatpush1.msra.mxu0 %v205
    %3384 = vmatprep.subr.mxu0 %v208
    %3385 = vmatpush1.msra.mxu0 %v207
    %3386 = vmatprep.subr.mxu0 %v210
    %3387 = vmatpush1.msra.mxu0 %v209
    %3388 = vmatprep.subr.mxu0 %v212
    %3389 = vmatpush1.msra.mxu0 %v211
    %3390 = vmatprep.subr.mxu0 %v214
    %3391 = vmatpush1.msra.mxu0 %v213
    %3392 = vmatprep.subr.mxu0 %v216
    %3393 = vmatpush1.msra.mxu0 %v215
    %3394 = vmatprep.subr.mxu0 %v218
    %3395 = vmatpush1.msra.mxu0 %v217
    %3396 = vmatprep.mubr.f32.mxu0 %v3254
    %3397 = vmatmul.mubr.f32.gmra.mrb[0].mxu0 %v3253
    %v3398 = vpop.f32.mrb[0].mxu0
    %v3399 = vadd.f32 %v3328, %v3398
    %v3400 = vpop.f32.mrb[0].mxu0
    %v3401 = vadd.f32 %v3330, %v3400
    %3402 = vdwg.mxu0
    %3403 = vmatprep.subr.mxu0 %v220
    %3404 = vmatpush1.msra.mxu0 %v219
    %3405 = vmatprep.subr.mxu0 %v222
    %3406 = vmatpush1.msra.mxu0 %v221
    %3407 = vmatprep.subr.mxu0 %v224
    %3408 = vmatpush1.msra.mxu0 %v223
    %3409 = vmatprep.subr.mxu0 %v226
    %3410 = vmatpush1.msra.mxu0 %v225
    %3411 = vmatprep.subr.mxu0 %v228
    %3412 = vmatpush1.msra.mxu0 %v227
    %3413 = vmatprep.subr.mxu0 %v230
    %3414 = vmatpush1.msra.mxu0 %v229
    %3415 = vmatprep.subr.mxu0 %v232
    %3416 = vmatpush1.msra.mxu0 %v231
    %3417 = vmatprep.subr.mxu0 %v234
    %3418 = vmatpush1.msra.mxu0 %v233
    %3419 = vmatprep.subr.mxu0 %v236
    %3420 = vmatpush1.msra.mxu0 %v235
    %3421 = vmatprep.subr.mxu0 %v238
    %3422 = vmatpush1.msra.mxu0 %v237
    %3423 = vmatprep.subr.mxu0 %v240
    %3424 = vmatpush1.msra.mxu0 %v239
    %3425 = vmatprep.subr.mxu0 %v242
    %3426 = vmatpush1.msra.mxu0 %v241
    %3427 = vmatprep.subr.mxu0 %v244
    %3428 = vmatpush1.msra.mxu0 %v243
    %3429 = vmatprep.subr.mxu0 %v246
    %3430 = vmatpush1.msra.mxu0 %v245
    %3431 = vmatprep.subr.mxu0 %v248
    %3432 = vmatpush1.msra.mxu0 %v247
    %3433 = vmatprep.subr.mxu0 %v250
    %3434 = vmatpush1.msra.mxu0 %v249
    %3435 = vmatprep.subr.mxu0 %v252
    %3436 = vmatpush1.msra.mxu0 %v251
    %3437 = vmatprep.subr.mxu0 %v254
    %3438 = vmatpush1.msra.mxu0 %v253
    %3439 = vmatprep.subr.mxu0 %v256
    %3440 = vmatpush1.msra.mxu0 %v255
    %3441 = vmatprep.subr.mxu0 %v258
    %3442 = vmatpush1.msra.mxu0 %v257
    %3443 = vmatprep.subr.mxu0 %v260
    %3444 = vmatpush1.msra.mxu0 %v259
    %3445 = vmatprep.subr.mxu0 %v262
    %3446 = vmatpush1.msra.mxu0 %v261
    %3447 = vmatprep.subr.mxu0 %v264
    %3448 = vmatpush1.msra.mxu0 %v263
    %3449 = vmatprep.subr.mxu0 %v266
    %3450 = vmatpush1.msra.mxu0 %v265
    %3451 = vmatprep.subr.mxu0 %v268
    %3452 = vmatpush1.msra.mxu0 %v267
    %3453 = vmatprep.subr.mxu0 %v270
    %3454 = vmatpush1.msra.mxu0 %v269
    %3455 = vmatprep.subr.mxu0 %v272
    %3456 = vmatpush1.msra.mxu0 %v271
    %3457 = vmatprep.subr.mxu0 %v274
    %3458 = vmatpush1.msra.mxu0 %v273
    %3459 = vmatprep.subr.mxu0 %v276
    %3460 = vmatpush1.msra.mxu0 %v275
    %3461 = vmatprep.subr.mxu0 %v278
    %3462 = vmatpush1.msra.mxu0 %v277
    %3463 = vmatprep.subr.mxu0 %v280
    %3464 = vmatpush1.msra.mxu0 %v279
    %3465 = vmatprep.subr.mxu0 %v282
    %3466 = vmatpush1.msra.mxu0 %v281
    %3467 = vmatprep.mubr.f32.mxu0 %v3256
    %3468 = vmatmul.mubr.f32.gmra.mrb[0].mxu0 %v3255
    %v3469 = vpop.f32.mrb[0].mxu0
    %v3470 = vadd.f32 %v3399, %v3469
    %v3471 = vpop.f32.mrb[0].mxu0
    %v3472 = vadd.f32 %v3401, %v3471
    %3473 = vdwg.mxu0
    %3474 = vmatprep.subr.mxu0 %v284
    %3475 = vmatpush1.msra.mxu0 %v283
    %3476 = vmatprep.subr.mxu0 %v286
    %3477 = vmatpush1.msra.mxu0 %v285
    %3478 = vmatprep.subr.mxu0 %v288
    %3479 = vmatpush1.msra.mxu0 %v287
    %3480 = vmatprep.subr.mxu0 %v290
    %3481 = vmatpush1.msra.mxu0 %v289
    %3482 = vmatprep.subr.mxu0 %v2152
    %3483 = vmatpush1.msra.mxu0 %v2149
    %3484 = vmatprep.subr.mxu0 0.0
    %3485 = vmatpush1.msra.mxu0 0.0
    %3486 = vmatprep.subr.mxu0 0.0
    %3487 = vmatpush1.msra.mxu0 0.0
    %3488 = vmatprep.subr.mxu0 0.0
    %3489 = vmatpush1.msra.mxu0 0.0
    %3490 = vmatprep.subr.mxu0 0.0
    %3491 = vmatpush1.msra.mxu0 0.0
    %3492 = vmatprep.subr.mxu0 0.0
    %3493 = vmatpush1.msra.mxu0 0.0
    %3494 = vmatprep.subr.mxu0 0.0
    %3495 = vmatpush1.msra.mxu0 0.0
    %3496 = vmatprep.subr.mxu0 0.0
    %3497 = vmatpush1.msra.mxu0 0.0
    %3498 = vmatprep.subr.mxu0 0.0
    %3499 = vmatpush1.msra.mxu0 0.0
    %3500 = vmatprep.subr.mxu0 0.0
    %3501 = vmatpush1.msra.mxu0 0.0
    %3502 = vmatprep.subr.mxu0 0.0
    %3503 = vmatpush1.msra.mxu0 0.0
    %3504 = vmatprep.subr.mxu0 0.0
    %3505 = vmatpush1.msra.mxu0 0.0
    %3506 = vmatprep.subr.mxu0 0.0
    %3507 = vmatpush1.msra.mxu0 0.0
    %3508 = vmatprep.subr.mxu0 0.0
    %3509 = vmatpush1.msra.mxu0 0.0
    %3510 = vmatprep.subr.mxu0 0.0
    %3511 = vmatpush1.msra.mxu0 0.0
    %3512 = vmatprep.subr.mxu0 0.0
    %3513 = vmatpush1.msra.mxu0 0.0
    %3514 = vmatprep.subr.mxu0 0.0
    %3515 = vmatpush1.msra.mxu0 0.0
    %3516 = vmatprep.subr.mxu0 0.0
    %3517 = vmatpush1.msra.mxu0 0.0
    %3518 = vmatprep.subr.mxu0 0.0
    %3519 = vmatpush1.msra.mxu0 0.0
    %3520 = vmatprep.subr.mxu0 0.0
    %3521 = vmatpush1.msra.mxu0 0.0
    %3522 = vmatprep.subr.mxu0 0.0
    %3523 = vmatpush1.msra.mxu0 0.0
    %3524 = vmatprep.subr.mxu0 0.0
    %3525 = vmatpush1.msra.mxu0 0.0
    %3526 = vmatprep.subr.mxu0 0.0
    %3527 = vmatpush1.msra.mxu0 0.0
    %3528 = vmatprep.subr.mxu0 0.0
    %3529 = vmatpush1.msra.mxu0 0.0
    %3530 = vmatprep.subr.mxu0 0.0
    %3531 = vmatpush1.msra.mxu0 0.0
    %3532 = vmatprep.subr.mxu0 0.0
    %3533 = vmatpush1.msra.mxu0 0.0
    %3534 = vmatprep.subr.mxu0 0.0
    %3535 = vmatpush1.msra.mxu0 0.0
    %3536 = vmatprep.subr.mxu0 0.0
    %3537 = vmatpush1.msra.mxu0 0.0
    %3538 = vmatprep.mubr.f32.mxu0 0.0
    %3539 = vmatmul.mubr.f32.gmra.mrb[0].mxu0 %v3259
    %v3540 = vpop.f32.mrb[0].mxu0
    %v3541 = vadd.f32 %v3470, %v3540
    %v3542 = vpop.f32.mrb[0].mxu0
    %v3543 = vadd.f32 %v3472, %v3542
    %3544 = vdwg.mxu0
    %s3545 = sld [smem:[#allocation6]]
    %v3546 = vstv %s3545
    %v3547 = vmul.f32 %v2434, %v3546
    %v3548 = vmul.f32 %v2436, %v3546
    %s3549 = sld [smem:[#allocation6 + $0x1]]
    %v3550 = vstv %s3549
    %v3551 = vmul.f32 %v2434, %v3550
    %v3552 = vmul.f32 %v2436, %v3550
    %3555 = vrot.lane.b32.xlu0 %v3551, 127
    %v3556 = vpop.permute.xlu0 %3555
    %3557 = vrot.lane.b32.xlu0 %v3552, 127
    %v3558 = vpop.permute.xlu0 %3557
    %v3559 = vsel %vm332, %v3556, %v3558
    %v3562 = vadd.f32 %v3547, %v3559
    %v3563 = vadd.f32 %v3548, %v3558
    %s3564 = sld [smem:[#allocation6 + $0x2]]
    %v3565 = vstv %s3564
    %v3566 = vmul.f32 %v2434, %v3565
    %v3567 = vmul.f32 %v2436, %v3565
    %3570 = vrot.lane.b32.xlu0 %v3566, 126
    %v3571 = vpop.permute.xlu0 %3570
    %3572 = vrot.lane.b32.xlu0 %v3567, 126
    %v3573 = vpop.permute.xlu0 %3572
    %v3574 = vsel %vm383, %v3571, %v3573
    %v3577 = vadd.f32 %v3562, %v3574
    %v3578 = vadd.f32 %v3563, %v3573
    %s3579 = sld [smem:[#allocation6 + $0x3]]
    %v3580 = vstv %s3579
    %v3581 = vmul.f32 %v2434, %v3580
    %v3582 = vmul.f32 %v2436, %v3580
    %3585 = vrot.lane.b32.xlu0 %v3581, 112
    %v3586 = vpop.permute.xlu0 %3585
    %3587 = vrot.lane.b32.xlu0 %v3582, 112
    %v3588 = vpop.permute.xlu0 %3587
    %vm3589 = vcmask 916480
    %v3590 = vsel %vm3589, %v3586, %v3588
    %v3593 = vadd.f32 %v3577, %v3590
    %v3594 = vadd.f32 %v3578, %v3588
    %s3595 = sld [smem:[#allocation6 + $0x4]]
    %v3596 = vstv %s3595
    %v3597 = vmul.f32 %v2434, %v3596
    %v3598 = vmul.f32 %v2436, %v3596
    %3601 = vrot.lane.b32.xlu0 %v3597, 111
    %v3602 = vpop.permute.xlu0 %3601
    %3603 = vrot.lane.b32.xlu0 %v3598, 111
    %v3604 = vpop.permute.xlu0 %3603
    %vm3605 = vcmask 908288
    %v3606 = vsel %vm3605, %v3602, %v3604
    %v3609 = vadd.f32 %v3593, %v3606
    %v3610 = vadd.f32 %v3594, %v3604
    %s3611 = sld [smem:[#allocation6 + $0x5]]
    %v3612 = vstv %s3611
    %v3613 = vmul.f32 %v2434, %v3612
    %v3614 = vmul.f32 %v2436, %v3612
    %3617 = vrot.lane.b32.xlu0 %v3613, 110
    %v3618 = vpop.permute.xlu0 %3617
    %3619 = vrot.lane.b32.xlu0 %v3614, 110
    %v3620 = vpop.permute.xlu0 %3619
    %vm3621 = vcmask 900096
    %v3622 = vsel %vm3621, %v3618, %v3620
    %v3625 = vadd.f32 %v3609, %v3622
    %v3626 = vadd.f32 %v3610, %v3620
    %s3627 = sld [smem:[#allocation6 + $0x6]]
    %v3628 = vstv %s3627
    %v3629 = vmul.f32 %v2434, %v3628
    %v3630 = vmul.f32 %v2436, %v3628
    %3633 = vrot.lane.b32.xlu0 %v3629, 96
    %v3634 = vpop.permute.xlu0 %3633
    %3635 = vrot.lane.b32.xlu0 %v3630, 96
    %v3636 = vpop.permute.xlu0 %3635
    %v3637 = vsel %vm536, %v3634, %v3636
    %v3640 = vadd.f32 %v3625, %v3637
    %v3641 = vadd.f32 %v3626, %v3636
    %s3642 = sld [smem:[#allocation6 + $0x7]]
    %v3643 = vstv %s3642
    %v3644 = vmul.f32 %v2434, %v3643
    %v3645 = vmul.f32 %v2436, %v3643
    %3648 = vrot.lane.b32.xlu0 %v3644, 95
    %v3649 = vpop.permute.xlu0 %3648
    %3650 = vrot.lane.b32.xlu0 %v3645, 95
    %v3651 = vpop.permute.xlu0 %3650
    %vm3652 = vcmask 777216
    %v3653 = vsel %vm3652, %v3649, %v3651
    %v3656 = vadd.f32 %v3640, %v3653
    %v3657 = vadd.f32 %v3641, %v3651
    %s3658 = sld [smem:[#allocation6 + $0x8]]
    %v3659 = vstv %s3658
    %v3660 = vmul.f32 %v2434, %v3659
    %v3661 = vmul.f32 %v2436, %v3659
    %3664 = vrot.lane.b32.xlu0 %v3660, 94
    %v3665 = vpop.permute.xlu0 %3664
    %3666 = vrot.lane.b32.xlu0 %v3661, 94
    %v3667 = vpop.permute.xlu0 %3666
    %vm3668 = vcmask 769024
    %v3669 = vsel %vm3668, %v3665, %v3667
    %v3672 = vadd.f32 %v3656, %v3669
    %v3673 = vadd.f32 %v3657, %v3667
    %s3674 = sld [smem:[#allocation6 + $0x9]]
    %v3675 = vstv %s3674
    %v3676 = vmul.f32 %v2803, %v3675
    %v3677 = vmul.f32 %v2805, %v3675
    %v3678 = vadd.f32 %v3672, %v3676
    %v3679 = vadd.f32 %v3673, %v3677
    %s3680 = sld [smem:[#allocation6 + $0xa]]
    %v3681 = vstv %s3680
    %v3682 = vmul.f32 %v2803, %v3681
    %v3683 = vmul.f32 %v2805, %v3681
    %3686 = vrot.lane.b32.xlu0 %v3682, 127
    %v3687 = vpop.permute.xlu0 %3686
    %3688 = vrot.lane.b32.xlu0 %v3683, 127
    %v3689 = vpop.permute.xlu0 %3688
    %v3690 = vsel %vm332, %v3687, %v3689
    %v3693 = vadd.f32 %v3678, %v3690
    %v3694 = vadd.f32 %v3679, %v3689
    %s3695 = sld [smem:[#allocation6 + $0xb]]
    %v3696 = vstv %s3695
    %v3697 = vmul.f32 %v2803, %v3696
    %v3698 = vmul.f32 %v2805, %v3696
    %3701 = vrot.lane.b32.xlu0 %v3697, 126
    %v3702 = vpop.permute.xlu0 %3701
    %3703 = vrot.lane.b32.xlu0 %v3698, 126
    %v3704 = vpop.permute.xlu0 %3703
    %v3705 = vsel %vm383, %v3702, %v3704
    %v3708 = vadd.f32 %v3693, %v3705
    %v3709 = vadd.f32 %v3694, %v3704
    %s3710 = sld [smem:[#allocation6 + $0xc]]
    %v3711 = vstv %s3710
    %v3712 = vmul.f32 %v2803, %v3711
    %v3713 = vmul.f32 %v2805, %v3711
    %3716 = vrot.lane.b32.xlu0 %v3712, 112
    %v3717 = vpop.permute.xlu0 %3716
    %3718 = vrot.lane.b32.xlu0 %v3713, 112
    %v3719 = vpop.permute.xlu0 %3718
    %v3720 = vsel %vm3589, %v3717, %v3719
    %v3723 = vadd.f32 %v3708, %v3720
    %v3724 = vadd.f32 %v3709, %v3719
    %s3725 = sld [smem:[#allocation6 + $0xd]]
    %v3726 = vstv %s3725
    %v3727 = vmul.f32 %v2803, %v3726
    %v3728 = vmul.f32 %v2805, %v3726
    %3731 = vrot.lane.b32.xlu0 %v3727, 111
    %v3732 = vpop.permute.xlu0 %3731
    %3733 = vrot.lane.b32.xlu0 %v3728, 111
    %v3734 = vpop.permute.xlu0 %3733
    %v3735 = vsel %vm3605, %v3732, %v3734
    %v3738 = vadd.f32 %v3723, %v3735
    %v3739 = vadd.f32 %v3724, %v3734
    %s3740 = sld [smem:[#allocation6 + $0xe]]
    %v3741 = vstv %s3740
    %v3742 = vmul.f32 %v2803, %v3741
    %v3743 = vmul.f32 %v2805, %v3741
    %3746 = vrot.lane.b32.xlu0 %v3742, 110
    %v3747 = vpop.permute.xlu0 %3746
    %3748 = vrot.lane.b32.xlu0 %v3743, 110
    %v3749 = vpop.permute.xlu0 %3748
    %v3750 = vsel %vm3621, %v3747, %v3749
    %v3753 = vadd.f32 %v3738, %v3750
    %v3754 = vadd.f32 %v3739, %v3749
    %s3755 = sld [smem:[#allocation6 + $0xf]]
    %v3756 = vstv %s3755
    %v3757 = vmul.f32 %v2803, %v3756
    %v3758 = vmul.f32 %v2805, %v3756
    %3761 = vrot.lane.b32.xlu0 %v3757, 96
    %v3762 = vpop.permute.xlu0 %3761
    %3763 = vrot.lane.b32.xlu0 %v3758, 96
    %v3764 = vpop.permute.xlu0 %3763
    %v3765 = vsel %vm536, %v3762, %v3764
    %v3768 = vadd.f32 %v3753, %v3765
    %v3769 = vadd.f32 %v3754, %v3764
    %s3770 = sld [smem:[#allocation6 + $0x10]]
    %v3771 = vstv %s3770
    %v3772 = vmul.f32 %v2803, %v3771
    %v3773 = vmul.f32 %v2805, %v3771
    %3776 = vrot.lane.b32.xlu0 %v3772, 95
    %v3777 = vpop.permute.xlu0 %3776
    %3778 = vrot.lane.b32.xlu0 %v3773, 95
    %v3779 = vpop.permute.xlu0 %3778
    %v3780 = vsel %vm3652, %v3777, %v3779
    %v3783 = vadd.f32 %v3768, %v3780
    %v3784 = vadd.f32 %v3769, %v3779
    %s3785 = sld [smem:[#allocation6 + $0x11]]
    %v3786 = vstv %s3785
    %v3787 = vmul.f32 %v2803, %v3786
    %v3788 = vmul.f32 %v2805, %v3786
    %3791 = vrot.lane.b32.xlu0 %v3787, 94
    %v3792 = vpop.permute.xlu0 %3791
    %3793 = vrot.lane.b32.xlu0 %v3788, 94
    %v3794 = vpop.permute.xlu0 %3793
    %v3795 = vsel %vm3668, %v3792, %v3794
    %v3798 = vadd.f32 %v3783, %v3795
    %v3799 = vadd.f32 %v3784, %v3794
    %s3800 = sld [smem:[#allocation6 + $0x12]]
    %v3801 = vstv %s3800
    %v3802 = vmul.f32 %v3172, %v3801
    %v3803 = vmul.f32 %v3174, %v3801
    %v3804 = vadd.f32 %v3798, %v3802
    %v3805 = vadd.f32 %v3799, %v3803
    %s3806 = sld [smem:[#allocation6 + $0x13]]
    %v3807 = vstv %s3806
    %v3808 = vmul.f32 %v3172, %v3807
    %v3809 = vmul.f32 %v3174, %v3807
    %3812 = vrot.lane.b32.xlu0 %v3808, 127
    %v3813 = vpop.permute.xlu0 %3812
    %3814 = vrot.lane.b32.xlu0 %v3809, 127
    %v3815 = vpop.permute.xlu0 %3814
    %v3816 = vsel %vm332, %v3813, %v3815
    %v3819 = vadd.f32 %v3804, %v3816
    %v3820 = vadd.f32 %v3805, %v3815
    %s3821 = sld [smem:[#allocation6 + $0x14]]
    %v3822 = vstv %s3821
    %v3823 = vmul.f32 %v3172, %v3822
    %v3824 = vmul.f32 %v3174, %v3822
    %3827 = vrot.lane.b32.xlu0 %v3823, 126
    %v3828 = vpop.permute.xlu0 %3827
    %3829 = vrot.lane.b32.xlu0 %v3824, 126
    %v3830 = vpop.permute.xlu0 %3829
    %v3831 = vsel %vm383, %v3828, %v3830
    %v3834 = vadd.f32 %v3819, %v3831
    %v3835 = vadd.f32 %v3820, %v3830
    %s3836 = sld [smem:[#allocation6 + $0x15]]
    %v3837 = vstv %s3836
    %v3838 = vmul.f32 %v3172, %v3837
    %v3839 = vmul.f32 %v3174, %v3837
    %3842 = vrot.lane.b32.xlu0 %v3838, 112
    %v3843 = vpop.permute.xlu0 %3842
    %3844 = vrot.lane.b32.xlu0 %v3839, 112
    %v3845 = vpop.permute.xlu0 %3844
    %v3846 = vsel %vm3589, %v3843, %v3845
    %v3849 = vadd.f32 %v3834, %v3846
    %v3850 = vadd.f32 %v3835, %v3845
    %s3851 = sld [smem:[#allocation6 + $0x16]]
    %v3852 = vstv %s3851
    %v3853 = vmul.f32 %v3172, %v3852
    %v3854 = vmul.f32 %v3174, %v3852
    %3857 = vrot.lane.b32.xlu0 %v3853, 111
    %v3858 = vpop.permute.xlu0 %3857
    %3859 = vrot.lane.b32.xlu0 %v3854, 111
    %v3860 = vpop.permute.xlu0 %3859
    %v3861 = vsel %vm3605, %v3858, %v3860
    %v3864 = vadd.f32 %v3849, %v3861
    %v3865 = vadd.f32 %v3850, %v3860
    %s3866 = sld [smem:[#allocation6 + $0x17]]
    %v3867 = vstv %s3866
    %v3868 = vmul.f32 %v3172, %v3867
    %v3869 = vmul.f32 %v3174, %v3867
    %3872 = vrot.lane.b32.xlu0 %v3868, 110
    %v3873 = vpop.permute.xlu0 %3872
    %3874 = vrot.lane.b32.xlu0 %v3869, 110
    %v3875 = vpop.permute.xlu0 %3874
    %v3876 = vsel %vm3621, %v3873, %v3875
    %v3879 = vadd.f32 %v3864, %v3876
    %v3880 = vadd.f32 %v3865, %v3875
    %s3881 = sld [smem:[#allocation6 + $0x18]]
    %v3882 = vstv %s3881
    %v3883 = vmul.f32 %v3172, %v3882
    %v3884 = vmul.f32 %v3174, %v3882
    %3887 = vrot.lane.b32.xlu0 %v3883, 96
    %v3888 = vpop.permute.xlu0 %3887
    %3889 = vrot.lane.b32.xlu0 %v3884, 96
    %v3890 = vpop.permute.xlu0 %3889
    %v3891 = vsel %vm536, %v3888, %v3890
    %v3894 = vadd.f32 %v3879, %v3891
    %v3895 = vadd.f32 %v3880, %v3890
    %s3896 = sld [smem:[#allocation6 + $0x19]]
    %v3897 = vstv %s3896
    %v3898 = vmul.f32 %v3172, %v3897
    %v3899 = vmul.f32 %v3174, %v3897
    %3902 = vrot.lane.b32.xlu0 %v3898, 95
    %v3903 = vpop.permute.xlu0 %3902
    %3904 = vrot.lane.b32.xlu0 %v3899, 95
    %v3905 = vpop.permute.xlu0 %3904
    %v3906 = vsel %vm3652, %v3903, %v3905
    %v3909 = vadd.f32 %v3894, %v3906
    %v3910 = vadd.f32 %v3895, %v3905
    %s3911 = sld [smem:[#allocation6 + $0x1a]]
    %v3912 = vstv %s3911
    %v3913 = vmul.f32 %v3172, %v3912
    %v3914 = vmul.f32 %v3174, %v3912
    %3917 = vrot.lane.b32.xlu0 %v3913, 94
    %v3918 = vpop.permute.xlu0 %3917
    %3919 = vrot.lane.b32.xlu0 %v3914, 94
    %v3920 = vpop.permute.xlu0 %3919
    %v3921 = vsel %vm3668, %v3918, %v3920
    %v3924 = vadd.f32 %v3909, %v3921
    %v3925 = vadd.f32 %v3910, %v3920
    %s3926 = sld [smem:[#allocation6 + $0x1b]]
    %v3927 = vstv %s3926
    %v3928 = vmul.f32 %v3541, %v3927
    %v3929 = vmul.f32 %v3543, %v3927
    %v3930 = vadd.f32 %v3924, %v3928
    %v3931 = vadd.f32 %v3925, %v3929
    %s3932 = sld [smem:[#allocation6 + $0x1c]]
    %v3933 = vstv %s3932
    %v3934 = vmul.f32 %v3541, %v3933
    %v3935 = vmul.f32 %v3543, %v3933
    %3938 = vrot.lane.b32.xlu0 %v3934, 127
    %v3939 = vpop.permute.xlu0 %3938
    %3940 = vrot.lane.b32.xlu0 %v3935, 127
    %v3941 = vpop.permute.xlu0 %3940
    %v3942 = vsel %vm332, %v3939, %v3941
    %v3945 = vadd.f32 %v3930, %v3942
    %v3946 = vadd.f32 %v3931, %v3941
    %s3947 = sld [smem:[#allocation6 + $0x1d]]
    %v3948 = vstv %s3947
    %v3949 = vmul.f32 %v3541, %v3948
    %v3950 = vmul.f32 %v3543, %v3948
    %3953 = vrot.lane.b32.xlu0 %v3949, 126
    %v3954 = vpop.permute.xlu0 %3953
    %3955 = vrot.lane.b32.xlu0 %v3950, 126
    %v3956 = vpop.permute.xlu0 %3955
    %v3957 = vsel %vm383, %v3954, %v3956
    %v3960 = vadd.f32 %v3945, %v3957
    %v3961 = vadd.f32 %v3946, %v3956
    %s3962 = sld [smem:[#allocation6 + $0x1e]]
    %v3963 = vstv %s3962
    %v3964 = vmul.f32 %v3541, %v3963
    %v3965 = vmul.f32 %v3543, %v3963
    %3968 = vrot.lane.b32.xlu0 %v3964, 112
    %v3969 = vpop.permute.xlu0 %3968
    %3970 = vrot.lane.b32.xlu0 %v3965, 112
    %v3971 = vpop.permute.xlu0 %3970
    %v3972 = vsel %vm3589, %v3969, %v3971
    %v3975 = vadd.f32 %v3960, %v3972
    %v3976 = vadd.f32 %v3961, %v3971
    %s3977 = sld [smem:[#allocation6 + $0x1f]]
    %v3978 = vstv %s3977
    %v3979 = vmul.f32 %v3541, %v3978
    %v3980 = vmul.f32 %v3543, %v3978
    %3983 = vrot.lane.b32.xlu0 %v3979, 111
    %v3984 = vpop.permute.xlu0 %3983
    %3985 = vrot.lane.b32.xlu0 %v3980, 111
    %v3986 = vpop.permute.xlu0 %3985
    %v3987 = vsel %vm3605, %v3984, %v3986
    %v3990 = vadd.f32 %v3975, %v3987
    %v3991 = vadd.f32 %v3976, %v3986
    %s3992 = sld [smem:[#allocation6 + $0x20]]
    %v3993 = vstv %s3992
    %v3994 = vmul.f32 %v3541, %v3993
    %v3995 = vmul.f32 %v3543, %v3993
    %3998 = vrot.lane.b32.xlu0 %v3994, 110
    %v3999 = vpop.permute.xlu0 %3998
    %4000 = vrot.lane.b32.xlu0 %v3995, 110
    %v4001 = vpop.permute.xlu0 %4000
    %v4002 = vsel %vm3621, %v3999, %v4001
    %v4005 = vadd.f32 %v3990, %v4002
    %v4006 = vadd.f32 %v3991, %v4001
    %s4007 = sld [smem:[#allocation6 + $0x21]]
    %v4008 = vstv %s4007
    %v4009 = vmul.f32 %v3541, %v4008
    %v4010 = vmul.f32 %v3543, %v4008
    %4013 = vrot.lane.b32.xlu0 %v4009, 96
    %v4014 = vpop.permute.xlu0 %4013
    %4015 = vrot.lane.b32.xlu0 %v4010, 96
    %v4016 = vpop.permute.xlu0 %4015
    %v4017 = vsel %vm536, %v4014, %v4016
    %v4020 = vadd.f32 %v4005, %v4017
    %v4021 = vadd.f32 %v4006, %v4016
    %s4022 = sld [smem:[#allocation6 + $0x22]]
    %v4023 = vstv %s4022
    %v4024 = vmul.f32 %v3541, %v4023
    %v4025 = vmul.f32 %v3543, %v4023
    %4028 = vrot.lane.b32.xlu0 %v4024, 95
    %v4029 = vpop.permute.xlu0 %4028
    %4030 = vrot.lane.b32.xlu0 %v4025, 95
    %v4031 = vpop.permute.xlu0 %4030
    %v4032 = vsel %vm3652, %v4029, %v4031
    %v4035 = vadd.f32 %v4020, %v4032
    %v4036 = vadd.f32 %v4021, %v4031
    %s4037 = sld [smem:[#allocation6 + $0x23]]
    %v4038 = vstv %s4037
    %v4039 = vmul.f32 %v3541, %v4038
    %v4040 = vmul.f32 %v3543, %v4038
    %4043 = vrot.lane.b32.xlu0 %v4039, 94
    %v4044 = vpop.permute.xlu0 %4043
    %4045 = vrot.lane.b32.xlu0 %v4040, 94
    %v4046 = vpop.permute.xlu0 %4045
    %v4047 = vsel %vm3668, %v4044, %v4046
    %v4050 = vadd.f32 %v4035, %v4047
    %v4051 = vadd.f32 %v4036, %v4046
    %s4052 = sld [smem:[#allocation7]]
    %v4053 = vstv %s4052
    %v4054 = vadd.f32 %v4050, %v4053
    %v4055 = vadd.f32 %v4051, %v4053
    %v4056 = vmax.f32 %v4054, 0.0
    %v4057 = vmax.f32 %v4055, 0.0
    %s4058 = sld [smem:[#allocation6 + $0x80]]
    %v4059 = vstv %s4058
    %v4060 = vmul.f32 %v2434, %v4059
    %v4061 = vmul.f32 %v2436, %v4059
    %s4062 = sld [smem:[#allocation6 + $0x81]]
    %v4063 = vstv %s4062
    %v4064 = vmul.f32 %v2434, %v4063
    %v4065 = vmul.f32 %v2436, %v4063
    %4068 = vrot.lane.b32.xlu0 %v4064, 127
    %v4069 = vpop.permute.xlu0 %4068
    %4070 = vrot.lane.b32.xlu0 %v4065, 127
    %v4071 = vpop.permute.xlu0 %4070
    %v4072 = vsel %vm332, %v4069, %v4071
    %v4075 = vadd.f32 %v4060, %v4072
    %v4076 = vadd.f32 %v4061, %v4071
    %s4077 = sld [smem:[#allocation6 + $0x82]]
    %v4078 = vstv %s4077
    %v4079 = vmul.f32 %v2434, %v4078
    %v4080 = vmul.f32 %v2436, %v4078
    %4083 = vrot.lane.b32.xlu0 %v4079, 126
    %v4084 = vpop.permute.xlu0 %4083
    %4085 = vrot.lane.b32.xlu0 %v4080, 126
    %v4086 = vpop.permute.xlu0 %4085
    %v4087 = vsel %vm383, %v4084, %v4086
    %v4090 = vadd.f32 %v4075, %v4087
    %v4091 = vadd.f32 %v4076, %v4086
    %s4092 = sld [smem:[#allocation6 + $0x83]]
    %v4093 = vstv %s4092
    %v4094 = vmul.f32 %v2434, %v4093
    %v4095 = vmul.f32 %v2436, %v4093
    %4098 = vrot.lane.b32.xlu0 %v4094, 112
    %v4099 = vpop.permute.xlu0 %4098
    %4100 = vrot.lane.b32.xlu0 %v4095, 112
    %v4101 = vpop.permute.xlu0 %4100
    %v4102 = vsel %vm3589, %v4099, %v4101
    %v4105 = vadd.f32 %v4090, %v4102
    %v4106 = vadd.f32 %v4091, %v4101
    %s4107 = sld [smem:[#allocation6 + $0x84]]
    %v4108 = vstv %s4107
    %v4109 = vmul.f32 %v2434, %v4108
    %v4110 = vmul.f32 %v2436, %v4108
    %4113 = vrot.lane.b32.xlu0 %v4109, 111
    %v4114 = vpop.permute.xlu0 %4113
    %4115 = vrot.lane.b32.xlu0 %v4110, 111
    %v4116 = vpop.permute.xlu0 %4115
    %v4117 = vsel %vm3605, %v4114, %v4116
    %v4120 = vadd.f32 %v4105, %v4117
    %v4121 = vadd.f32 %v4106, %v4116
    %s4122 = sld [smem:[#allocation6 + $0x85]]
    %v4123 = vstv %s4122
    %v4124 = vmul.f32 %v2434, %v4123
    %v4125 = vmul.f32 %v2436, %v4123
    %4128 = vrot.lane.b32.xlu0 %v4124, 110
    %v4129 = vpop.permute.xlu0 %4128
    %4130 = vrot.lane.b32.xlu0 %v4125, 110
    %v4131 = vpop.permute.xlu0 %4130
    %v4132 = vsel %vm3621, %v4129, %v4131
    %v4135 = vadd.f32 %v4120, %v4132
    %v4136 = vadd.f32 %v4121, %v4131
    %s4137 = sld [smem:[#allocation6 + $0x86]]
    %v4138 = vstv %s4137
    %v4139 = vmul.f32 %v2434, %v4138
    %v4140 = vmul.f32 %v2436, %v4138
    %4143 = vrot.lane.b32.xlu0 %v4139, 96
    %v4144 = vpop.permute.xlu0 %4143
    %4145 = vrot.lane.b32.xlu0 %v4140, 96
    %v4146 = vpop.permute.xlu0 %4145
    %v4147 = vsel %vm536, %v4144, %v4146
    %v4150 = vadd.f32 %v4135, %v4147
    %v4151 = vadd.f32 %v4136, %v4146
    %s4152 = sld [smem:[#allocation6 + $0x87]]
    %v4153 = vstv %s4152
    %v4154 = vmul.f32 %v2434, %v4153
    %v4155 = vmul.f32 %v2436, %v4153
    %4158 = vrot.lane.b32.xlu0 %v4154, 95
    %v4159 = vpop.permute.xlu0 %4158
    %4160 = vrot.lane.b32.xlu0 %v4155, 95
    %v4161 = vpop.permute.xlu0 %4160
    %v4162 = vsel %vm3652, %v4159, %v4161
    %v4165 = vadd.f32 %v4150, %v4162
    %v4166 = vadd.f32 %v4151, %v4161
    %s4167 = sld [smem:[#allocation6 + $0x88]]
    %v4168 = vstv %s4167
    %v4169 = vmul.f32 %v2434, %v4168
    %v4170 = vmul.f32 %v2436, %v4168
    %4173 = vrot.lane.b32.xlu0 %v4169, 94
    %v4174 = vpop.permute.xlu0 %4173
    %4175 = vrot.lane.b32.xlu0 %v4170, 94
    %v4176 = vpop.permute.xlu0 %4175
    %v4177 = vsel %vm3668, %v4174, %v4176
    %v4180 = vadd.f32 %v4165, %v4177
    %v4181 = vadd.f32 %v4166, %v4176
    %s4182 = sld [smem:[#allocation6 + $0x89]]
    %v4183 = vstv %s4182
    %v4184 = vmul.f32 %v2803, %v4183
    %v4185 = vmul.f32 %v2805, %v4183
    %v4186 = vadd.f32 %v4180, %v4184
    %v4187 = vadd.f32 %v4181, %v4185
    %s4188 = sld [smem:[#allocation6 + $0x8a]]
    %v4189 = vstv %s4188
    %v4190 = vmul.f32 %v2803, %v4189
    %v4191 = vmul.f32 %v2805, %v4189
    %4194 = vrot.lane.b32.xlu0 %v4190, 127
    %v4195 = vpop.permute.xlu0 %4194
    %4196 = vrot.lane.b32.xlu0 %v4191, 127
    %v4197 = vpop.permute.xlu0 %4196
    %v4198 = vsel %vm332, %v4195, %v4197
    %v4201 = vadd.f32 %v4186, %v4198
    %v4202 = vadd.f32 %v4187, %v4197
    %s4203 = sld [smem:[#allocation6 + $0x8b]]
    %v4204 = vstv %s4203
    %v4205 = vmul.f32 %v2803, %v4204
    %v4206 = vmul.f32 %v2805, %v4204
    %4209 = vrot.lane.b32.xlu0 %v4205, 126
    %v4210 = vpop.permute.xlu0 %4209
    %4211 = vrot.lane.b32.xlu0 %v4206, 126
    %v4212 = vpop.permute.xlu0 %4211
    %v4213 = vsel %vm383, %v4210, %v4212
    %v4216 = vadd.f32 %v4201, %v4213
    %v4217 = vadd.f32 %v4202, %v4212
    %s4218 = sld [smem:[#allocation6 + $0x8c]]
    %v4219 = vstv %s4218
    %v4220 = vmul.f32 %v2803, %v4219
    %v4221 = vmul.f32 %v2805, %v4219
    %4224 = vrot.lane.b32.xlu0 %v4220, 112
    %v4225 = vpop.permute.xlu0 %4224
    %4226 = vrot.lane.b32.xlu0 %v4221, 112
    %v4227 = vpop.permute.xlu0 %4226
    %v4228 = vsel %vm3589, %v4225, %v4227
    %v4231 = vadd.f32 %v4216, %v4228
    %v4232 = vadd.f32 %v4217, %v4227
    %s4233 = sld [smem:[#allocation6 + $0x8d]]
    %v4234 = vstv %s4233
    %v4235 = vmul.f32 %v2803, %v4234
    %v4236 = vmul.f32 %v2805, %v4234
    %4239 = vrot.lane.b32.xlu0 %v4235, 111
    %v4240 = vpop.permute.xlu0 %4239
    %4241 = vrot.lane.b32.xlu0 %v4236, 111
    %v4242 = vpop.permute.xlu0 %4241
    %v4243 = vsel %vm3605, %v4240, %v4242
    %v4246 = vadd.f32 %v4231, %v4243
    %v4247 = vadd.f32 %v4232, %v4242
    %s4248 = sld [smem:[#allocation6 + $0x8e]]
    %v4249 = vstv %s4248
    %v4250 = vmul.f32 %v2803, %v4249
    %v4251 = vmul.f32 %v2805, %v4249
    %4254 = vrot.lane.b32.xlu0 %v4250, 110
    %v4255 = vpop.permute.xlu0 %4254
    %4256 = vrot.lane.b32.xlu0 %v4251, 110
    %v4257 = vpop.permute.xlu0 %4256
    %v4258 = vsel %vm3621, %v4255, %v4257
    %v4261 = vadd.f32 %v4246, %v4258
    %v4262 = vadd.f32 %v4247, %v4257
    %s4263 = sld [smem:[#allocation6 + $0x8f]]
    %v4264 = vstv %s4263
    %v4265 = vmul.f32 %v2803, %v4264
    %v4266 = vmul.f32 %v2805, %v4264
    %4269 = vrot.lane.b32.xlu0 %v4265, 96
    %v4270 = vpop.permute.xlu0 %4269
    %4271 = vrot.lane.b32.xlu0 %v4266, 96
    %v4272 = vpop.permute.xlu0 %4271
    %v4273 = vsel %vm536, %v4270, %v4272
    %v4276 = vadd.f32 %v4261, %v4273
    %v4277 = vadd.f32 %v4262, %v4272
    %s4278 = sld [smem:[#allocation6 + $0x90]]
    %v4279 = vstv %s4278
    %v4280 = vmul.f32 %v2803, %v4279
    %v4281 = vmul.f32 %v2805, %v4279
    %4284 = vrot.lane.b32.xlu0 %v4280, 95
    %v4285 = vpop.permute.xlu0 %4284
    %4286 = vrot.lane.b32.xlu0 %v4281, 95
    %v4287 = vpop.permute.xlu0 %4286
    %v4288 = vsel %vm3652, %v4285, %v4287
    %v4291 = vadd.f32 %v4276, %v4288
    %v4292 = vadd.f32 %v4277, %v4287
    %s4293 = sld [smem:[#allocation6 + $0x91]]
    %v4294 = vstv %s4293
    %v4295 = vmul.f32 %v2803, %v4294
    %v4296 = vmul.f32 %v2805, %v4294
    %4299 = vrot.lane.b32.xlu0 %v4295, 94
    %v4300 = vpop.permute.xlu0 %4299
    %4301 = vrot.lane.b32.xlu0 %v4296, 94
    %v4302 = vpop.permute.xlu0 %4301
    %v4303 = vsel %vm3668, %v4300, %v4302
    %v4306 = vadd.f32 %v4291, %v4303
    %v4307 = vadd.f32 %v4292, %v4302
    %s4308 = sld [smem:[#allocation6 + $0x92]]
    %v4309 = vstv %s4308
    %v4310 = vmul.f32 %v3172, %v4309
    %v4311 = vmul.f32 %v3174, %v4309
    %v4312 = vadd.f32 %v4306, %v4310
    %v4313 = vadd.f32 %v4307, %v4311
    %s4314 = sld [smem:[#allocation6 + $0x93]]
    %v4315 = vstv %s4314
    %v4316 = vmul.f32 %v3172, %v4315
    %v4317 = vmul.f32 %v3174, %v4315
    %4320 = vrot.lane.b32.xlu0 %v4316, 127
    %v4321 = vpop.permute.xlu0 %4320
    %4322 = vrot.lane.b32.xlu0 %v4317, 127
    %v4323 = vpop.permute.xlu0 %4322
    %v4324 = vsel %vm332, %v4321, %v4323
    %v4327 = vadd.f32 %v4312, %v4324
    %v4328 = vadd.f32 %v4313, %v4323
    %s4329 = sld [smem:[#allocation6 + $0x94]]
    %v4330 = vstv %s4329
    %v4331 = vmul.f32 %v3172, %v4330
    %v4332 = vmul.f32 %v3174, %v4330
    %4335 = vrot.lane.b32.xlu0 %v4331, 126
    %v4336 = vpop.permute.xlu0 %4335
    %4337 = vrot.lane.b32.xlu0 %v4332, 126
    %v4338 = vpop.permute.xlu0 %4337
    %v4339 = vsel %vm383, %v4336, %v4338
    %v4342 = vadd.f32 %v4327, %v4339
    %v4343 = vadd.f32 %v4328, %v4338
    %s4344 = sld [smem:[#allocation6 + $0x95]]
    %v4345 = vstv %s4344
    %v4346 = vmul.f32 %v3172, %v4345
    %v4347 = vmul.f32 %v3174, %v4345
    %4350 = vrot.lane.b32.xlu0 %v4346, 112
    %v4351 = vpop.permute.xlu0 %4350
    %4352 = vrot.lane.b32.xlu0 %v4347, 112
    %v4353 = vpop.permute.xlu0 %4352
    %v4354 = vsel %vm3589, %v4351, %v4353
    %v4357 = vadd.f32 %v4342, %v4354
    %v4358 = vadd.f32 %v4343, %v4353
    %s4359 = sld [smem:[#allocation6 + $0x96]]
    %v4360 = vstv %s4359
    %v4361 = vmul.f32 %v3172, %v4360
    %v4362 = vmul.f32 %v3174, %v4360
    %4365 = vrot.lane.b32.xlu0 %v4361, 111
    %v4366 = vpop.permute.xlu0 %4365
    %4367 = vrot.lane.b32.xlu0 %v4362, 111
    %v4368 = vpop.permute.xlu0 %4367
    %v4369 = vsel %vm3605, %v4366, %v4368
    %v4372 = vadd.f32 %v4357, %v4369
    %v4373 = vadd.f32 %v4358, %v4368
    %s4374 = sld [smem:[#allocation6 + $0x97]]
    %v4375 = vstv %s4374
    %v4376 = vmul.f32 %v3172, %v4375
    %v4377 = vmul.f32 %v3174, %v4375
    %4380 = vrot.lane.b32.xlu0 %v4376, 110
    %v4381 = vpop.permute.xlu0 %4380
    %4382 = vrot.lane.b32.xlu0 %v4377, 110
    %v4383 = vpop.permute.xlu0 %4382
    %v4384 = vsel %vm3621, %v4381, %v4383
    %v4387 = vadd.f32 %v4372, %v4384
    %v4388 = vadd.f32 %v4373, %v4383
    %s4389 = sld [smem:[#allocation6 + $0x98]]
    %v4390 = vstv %s4389
    %v4391 = vmul.f32 %v3172, %v4390
    %v4392 = vmul.f32 %v3174, %v4390
    %4395 = vrot.lane.b32.xlu0 %v4391, 96
    %v4396 = vpop.permute.xlu0 %4395
    %4397 = vrot.lane.b32.xlu0 %v4392, 96
    %v4398 = vpop.permute.xlu0 %4397
    %v4399 = vsel %vm536, %v4396, %v4398
    %v4402 = vadd.f32 %v4387, %v4399
    %v4403 = vadd.f32 %v4388, %v4398
    %s4404 = sld [smem:[#allocation6 + $0x99]]
    %v4405 = vstv %s4404
    %v4406 = vmul.f32 %v3172, %v4405
    %v4407 = vmul.f32 %v3174, %v4405
    %4410 = vrot.lane.b32.xlu0 %v4406, 95
    %v4411 = vpop.permute.xlu0 %4410
    %4412 = vrot.lane.b32.xlu0 %v4407, 95
    %v4413 = vpop.permute.xlu0 %4412
    %v4414 = vsel %vm3652, %v4411, %v4413
    %v4417 = vadd.f32 %v4402, %v4414
    %v4418 = vadd.f32 %v4403, %v4413
    %s4419 = sld [smem:[#allocation6 + $0x9a]]
    %v4420 = vstv %s4419
    %v4421 = vmul.f32 %v3172, %v4420
    %v4422 = vmul.f32 %v3174, %v4420
    %4425 = vrot.lane.b32.xlu0 %v4421, 94
    %v4426 = vpop.permute.xlu0 %4425
    %4427 = vrot.lane.b32.xlu0 %v4422, 94
    %v4428 = vpop.permute.xlu0 %4427
    %v4429 = vsel %vm3668, %v4426, %v4428
    %v4432 = vadd.f32 %v4417, %v4429
    %v4433 = vadd.f32 %v4418, %v4428
    %s4434 = sld [smem:[#allocation6 + $0x9b]]
    %v4435 = vstv %s4434
    %v4436 = vmul.f32 %v3541, %v4435
    %v4437 = vmul.f32 %v3543, %v4435
    %v4438 = vadd.f32 %v4432, %v4436
    %v4439 = vadd.f32 %v4433, %v4437
    %s4440 = sld [smem:[#allocation6 + $0x9c]]
    %v4441 = vstv %s4440
    %v4442 = vmul.f32 %v3541, %v4441
    %v4443 = vmul.f32 %v3543, %v4441
    %4446 = vrot.lane.b32.xlu0 %v4442, 127
    %v4447 = vpop.permute.xlu0 %4446
    %4448 = vrot.lane.b32.xlu0 %v4443, 127
    %v4449 = vpop.permute.xlu0 %4448
    %v4450 = vsel %vm332, %v4447, %v4449
    %v4453 = vadd.f32 %v4438, %v4450
    %v4454 = vadd.f32 %v4439, %v4449
    %s4455 = sld [smem:[#allocation6 + $0x9d]]
    %v4456 = vstv %s4455
    %v4457 = vmul.f32 %v3541, %v4456
    %v4458 = vmul.f32 %v3543, %v4456
    %4461 = vrot.lane.b32.xlu0 %v4457, 126
    %v4462 = vpop.permute.xlu0 %4461
    %4463 = vrot.lane.b32.xlu0 %v4458, 126
    %v4464 = vpop.permute.xlu0 %4463
    %v4465 = vsel %vm383, %v4462, %v4464
    %v4468 = vadd.f32 %v4453, %v4465
    %v4469 = vadd.f32 %v4454, %v4464
    %s4470 = sld [smem:[#allocation6 + $0x9e]]
    %v4471 = vstv %s4470
    %v4472 = vmul.f32 %v3541, %v4471
    %v4473 = vmul.f32 %v3543, %v4471
    %4476 = vrot.lane.b32.xlu0 %v4472, 112
    %v4477 = vpop.permute.xlu0 %4476
    %4478 = vrot.lane.b32.xlu0 %v4473, 112
    %v4479 = vpop.permute.xlu0 %4478
    %v4480 = vsel %vm3589, %v4477, %v4479
    %v4483 = vadd.f32 %v4468, %v4480
    %v4484 = vadd.f32 %v4469, %v4479
    %s4485 = sld [smem:[#allocation6 + $0x9f]]
    %v4486 = vstv %s4485
    %v4487 = vmul.f32 %v3541, %v4486
    %v4488 = vmul.f32 %v3543, %v4486
    %4491 = vrot.lane.b32.xlu0 %v4487, 111
    %v4492 = vpop.permute.xlu0 %4491
    %4493 = vrot.lane.b32.xlu0 %v4488, 111
    %v4494 = vpop.permute.xlu0 %4493
    %v4495 = vsel %vm3605, %v4492, %v4494
    %v4498 = vadd.f32 %v4483, %v4495
    %v4499 = vadd.f32 %v4484, %v4494
    %s4500 = sld [smem:[#allocation6 + $0xa0]]
    %v4501 = vstv %s4500
    %v4502 = vmul.f32 %v3541, %v4501
    %v4503 = vmul.f32 %v3543, %v4501
    %4506 = vrot.lane.b32.xlu0 %v4502, 110
    %v4507 = vpop.permute.xlu0 %4506
    %4508 = vrot.lane.b32.xlu0 %v4503, 110
    %v4509 = vpop.permute.xlu0 %4508
    %v4510 = vsel %vm3621, %v4507, %v4509
    %v4513 = vadd.f32 %v4498, %v4510
    %v4514 = vadd.f32 %v4499, %v4509
    %s4515 = sld [smem:[#allocation6 + $0xa1]]
    %v4516 = vstv %s4515
    %v4517 = vmul.f32 %v3541, %v4516
    %v4518 = vmul.f32 %v3543, %v4516
    %4521 = vrot.lane.b32.xlu0 %v4517, 96
    %v4522 = vpop.permute.xlu0 %4521
    %4523 = vrot.lane.b32.xlu0 %v4518, 96
    %v4524 = vpop.permute.xlu0 %4523
    %v4525 = vsel %vm536, %v4522, %v4524
    %v4528 = vadd.f32 %v4513, %v4525
    %v4529 = vadd.f32 %v4514, %v4524
    %s4530 = sld [smem:[#allocation6 + $0xa2]]
    %v4531 = vstv %s4530
    %v4532 = vmul.f32 %v3541, %v4531
    %v4533 = vmul.f32 %v3543, %v4531
    %4536 = vrot.lane.b32.xlu0 %v4532, 95
    %v4537 = vpop.permute.xlu0 %4536
    %4538 = vrot.lane.b32.xlu0 %v4533, 95
    %v4539 = vpop.permute.xlu0 %4538
    %v4540 = vsel %vm3652, %v4537, %v4539
    %v4543 = vadd.f32 %v4528, %v4540
    %v4544 = vadd.f32 %v4529, %v4539
    %s4545 = sld [smem:[#allocation6 + $0xa3]]
    %v4546 = vstv %s4545
    %v4547 = vmul.f32 %v3541, %v4546
    %v4548 = vmul.f32 %v3543, %v4546
    %4551 = vrot.lane.b32.xlu0 %v4547, 94
    %v4552 = vpop.permute.xlu0 %4551
    %4553 = vrot.lane.b32.xlu0 %v4548, 94
    %v4554 = vpop.permute.xlu0 %4553
    %v4555 = vsel %vm3668, %v4552, %v4554
    %v4558 = vadd.f32 %v4543, %v4555
    %v4559 = vadd.f32 %v4544, %v4554
    %s4560 = sld [smem:[#allocation7 + $0x1]]
    %v4561 = vstv %s4560
    %v4562 = vadd.f32 %v4558, %v4561
    %v4563 = vadd.f32 %v4559, %v4561
    %v4564 = vmax.f32 %v4562, 0.0
    %v4565 = vmax.f32 %v4563, 0.0
    %s4566 = sld [smem:[#allocation6 + $0x100]]
    %v4567 = vstv %s4566
    %v4568 = vmul.f32 %v2434, %v4567
    %v4569 = vmul.f32 %v2436, %v4567
    %s4570 = sld [smem:[#allocation6 + $0x101]]
    %v4571 = vstv %s4570
    %v4572 = vmul.f32 %v2434, %v4571
    %v4573 = vmul.f32 %v2436, %v4571
    %4576 = vrot.lane.b32.xlu0 %v4572, 127
    %v4577 = vpop.permute.xlu0 %4576
    %4578 = vrot.lane.b32.xlu0 %v4573, 127
    %v4579 = vpop.permute.xlu0 %4578
    %v4580 = vsel %vm332, %v4577, %v4579
    %v4583 = vadd.f32 %v4568, %v4580
    %v4584 = vadd.f32 %v4569, %v4579
    %s4585 = sld [smem:[#allocation6 + $0x102]]
    %v4586 = vstv %s4585
    %v4587 = vmul.f32 %v2434, %v4586
    %v4588 = vmul.f32 %v2436, %v4586
    %4591 = vrot.lane.b32.xlu0 %v4587, 126
    %v4592 = vpop.permute.xlu0 %4591
    %4593 = vrot.lane.b32.xlu0 %v4588, 126
    %v4594 = vpop.permute.xlu0 %4593
    %v4595 = vsel %vm383, %v4592, %v4594
    %v4598 = vadd.f32 %v4583, %v4595
    %v4599 = vadd.f32 %v4584, %v4594
    %s4600 = sld [smem:[#allocation6 + $0x103]]
    %v4601 = vstv %s4600
    %v4602 = vmul.f32 %v2434, %v4601
    %v4603 = vmul.f32 %v2436, %v4601
    %4606 = vrot.lane.b32.xlu0 %v4602, 112
    %v4607 = vpop.permute.xlu0 %4606
    %4608 = vrot.lane.b32.xlu0 %v4603, 112
    %v4609 = vpop.permute.xlu0 %4608
    %v4610 = vsel %vm3589, %v4607, %v4609
    %v4613 = vadd.f32 %v4598, %v4610
    %v4614 = vadd.f32 %v4599, %v4609
    %s4615 = sld [smem:[#allocation6 + $0x104]]
    %v4616 = vstv %s4615
    %v4617 = vmul.f32 %v2434, %v4616
    %v4618 = vmul.f32 %v2436, %v4616
    %4621 = vrot.lane.b32.xlu0 %v4617, 111
    %v4622 = vpop.permute.xlu0 %4621
    %4623 = vrot.lane.b32.xlu0 %v4618, 111
    %v4624 = vpop.permute.xlu0 %4623
    %v4625 = vsel %vm3605, %v4622, %v4624
    %v4628 = vadd.f32 %v4613, %v4625
    %v4629 = vadd.f32 %v4614, %v4624
    %s4630 = sld [smem:[#allocation6 + $0x105]]
    %v4631 = vstv %s4630
    %v4632 = vmul.f32 %v2434, %v4631
    %v4633 = vmul.f32 %v2436, %v4631
    %4636 = vrot.lane.b32.xlu0 %v4632, 110
    %v4637 = vpop.permute.xlu0 %4636
    %4638 = vrot.lane.b32.xlu0 %v4633, 110
    %v4639 = vpop.permute.xlu0 %4638
    %v4640 = vsel %vm3621, %v4637, %v4639
    %v4643 = vadd.f32 %v4628, %v4640
    %v4644 = vadd.f32 %v4629, %v4639
    %s4645 = sld [smem:[#allocation6 + $0x106]]
    %v4646 = vstv %s4645
    %v4647 = vmul.f32 %v2434, %v4646
    %v4648 = vmul.f32 %v2436, %v4646
    %4651 = vrot.lane.b32.xlu0 %v4647, 96
    %v4652 = vpop.permute.xlu0 %4651
    %4653 = vrot.lane.b32.xlu0 %v4648, 96
    %v4654 = vpop.permute.xlu0 %4653
    %v4655 = vsel %vm536, %v4652, %v4654
    %v4658 = vadd.f32 %v4643, %v4655
    %v4659 = vadd.f32 %v4644, %v4654
    %s4660 = sld [smem:[#allocation6 + $0x107]]
    %v4661 = vstv %s4660
    %v4662 = vmul.f32 %v2434, %v4661
    %v4663 = vmul.f32 %v2436, %v4661
    %4666 = vrot.lane.b32.xlu0 %v4662, 95
    %v4667 = vpop.permute.xlu0 %4666
    %4668 = vrot.lane.b32.xlu0 %v4663, 95
    %v4669 = vpop.permute.xlu0 %4668
    %v4670 = vsel %vm3652, %v4667, %v4669
    %v4673 = vadd.f32 %v4658, %v4670
    %v4674 = vadd.f32 %v4659, %v4669
    %s4675 = sld [smem:[#allocation6 + $0x108]]
    %v4676 = vstv %s4675
    %v4677 = vmul.f32 %v2434, %v4676
    %v4678 = vmul.f32 %v2436, %v4676
    %4681 = vrot.lane.b32.xlu0 %v4677, 94
    %v4682 = vpop.permute.xlu0 %4681
    %4683 = vrot.lane.b32.xlu0 %v4678, 94
    %v4684 = vpop.permute.xlu0 %4683
    %v4685 = vsel %vm3668, %v4682, %v4684
    %v4688 = vadd.f32 %v4673, %v4685
    %v4689 = vadd.f32 %v4674, %v4684
    %s4690 = sld [smem:[#allocation6 + $0x109]]
    %v4691 = vstv %s4690
    %v4692 = vmul.f32 %v2803, %v4691
    %v4693 = vmul.f32 %v2805, %v4691
    %v4694 = vadd.f32 %v4688, %v4692
    %v4695 = vadd.f32 %v4689, %v4693
    %s4696 = sld [smem:[#allocation6 + $0x10a]]
    %v4697 = vstv %s4696
    %v4698 = vmul.f32 %v2803, %v4697
    %v4699 = vmul.f32 %v2805, %v4697
    %4702 = vrot.lane.b32.xlu0 %v4698, 127
    %v4703 = vpop.permute.xlu0 %4702
    %4704 = vrot.lane.b32.xlu0 %v4699, 127
    %v4705 = vpop.permute.xlu0 %4704
    %v4706 = vsel %vm332, %v4703, %v4705
    %v4709 = vadd.f32 %v4694, %v4706
    %v4710 = vadd.f32 %v4695, %v4705
    %s4711 = sld [smem:[#allocation6 + $0x10b]]
    %v4712 = vstv %s4711
    %v4713 = vmul.f32 %v2803, %v4712
    %v4714 = vmul.f32 %v2805, %v4712
    %4717 = vrot.lane.b32.xlu0 %v4713, 126
    %v4718 = vpop.permute.xlu0 %4717
    %4719 = vrot.lane.b32.xlu0 %v4714, 126
    %v4720 = vpop.permute.xlu0 %4719
    %v4721 = vsel %vm383, %v4718, %v4720
    %v4724 = vadd.f32 %v4709, %v4721
    %v4725 = vadd.f32 %v4710, %v4720
    %s4726 = sld [smem:[#allocation6 + $0x10c]]
    %v4727 = vstv %s4726
    %v4728 = vmul.f32 %v2803, %v4727
    %v4729 = vmul.f32 %v2805, %v4727
    %4732 = vrot.lane.b32.xlu0 %v4728, 112
    %v4733 = vpop.permute.xlu0 %4732
    %4734 = vrot.lane.b32.xlu0 %v4729, 112
    %v4735 = vpop.permute.xlu0 %4734
    %v4736 = vsel %vm3589, %v4733, %v4735
    %v4739 = vadd.f32 %v4724, %v4736
    %v4740 = vadd.f32 %v4725, %v4735
    %s4741 = sld [smem:[#allocation6 + $0x10d]]
    %v4742 = vstv %s4741
    %v4743 = vmul.f32 %v2803, %v4742
    %v4744 = vmul.f32 %v2805, %v4742
    %4747 = vrot.lane.b32.xlu0 %v4743, 111
    %v4748 = vpop.permute.xlu0 %4747
    %4749 = vrot.lane.b32.xlu0 %v4744, 111
    %v4750 = vpop.permute.xlu0 %4749
    %v4751 = vsel %vm3605, %v4748, %v4750
    %v4754 = vadd.f32 %v4739, %v4751
    %v4755 = vadd.f32 %v4740, %v4750
    %s4756 = sld [smem:[#allocation6 + $0x10e]]
    %v4757 = vstv %s4756
    %v4758 = vmul.f32 %v2803, %v4757
    %v4759 = vmul.f32 %v2805, %v4757
    %4762 = vrot.lane.b32.xlu0 %v4758, 110
    %v4763 = vpop.permute.xlu0 %4762
    %4764 = vrot.lane.b32.xlu0 %v4759, 110
    %v4765 = vpop.permute.xlu0 %4764
    %v4766 = vsel %vm3621, %v4763, %v4765
    %v4769 = vadd.f32 %v4754, %v4766
    %v4770 = vadd.f32 %v4755, %v4765
    %s4771 = sld [smem:[#allocation6 + $0x10f]]
    %v4772 = vstv %s4771
    %v4773 = vmul.f32 %v2803, %v4772
    %v4774 = vmul.f32 %v2805, %v4772
    %4777 = vrot.lane.b32.xlu0 %v4773, 96
    %v4778 = vpop.permute.xlu0 %4777
    %4779 = vrot.lane.b32.xlu0 %v4774, 96
    %v4780 = vpop.permute.xlu0 %4779
    %v4781 = vsel %vm536, %v4778, %v4780
    %v4784 = vadd.f32 %v4769, %v4781
    %v4785 = vadd.f32 %v4770, %v4780
    %s4786 = sld [smem:[#allocation6 + $0x110]]
    %v4787 = vstv %s4786
    %v4788 = vmul.f32 %v2803, %v4787
    %v4789 = vmul.f32 %v2805, %v4787
    %4792 = vrot.lane.b32.xlu0 %v4788, 95
    %v4793 = vpop.permute.xlu0 %4792
    %4794 = vrot.lane.b32.xlu0 %v4789, 95
    %v4795 = vpop.permute.xlu0 %4794
    %v4796 = vsel %vm3652, %v4793, %v4795
    %v4799 = vadd.f32 %v4784, %v4796
    %v4800 = vadd.f32 %v4785, %v4795
    %s4801 = sld [smem:[#allocation6 + $0x111]]
    %v4802 = vstv %s4801
    %v4803 = vmul.f32 %v2803, %v4802
    %v4804 = vmul.f32 %v2805, %v4802
    %4807 = vrot.lane.b32.xlu0 %v4803, 94
    %v4808 = vpop.permute.xlu0 %4807
    %4809 = vrot.lane.b32.xlu0 %v4804, 94
    %v4810 = vpop.permute.xlu0 %4809
    %v4811 = vsel %vm3668, %v4808, %v4810
    %v4814 = vadd.f32 %v4799, %v4811
    %v4815 = vadd.f32 %v4800, %v4810
    %s4816 = sld [smem:[#allocation6 + $0x112]]
    %v4817 = vstv %s4816
    %v4818 = vmul.f32 %v3172, %v4817
    %v4819 = vmul.f32 %v3174, %v4817
    %v4820 = vadd.f32 %v4814, %v4818
    %v4821 = vadd.f32 %v4815, %v4819
    %s4822 = sld [smem:[#allocation6 + $0x113]]
    %v4823 = vstv %s4822
    %v4824 = vmul.f32 %v3172, %v4823
    %v4825 = vmul.f32 %v3174, %v4823
    %4828 = vrot.lane.b32.xlu0 %v4824, 127
    %v4829 = vpop.permute.xlu0 %4828
    %4830 = vrot.lane.b32.xlu0 %v4825, 127
    %v4831 = vpop.permute.xlu0 %4830
    %v4832 = vsel %vm332, %v4829, %v4831
    %v4835 = vadd.f32 %v4820, %v4832
    %v4836 = vadd.f32 %v4821, %v4831
    %s4837 = sld [smem:[#allocation6 + $0x114]]
    %v4838 = vstv %s4837
    %v4839 = vmul.f32 %v3172, %v4838
    %v4840 = vmul.f32 %v3174, %v4838
    %4843 = vrot.lane.b32.xlu0 %v4839, 126
    %v4844 = vpop.permute.xlu0 %4843
    %4845 = vrot.lane.b32.xlu0 %v4840, 126
    %v4846 = vpop.permute.xlu0 %4845
    %v4847 = vsel %vm383, %v4844, %v4846
    %v4850 = vadd.f32 %v4835, %v4847
    %v4851 = vadd.f32 %v4836, %v4846
    %s4852 = sld [smem:[#allocation6 + $0x115]]
    %v4853 = vstv %s4852
    %v4854 = vmul.f32 %v3172, %v4853
    %v4855 = vmul.f32 %v3174, %v4853
    %4858 = vrot.lane.b32.xlu0 %v4854, 112
    %v4859 = vpop.permute.xlu0 %4858
    %4860 = vrot.lane.b32.xlu0 %v4855, 112
    %v4861 = vpop.permute.xlu0 %4860
    %v4862 = vsel %vm3589, %v4859, %v4861
    %v4865 = vadd.f32 %v4850, %v4862
    %v4866 = vadd.f32 %v4851, %v4861
    %s4867 = sld [smem:[#allocation6 + $0x116]]
    %v4868 = vstv %s4867
    %v4869 = vmul.f32 %v3172, %v4868
    %v4870 = vmul.f32 %v3174, %v4868
    %4873 = vrot.lane.b32.xlu0 %v4869, 111
    %v4874 = vpop.permute.xlu0 %4873
    %4875 = vrot.lane.b32.xlu0 %v4870, 111
    %v4876 = vpop.permute.xlu0 %4875
    %v4877 = vsel %vm3605, %v4874, %v4876
    %v4880 = vadd.f32 %v4865, %v4877
    %v4881 = vadd.f32 %v4866, %v4876
    %s4882 = sld [smem:[#allocation6 + $0x117]]
    %v4883 = vstv %s4882
    %v4884 = vmul.f32 %v3172, %v4883
    %v4885 = vmul.f32 %v3174, %v4883
    %4888 = vrot.lane.b32.xlu0 %v4884, 110
    %v4889 = vpop.permute.xlu0 %4888
    %4890 = vrot.lane.b32.xlu0 %v4885, 110
    %v4891 = vpop.permute.xlu0 %4890
    %v4892 = vsel %vm3621, %v4889, %v4891
    %v4895 = vadd.f32 %v4880, %v4892
    %v4896 = vadd.f32 %v4881, %v4891
    %s4897 = sld [smem:[#allocation6 + $0x118]]
    %v4898 = vstv %s4897
    %v4899 = vmul.f32 %v3172, %v4898
    %v4900 = vmul.f32 %v3174, %v4898
    %4903 = vrot.lane.b32.xlu0 %v4899, 96
    %v4904 = vpop.permute.xlu0 %4903
    %4905 = vrot.lane.b32.xlu0 %v4900, 96
    %v4906 = vpop.permute.xlu0 %4905
    %v4907 = vsel %vm536, %v4904, %v4906
    %v4910 = vadd.f32 %v4895, %v4907
    %v4911 = vadd.f32 %v4896, %v4906
    %s4912 = sld [smem:[#allocation6 + $0x119]]
    %v4913 = vstv %s4912
    %v4914 = vmul.f32 %v3172, %v4913
    %v4915 = vmul.f32 %v3174, %v4913
    %4918 = vrot.lane.b32.xlu0 %v4914, 95
    %v4919 = vpop.permute.xlu0 %4918
    %4920 = vrot.lane.b32.xlu0 %v4915, 95
    %v4921 = vpop.permute.xlu0 %4920
    %v4922 = vsel %vm3652, %v4919, %v4921
    %v4925 = vadd.f32 %v4910, %v4922
    %v4926 = vadd.f32 %v4911, %v4921
    %s4927 = sld [smem:[#allocation6 + $0x11a]]
    %v4928 = vstv %s4927
    %v4929 = vmul.f32 %v3172, %v4928
    %v4930 = vmul.f32 %v3174, %v4928
    %4933 = vrot.lane.b32.xlu0 %v4929, 94
    %v4934 = vpop.permute.xlu0 %4933
    %4935 = vrot.lane.b32.xlu0 %v4930, 94
    %v4936 = vpop.permute.xlu0 %4935
    %v4937 = vsel %vm3668, %v4934, %v4936
    %v4940 = vadd.f32 %v4925, %v4937
    %v4941 = vadd.f32 %v4926, %v4936
    %s4942 = sld [smem:[#allocation6 + $0x11b]]
    %v4943 = vstv %s4942
    %v4944 = vmul.f32 %v3541, %v4943
    %v4945 = vmul.f32 %v3543, %v4943
    %v4946 = vadd.f32 %v4940, %v4944
    %v4947 = vadd.f32 %v4941, %v4945
    %s4948 = sld [smem:[#allocation6 + $0x11c]]
    %v4949 = vstv %s4948
    %v4950 = vmul.f32 %v3541, %v4949
    %v4951 = vmul.f32 %v3543, %v4949
    %4954 = vrot.lane.b32.xlu0 %v4950, 127
    %v4955 = vpop.permute.xlu0 %4954
    %4956 = vrot.lane.b32.xlu0 %v4951, 127
    %v4957 = vpop.permute.xlu0 %4956
    %v4958 = vsel %vm332, %v4955, %v4957
    %v4961 = vadd.f32 %v4946, %v4958
    %v4962 = vadd.f32 %v4947, %v4957
    %s4963 = sld [smem:[#allocation6 + $0x11d]]
    %v4964 = vstv %s4963
    %v4965 = vmul.f32 %v3541, %v4964
    %v4966 = vmul.f32 %v3543, %v4964
    %4969 = vrot.lane.b32.xlu0 %v4965, 126
    %v4970 = vpop.permute.xlu0 %4969
    %4971 = vrot.lane.b32.xlu0 %v4966, 126
    %v4972 = vpop.permute.xlu0 %4971
    %v4973 = vsel %vm383, %v4970, %v4972
    %v4976 = vadd.f32 %v4961, %v4973
    %v4977 = vadd.f32 %v4962, %v4972
    %s4978 = sld [smem:[#allocation6 + $0x11e]]
    %v4979 = vstv %s4978
    %v4980 = vmul.f32 %v3541, %v4979
    %v4981 = vmul.f32 %v3543, %v4979
    %4984 = vrot.lane.b32.xlu0 %v4980, 112
    %v4985 = vpop.permute.xlu0 %4984
    %4986 = vrot.lane.b32.xlu0 %v4981, 112
    %v4987 = vpop.permute.xlu0 %4986
    %v4988 = vsel %vm3589, %v4985, %v4987
    %v4991 = vadd.f32 %v4976, %v4988
    %v4992 = vadd.f32 %v4977, %v4987
    %s4993 = sld [smem:[#allocation6 + $0x11f]]
    %v4994 = vstv %s4993
    %v4995 = vmul.f32 %v3541, %v4994
    %v4996 = vmul.f32 %v3543, %v4994
    %4999 = vrot.lane.b32.xlu0 %v4995, 111
    %v5000 = vpop.permute.xlu0 %4999
    %5001 = vrot.lane.b32.xlu0 %v4996, 111
    %v5002 = vpop.permute.xlu0 %5001
    %v5003 = vsel %vm3605, %v5000, %v5002
    %v5006 = vadd.f32 %v4991, %v5003
    %v5007 = vadd.f32 %v4992, %v5002
    %s5008 = sld [smem:[#allocation6 + $0x120]]
    %v5009 = vstv %s5008
    %v5010 = vmul.f32 %v3541, %v5009
    %v5011 = vmul.f32 %v3543, %v5009
    %5014 = vrot.lane.b32.xlu0 %v5010, 110
    %v5015 = vpop.permute.xlu0 %5014
    %5016 = vrot.lane.b32.xlu0 %v5011, 110
    %v5017 = vpop.permute.xlu0 %5016
    %v5018 = vsel %vm3621, %v5015, %v5017
    %v5021 = vadd.f32 %v5006, %v5018
    %v5022 = vadd.f32 %v5007, %v5017
    %s5023 = sld [smem:[#allocation6 + $0x121]]
    %v5024 = vstv %s5023
    %v5025 = vmul.f32 %v3541, %v5024
    %v5026 = vmul.f32 %v3543, %v5024
    %5029 = vrot.lane.b32.xlu0 %v5025, 96
    %v5030 = vpop.permute.xlu0 %5029
    %5031 = vrot.lane.b32.xlu0 %v5026, 96
    %v5032 = vpop.permute.xlu0 %5031
    %v5033 = vsel %vm536, %v5030, %v5032
    %v5036 = vadd.f32 %v5021, %v5033
    %v5037 = vadd.f32 %v5022, %v5032
    %s5038 = sld [smem:[#allocation6 + $0x122]]
    %v5039 = vstv %s5038
    %v5040 = vmul.f32 %v3541, %v5039
    %v5041 = vmul.f32 %v3543, %v5039
    %5044 = vrot.lane.b32.xlu0 %v5040, 95
    %v5045 = vpop.permute.xlu0 %5044
    %5046 = vrot.lane.b32.xlu0 %v5041, 95
    %v5047 = vpop.permute.xlu0 %5046
    %v5048 = vsel %vm3652, %v5045, %v5047
    %v5051 = vadd.f32 %v5036, %v5048
    %v5052 = vadd.f32 %v5037, %v5047
    %s5053 = sld [smem:[#allocation6 + $0x123]]
    %v5054 = vstv %s5053
    %v5055 = vmul.f32 %v3541, %v5054
    %v5056 = vmul.f32 %v3543, %v5054
    %5059 = vrot.lane.b32.xlu0 %v5055, 94
    %v5060 = vpop.permute.xlu0 %5059
    %5061 = vrot.lane.b32.xlu0 %v5056, 94
    %v5062 = vpop.permute.xlu0 %5061
    %v5063 = vsel %vm3668, %v5060, %v5062
    %v5066 = vadd.f32 %v5051, %v5063
    %v5067 = vadd.f32 %v5052, %v5062
    %s5068 = sld [smem:[#allocation7 + $0x2]]
    %v5069 = vstv %s5068
    %v5070 = vadd.f32 %v5066, %v5069
    %v5071 = vadd.f32 %v5067, %v5069
    %v5072 = vmax.f32 %v5070, 0.0
    %v5073 = vmax.f32 %v5071, 0.0
    %s5074 = sld [smem:[#allocation6 + $0x180]]
    %v5075 = vstv %s5074
    %v5076 = vmul.f32 %v2434, %v5075
    %v5077 = vmul.f32 %v2436, %v5075
    %s5078 = sld [smem:[#allocation6 + $0x181]]
    %v5079 = vstv %s5078
    %v5080 = vmul.f32 %v2434, %v5079
    %v5081 = vmul.f32 %v2436, %v5079
    %5084 = vrot.lane.b32.xlu0 %v5080, 127
    %v5085 = vpop.permute.xlu0 %5084
    %5086 = vrot.lane.b32.xlu0 %v5081, 127
    %v5087 = vpop.permute.xlu0 %5086
    %v5088 = vsel %vm332, %v5085, %v5087
    %v5091 = vadd.f32 %v5076, %v5088
    %v5092 = vadd.f32 %v5077, %v5087
    %s5093 = sld [smem:[#allocation6 + $0x182]]
    %v5094 = vstv %s5093
    %v5095 = vmul.f32 %v2434, %v5094
    %v5096 = vmul.f32 %v2436, %v5094
    %5099 = vrot.lane.b32.xlu0 %v5095, 126
    %v5100 = vpop.permute.xlu0 %5099
    %5101 = vrot.lane.b32.xlu0 %v5096, 126
    %v5102 = vpop.permute.xlu0 %5101
    %v5103 = vsel %vm383, %v5100, %v5102
    %v5106 = vadd.f32 %v5091, %v5103
    %v5107 = vadd.f32 %v5092, %v5102
    %s5108 = sld [smem:[#allocation6 + $0x183]]
    %v5109 = vstv %s5108
    %v5110 = vmul.f32 %v2434, %v5109
    %v5111 = vmul.f32 %v2436, %v5109
    %5114 = vrot.lane.b32.xlu0 %v5110, 112
    %v5115 = vpop.permute.xlu0 %5114
    %5116 = vrot.lane.b32.xlu0 %v5111, 112
    %v5117 = vpop.permute.xlu0 %5116
    %v5118 = vsel %vm3589, %v5115, %v5117
    %v5121 = vadd.f32 %v5106, %v5118
    %v5122 = vadd.f32 %v5107, %v5117
    %s5123 = sld [smem:[#allocation6 + $0x184]]
    %v5124 = vstv %s5123
    %v5125 = vmul.f32 %v2434, %v5124
    %v5126 = vmul.f32 %v2436, %v5124
    %5129 = vrot.lane.b32.xlu0 %v5125, 111
    %v5130 = vpop.permute.xlu0 %5129
    %5131 = vrot.lane.b32.xlu0 %v5126, 111
    %v5132 = vpop.permute.xlu0 %5131
    %v5133 = vsel %vm3605, %v5130, %v5132
    %v5136 = vadd.f32 %v5121, %v5133
    %v5137 = vadd.f32 %v5122, %v5132
    %s5138 = sld [smem:[#allocation6 + $0x185]]
    %v5139 = vstv %s5138
    %v5140 = vmul.f32 %v2434, %v5139
    %v5141 = vmul.f32 %v2436, %v5139
    %5144 = vrot.lane.b32.xlu0 %v5140, 110
    %v5145 = vpop.permute.xlu0 %5144
    %5146 = vrot.lane.b32.xlu0 %v5141, 110
    %v5147 = vpop.permute.xlu0 %5146
    %v5148 = vsel %vm3621, %v5145, %v5147
    %v5151 = vadd.f32 %v5136, %v5148
    %v5152 = vadd.f32 %v5137, %v5147
    %s5153 = sld [smem:[#allocation6 + $0x186]]
    %v5154 = vstv %s5153
    %v5155 = vmul.f32 %v2434, %v5154
    %v5156 = vmul.f32 %v2436, %v5154
    %5159 = vrot.lane.b32.xlu0 %v5155, 96
    %v5160 = vpop.permute.xlu0 %5159
    %5161 = vrot.lane.b32.xlu0 %v5156, 96
    %v5162 = vpop.permute.xlu0 %5161
    %v5163 = vsel %vm536, %v5160, %v5162
    %v5166 = vadd.f32 %v5151, %v5163
    %v5167 = vadd.f32 %v5152, %v5162
    %s5168 = sld [smem:[#allocation6 + $0x187]]
    %v5169 = vstv %s5168
    %v5170 = vmul.f32 %v2434, %v5169
    %v5171 = vmul.f32 %v2436, %v5169
    %5174 = vrot.lane.b32.xlu0 %v5170, 95
    %v5175 = vpop.permute.xlu0 %5174
    %5176 = vrot.lane.b32.xlu0 %v5171, 95
    %v5177 = vpop.permute.xlu0 %5176
    %v5178 = vsel %vm3652, %v5175, %v5177
    %v5181 = vadd.f32 %v5166, %v5178
    %v5182 = vadd.f32 %v5167, %v5177
    %s5183 = sld [smem:[#allocation6 + $0x188]]
    %v5184 = vstv %s5183
    %v5185 = vmul.f32 %v2434, %v5184
    %v5186 = vmul.f32 %v2436, %v5184
    %5189 = vrot.lane.b32.xlu0 %v5185, 94
    %v5190 = vpop.permute.xlu0 %5189
    %5191 = vrot.lane.b32.xlu0 %v5186, 94
    %v5192 = vpop.permute.xlu0 %5191
    %v5193 = vsel %vm3668, %v5190, %v5192
    %v5196 = vadd.f32 %v5181, %v5193
    %v5197 = vadd.f32 %v5182, %v5192
    %s5198 = sld [smem:[#allocation6 + $0x189]]
    %v5199 = vstv %s5198
    %v5200 = vmul.f32 %v2803, %v5199
    %v5201 = vmul.f32 %v2805, %v5199
    %v5202 = vadd.f32 %v5196, %v5200
    %v5203 = vadd.f32 %v5197, %v5201
    %s5204 = sld [smem:[#allocation6 + $0x18a]]
    %v5205 = vstv %s5204
    %v5206 = vmul.f32 %v2803, %v5205
    %v5207 = vmul.f32 %v2805, %v5205
    %5210 = vrot.lane.b32.xlu0 %v5206, 127
    %v5211 = vpop.permute.xlu0 %5210
    %5212 = vrot.lane.b32.xlu0 %v5207, 127
    %v5213 = vpop.permute.xlu0 %5212
    %v5214 = vsel %vm332, %v5211, %v5213
    %v5217 = vadd.f32 %v5202, %v5214
    %v5218 = vadd.f32 %v5203, %v5213
    %s5219 = sld [smem:[#allocation6 + $0x18b]]
    %v5220 = vstv %s5219
    %v5221 = vmul.f32 %v2803, %v5220
    %v5222 = vmul.f32 %v2805, %v5220
    %5225 = vrot.lane.b32.xlu0 %v5221, 126
    %v5226 = vpop.permute.xlu0 %5225
    %5227 = vrot.lane.b32.xlu0 %v5222, 126
    %v5228 = vpop.permute.xlu0 %5227
    %v5229 = vsel %vm383, %v5226, %v5228
    %v5232 = vadd.f32 %v5217, %v5229
    %v5233 = vadd.f32 %v5218, %v5228
    %s5234 = sld [smem:[#allocation6 + $0x18c]]
    %v5235 = vstv %s5234
    %v5236 = vmul.f32 %v2803, %v5235
    %v5237 = vmul.f32 %v2805, %v5235
    %5240 = vrot.lane.b32.xlu0 %v5236, 112
    %v5241 = vpop.permute.xlu0 %5240
    %5242 = vrot.lane.b32.xlu0 %v5237, 112
    %v5243 = vpop.permute.xlu0 %5242
    %v5244 = vsel %vm3589, %v5241, %v5243
    %v5247 = vadd.f32 %v5232, %v5244
    %v5248 = vadd.f32 %v5233, %v5243
    %s5249 = sld [smem:[#allocation6 + $0x18d]]
    %v5250 = vstv %s5249
    %v5251 = vmul.f32 %v2803, %v5250
    %v5252 = vmul.f32 %v2805, %v5250
    %5255 = vrot.lane.b32.xlu0 %v5251, 111
    %v5256 = vpop.permute.xlu0 %5255
    %5257 = vrot.lane.b32.xlu0 %v5252, 111
    %v5258 = vpop.permute.xlu0 %5257
    %v5259 = vsel %vm3605, %v5256, %v5258
    %v5262 = vadd.f32 %v5247, %v5259
    %v5263 = vadd.f32 %v5248, %v5258
    %s5264 = sld [smem:[#allocation6 + $0x18e]]
    %v5265 = vstv %s5264
    %v5266 = vmul.f32 %v2803, %v5265
    %v5267 = vmul.f32 %v2805, %v5265
    %5270 = vrot.lane.b32.xlu0 %v5266, 110
    %v5271 = vpop.permute.xlu0 %5270
    %5272 = vrot.lane.b32.xlu0 %v5267, 110
    %v5273 = vpop.permute.xlu0 %5272
    %v5274 = vsel %vm3621, %v5271, %v5273
    %v5277 = vadd.f32 %v5262, %v5274
    %v5278 = vadd.f32 %v5263, %v5273
    %s5279 = sld [smem:[#allocation6 + $0x18f]]
    %v5280 = vstv %s5279
    %v5281 = vmul.f32 %v2803, %v5280
    %v5282 = vmul.f32 %v2805, %v5280
    %5285 = vrot.lane.b32.xlu0 %v5281, 96
    %v5286 = vpop.permute.xlu0 %5285
    %5287 = vrot.lane.b32.xlu0 %v5282, 96
    %v5288 = vpop.permute.xlu0 %5287
    %v5289 = vsel %vm536, %v5286, %v5288
    %v5292 = vadd.f32 %v5277, %v5289
    %v5293 = vadd.f32 %v5278, %v5288
    %s5294 = sld [smem:[#allocation6 + $0x190]]
    %v5295 = vstv %s5294
    %v5296 = vmul.f32 %v2803, %v5295
    %v5297 = vmul.f32 %v2805, %v5295
    %5300 = vrot.lane.b32.xlu0 %v5296, 95
    %v5301 = vpop.permute.xlu0 %5300
    %5302 = vrot.lane.b32.xlu0 %v5297, 95
    %v5303 = vpop.permute.xlu0 %5302
    %v5304 = vsel %vm3652, %v5301, %v5303
    %v5307 = vadd.f32 %v5292, %v5304
    %v5308 = vadd.f32 %v5293, %v5303
    %s5309 = sld [smem:[#allocation6 + $0x191]]
    %v5310 = vstv %s5309
    %v5311 = vmul.f32 %v2803, %v5310
    %v5312 = vmul.f32 %v2805, %v5310
    %5315 = vrot.lane.b32.xlu0 %v5311, 94
    %v5316 = vpop.permute.xlu0 %5315
    %5317 = vrot.lane.b32.xlu0 %v5312, 94
    %v5318 = vpop.permute.xlu0 %5317
    %v5319 = vsel %vm3668, %v5316, %v5318
    %v5322 = vadd.f32 %v5307, %v5319
    %v5323 = vadd.f32 %v5308, %v5318
    %s5324 = sld [smem:[#allocation6 + $0x192]]
    %v5325 = vstv %s5324
    %v5326 = vmul.f32 %v3172, %v5325
    %v5327 = vmul.f32 %v3174, %v5325
    %v5328 = vadd.f32 %v5322, %v5326
    %v5329 = vadd.f32 %v5323, %v5327
    %s5330 = sld [smem:[#allocation6 + $0x193]]
    %v5331 = vstv %s5330
    %v5332 = vmul.f32 %v3172, %v5331
    %v5333 = vmul.f32 %v3174, %v5331
    %5336 = vrot.lane.b32.xlu0 %v5332, 127
    %v5337 = vpop.permute.xlu0 %5336
    %5338 = vrot.lane.b32.xlu0 %v5333, 127
    %v5339 = vpop.permute.xlu0 %5338
    %v5340 = vsel %vm332, %v5337, %v5339
    %v5343 = vadd.f32 %v5328, %v5340
    %v5344 = vadd.f32 %v5329, %v5339
    %s5345 = sld [smem:[#allocation6 + $0x194]]
    %v5346 = vstv %s5345
    %v5347 = vmul.f32 %v3172, %v5346
    %v5348 = vmul.f32 %v3174, %v5346
    %5351 = vrot.lane.b32.xlu0 %v5347, 126
    %v5352 = vpop.permute.xlu0 %5351
    %5353 = vrot.lane.b32.xlu0 %v5348, 126
    %v5354 = vpop.permute.xlu0 %5353
    %v5355 = vsel %vm383, %v5352, %v5354
    %v5358 = vadd.f32 %v5343, %v5355
    %v5359 = vadd.f32 %v5344, %v5354
    %s5360 = sld [smem:[#allocation6 + $0x195]]
    %v5361 = vstv %s5360
    %v5362 = vmul.f32 %v3172, %v5361
    %v5363 = vmul.f32 %v3174, %v5361
    %5366 = vrot.lane.b32.xlu0 %v5362, 112
    %v5367 = vpop.permute.xlu0 %5366
    %5368 = vrot.lane.b32.xlu0 %v5363, 112
    %v5369 = vpop.permute.xlu0 %5368
    %v5370 = vsel %vm3589, %v5367, %v5369
    %v5373 = vadd.f32 %v5358, %v5370
    %v5374 = vadd.f32 %v5359, %v5369
    %s5375 = sld [smem:[#allocation6 + $0x196]]
    %v5376 = vstv %s5375
    %v5377 = vmul.f32 %v3172, %v5376
    %v5378 = vmul.f32 %v3174, %v5376
    %5381 = vrot.lane.b32.xlu0 %v5377, 111
    %v5382 = vpop.permute.xlu0 %5381
    %5383 = vrot.lane.b32.xlu0 %v5378, 111
    %v5384 = vpop.permute.xlu0 %5383
    %v5385 = vsel %vm3605, %v5382, %v5384
    %v5388 = vadd.f32 %v5373, %v5385
    %v5389 = vadd.f32 %v5374, %v5384
    %s5390 = sld [smem:[#allocation6 + $0x197]]
    %v5391 = vstv %s5390
    %v5392 = vmul.f32 %v3172, %v5391
    %v5393 = vmul.f32 %v3174, %v5391
    %5396 = vrot.lane.b32.xlu0 %v5392, 110
    %v5397 = vpop.permute.xlu0 %5396
    %5398 = vrot.lane.b32.xlu0 %v5393, 110
    %v5399 = vpop.permute.xlu0 %5398
    %v5400 = vsel %vm3621, %v5397, %v5399
    %v5403 = vadd.f32 %v5388, %v5400
    %v5404 = vadd.f32 %v5389, %v5399
    %s5405 = sld [smem:[#allocation6 + $0x198]]
    %v5406 = vstv %s5405
    %v5407 = vmul.f32 %v3172, %v5406
    %v5408 = vmul.f32 %v3174, %v5406
    %5411 = vrot.lane.b32.xlu0 %v5407, 96
    %v5412 = vpop.permute.xlu0 %5411
    %5413 = vrot.lane.b32.xlu0 %v5408, 96
    %v5414 = vpop.permute.xlu0 %5413
    %v5415 = vsel %vm536, %v5412, %v5414
    %v5418 = vadd.f32 %v5403, %v5415
    %v5419 = vadd.f32 %v5404, %v5414
    %s5420 = sld [smem:[#allocation6 + $0x199]]
    %v5421 = vstv %s5420
    %v5422 = vmul.f32 %v3172, %v5421
    %v5423 = vmul.f32 %v3174, %v5421
    %5426 = vrot.lane.b32.xlu0 %v5422, 95
    %v5427 = vpop.permute.xlu0 %5426
    %5428 = vrot.lane.b32.xlu0 %v5423, 95
    %v5429 = vpop.permute.xlu0 %5428
    %v5430 = vsel %vm3652, %v5427, %v5429
    %v5433 = vadd.f32 %v5418, %v5430
    %v5434 = vadd.f32 %v5419, %v5429
    %s5435 = sld [smem:[#allocation6 + $0x19a]]
    %v5436 = vstv %s5435
    %v5437 = vmul.f32 %v3172, %v5436
    %v5438 = vmul.f32 %v3174, %v5436
    %5441 = vrot.lane.b32.xlu0 %v5437, 94
    %v5442 = vpop.permute.xlu0 %5441
    %5443 = vrot.lane.b32.xlu0 %v5438, 94
    %v5444 = vpop.permute.xlu0 %5443
    %v5445 = vsel %vm3668, %v5442, %v5444
    %v5448 = vadd.f32 %v5433, %v5445
    %v5449 = vadd.f32 %v5434, %v5444
    %s5450 = sld [smem:[#allocation6 + $0x19b]]
    %v5451 = vstv %s5450
    %v5452 = vmul.f32 %v3541, %v5451
    %v5453 = vmul.f32 %v3543, %v5451
    %v5454 = vadd.f32 %v5448, %v5452
    %v5455 = vadd.f32 %v5449, %v5453
    %s5456 = sld [smem:[#allocation6 + $0x19c]]
    %v5457 = vstv %s5456
    %v5458 = vmul.f32 %v3541, %v5457
    %v5459 = vmul.f32 %v3543, %v5457
    %5462 = vrot.lane.b32.xlu0 %v5458, 127
    %v5463 = vpop.permute.xlu0 %5462
    %5464 = vrot.lane.b32.xlu0 %v5459, 127
    %v5465 = vpop.permute.xlu0 %5464
    %v5466 = vsel %vm332, %v5463, %v5465
    %v5469 = vadd.f32 %v5454, %v5466
    %v5470 = vadd.f32 %v5455, %v5465
    %s5471 = sld [smem:[#allocation6 + $0x19d]]
    %v5472 = vstv %s5471
    %v5473 = vmul.f32 %v3541, %v5472
    %v5474 = vmul.f32 %v3543, %v5472
    %5477 = vrot.lane.b32.xlu0 %v5473, 126
    %v5478 = vpop.permute.xlu0 %5477
    %5479 = vrot.lane.b32.xlu0 %v5474, 126
    %v5480 = vpop.permute.xlu0 %5479
    %v5481 = vsel %vm383, %v5478, %v5480
    %v5484 = vadd.f32 %v5469, %v5481
    %v5485 = vadd.f32 %v5470, %v5480
    %s5486 = sld [smem:[#allocation6 + $0x19e]]
    %v5487 = vstv %s5486
    %v5488 = vmul.f32 %v3541, %v5487
    %v5489 = vmul.f32 %v3543, %v5487
    %5492 = vrot.lane.b32.xlu0 %v5488, 112
    %v5493 = vpop.permute.xlu0 %5492
    %5494 = vrot.lane.b32.xlu0 %v5489, 112
    %v5495 = vpop.permute.xlu0 %5494
    %v5496 = vsel %vm3589, %v5493, %v5495
    %v5499 = vadd.f32 %v5484, %v5496
    %v5500 = vadd.f32 %v5485, %v5495
    %s5501 = sld [smem:[#allocation6 + $0x19f]]
    %v5502 = vstv %s5501
    %v5503 = vmul.f32 %v3541, %v5502
    %v5504 = vmul.f32 %v3543, %v5502
    %5507 = vrot.lane.b32.xlu0 %v5503, 111
    %v5508 = vpop.permute.xlu0 %5507
    %5509 = vrot.lane.b32.xlu0 %v5504, 111
    %v5510 = vpop.permute.xlu0 %5509
    %v5511 = vsel %vm3605, %v5508, %v5510
    %v5514 = vadd.f32 %v5499, %v5511
    %v5515 = vadd.f32 %v5500, %v5510
    %s5516 = sld [smem:[#allocation6 + $0x1a0]]
    %v5517 = vstv %s5516
    %v5518 = vmul.f32 %v3541, %v5517
    %v5519 = vmul.f32 %v3543, %v5517
    %5522 = vrot.lane.b32.xlu0 %v5518, 110
    %v5523 = vpop.permute.xlu0 %5522
    %5524 = vrot.lane.b32.xlu0 %v5519, 110
    %v5525 = vpop.permute.xlu0 %5524
    %v5526 = vsel %vm3621, %v5523, %v5525
    %v5529 = vadd.f32 %v5514, %v5526
    %v5530 = vadd.f32 %v5515, %v5525
    %s5531 = sld [smem:[#allocation6 + $0x1a1]]
    %v5532 = vstv %s5531
    %v5533 = vmul.f32 %v3541, %v5532
    %v5534 = vmul.f32 %v3543, %v5532
    %5537 = vrot.lane.b32.xlu0 %v5533, 96
    %v5538 = vpop.permute.xlu0 %5537
    %5539 = vrot.lane.b32.xlu0 %v5534, 96
    %v5540 = vpop.permute.xlu0 %5539
    %v5541 = vsel %vm536, %v5538, %v5540
    %v5544 = vadd.f32 %v5529, %v5541
    %v5545 = vadd.f32 %v5530, %v5540
    %s5546 = sld [smem:[#allocation6 + $0x1a2]]
    %v5547 = vstv %s5546
    %v5548 = vmul.f32 %v3541, %v5547
    %v5549 = vmul.f32 %v3543, %v5547
    %5552 = vrot.lane.b32.xlu0 %v5548, 95
    %v5553 = vpop.permute.xlu0 %5552
    %5554 = vrot.lane.b32.xlu0 %v5549, 95
    %v5555 = vpop.permute.xlu0 %5554
    %v5556 = vsel %vm3652, %v5553, %v5555
    %v5559 = vadd.f32 %v5544, %v5556
    %v5560 = vadd.f32 %v5545, %v5555
    %s5561 = sld [smem:[#allocation6 + $0x1a3]]
    %v5562 = vstv %s5561
    %v5563 = vmul.f32 %v3541, %v5562
    %v5564 = vmul.f32 %v3543, %v5562
    %5567 = vrot.lane.b32.xlu0 %v5563, 94
    %v5568 = vpop.permute.xlu0 %5567
    %5569 = vrot.lane.b32.xlu0 %v5564, 94
    %v5570 = vpop.permute.xlu0 %5569
    %v5571 = vsel %vm3668, %v5568, %v5570
    %v5574 = vadd.f32 %v5559, %v5571
    %v5575 = vadd.f32 %v5560, %v5570
    %s5576 = sld [smem:[#allocation7 + $0x3]]
    %v5577 = vstv %s5576
    %v5578 = vadd.f32 %v5574, %v5577
    %v5579 = vadd.f32 %v5575, %v5577
    %v5580 = vmax.f32 %v5578, 0.0
    %v5581 = vmax.f32 %v5579, 0.0
    %s5582 = sld [smem:[#allocation6 + $0x200]]
    %v5583 = vstv %s5582
    %v5584 = vmul.f32 %v2434, %v5583
    %v5585 = vmul.f32 %v2436, %v5583
    %s5586 = sld [smem:[#allocation6 + $0x201]]
    %v5587 = vstv %s5586
    %v5588 = vmul.f32 %v2434, %v5587
    %v5589 = vmul.f32 %v2436, %v5587
    %5592 = vrot.lane.b32.xlu0 %v5588, 127
    %v5593 = vpop.permute.xlu0 %5592
    %5594 = vrot.lane.b32.xlu0 %v5589, 127
    %v5595 = vpop.permute.xlu0 %5594
    %v5596 = vsel %vm332, %v5593, %v5595
    %v5599 = vadd.f32 %v5584, %v5596
    %v5600 = vadd.f32 %v5585, %v5595
    %s5601 = sld [smem:[#allocation6 + $0x202]]
    %v5602 = vstv %s5601
    %v5603 = vmul.f32 %v2434, %v5602
    %v5604 = vmul.f32 %v2436, %v5602
    %5607 = vrot.lane.b32.xlu0 %v5603, 126
    %v5608 = vpop.permute.xlu0 %5607
    %5609 = vrot.lane.b32.xlu0 %v5604, 126
    %v5610 = vpop.permute.xlu0 %5609
    %v5611 = vsel %vm383, %v5608, %v5610
    %v5614 = vadd.f32 %v5599, %v5611
    %v5615 = vadd.f32 %v5600, %v5610
    %s5616 = sld [smem:[#allocation6 + $0x203]]
    %v5617 = vstv %s5616
    %v5618 = vmul.f32 %v2434, %v5617
    %v5619 = vmul.f32 %v2436, %v5617
    %5622 = vrot.lane.b32.xlu0 %v5618, 112
    %v5623 = vpop.permute.xlu0 %5622
    %5624 = vrot.lane.b32.xlu0 %v5619, 112
    %v5625 = vpop.permute.xlu0 %5624
    %v5626 = vsel %vm3589, %v5623, %v5625
    %v5629 = vadd.f32 %v5614, %v5626
    %v5630 = vadd.f32 %v5615, %v5625
    %s5631 = sld [smem:[#allocation6 + $0x204]]
    %v5632 = vstv %s5631
    %v5633 = vmul.f32 %v2434, %v5632
    %v5634 = vmul.f32 %v2436, %v5632
    %5637 = vrot.lane.b32.xlu0 %v5633, 111
    %v5638 = vpop.permute.xlu0 %5637
    %5639 = vrot.lane.b32.xlu0 %v5634, 111
    %v5640 = vpop.permute.xlu0 %5639
    %v5641 = vsel %vm3605, %v5638, %v5640
    %v5644 = vadd.f32 %v5629, %v5641
    %v5645 = vadd.f32 %v5630, %v5640
    %s5646 = sld [smem:[#allocation6 + $0x205]]
    %v5647 = vstv %s5646
    %v5648 = vmul.f32 %v2434, %v5647
    %v5649 = vmul.f32 %v2436, %v5647
    %5652 = vrot.lane.b32.xlu0 %v5648, 110
    %v5653 = vpop.permute.xlu0 %5652
    %5654 = vrot.lane.b32.xlu0 %v5649, 110
    %v5655 = vpop.permute.xlu0 %5654
    %v5656 = vsel %vm3621, %v5653, %v5655
    %v5659 = vadd.f32 %v5644, %v5656
    %v5660 = vadd.f32 %v5645, %v5655
    %s5661 = sld [smem:[#allocation6 + $0x206]]
    %v5662 = vstv %s5661
    %v5663 = vmul.f32 %v2434, %v5662
    %v5664 = vmul.f32 %v2436, %v5662
    %5667 = vrot.lane.b32.xlu0 %v5663, 96
    %v5668 = vpop.permute.xlu0 %5667
    %5669 = vrot.lane.b32.xlu0 %v5664, 96
    %v5670 = vpop.permute.xlu0 %5669
    %v5671 = vsel %vm536, %v5668, %v5670
    %v5674 = vadd.f32 %v5659, %v5671
    %v5675 = vadd.f32 %v5660, %v5670
    %s5676 = sld [smem:[#allocation6 + $0x207]]
    %v5677 = vstv %s5676
    %v5678 = vmul.f32 %v2434, %v5677
    %v5679 = vmul.f32 %v2436, %v5677
    %5682 = vrot.lane.b32.xlu0 %v5678, 95
    %v5683 = vpop.permute.xlu0 %5682
    %5684 = vrot.lane.b32.xlu0 %v5679, 95
    %v5685 = vpop.permute.xlu0 %5684
    %v5686 = vsel %vm3652, %v5683, %v5685
    %v5689 = vadd.f32 %v5674, %v5686
    %v5690 = vadd.f32 %v5675, %v5685
    %s5691 = sld [smem:[#allocation6 + $0x208]]
    %v5692 = vstv %s5691
    %v5693 = vmul.f32 %v2434, %v5692
    %v5694 = vmul.f32 %v2436, %v5692
    %5697 = vrot.lane.b32.xlu0 %v5693, 94
    %v5698 = vpop.permute.xlu0 %5697
    %5699 = vrot.lane.b32.xlu0 %v5694, 94
    %v5700 = vpop.permute.xlu0 %5699
    %v5701 = vsel %vm3668, %v5698, %v5700
    %v5704 = vadd.f32 %v5689, %v5701
    %v5705 = vadd.f32 %v5690, %v5700
    %s5706 = sld [smem:[#allocation6 + $0x209]]
    %v5707 = vstv %s5706
    %v5708 = vmul.f32 %v2803, %v5707
    %v5709 = vmul.f32 %v2805, %v5707
    %v5710 = vadd.f32 %v5704, %v5708
    %v5711 = vadd.f32 %v5705, %v5709
    %s5712 = sld [smem:[#allocation6 + $0x20a]]
    %v5713 = vstv %s5712
    %v5714 = vmul.f32 %v2803, %v5713
    %v5715 = vmul.f32 %v2805, %v5713
    %5718 = vrot.lane.b32.xlu0 %v5714, 127
    %v5719 = vpop.permute.xlu0 %5718
    %5720 = vrot.lane.b32.xlu0 %v5715, 127
    %v5721 = vpop.permute.xlu0 %5720
    %v5722 = vsel %vm332, %v5719, %v5721
    %v5725 = vadd.f32 %v5710, %v5722
    %v5726 = vadd.f32 %v5711, %v5721
    %s5727 = sld [smem:[#allocation6 + $0x20b]]
    %v5728 = vstv %s5727
    %v5729 = vmul.f32 %v2803, %v5728
    %v5730 = vmul.f32 %v2805, %v5728
    %5733 = vrot.lane.b32.xlu0 %v5729, 126
    %v5734 = vpop.permute.xlu0 %5733
    %5735 = vrot.lane.b32.xlu0 %v5730, 126
    %v5736 = vpop.permute.xlu0 %5735
    %v5737 = vsel %vm383, %v5734, %v5736
    %v5740 = vadd.f32 %v5725, %v5737
    %v5741 = vadd.f32 %v5726, %v5736
    %s5742 = sld [smem:[#allocation6 + $0x20c]]
    %v5743 = vstv %s5742
    %v5744 = vmul.f32 %v2803, %v5743
    %v5745 = vmul.f32 %v2805, %v5743
    %5748 = vrot.lane.b32.xlu0 %v5744, 112
    %v5749 = vpop.permute.xlu0 %5748
    %5750 = vrot.lane.b32.xlu0 %v5745, 112
    %v5751 = vpop.permute.xlu0 %5750
    %v5752 = vsel %vm3589, %v5749, %v5751
    %v5755 = vadd.f32 %v5740, %v5752
    %v5756 = vadd.f32 %v5741, %v5751
    %s5757 = sld [smem:[#allocation6 + $0x20d]]
    %v5758 = vstv %s5757
    %v5759 = vmul.f32 %v2803, %v5758
    %v5760 = vmul.f32 %v2805, %v5758
    %5763 = vrot.lane.b32.xlu0 %v5759, 111
    %v5764 = vpop.permute.xlu0 %5763
    %5765 = vrot.lane.b32.xlu0 %v5760, 111
    %v5766 = vpop.permute.xlu0 %5765
    %v5767 = vsel %vm3605, %v5764, %v5766
    %v5770 = vadd.f32 %v5755, %v5767
    %v5771 = vadd.f32 %v5756, %v5766
    %s5772 = sld [smem:[#allocation6 + $0x20e]]
    %v5773 = vstv %s5772
    %v5774 = vmul.f32 %v2803, %v5773
    %v5775 = vmul.f32 %v2805, %v5773
    %5778 = vrot.lane.b32.xlu0 %v5774, 110
    %v5779 = vpop.permute.xlu0 %5778
    %5780 = vrot.lane.b32.xlu0 %v5775, 110
    %v5781 = vpop.permute.xlu0 %5780
    %v5782 = vsel %vm3621, %v5779, %v5781
    %v5785 = vadd.f32 %v5770, %v5782
    %v5786 = vadd.f32 %v5771, %v5781
    %s5787 = sld [smem:[#allocation6 + $0x20f]]
    %v5788 = vstv %s5787
    %v5789 = vmul.f32 %v2803, %v5788
    %v5790 = vmul.f32 %v2805, %v5788
    %5793 = vrot.lane.b32.xlu0 %v5789, 96
    %v5794 = vpop.permute.xlu0 %5793
    %5795 = vrot.lane.b32.xlu0 %v5790, 96
    %v5796 = vpop.permute.xlu0 %5795
    %v5797 = vsel %vm536, %v5794, %v5796
    %v5800 = vadd.f32 %v5785, %v5797
    %v5801 = vadd.f32 %v5786, %v5796
    %s5802 = sld [smem:[#allocation6 + $0x210]]
    %v5803 = vstv %s5802
    %v5804 = vmul.f32 %v2803, %v5803
    %v5805 = vmul.f32 %v2805, %v5803
    %5808 = vrot.lane.b32.xlu0 %v5804, 95
    %v5809 = vpop.permute.xlu0 %5808
    %5810 = vrot.lane.b32.xlu0 %v5805, 95
    %v5811 = vpop.permute.xlu0 %5810
    %v5812 = vsel %vm3652, %v5809, %v5811
    %v5815 = vadd.f32 %v5800, %v5812
    %v5816 = vadd.f32 %v5801, %v5811
    %s5817 = sld [smem:[#allocation6 + $0x211]]
    %v5818 = vstv %s5817
    %v5819 = vmul.f32 %v2803, %v5818
    %v5820 = vmul.f32 %v2805, %v5818
    %5823 = vrot.lane.b32.xlu0 %v5819, 94
    %v5824 = vpop.permute.xlu0 %5823
    %5825 = vrot.lane.b32.xlu0 %v5820, 94
    %v5826 = vpop.permute.xlu0 %5825
    %v5827 = vsel %vm3668, %v5824, %v5826
    %v5830 = vadd.f32 %v5815, %v5827
    %v5831 = vadd.f32 %v5816, %v5826
    %s5832 = sld [smem:[#allocation6 + $0x212]]
    %v5833 = vstv %s5832
    %v5834 = vmul.f32 %v3172, %v5833
    %v5835 = vmul.f32 %v3174, %v5833
    %v5836 = vadd.f32 %v5830, %v5834
    %v5837 = vadd.f32 %v5831, %v5835
    %s5838 = sld [smem:[#allocation6 + $0x213]]
    %v5839 = vstv %s5838
    %v5840 = vmul.f32 %v3172, %v5839
    %v5841 = vmul.f32 %v3174, %v5839
    %5844 = vrot.lane.b32.xlu0 %v5840, 127
    %v5845 = vpop.permute.xlu0 %5844
    %5846 = vrot.lane.b32.xlu0 %v5841, 127
    %v5847 = vpop.permute.xlu0 %5846
    %v5848 = vsel %vm332, %v5845, %v5847
    %v5851 = vadd.f32 %v5836, %v5848
    %v5852 = vadd.f32 %v5837, %v5847
    %s5853 = sld [smem:[#allocation6 + $0x214]]
    %v5854 = vstv %s5853
    %v5855 = vmul.f32 %v3172, %v5854
    %v5856 = vmul.f32 %v3174, %v5854
    %5859 = vrot.lane.b32.xlu0 %v5855, 126
    %v5860 = vpop.permute.xlu0 %5859
    %5861 = vrot.lane.b32.xlu0 %v5856, 126
    %v5862 = vpop.permute.xlu0 %5861
    %v5863 = vsel %vm383, %v5860, %v5862
    %v5866 = vadd.f32 %v5851, %v5863
    %v5867 = vadd.f32 %v5852, %v5862
    %s5868 = sld [smem:[#allocation6 + $0x215]]
    %v5869 = vstv %s5868
    %v5870 = vmul.f32 %v3172, %v5869
    %v5871 = vmul.f32 %v3174, %v5869
    %5874 = vrot.lane.b32.xlu0 %v5870, 112
    %v5875 = vpop.permute.xlu0 %5874
    %5876 = vrot.lane.b32.xlu0 %v5871, 112
    %v5877 = vpop.permute.xlu0 %5876
    %v5878 = vsel %vm3589, %v5875, %v5877
    %v5881 = vadd.f32 %v5866, %v5878
    %v5882 = vadd.f32 %v5867, %v5877
    %s5883 = sld [smem:[#allocation6 + $0x216]]
    %v5884 = vstv %s5883
    %v5885 = vmul.f32 %v3172, %v5884
    %v5886 = vmul.f32 %v3174, %v5884
    %5889 = vrot.lane.b32.xlu0 %v5885, 111
    %v5890 = vpop.permute.xlu0 %5889
    %5891 = vrot.lane.b32.xlu0 %v5886, 111
    %v5892 = vpop.permute.xlu0 %5891
    %v5893 = vsel %vm3605, %v5890, %v5892
    %v5896 = vadd.f32 %v5881, %v5893
    %v5897 = vadd.f32 %v5882, %v5892
    %s5898 = sld [smem:[#allocation6 + $0x217]]
    %v5899 = vstv %s5898
    %v5900 = vmul.f32 %v3172, %v5899
    %v5901 = vmul.f32 %v3174, %v5899
    %5904 = vrot.lane.b32.xlu0 %v5900, 110
    %v5905 = vpop.permute.xlu0 %5904
    %5906 = vrot.lane.b32.xlu0 %v5901, 110
    %v5907 = vpop.permute.xlu0 %5906
    %v5908 = vsel %vm3621, %v5905, %v5907
    %v5911 = vadd.f32 %v5896, %v5908
    %v5912 = vadd.f32 %v5897, %v5907
    %s5913 = sld [smem:[#allocation6 + $0x218]]
    %v5914 = vstv %s5913
    %v5915 = vmul.f32 %v3172, %v5914
    %v5916 = vmul.f32 %v3174, %v5914
    %5919 = vrot.lane.b32.xlu0 %v5915, 96
    %v5920 = vpop.permute.xlu0 %5919
    %5921 = vrot.lane.b32.xlu0 %v5916, 96
    %v5922 = vpop.permute.xlu0 %5921
    %v5923 = vsel %vm536, %v5920, %v5922
    %v5926 = vadd.f32 %v5911, %v5923
    %v5927 = vadd.f32 %v5912, %v5922
    %s5928 = sld [smem:[#allocation6 + $0x219]]
    %v5929 = vstv %s5928
    %v5930 = vmul.f32 %v3172, %v5929
    %v5931 = vmul.f32 %v3174, %v5929
    %5934 = vrot.lane.b32.xlu0 %v5930, 95
    %v5935 = vpop.permute.xlu0 %5934
    %5936 = vrot.lane.b32.xlu0 %v5931, 95
    %v5937 = vpop.permute.xlu0 %5936
    %v5938 = vsel %vm3652, %v5935, %v5937
    %v5941 = vadd.f32 %v5926, %v5938
    %v5942 = vadd.f32 %v5927, %v5937
    %s5943 = sld [smem:[#allocation6 + $0x21a]]
    %v5944 = vstv %s5943
    %v5945 = vmul.f32 %v3172, %v5944
    %v5946 = vmul.f32 %v3174, %v5944
    %5949 = vrot.lane.b32.xlu0 %v5945, 94
    %v5950 = vpop.permute.xlu0 %5949
    %5951 = vrot.lane.b32.xlu0 %v5946, 94
    %v5952 = vpop.permute.xlu0 %5951
    %v5953 = vsel %vm3668, %v5950, %v5952
    %v5956 = vadd.f32 %v5941, %v5953
    %v5957 = vadd.f32 %v5942, %v5952
    %s5958 = sld [smem:[#allocation6 + $0x21b]]
    %v5959 = vstv %s5958
    %v5960 = vmul.f32 %v3541, %v5959
    %v5961 = vmul.f32 %v3543, %v5959
    %v5962 = vadd.f32 %v5956, %v5960
    %v5963 = vadd.f32 %v5957, %v5961
    %s5964 = sld [smem:[#allocation6 + $0x21c]]
    %v5965 = vstv %s5964
    %v5966 = vmul.f32 %v3541, %v5965
    %v5967 = vmul.f32 %v3543, %v5965
    %5970 = vrot.lane.b32.xlu0 %v5966, 127
    %v5971 = vpop.permute.xlu0 %5970
    %5972 = vrot.lane.b32.xlu0 %v5967, 127
    %v5973 = vpop.permute.xlu0 %5972
    %v5974 = vsel %vm332, %v5971, %v5973
    %v5977 = vadd.f32 %v5962, %v5974
    %v5978 = vadd.f32 %v5963, %v5973
    %s5979 = sld [smem:[#allocation6 + $0x21d]]
    %v5980 = vstv %s5979
    %v5981 = vmul.f32 %v3541, %v5980
    %v5982 = vmul.f32 %v3543, %v5980
    %5985 = vrot.lane.b32.xlu0 %v5981, 126
    %v5986 = vpop.permute.xlu0 %5985
    %5987 = vrot.lane.b32.xlu0 %v5982, 126
    %v5988 = vpop.permute.xlu0 %5987
    %v5989 = vsel %vm383, %v5986, %v5988
    %v5992 = vadd.f32 %v5977, %v5989
    %v5993 = vadd.f32 %v5978, %v5988
    %s5994 = sld [smem:[#allocation6 + $0x21e]]
    %v5995 = vstv %s5994
    %v5996 = vmul.f32 %v3541, %v5995
    %v5997 = vmul.f32 %v3543, %v5995
    %6000 = vrot.lane.b32.xlu0 %v5996, 112
    %v6001 = vpop.permute.xlu0 %6000
    %6002 = vrot.lane.b32.xlu0 %v5997, 112
    %v6003 = vpop.permute.xlu0 %6002
    %v6004 = vsel %vm3589, %v6001, %v6003
    %v6007 = vadd.f32 %v5992, %v6004
    %v6008 = vadd.f32 %v5993, %v6003
    %s6009 = sld [smem:[#allocation6 + $0x21f]]
    %v6010 = vstv %s6009
    %v6011 = vmul.f32 %v3541, %v6010
    %v6012 = vmul.f32 %v3543, %v6010
    %6015 = vrot.lane.b32.xlu0 %v6011, 111
    %v6016 = vpop.permute.xlu0 %6015
    %6017 = vrot.lane.b32.xlu0 %v6012, 111
    %v6018 = vpop.permute.xlu0 %6017
    %v6019 = vsel %vm3605, %v6016, %v6018
    %v6022 = vadd.f32 %v6007, %v6019
    %v6023 = vadd.f32 %v6008, %v6018
    %s6024 = sld [smem:[#allocation6 + $0x220]]
    %v6025 = vstv %s6024
    %v6026 = vmul.f32 %v3541, %v6025
    %v6027 = vmul.f32 %v3543, %v6025
    %6030 = vrot.lane.b32.xlu0 %v6026, 110
    %v6031 = vpop.permute.xlu0 %6030
    %6032 = vrot.lane.b32.xlu0 %v6027, 110
    %v6033 = vpop.permute.xlu0 %6032
    %v6034 = vsel %vm3621, %v6031, %v6033
    %v6037 = vadd.f32 %v6022, %v6034
    %v6038 = vadd.f32 %v6023, %v6033
    %s6039 = sld [smem:[#allocation6 + $0x221]]
    %v6040 = vstv %s6039
    %v6041 = vmul.f32 %v3541, %v6040
    %v6042 = vmul.f32 %v3543, %v6040
    %6045 = vrot.lane.b32.xlu0 %v6041, 96
    %v6046 = vpop.permute.xlu0 %6045
    %6047 = vrot.lane.b32.xlu0 %v6042, 96
    %v6048 = vpop.permute.xlu0 %6047
    %v6049 = vsel %vm536, %v6046, %v6048
    %v6052 = vadd.f32 %v6037, %v6049
    %v6053 = vadd.f32 %v6038, %v6048
    %s6054 = sld [smem:[#allocation6 + $0x222]]
    %v6055 = vstv %s6054
    %v6056 = vmul.f32 %v3541, %v6055
    %v6057 = vmul.f32 %v3543, %v6055
    %6060 = vrot.lane.b32.xlu0 %v6056, 95
    %v6061 = vpop.permute.xlu0 %6060
    %6062 = vrot.lane.b32.xlu0 %v6057, 95
    %v6063 = vpop.permute.xlu0 %6062
    %v6064 = vsel %vm3652, %v6061, %v6063
    %v6067 = vadd.f32 %v6052, %v6064
    %v6068 = vadd.f32 %v6053, %v6063
    %s6069 = sld [smem:[#allocation6 + $0x223]]
    %v6070 = vstv %s6069
    %v6071 = vmul.f32 %v3541, %v6070
    %v6072 = vmul.f32 %v3543, %v6070
    %6075 = vrot.lane.b32.xlu0 %v6071, 94
    %v6076 = vpop.permute.xlu0 %6075
    %6077 = vrot.lane.b32.xlu0 %v6072, 94
    %v6078 = vpop.permute.xlu0 %6077
    %v6079 = vsel %vm3668, %v6076, %v6078
    %v6082 = vadd.f32 %v6067, %v6079
    %v6083 = vadd.f32 %v6068, %v6078
    %s6084 = sld [smem:[#allocation7 + $0x4]]
    %v6085 = vstv %s6084
    %v6086 = vadd.f32 %v6082, %v6085
    %v6087 = vadd.f32 %v6083, %v6085
    %v6088 = vmax.f32 %v6086, 0.0
    %v6089 = vmax.f32 %v6087, 0.0
    %s6090 = sld [smem:[#allocation6 + $0x280]]
    %v6091 = vstv %s6090
    %v6092 = vmul.f32 %v2434, %v6091
    %v6093 = vmul.f32 %v2436, %v6091
    %s6094 = sld [smem:[#allocation6 + $0x281]]
    %v6095 = vstv %s6094
    %v6096 = vmul.f32 %v2434, %v6095
    %v6097 = vmul.f32 %v2436, %v6095
    %6100 = vrot.lane.b32.xlu0 %v6096, 127
    %v6101 = vpop.permute.xlu0 %6100
    %6102 = vrot.lane.b32.xlu0 %v6097, 127
    %v6103 = vpop.permute.xlu0 %6102
    %v6104 = vsel %vm332, %v6101, %v6103
    %v6107 = vadd.f32 %v6092, %v6104
    %v6108 = vadd.f32 %v6093, %v6103
    %s6109 = sld [smem:[#allocation6 + $0x282]]
    %v6110 = vstv %s6109
    %v6111 = vmul.f32 %v2434, %v6110
    %v6112 = vmul.f32 %v2436, %v6110
    %6115 = vrot.lane.b32.xlu0 %v6111, 126
    %v6116 = vpop.permute.xlu0 %6115
    %6117 = vrot.lane.b32.xlu0 %v6112, 126
    %v6118 = vpop.permute.xlu0 %6117
    %v6119 = vsel %vm383, %v6116, %v6118
    %v6122 = vadd.f32 %v6107, %v6119
    %v6123 = vadd.f32 %v6108, %v6118
    %s6124 = sld [smem:[#allocation6 + $0x283]]
    %v6125 = vstv %s6124
    %v6126 = vmul.f32 %v2434, %v6125
    %v6127 = vmul.f32 %v2436, %v6125
    %6130 = vrot.lane.b32.xlu0 %v6126, 112
    %v6131 = vpop.permute.xlu0 %6130
    %6132 = vrot.lane.b32.xlu0 %v6127, 112
    %v6133 = vpop.permute.xlu0 %6132
    %v6134 = vsel %vm3589, %v6131, %v6133
    %v6137 = vadd.f32 %v6122, %v6134
    %v6138 = vadd.f32 %v6123, %v6133
    %s6139 = sld [smem:[#allocation6 + $0x284]]
    %v6140 = vstv %s6139
    %v6141 = vmul.f32 %v2434, %v6140
    %v6142 = vmul.f32 %v2436, %v6140
    %6145 = vrot.lane.b32.xlu0 %v6141, 111
    %v6146 = vpop.permute.xlu0 %6145
    %6147 = vrot.lane.b32.xlu0 %v6142, 111
    %v6148 = vpop.permute.xlu0 %6147
    %v6149 = vsel %vm3605, %v6146, %v6148
    %v6152 = vadd.f32 %v6137, %v6149
    %v6153 = vadd.f32 %v6138, %v6148
    %s6154 = sld [smem:[#allocation6 + $0x285]]
    %v6155 = vstv %s6154
    %v6156 = vmul.f32 %v2434, %v6155
    %v6157 = vmul.f32 %v2436, %v6155
    %6160 = vrot.lane.b32.xlu0 %v6156, 110
    %v6161 = vpop.permute.xlu0 %6160
    %6162 = vrot.lane.b32.xlu0 %v6157, 110
    %v6163 = vpop.permute.xlu0 %6162
    %v6164 = vsel %vm3621, %v6161, %v6163
    %v6167 = vadd.f32 %v6152, %v6164
    %v6168 = vadd.f32 %v6153, %v6163
    %s6169 = sld [smem:[#allocation6 + $0x286]]
    %v6170 = vstv %s6169
    %v6171 = vmul.f32 %v2434, %v6170
    %v6172 = vmul.f32 %v2436, %v6170
    %6175 = vrot.lane.b32.xlu0 %v6171, 96
    %v6176 = vpop.permute.xlu0 %6175
    %6177 = vrot.lane.b32.xlu0 %v6172, 96
    %v6178 = vpop.permute.xlu0 %6177
    %v6179 = vsel %vm536, %v6176, %v6178
    %v6182 = vadd.f32 %v6167, %v6179
    %v6183 = vadd.f32 %v6168, %v6178
    %s6184 = sld [smem:[#allocation6 + $0x287]]
    %v6185 = vstv %s6184
    %v6186 = vmul.f32 %v2434, %v6185
    %v6187 = vmul.f32 %v2436, %v6185
    %6190 = vrot.lane.b32.xlu0 %v6186, 95
    %v6191 = vpop.permute.xlu0 %6190
    %6192 = vrot.lane.b32.xlu0 %v6187, 95
    %v6193 = vpop.permute.xlu0 %6192
    %v6194 = vsel %vm3652, %v6191, %v6193
    %v6197 = vadd.f32 %v6182, %v6194
    %v6198 = vadd.f32 %v6183, %v6193
    %s6199 = sld [smem:[#allocation6 + $0x288]]
    %v6200 = vstv %s6199
    %v6201 = vmul.f32 %v2434, %v6200
    %v6202 = vmul.f32 %v2436, %v6200
    %6205 = vrot.lane.b32.xlu0 %v6201, 94
    %v6206 = vpop.permute.xlu0 %6205
    %6207 = vrot.lane.b32.xlu0 %v6202, 94
    %v6208 = vpop.permute.xlu0 %6207
    %v6209 = vsel %vm3668, %v6206, %v6208
    %v6212 = vadd.f32 %v6197, %v6209
    %v6213 = vadd.f32 %v6198, %v6208
    %s6214 = sld [smem:[#allocation6 + $0x289]]
    %v6215 = vstv %s6214
    %v6216 = vmul.f32 %v2803, %v6215
    %v6217 = vmul.f32 %v2805, %v6215
    %v6218 = vadd.f32 %v6212, %v6216
    %v6219 = vadd.f32 %v6213, %v6217
    %s6220 = sld [smem:[#allocation6 + $0x28a]]
    %v6221 = vstv %s6220
    %v6222 = vmul.f32 %v2803, %v6221
    %v6223 = vmul.f32 %v2805, %v6221
    %6226 = vrot.lane.b32.xlu0 %v6222, 127
    %v6227 = vpop.permute.xlu0 %6226
    %6228 = vrot.lane.b32.xlu0 %v6223, 127
    %v6229 = vpop.permute.xlu0 %6228
    %v6230 = vsel %vm332, %v6227, %v6229
    %v6233 = vadd.f32 %v6218, %v6230
    %v6234 = vadd.f32 %v6219, %v6229
    %s6235 = sld [smem:[#allocation6 + $0x28b]]
    %v6236 = vstv %s6235
    %v6237 = vmul.f32 %v2803, %v6236
    %v6238 = vmul.f32 %v2805, %v6236
    %6241 = vrot.lane.b32.xlu0 %v6237, 126
    %v6242 = vpop.permute.xlu0 %6241
    %6243 = vrot.lane.b32.xlu0 %v6238, 126
    %v6244 = vpop.permute.xlu0 %6243
    %v6245 = vsel %vm383, %v6242, %v6244
    %v6248 = vadd.f32 %v6233, %v6245
    %v6249 = vadd.f32 %v6234, %v6244
    %s6250 = sld [smem:[#allocation6 + $0x28c]]
    %v6251 = vstv %s6250
    %v6252 = vmul.f32 %v2803, %v6251
    %v6253 = vmul.f32 %v2805, %v6251
    %6256 = vrot.lane.b32.xlu0 %v6252, 112
    %v6257 = vpop.permute.xlu0 %6256
    %6258 = vrot.lane.b32.xlu0 %v6253, 112
    %v6259 = vpop.permute.xlu0 %6258
    %v6260 = vsel %vm3589, %v6257, %v6259
    %v6263 = vadd.f32 %v6248, %v6260
    %v6264 = vadd.f32 %v6249, %v6259
    %s6265 = sld [smem:[#allocation6 + $0x28d]]
    %v6266 = vstv %s6265
    %v6267 = vmul.f32 %v2803, %v6266
    %v6268 = vmul.f32 %v2805, %v6266
    %6271 = vrot.lane.b32.xlu0 %v6267, 111
    %v6272 = vpop.permute.xlu0 %6271
    %6273 = vrot.lane.b32.xlu0 %v6268, 111
    %v6274 = vpop.permute.xlu0 %6273
    %v6275 = vsel %vm3605, %v6272, %v6274
    %v6278 = vadd.f32 %v6263, %v6275
    %v6279 = vadd.f32 %v6264, %v6274
    %s6280 = sld [smem:[#allocation6 + $0x28e]]
    %v6281 = vstv %s6280
    %v6282 = vmul.f32 %v2803, %v6281
    %v6283 = vmul.f32 %v2805, %v6281
    %6286 = vrot.lane.b32.xlu0 %v6282, 110
    %v6287 = vpop.permute.xlu0 %6286
    %6288 = vrot.lane.b32.xlu0 %v6283, 110
    %v6289 = vpop.permute.xlu0 %6288
    %v6290 = vsel %vm3621, %v6287, %v6289
    %v6293 = vadd.f32 %v6278, %v6290
    %v6294 = vadd.f32 %v6279, %v6289
    %s6295 = sld [smem:[#allocation6 + $0x28f]]
    %v6296 = vstv %s6295
    %v6297 = vmul.f32 %v2803, %v6296
    %v6298 = vmul.f32 %v2805, %v6296
    %6301 = vrot.lane.b32.xlu0 %v6297, 96
    %v6302 = vpop.permute.xlu0 %6301
    %6303 = vrot.lane.b32.xlu0 %v6298, 96
    %v6304 = vpop.permute.xlu0 %6303
    %v6305 = vsel %vm536, %v6302, %v6304
    %v6308 = vadd.f32 %v6293, %v6305
    %v6309 = vadd.f32 %v6294, %v6304
    %s6310 = sld [smem:[#allocation6 + $0x290]]
    %v6311 = vstv %s6310
    %v6312 = vmul.f32 %v2803, %v6311
    %v6313 = vmul.f32 %v2805, %v6311
    %6316 = vrot.lane.b32.xlu0 %v6312, 95
    %v6317 = vpop.permute.xlu0 %6316
    %6318 = vrot.lane.b32.xlu0 %v6313, 95
    %v6319 = vpop.permute.xlu0 %6318
    %v6320 = vsel %vm3652, %v6317, %v6319
    %v6323 = vadd.f32 %v6308, %v6320
    %v6324 = vadd.f32 %v6309, %v6319
    %s6325 = sld [smem:[#allocation6 + $0x291]]
    %v6326 = vstv %s6325
    %v6327 = vmul.f32 %v2803, %v6326
    %v6328 = vmul.f32 %v2805, %v6326
    %6331 = vrot.lane.b32.xlu0 %v6327, 94
    %v6332 = vpop.permute.xlu0 %6331
    %6333 = vrot.lane.b32.xlu0 %v6328, 94
    %v6334 = vpop.permute.xlu0 %6333
    %v6335 = vsel %vm3668, %v6332, %v6334
    %v6338 = vadd.f32 %v6323, %v6335
    %v6339 = vadd.f32 %v6324, %v6334
    %s6340 = sld [smem:[#allocation6 + $0x292]]
    %v6341 = vstv %s6340
    %v6342 = vmul.f32 %v3172, %v6341
    %v6343 = vmul.f32 %v3174, %v6341
    %v6344 = vadd.f32 %v6338, %v6342
    %v6345 = vadd.f32 %v6339, %v6343
    %s6346 = sld [smem:[#allocation6 + $0x293]]
    %v6347 = vstv %s6346
    %v6348 = vmul.f32 %v3172, %v6347
    %v6349 = vmul.f32 %v3174, %v6347
    %6352 = vrot.lane.b32.xlu0 %v6348, 127
    %v6353 = vpop.permute.xlu0 %6352
    %6354 = vrot.lane.b32.xlu0 %v6349, 127
    %v6355 = vpop.permute.xlu0 %6354
    %v6356 = vsel %vm332, %v6353, %v6355
    %v6359 = vadd.f32 %v6344, %v6356
    %v6360 = vadd.f32 %v6345, %v6355
    %s6361 = sld [smem:[#allocation6 + $0x294]]
    %v6362 = vstv %s6361
    %v6363 = vmul.f32 %v3172, %v6362
    %v6364 = vmul.f32 %v3174, %v6362
    %6367 = vrot.lane.b32.xlu0 %v6363, 126
    %v6368 = vpop.permute.xlu0 %6367
    %6369 = vrot.lane.b32.xlu0 %v6364, 126
    %v6370 = vpop.permute.xlu0 %6369
    %v6371 = vsel %vm383, %v6368, %v6370
    %v6374 = vadd.f32 %v6359, %v6371
    %v6375 = vadd.f32 %v6360, %v6370
    %s6376 = sld [smem:[#allocation6 + $0x295]]
    %v6377 = vstv %s6376
    %v6378 = vmul.f32 %v3172, %v6377
    %v6379 = vmul.f32 %v3174, %v6377
    %6382 = vrot.lane.b32.xlu0 %v6378, 112
    %v6383 = vpop.permute.xlu0 %6382
    %6384 = vrot.lane.b32.xlu0 %v6379, 112
    %v6385 = vpop.permute.xlu0 %6384
    %v6386 = vsel %vm3589, %v6383, %v6385
    %v6389 = vadd.f32 %v6374, %v6386
    %v6390 = vadd.f32 %v6375, %v6385
    %s6391 = sld [smem:[#allocation6 + $0x296]]
    %v6392 = vstv %s6391
    %v6393 = vmul.f32 %v3172, %v6392
    %v6394 = vmul.f32 %v3174, %v6392
    %6397 = vrot.lane.b32.xlu0 %v6393, 111
    %v6398 = vpop.permute.xlu0 %6397
    %6399 = vrot.lane.b32.xlu0 %v6394, 111
    %v6400 = vpop.permute.xlu0 %6399
    %v6401 = vsel %vm3605, %v6398, %v6400
    %v6404 = vadd.f32 %v6389, %v6401
    %v6405 = vadd.f32 %v6390, %v6400
    %s6406 = sld [smem:[#allocation6 + $0x297]]
    %v6407 = vstv %s6406
    %v6408 = vmul.f32 %v3172, %v6407
    %v6409 = vmul.f32 %v3174, %v6407
    %6412 = vrot.lane.b32.xlu0 %v6408, 110
    %v6413 = vpop.permute.xlu0 %6412
    %6414 = vrot.lane.b32.xlu0 %v6409, 110
    %v6415 = vpop.permute.xlu0 %6414
    %v6416 = vsel %vm3621, %v6413, %v6415
    %v6419 = vadd.f32 %v6404, %v6416
    %v6420 = vadd.f32 %v6405, %v6415
    %s6421 = sld [smem:[#allocation6 + $0x298]]
    %v6422 = vstv %s6421
    %v6423 = vmul.f32 %v3172, %v6422
    %v6424 = vmul.f32 %v3174, %v6422
    %6427 = vrot.lane.b32.xlu0 %v6423, 96
    %v6428 = vpop.permute.xlu0 %6427
    %6429 = vrot.lane.b32.xlu0 %v6424, 96
    %v6430 = vpop.permute.xlu0 %6429
    %v6431 = vsel %vm536, %v6428, %v6430
    %v6434 = vadd.f32 %v6419, %v6431
    %v6435 = vadd.f32 %v6420, %v6430
    %s6436 = sld [smem:[#allocation6 + $0x299]]
    %v6437 = vstv %s6436
    %v6438 = vmul.f32 %v3172, %v6437
    %v6439 = vmul.f32 %v3174, %v6437
    %6442 = vrot.lane.b32.xlu0 %v6438, 95
    %v6443 = vpop.permute.xlu0 %6442
    %6444 = vrot.lane.b32.xlu0 %v6439, 95
    %v6445 = vpop.permute.xlu0 %6444
    %v6446 = vsel %vm3652, %v6443, %v6445
    %v6449 = vadd.f32 %v6434, %v6446
    %v6450 = vadd.f32 %v6435, %v6445
    %s6451 = sld [smem:[#allocation6 + $0x29a]]
    %v6452 = vstv %s6451
    %v6453 = vmul.f32 %v3172, %v6452
    %v6454 = vmul.f32 %v3174, %v6452
    %6457 = vrot.lane.b32.xlu0 %v6453, 94
    %v6458 = vpop.permute.xlu0 %6457
    %6459 = vrot.lane.b32.xlu0 %v6454, 94
    %v6460 = vpop.permute.xlu0 %6459
    %v6461 = vsel %vm3668, %v6458, %v6460
    %v6464 = vadd.f32 %v6449, %v6461
    %v6465 = vadd.f32 %v6450, %v6460
    %s6466 = sld [smem:[#allocation6 + $0x29b]]
    %v6467 = vstv %s6466
    %v6468 = vmul.f32 %v3541, %v6467
    %v6469 = vmul.f32 %v3543, %v6467
    %v6470 = vadd.f32 %v6464, %v6468
    %v6471 = vadd.f32 %v6465, %v6469
    %s6472 = sld [smem:[#allocation6 + $0x29c]]
    %v6473 = vstv %s6472
    %v6474 = vmul.f32 %v3541, %v6473
    %v6475 = vmul.f32 %v3543, %v6473
    %6478 = vrot.lane.b32.xlu0 %v6474, 127
    %v6479 = vpop.permute.xlu0 %6478
    %6480 = vrot.lane.b32.xlu0 %v6475, 127
    %v6481 = vpop.permute.xlu0 %6480
    %v6482 = vsel %vm332, %v6479, %v6481
    %v6485 = vadd.f32 %v6470, %v6482
    %v6486 = vadd.f32 %v6471, %v6481
    %s6487 = sld [smem:[#allocation6 + $0x29d]]
    %v6488 = vstv %s6487
    %v6489 = vmul.f32 %v3541, %v6488
    %v6490 = vmul.f32 %v3543, %v6488
    %6493 = vrot.lane.b32.xlu0 %v6489, 126
    %v6494 = vpop.permute.xlu0 %6493
    %6495 = vrot.lane.b32.xlu0 %v6490, 126
    %v6496 = vpop.permute.xlu0 %6495
    %v6497 = vsel %vm383, %v6494, %v6496
    %v6500 = vadd.f32 %v6485, %v6497
    %v6501 = vadd.f32 %v6486, %v6496
    %s6502 = sld [smem:[#allocation6 + $0x29e]]
    %v6503 = vstv %s6502
    %v6504 = vmul.f32 %v3541, %v6503
    %v6505 = vmul.f32 %v3543, %v6503
    %6508 = vrot.lane.b32.xlu0 %v6504, 112
    %v6509 = vpop.permute.xlu0 %6508
    %6510 = vrot.lane.b32.xlu0 %v6505, 112
    %v6511 = vpop.permute.xlu0 %6510
    %v6512 = vsel %vm3589, %v6509, %v6511
    %v6515 = vadd.f32 %v6500, %v6512
    %v6516 = vadd.f32 %v6501, %v6511
    %s6517 = sld [smem:[#allocation6 + $0x29f]]
    %v6518 = vstv %s6517
    %v6519 = vmul.f32 %v3541, %v6518
    %v6520 = vmul.f32 %v3543, %v6518
    %6523 = vrot.lane.b32.xlu0 %v6519, 111
    %v6524 = vpop.permute.xlu0 %6523
    %6525 = vrot.lane.b32.xlu0 %v6520, 111
    %v6526 = vpop.permute.xlu0 %6525
    %v6527 = vsel %vm3605, %v6524, %v6526
    %v6530 = vadd.f32 %v6515, %v6527
    %v6531 = vadd.f32 %v6516, %v6526
    %s6532 = sld [smem:[#allocation6 + $0x2a0]]
    %v6533 = vstv %s6532
    %v6534 = vmul.f32 %v3541, %v6533
    %v6535 = vmul.f32 %v3543, %v6533
    %6538 = vrot.lane.b32.xlu0 %v6534, 110
    %v6539 = vpop.permute.xlu0 %6538
    %6540 = vrot.lane.b32.xlu0 %v6535, 110
    %v6541 = vpop.permute.xlu0 %6540
    %v6542 = vsel %vm3621, %v6539, %v6541
    %v6545 = vadd.f32 %v6530, %v6542
    %v6546 = vadd.f32 %v6531, %v6541
    %s6547 = sld [smem:[#allocation6 + $0x2a1]]
    %v6548 = vstv %s6547
    %v6549 = vmul.f32 %v3541, %v6548
    %v6550 = vmul.f32 %v3543, %v6548
    %6553 = vrot.lane.b32.xlu0 %v6549, 96
    %v6554 = vpop.permute.xlu0 %6553
    %6555 = vrot.lane.b32.xlu0 %v6550, 96
    %v6556 = vpop.permute.xlu0 %6555
    %v6557 = vsel %vm536, %v6554, %v6556
    %v6560 = vadd.f32 %v6545, %v6557
    %v6561 = vadd.f32 %v6546, %v6556
    %s6562 = sld [smem:[#allocation6 + $0x2a2]]
    %v6563 = vstv %s6562
    %v6564 = vmul.f32 %v3541, %v6563
    %v6565 = vmul.f32 %v3543, %v6563
    %6568 = vrot.lane.b32.xlu0 %v6564, 95
    %v6569 = vpop.permute.xlu0 %6568
    %6570 = vrot.lane.b32.xlu0 %v6565, 95
    %v6571 = vpop.permute.xlu0 %6570
    %v6572 = vsel %vm3652, %v6569, %v6571
    %v6575 = vadd.f32 %v6560, %v6572
    %v6576 = vadd.f32 %v6561, %v6571
    %s6577 = sld [smem:[#allocation6 + $0x2a3]]
    %v6578 = vstv %s6577
    %v6579 = vmul.f32 %v3541, %v6578
    %v6580 = vmul.f32 %v3543, %v6578
    %6583 = vrot.lane.b32.xlu0 %v6579, 94
    %v6584 = vpop.permute.xlu0 %6583
    %6585 = vrot.lane.b32.xlu0 %v6580, 94
    %v6586 = vpop.permute.xlu0 %6585
    %v6587 = vsel %vm3668, %v6584, %v6586
    %v6590 = vadd.f32 %v6575, %v6587
    %v6591 = vadd.f32 %v6576, %v6586
    %s6592 = sld [smem:[#allocation7 + $0x5]]
    %v6593 = vstv %s6592
    %v6594 = vadd.f32 %v6590, %v6593
    %v6595 = vadd.f32 %v6591, %v6593
    %v6596 = vmax.f32 %v6594, 0.0
    %v6597 = vmax.f32 %v6595, 0.0
    %s6598 = sld [smem:[#allocation6 + $0x300]]
    %v6599 = vstv %s6598
    %v6600 = vmul.f32 %v2434, %v6599
    %v6601 = vmul.f32 %v2436, %v6599
    %s6602 = sld [smem:[#allocation6 + $0x301]]
    %v6603 = vstv %s6602
    %v6604 = vmul.f32 %v2434, %v6603
    %v6605 = vmul.f32 %v2436, %v6603
    %6608 = vrot.lane.b32.xlu0 %v6604, 127
    %v6609 = vpop.permute.xlu0 %6608
    %6610 = vrot.lane.b32.xlu0 %v6605, 127
    %v6611 = vpop.permute.xlu0 %6610
    %v6612 = vsel %vm332, %v6609, %v6611
    %v6615 = vadd.f32 %v6600, %v6612
    %v6616 = vadd.f32 %v6601, %v6611
    %s6617 = sld [smem:[#allocation6 + $0x302]]
    %v6618 = vstv %s6617
    %v6619 = vmul.f32 %v2434, %v6618
    %v6620 = vmul.f32 %v2436, %v6618
    %6623 = vrot.lane.b32.xlu0 %v6619, 126
    %v6624 = vpop.permute.xlu0 %6623
    %6625 = vrot.lane.b32.xlu0 %v6620, 126
    %v6626 = vpop.permute.xlu0 %6625
    %v6627 = vsel %vm383, %v6624, %v6626
    %v6630 = vadd.f32 %v6615, %v6627
    %v6631 = vadd.f32 %v6616, %v6626
    %s6632 = sld [smem:[#allocation6 + $0x303]]
    %v6633 = vstv %s6632
    %v6634 = vmul.f32 %v2434, %v6633
    %v6635 = vmul.f32 %v2436, %v6633
    %6638 = vrot.lane.b32.xlu0 %v6634, 112
    %v6639 = vpop.permute.xlu0 %6638
    %6640 = vrot.lane.b32.xlu0 %v6635, 112
    %v6641 = vpop.permute.xlu0 %6640
    %v6642 = vsel %vm3589, %v6639, %v6641
    %v6645 = vadd.f32 %v6630, %v6642
    %v6646 = vadd.f32 %v6631, %v6641
    %s6647 = sld [smem:[#allocation6 + $0x304]]
    %v6648 = vstv %s6647
    %v6649 = vmul.f32 %v2434, %v6648
    %v6650 = vmul.f32 %v2436, %v6648
    %6653 = vrot.lane.b32.xlu0 %v6649, 111
    %v6654 = vpop.permute.xlu0 %6653
    %6655 = vrot.lane.b32.xlu0 %v6650, 111
    %v6656 = vpop.permute.xlu0 %6655
    %v6657 = vsel %vm3605, %v6654, %v6656
    %v6660 = vadd.f32 %v6645, %v6657
    %v6661 = vadd.f32 %v6646, %v6656
    %s6662 = sld [smem:[#allocation6 + $0x305]]
    %v6663 = vstv %s6662
    %v6664 = vmul.f32 %v2434, %v6663
    %v6665 = vmul.f32 %v2436, %v6663
    %6668 = vrot.lane.b32.xlu0 %v6664, 110
    %v6669 = vpop.permute.xlu0 %6668
    %6670 = vrot.lane.b32.xlu0 %v6665, 110
    %v6671 = vpop.permute.xlu0 %6670
    %v6672 = vsel %vm3621, %v6669, %v6671
    %v6675 = vadd.f32 %v6660, %v6672
    %v6676 = vadd.f32 %v6661, %v6671
    %s6677 = sld [smem:[#allocation6 + $0x306]]
    %v6678 = vstv %s6677
    %v6679 = vmul.f32 %v2434, %v6678
    %v6680 = vmul.f32 %v2436, %v6678
    %6683 = vrot.lane.b32.xlu0 %v6679, 96
    %v6684 = vpop.permute.xlu0 %6683
    %6685 = vrot.lane.b32.xlu0 %v6680, 96
    %v6686 = vpop.permute.xlu0 %6685
    %v6687 = vsel %vm536, %v6684, %v6686
    %v6690 = vadd.f32 %v6675, %v6687
    %v6691 = vadd.f32 %v6676, %v6686
    %s6692 = sld [smem:[#allocation6 + $0x307]]
    %v6693 = vstv %s6692
    %v6694 = vmul.f32 %v2434, %v6693
    %v6695 = vmul.f32 %v2436, %v6693
    %6698 = vrot.lane.b32.xlu0 %v6694, 95
    %v6699 = vpop.permute.xlu0 %6698
    %6700 = vrot.lane.b32.xlu0 %v6695, 95
    %v6701 = vpop.permute.xlu0 %6700
    %v6702 = vsel %vm3652, %v6699, %v6701
    %v6705 = vadd.f32 %v6690, %v6702
    %v6706 = vadd.f32 %v6691, %v6701
    %s6707 = sld [smem:[#allocation6 + $0x308]]
    %v6708 = vstv %s6707
    %v6709 = vmul.f32 %v2434, %v6708
    %v6710 = vmul.f32 %v2436, %v6708
    %6713 = vrot.lane.b32.xlu0 %v6709, 94
    %v6714 = vpop.permute.xlu0 %6713
    %6715 = vrot.lane.b32.xlu0 %v6710, 94
    %v6716 = vpop.permute.xlu0 %6715
    %v6717 = vsel %vm3668, %v6714, %v6716
    %v6720 = vadd.f32 %v6705, %v6717
    %v6721 = vadd.f32 %v6706, %v6716
    %s6722 = sld [smem:[#allocation6 + $0x309]]
    %v6723 = vstv %s6722
    %v6724 = vmul.f32 %v2803, %v6723
    %v6725 = vmul.f32 %v2805, %v6723
    %v6726 = vadd.f32 %v6720, %v6724
    %v6727 = vadd.f32 %v6721, %v6725
    %s6728 = sld [smem:[#allocation6 + $0x30a]]
    %v6729 = vstv %s6728
    %v6730 = vmul.f32 %v2803, %v6729
    %v6731 = vmul.f32 %v2805, %v6729
    %6734 = vrot.lane.b32.xlu0 %v6730, 127
    %v6735 = vpop.permute.xlu0 %6734
    %6736 = vrot.lane.b32.xlu0 %v6731, 127
    %v6737 = vpop.permute.xlu0 %6736
    %v6738 = vsel %vm332, %v6735, %v6737
    %v6741 = vadd.f32 %v6726, %v6738
    %v6742 = vadd.f32 %v6727, %v6737
    %s6743 = sld [smem:[#allocation6 + $0x30b]]
    %v6744 = vstv %s6743
    %v6745 = vmul.f32 %v2803, %v6744
    %v6746 = vmul.f32 %v2805, %v6744
    %6749 = vrot.lane.b32.xlu0 %v6745, 126
    %v6750 = vpop.permute.xlu0 %6749
    %6751 = vrot.lane.b32.xlu0 %v6746, 126
    %v6752 = vpop.permute.xlu0 %6751
    %v6753 = vsel %vm383, %v6750, %v6752
    %v6756 = vadd.f32 %v6741, %v6753
    %v6757 = vadd.f32 %v6742, %v6752
    %s6758 = sld [smem:[#allocation6 + $0x30c]]
    %v6759 = vstv %s6758
    %v6760 = vmul.f32 %v2803, %v6759
    %v6761 = vmul.f32 %v2805, %v6759
    %6764 = vrot.lane.b32.xlu0 %v6760, 112
    %v6765 = vpop.permute.xlu0 %6764
    %6766 = vrot.lane.b32.xlu0 %v6761, 112
    %v6767 = vpop.permute.xlu0 %6766
    %v6768 = vsel %vm3589, %v6765, %v6767
    %v6771 = vadd.f32 %v6756, %v6768
    %v6772 = vadd.f32 %v6757, %v6767
    %s6773 = sld [smem:[#allocation6 + $0x30d]]
    %v6774 = vstv %s6773
    %v6775 = vmul.f32 %v2803, %v6774
    %v6776 = vmul.f32 %v2805, %v6774
    %6779 = vrot.lane.b32.xlu0 %v6775, 111
    %v6780 = vpop.permute.xlu0 %6779
    %6781 = vrot.lane.b32.xlu0 %v6776, 111
    %v6782 = vpop.permute.xlu0 %6781
    %v6783 = vsel %vm3605, %v6780, %v6782
    %v6786 = vadd.f32 %v6771, %v6783
    %v6787 = vadd.f32 %v6772, %v6782
    %s6788 = sld [smem:[#allocation6 + $0x30e]]
    %v6789 = vstv %s6788
    %v6790 = vmul.f32 %v2803, %v6789
    %v6791 = vmul.f32 %v2805, %v6789
    %6794 = vrot.lane.b32.xlu0 %v6790, 110
    %v6795 = vpop.permute.xlu0 %6794
    %6796 = vrot.lane.b32.xlu0 %v6791, 110
    %v6797 = vpop.permute.xlu0 %6796
    %v6798 = vsel %vm3621, %v6795, %v6797
    %v6801 = vadd.f32 %v6786, %v6798
    %v6802 = vadd.f32 %v6787, %v6797
    %s6803 = sld [smem:[#allocation6 + $0x30f]]
    %v6804 = vstv %s6803
    %v6805 = vmul.f32 %v2803, %v6804
    %v6806 = vmul.f32 %v2805, %v6804
    %6809 = vrot.lane.b32.xlu0 %v6805, 96
    %v6810 = vpop.permute.xlu0 %6809
    %6811 = vrot.lane.b32.xlu0 %v6806, 96
    %v6812 = vpop.permute.xlu0 %6811
    %v6813 = vsel %vm536, %v6810, %v6812
    %v6816 = vadd.f32 %v6801, %v6813
    %v6817 = vadd.f32 %v6802, %v6812
    %s6818 = sld [smem:[#allocation6 + $0x310]]
    %v6819 = vstv %s6818
    %v6820 = vmul.f32 %v2803, %v6819
    %v6821 = vmul.f32 %v2805, %v6819
    %6824 = vrot.lane.b32.xlu0 %v6820, 95
    %v6825 = vpop.permute.xlu0 %6824
    %6826 = vrot.lane.b32.xlu0 %v6821, 95
    %v6827 = vpop.permute.xlu0 %6826
    %v6828 = vsel %vm3652, %v6825, %v6827
    %v6831 = vadd.f32 %v6816, %v6828
    %v6832 = vadd.f32 %v6817, %v6827
    %s6833 = sld [smem:[#allocation6 + $0x311]]
    %v6834 = vstv %s6833
    %v6835 = vmul.f32 %v2803, %v6834
    %v6836 = vmul.f32 %v2805, %v6834
    %6839 = vrot.lane.b32.xlu0 %v6835, 94
    %v6840 = vpop.permute.xlu0 %6839
    %6841 = vrot.lane.b32.xlu0 %v6836, 94
    %v6842 = vpop.permute.xlu0 %6841
    %v6843 = vsel %vm3668, %v6840, %v6842
    %v6846 = vadd.f32 %v6831, %v6843
    %v6847 = vadd.f32 %v6832, %v6842
    %s6848 = sld [smem:[#allocation6 + $0x312]]
    %v6849 = vstv %s6848
    %v6850 = vmul.f32 %v3172, %v6849
    %v6851 = vmul.f32 %v3174, %v6849
    %v6852 = vadd.f32 %v6846, %v6850
    %v6853 = vadd.f32 %v6847, %v6851
    %s6854 = sld [smem:[#allocation6 + $0x313]]
    %v6855 = vstv %s6854
    %v6856 = vmul.f32 %v3172, %v6855
    %v6857 = vmul.f32 %v3174, %v6855
    %6860 = vrot.lane.b32.xlu0 %v6856, 127
    %v6861 = vpop.permute.xlu0 %6860
    %6862 = vrot.lane.b32.xlu0 %v6857, 127
    %v6863 = vpop.permute.xlu0 %6862
    %v6864 = vsel %vm332, %v6861, %v6863
    %v6867 = vadd.f32 %v6852, %v6864
    %v6868 = vadd.f32 %v6853, %v6863
    %s6869 = sld [smem:[#allocation6 + $0x314]]
    %v6870 = vstv %s6869
    %v6871 = vmul.f32 %v3172, %v6870
    %v6872 = vmul.f32 %v3174, %v6870
    %6875 = vrot.lane.b32.xlu0 %v6871, 126
    %v6876 = vpop.permute.xlu0 %6875
    %6877 = vrot.lane.b32.xlu0 %v6872, 126
    %v6878 = vpop.permute.xlu0 %6877
    %v6879 = vsel %vm383, %v6876, %v6878
    %v6882 = vadd.f32 %v6867, %v6879
    %v6883 = vadd.f32 %v6868, %v6878
    %s6884 = sld [smem:[#allocation6 + $0x315]]
    %v6885 = vstv %s6884
    %v6886 = vmul.f32 %v3172, %v6885
    %v6887 = vmul.f32 %v3174, %v6885
    %6890 = vrot.lane.b32.xlu0 %v6886, 112
    %v6891 = vpop.permute.xlu0 %6890
    %6892 = vrot.lane.b32.xlu0 %v6887, 112
    %v6893 = vpop.permute.xlu0 %6892
    %v6894 = vsel %vm3589, %v6891, %v6893
    %v6897 = vadd.f32 %v6882, %v6894
    %v6898 = vadd.f32 %v6883, %v6893
    %s6899 = sld [smem:[#allocation6 + $0x316]]
    %v6900 = vstv %s6899
    %v6901 = vmul.f32 %v3172, %v6900
    %v6902 = vmul.f32 %v3174, %v6900
    %6905 = vrot.lane.b32.xlu0 %v6901, 111
    %v6906 = vpop.permute.xlu0 %6905
    %6907 = vrot.lane.b32.xlu0 %v6902, 111
    %v6908 = vpop.permute.xlu0 %6907
    %v6909 = vsel %vm3605, %v6906, %v6908
    %v6912 = vadd.f32 %v6897, %v6909
    %v6913 = vadd.f32 %v6898, %v6908
    %s6914 = sld [smem:[#allocation6 + $0x317]]
    %v6915 = vstv %s6914
    %v6916 = vmul.f32 %v3172, %v6915
    %v6917 = vmul.f32 %v3174, %v6915
    %6920 = vrot.lane.b32.xlu0 %v6916, 110
    %v6921 = vpop.permute.xlu0 %6920
    %6922 = vrot.lane.b32.xlu0 %v6917, 110
    %v6923 = vpop.permute.xlu0 %6922
    %v6924 = vsel %vm3621, %v6921, %v6923
    %v6927 = vadd.f32 %v6912, %v6924
    %v6928 = vadd.f32 %v6913, %v6923
    %s6929 = sld [smem:[#allocation6 + $0x318]]
    %v6930 = vstv %s6929
    %v6931 = vmul.f32 %v3172, %v6930
    %v6932 = vmul.f32 %v3174, %v6930
    %6935 = vrot.lane.b32.xlu0 %v6931, 96
    %v6936 = vpop.permute.xlu0 %6935
    %6937 = vrot.lane.b32.xlu0 %v6932, 96
    %v6938 = vpop.permute.xlu0 %6937
    %v6939 = vsel %vm536, %v6936, %v6938
    %v6942 = vadd.f32 %v6927, %v6939
    %v6943 = vadd.f32 %v6928, %v6938
    %s6944 = sld [smem:[#allocation6 + $0x319]]
    %v6945 = vstv %s6944
    %v6946 = vmul.f32 %v3172, %v6945
    %v6947 = vmul.f32 %v3174, %v6945
    %6950 = vrot.lane.b32.xlu0 %v6946, 95
    %v6951 = vpop.permute.xlu0 %6950
    %6952 = vrot.lane.b32.xlu0 %v6947, 95
    %v6953 = vpop.permute.xlu0 %6952
    %v6954 = vsel %vm3652, %v6951, %v6953
    %v6957 = vadd.f32 %v6942, %v6954
    %v6958 = vadd.f32 %v6943, %v6953
    %s6959 = sld [smem:[#allocation6 + $0x31a]]
    %v6960 = vstv %s6959
    %v6961 = vmul.f32 %v3172, %v6960
    %v6962 = vmul.f32 %v3174, %v6960
    %6965 = vrot.lane.b32.xlu0 %v6961, 94
    %v6966 = vpop.permute.xlu0 %6965
    %6967 = vrot.lane.b32.xlu0 %v6962, 94
    %v6968 = vpop.permute.xlu0 %6967
    %v6969 = vsel %vm3668, %v6966, %v6968
    %v6972 = vadd.f32 %v6957, %v6969
    %v6973 = vadd.f32 %v6958, %v6968
    %s6974 = sld [smem:[#allocation6 + $0x31b]]
    %v6975 = vstv %s6974
    %v6976 = vmul.f32 %v3541, %v6975
    %v6977 = vmul.f32 %v3543, %v6975
    %v6978 = vadd.f32 %v6972, %v6976
    %v6979 = vadd.f32 %v6973, %v6977
    %s6980 = sld [smem:[#allocation6 + $0x31c]]
    %v6981 = vstv %s6980
    %v6982 = vmul.f32 %v3541, %v6981
    %v6983 = vmul.f32 %v3543, %v6981
    %6986 = vrot.lane.b32.xlu0 %v6982, 127
    %v6987 = vpop.permute.xlu0 %6986
    %6988 = vrot.lane.b32.xlu0 %v6983, 127
    %v6989 = vpop.permute.xlu0 %6988
    %v6990 = vsel %vm332, %v6987, %v6989
    %v6993 = vadd.f32 %v6978, %v6990
    %v6994 = vadd.f32 %v6979, %v6989
    %s6995 = sld [smem:[#allocation6 + $0x31d]]
    %v6996 = vstv %s6995
    %v6997 = vmul.f32 %v3541, %v6996
    %v6998 = vmul.f32 %v3543, %v6996
    %7001 = vrot.lane.b32.xlu0 %v6997, 126
    %v7002 = vpop.permute.xlu0 %7001
    %7003 = vrot.lane.b32.xlu0 %v6998, 126
    %v7004 = vpop.permute.xlu0 %7003
    %v7005 = vsel %vm383, %v7002, %v7004
    %v7008 = vadd.f32 %v6993, %v7005
    %v7009 = vadd.f32 %v6994, %v7004
    %s7010 = sld [smem:[#allocation6 + $0x31e]]
    %v7011 = vstv %s7010
    %v7012 = vmul.f32 %v3541, %v7011
    %v7013 = vmul.f32 %v3543, %v7011
    %7016 = vrot.lane.b32.xlu0 %v7012, 112
    %v7017 = vpop.permute.xlu0 %7016
    %7018 = vrot.lane.b32.xlu0 %v7013, 112
    %v7019 = vpop.permute.xlu0 %7018
    %v7020 = vsel %vm3589, %v7017, %v7019
    %v7023 = vadd.f32 %v7008, %v7020
    %v7024 = vadd.f32 %v7009, %v7019
    %s7025 = sld [smem:[#allocation6 + $0x31f]]
    %v7026 = vstv %s7025
    %v7027 = vmul.f32 %v3541, %v7026
    %v7028 = vmul.f32 %v3543, %v7026
    %7031 = vrot.lane.b32.xlu0 %v7027, 111
    %v7032 = vpop.permute.xlu0 %7031
    %7033 = vrot.lane.b32.xlu0 %v7028, 111
    %v7034 = vpop.permute.xlu0 %7033
    %v7035 = vsel %vm3605, %v7032, %v7034
    %v7038 = vadd.f32 %v7023, %v7035
    %v7039 = vadd.f32 %v7024, %v7034
    %s7040 = sld [smem:[#allocation6 + $0x320]]
    %v7041 = vstv %s7040
    %v7042 = vmul.f32 %v3541, %v7041
    %v7043 = vmul.f32 %v3543, %v7041
    %7046 = vrot.lane.b32.xlu0 %v7042, 110
    %v7047 = vpop.permute.xlu0 %7046
    %7048 = vrot.lane.b32.xlu0 %v7043, 110
    %v7049 = vpop.permute.xlu0 %7048
    %v7050 = vsel %vm3621, %v7047, %v7049
    %v7053 = vadd.f32 %v7038, %v7050
    %v7054 = vadd.f32 %v7039, %v7049
    %s7055 = sld [smem:[#allocation6 + $0x321]]
    %v7056 = vstv %s7055
    %v7057 = vmul.f32 %v3541, %v7056
    %v7058 = vmul.f32 %v3543, %v7056
    %7061 = vrot.lane.b32.xlu0 %v7057, 96
    %v7062 = vpop.permute.xlu0 %7061
    %7063 = vrot.lane.b32.xlu0 %v7058, 96
    %v7064 = vpop.permute.xlu0 %7063
    %v7065 = vsel %vm536, %v7062, %v7064
    %v7068 = vadd.f32 %v7053, %v7065
    %v7069 = vadd.f32 %v7054, %v7064
    %s7070 = sld [smem:[#allocation6 + $0x322]]
    %v7071 = vstv %s7070
    %v7072 = vmul.f32 %v3541, %v7071
    %v7073 = vmul.f32 %v3543, %v7071
    %7076 = vrot.lane.b32.xlu0 %v7072, 95
    %v7077 = vpop.permute.xlu0 %7076
    %7078 = vrot.lane.b32.xlu0 %v7073, 95
    %v7079 = vpop.permute.xlu0 %7078
    %v7080 = vsel %vm3652, %v7077, %v7079
    %v7083 = vadd.f32 %v7068, %v7080
    %v7084 = vadd.f32 %v7069, %v7079
    %s7085 = sld [smem:[#allocation6 + $0x323]]
    %v7086 = vstv %s7085
    %v7087 = vmul.f32 %v3541, %v7086
    %v7088 = vmul.f32 %v3543, %v7086
    %7091 = vrot.lane.b32.xlu0 %v7087, 94
    %v7092 = vpop.permute.xlu0 %7091
    %7093 = vrot.lane.b32.xlu0 %v7088, 94
    %v7094 = vpop.permute.xlu0 %7093
    %v7095 = vsel %vm3668, %v7092, %v7094
    %v7098 = vadd.f32 %v7083, %v7095
    %v7099 = vadd.f32 %v7084, %v7094
    %s7100 = sld [smem:[#allocation7 + $0x6]]
    %v7101 = vstv %s7100
    %v7102 = vadd.f32 %v7098, %v7101
    %v7103 = vadd.f32 %v7099, %v7101
    %v7104 = vmax.f32 %v7102, 0.0
    %v7105 = vmax.f32 %v7103, 0.0
    %s7106 = sld [smem:[#allocation6 + $0x380]]
    %v7107 = vstv %s7106
    %v7108 = vmul.f32 %v2434, %v7107
    %v7109 = vmul.f32 %v2436, %v7107
    %s7110 = sld [smem:[#allocation6 + $0x381]]
    %v7111 = vstv %s7110
    %v7112 = vmul.f32 %v2434, %v7111
    %v7113 = vmul.f32 %v2436, %v7111
    %7116 = vrot.lane.b32.xlu0 %v7112, 127
    %v7117 = vpop.permute.xlu0 %7116
    %7118 = vrot.lane.b32.xlu0 %v7113, 127
    %v7119 = vpop.permute.xlu0 %7118
    %v7120 = vsel %vm332, %v7117, %v7119
    %v7123 = vadd.f32 %v7108, %v7120
    %v7124 = vadd.f32 %v7109, %v7119
    %s7125 = sld [smem:[#allocation6 + $0x382]]
    %v7126 = vstv %s7125
    %v7127 = vmul.f32 %v2434, %v7126
    %v7128 = vmul.f32 %v2436, %v7126
    %7131 = vrot.lane.b32.xlu0 %v7127, 126
    %v7132 = vpop.permute.xlu0 %7131
    %7133 = vrot.lane.b32.xlu0 %v7128, 126
    %v7134 = vpop.permute.xlu0 %7133
    %v7135 = vsel %vm383, %v7132, %v7134
    %v7138 = vadd.f32 %v7123, %v7135
    %v7139 = vadd.f32 %v7124, %v7134
    %s7140 = sld [smem:[#allocation6 + $0x383]]
    %v7141 = vstv %s7140
    %v7142 = vmul.f32 %v2434, %v7141
    %v7143 = vmul.f32 %v2436, %v7141
    %7146 = vrot.lane.b32.xlu0 %v7142, 112
    %v7147 = vpop.permute.xlu0 %7146
    %7148 = vrot.lane.b32.xlu0 %v7143, 112
    %v7149 = vpop.permute.xlu0 %7148
    %v7150 = vsel %vm3589, %v7147, %v7149
    %v7153 = vadd.f32 %v7138, %v7150
    %v7154 = vadd.f32 %v7139, %v7149
    %s7155 = sld [smem:[#allocation6 + $0x384]]
    %v7156 = vstv %s7155
    %v7157 = vmul.f32 %v2434, %v7156
    %v7158 = vmul.f32 %v2436, %v7156
    %7161 = vrot.lane.b32.xlu0 %v7157, 111
    %v7162 = vpop.permute.xlu0 %7161
    %7163 = vrot.lane.b32.xlu0 %v7158, 111
    %v7164 = vpop.permute.xlu0 %7163
    %v7165 = vsel %vm3605, %v7162, %v7164
    %v7168 = vadd.f32 %v7153, %v7165
    %v7169 = vadd.f32 %v7154, %v7164
    %s7170 = sld [smem:[#allocation6 + $0x385]]
    %v7171 = vstv %s7170
    %v7172 = vmul.f32 %v2434, %v7171
    %v7173 = vmul.f32 %v2436, %v7171
    %7176 = vrot.lane.b32.xlu0 %v7172, 110
    %v7177 = vpop.permute.xlu0 %7176
    %7178 = vrot.lane.b32.xlu0 %v7173, 110
    %v7179 = vpop.permute.xlu0 %7178
    %v7180 = vsel %vm3621, %v7177, %v7179
    %v7183 = vadd.f32 %v7168, %v7180
    %v7184 = vadd.f32 %v7169, %v7179
    %s7185 = sld [smem:[#allocation6 + $0x386]]
    %v7186 = vstv %s7185
    %v7187 = vmul.f32 %v2434, %v7186
    %v7188 = vmul.f32 %v2436, %v7186
    %7191 = vrot.lane.b32.xlu0 %v7187, 96
    %v7192 = vpop.permute.xlu0 %7191
    %7193 = vrot.lane.b32.xlu0 %v7188, 96
    %v7194 = vpop.permute.xlu0 %7193
    %v7195 = vsel %vm536, %v7192, %v7194
    %v7198 = vadd.f32 %v7183, %v7195
    %v7199 = vadd.f32 %v7184, %v7194
    %s7200 = sld [smem:[#allocation6 + $0x387]]
    %v7201 = vstv %s7200
    %v7202 = vmul.f32 %v2434, %v7201
    %v7203 = vmul.f32 %v2436, %v7201
    %7206 = vrot.lane.b32.xlu0 %v7202, 95
    %v7207 = vpop.permute.xlu0 %7206
    %7208 = vrot.lane.b32.xlu0 %v7203, 95
    %v7209 = vpop.permute.xlu0 %7208
    %v7210 = vsel %vm3652, %v7207, %v7209
    %v7213 = vadd.f32 %v7198, %v7210
    %v7214 = vadd.f32 %v7199, %v7209
    %s7215 = sld [smem:[#allocation6 + $0x388]]
    %v7216 = vstv %s7215
    %v7217 = vmul.f32 %v2434, %v7216
    %v7218 = vmul.f32 %v2436, %v7216
    %7221 = vrot.lane.b32.xlu0 %v7217, 94
    %v7222 = vpop.permute.xlu0 %7221
    %7223 = vrot.lane.b32.xlu0 %v7218, 94
    %v7224 = vpop.permute.xlu0 %7223
    %v7225 = vsel %vm3668, %v7222, %v7224
    %v7228 = vadd.f32 %v7213, %v7225
    %v7229 = vadd.f32 %v7214, %v7224
    %s7230 = sld [smem:[#allocation6 + $0x389]]
    %v7231 = vstv %s7230
    %v7232 = vmul.f32 %v2803, %v7231
    %v7233 = vmul.f32 %v2805, %v7231
    %v7234 = vadd.f32 %v7228, %v7232
    %v7235 = vadd.f32 %v7229, %v7233
    %s7236 = sld [smem:[#allocation6 + $0x38a]]
    %v7237 = vstv %s7236
    %v7238 = vmul.f32 %v2803, %v7237
    %v7239 = vmul.f32 %v2805, %v7237
    %7242 = vrot.lane.b32.xlu0 %v7238, 127
    %v7243 = vpop.permute.xlu0 %7242
    %7244 = vrot.lane.b32.xlu0 %v7239, 127
    %v7245 = vpop.permute.xlu0 %7244
    %v7246 = vsel %vm332, %v7243, %v7245
    %v7249 = vadd.f32 %v7234, %v7246
    %v7250 = vadd.f32 %v7235, %v7245
    %s7251 = sld [smem:[#allocation6 + $0x38b]]
    %v7252 = vstv %s7251
    %v7253 = vmul.f32 %v2803, %v7252
    %v7254 = vmul.f32 %v2805, %v7252
    %7257 = vrot.lane.b32.xlu0 %v7253, 126
    %v7258 = vpop.permute.xlu0 %7257
    %7259 = vrot.lane.b32.xlu0 %v7254, 126
    %v7260 = vpop.permute.xlu0 %7259
    %v7261 = vsel %vm383, %v7258, %v7260
    %v7264 = vadd.f32 %v7249, %v7261
    %v7265 = vadd.f32 %v7250, %v7260
    %s7266 = sld [smem:[#allocation6 + $0x38c]]
    %v7267 = vstv %s7266
    %v7268 = vmul.f32 %v2803, %v7267
    %v7269 = vmul.f32 %v2805, %v7267
    %7272 = vrot.lane.b32.xlu0 %v7268, 112
    %v7273 = vpop.permute.xlu0 %7272
    %7274 = vrot.lane.b32.xlu0 %v7269, 112
    %v7275 = vpop.permute.xlu0 %7274
    %v7276 = vsel %vm3589, %v7273, %v7275
    %v7279 = vadd.f32 %v7264, %v7276
    %v7280 = vadd.f32 %v7265, %v7275
    %s7281 = sld [smem:[#allocation6 + $0x38d]]
    %v7282 = vstv %s7281
    %v7283 = vmul.f32 %v2803, %v7282
    %v7284 = vmul.f32 %v2805, %v7282
    %7287 = vrot.lane.b32.xlu0 %v7283, 111
    %v7288 = vpop.permute.xlu0 %7287
    %7289 = vrot.lane.b32.xlu0 %v7284, 111
    %v7290 = vpop.permute.xlu0 %7289
    %v7291 = vsel %vm3605, %v7288, %v7290
    %v7294 = vadd.f32 %v7279, %v7291
    %v7295 = vadd.f32 %v7280, %v7290
    %s7296 = sld [smem:[#allocation6 + $0x38e]]
    %v7297 = vstv %s7296
    %v7298 = vmul.f32 %v2803, %v7297
    %v7299 = vmul.f32 %v2805, %v7297
    %7302 = vrot.lane.b32.xlu0 %v7298, 110
    %v7303 = vpop.permute.xlu0 %7302
    %7304 = vrot.lane.b32.xlu0 %v7299, 110
    %v7305 = vpop.permute.xlu0 %7304
    %v7306 = vsel %vm3621, %v7303, %v7305
    %v7309 = vadd.f32 %v7294, %v7306
    %v7310 = vadd.f32 %v7295, %v7305
    %s7311 = sld [smem:[#allocation6 + $0x38f]]
    %v7312 = vstv %s7311
    %v7313 = vmul.f32 %v2803, %v7312
    %v7314 = vmul.f32 %v2805, %v7312
    %7317 = vrot.lane.b32.xlu0 %v7313, 96
    %v7318 = vpop.permute.xlu0 %7317
    %7319 = vrot.lane.b32.xlu0 %v7314, 96
    %v7320 = vpop.permute.xlu0 %7319
    %v7321 = vsel %vm536, %v7318, %v7320
    %v7324 = vadd.f32 %v7309, %v7321
    %v7325 = vadd.f32 %v7310, %v7320
    %s7326 = sld [smem:[#allocation6 + $0x390]]
    %v7327 = vstv %s7326
    %v7328 = vmul.f32 %v2803, %v7327
    %v7329 = vmul.f32 %v2805, %v7327
    %7332 = vrot.lane.b32.xlu0 %v7328, 95
    %v7333 = vpop.permute.xlu0 %7332
    %7334 = vrot.lane.b32.xlu0 %v7329, 95
    %v7335 = vpop.permute.xlu0 %7334
    %v7336 = vsel %vm3652, %v7333, %v7335
    %v7339 = vadd.f32 %v7324, %v7336
    %v7340 = vadd.f32 %v7325, %v7335
    %s7341 = sld [smem:[#allocation6 + $0x391]]
    %v7342 = vstv %s7341
    %v7343 = vmul.f32 %v2803, %v7342
    %v7344 = vmul.f32 %v2805, %v7342
    %7347 = vrot.lane.b32.xlu0 %v7343, 94
    %v7348 = vpop.permute.xlu0 %7347
    %7349 = vrot.lane.b32.xlu0 %v7344, 94
    %v7350 = vpop.permute.xlu0 %7349
    %v7351 = vsel %vm3668, %v7348, %v7350
    %v7354 = vadd.f32 %v7339, %v7351
    %v7355 = vadd.f32 %v7340, %v7350
    %s7356 = sld [smem:[#allocation6 + $0x392]]
    %v7357 = vstv %s7356
    %v7358 = vmul.f32 %v3172, %v7357
    %v7359 = vmul.f32 %v3174, %v7357
    %v7360 = vadd.f32 %v7354, %v7358
    %v7361 = vadd.f32 %v7355, %v7359
    %s7362 = sld [smem:[#allocation6 + $0x393]]
    %v7363 = vstv %s7362
    %v7364 = vmul.f32 %v3172, %v7363
    %v7365 = vmul.f32 %v3174, %v7363
    %7368 = vrot.lane.b32.xlu0 %v7364, 127
    %v7369 = vpop.permute.xlu0 %7368
    %7370 = vrot.lane.b32.xlu0 %v7365, 127
    %v7371 = vpop.permute.xlu0 %7370
    %v7372 = vsel %vm332, %v7369, %v7371
    %v7375 = vadd.f32 %v7360, %v7372
    %v7376 = vadd.f32 %v7361, %v7371
    %s7377 = sld [smem:[#allocation6 + $0x394]]
    %v7378 = vstv %s7377
    %v7379 = vmul.f32 %v3172, %v7378
    %v7380 = vmul.f32 %v3174, %v7378
    %7383 = vrot.lane.b32.xlu0 %v7379, 126
    %v7384 = vpop.permute.xlu0 %7383
    %7385 = vrot.lane.b32.xlu0 %v7380, 126
    %v7386 = vpop.permute.xlu0 %7385
    %v7387 = vsel %vm383, %v7384, %v7386
    %v7390 = vadd.f32 %v7375, %v7387
    %v7391 = vadd.f32 %v7376, %v7386
    %s7392 = sld [smem:[#allocation6 + $0x395]]
    %v7393 = vstv %s7392
    %v7394 = vmul.f32 %v3172, %v7393
    %v7395 = vmul.f32 %v3174, %v7393
    %7398 = vrot.lane.b32.xlu0 %v7394, 112
    %v7399 = vpop.permute.xlu0 %7398
    %7400 = vrot.lane.b32.xlu0 %v7395, 112
    %v7401 = vpop.permute.xlu0 %7400
    %v7402 = vsel %vm3589, %v7399, %v7401
    %v7405 = vadd.f32 %v7390, %v7402
    %v7406 = vadd.f32 %v7391, %v7401
    %s7407 = sld [smem:[#allocation6 + $0x396]]
    %v7408 = vstv %s7407
    %v7409 = vmul.f32 %v3172, %v7408
    %v7410 = vmul.f32 %v3174, %v7408
    %7413 = vrot.lane.b32.xlu0 %v7409, 111
    %v7414 = vpop.permute.xlu0 %7413
    %7415 = vrot.lane.b32.xlu0 %v7410, 111
    %v7416 = vpop.permute.xlu0 %7415
    %v7417 = vsel %vm3605, %v7414, %v7416
    %v7420 = vadd.f32 %v7405, %v7417
    %v7421 = vadd.f32 %v7406, %v7416
    %s7422 = sld [smem:[#allocation6 + $0x397]]
    %v7423 = vstv %s7422
    %v7424 = vmul.f32 %v3172, %v7423
    %v7425 = vmul.f32 %v3174, %v7423
    %7428 = vrot.lane.b32.xlu0 %v7424, 110
    %v7429 = vpop.permute.xlu0 %7428
    %7430 = vrot.lane.b32.xlu0 %v7425, 110
    %v7431 = vpop.permute.xlu0 %7430
    %v7432 = vsel %vm3621, %v7429, %v7431
    %v7435 = vadd.f32 %v7420, %v7432
    %v7436 = vadd.f32 %v7421, %v7431
    %s7437 = sld [smem:[#allocation6 + $0x398]]
    %v7438 = vstv %s7437
    %v7439 = vmul.f32 %v3172, %v7438
    %v7440 = vmul.f32 %v3174, %v7438
    %7443 = vrot.lane.b32.xlu0 %v7439, 96
    %v7444 = vpop.permute.xlu0 %7443
    %7445 = vrot.lane.b32.xlu0 %v7440, 96
    %v7446 = vpop.permute.xlu0 %7445
    %v7447 = vsel %vm536, %v7444, %v7446
    %v7450 = vadd.f32 %v7435, %v7447
    %v7451 = vadd.f32 %v7436, %v7446
    %s7452 = sld [smem:[#allocation6 + $0x399]]
    %v7453 = vstv %s7452
    %v7454 = vmul.f32 %v3172, %v7453
    %v7455 = vmul.f32 %v3174, %v7453
    %7458 = vrot.lane.b32.xlu0 %v7454, 95
    %v7459 = vpop.permute.xlu0 %7458
    %7460 = vrot.lane.b32.xlu0 %v7455, 95
    %v7461 = vpop.permute.xlu0 %7460
    %v7462 = vsel %vm3652, %v7459, %v7461
    %v7465 = vadd.f32 %v7450, %v7462
    %v7466 = vadd.f32 %v7451, %v7461
    %s7467 = sld [smem:[#allocation6 + $0x39a]]
    %v7468 = vstv %s7467
    %v7469 = vmul.f32 %v3172, %v7468
    %v7470 = vmul.f32 %v3174, %v7468
    %7473 = vrot.lane.b32.xlu0 %v7469, 94
    %v7474 = vpop.permute.xlu0 %7473
    %7475 = vrot.lane.b32.xlu0 %v7470, 94
    %v7476 = vpop.permute.xlu0 %7475
    %v7477 = vsel %vm3668, %v7474, %v7476
    %v7480 = vadd.f32 %v7465, %v7477
    %v7481 = vadd.f32 %v7466, %v7476
    %s7482 = sld [smem:[#allocation6 + $0x39b]]
    %v7483 = vstv %s7482
    %v7484 = vmul.f32 %v3541, %v7483
    %v7485 = vmul.f32 %v3543, %v7483
    %v7486 = vadd.f32 %v7480, %v7484
    %v7487 = vadd.f32 %v7481, %v7485
    %s7488 = sld [smem:[#allocation6 + $0x39c]]
    %v7489 = vstv %s7488
    %v7490 = vmul.f32 %v3541, %v7489
    %v7491 = vmul.f32 %v3543, %v7489
    %7494 = vrot.lane.b32.xlu0 %v7490, 127
    %v7495 = vpop.permute.xlu0 %7494
    %7496 = vrot.lane.b32.xlu0 %v7491, 127
    %v7497 = vpop.permute.xlu0 %7496
    %v7498 = vsel %vm332, %v7495, %v7497
    %v7501 = vadd.f32 %v7486, %v7498
    %v7502 = vadd.f32 %v7487, %v7497
    %s7503 = sld [smem:[#allocation6 + $0x39d]]
    %v7504 = vstv %s7503
    %v7505 = vmul.f32 %v3541, %v7504
    %v7506 = vmul.f32 %v3543, %v7504
    %7509 = vrot.lane.b32.xlu0 %v7505, 126
    %v7510 = vpop.permute.xlu0 %7509
    %7511 = vrot.lane.b32.xlu0 %v7506, 126
    %v7512 = vpop.permute.xlu0 %7511
    %v7513 = vsel %vm383, %v7510, %v7512
    %v7516 = vadd.f32 %v7501, %v7513
    %v7517 = vadd.f32 %v7502, %v7512
    %s7518 = sld [smem:[#allocation6 + $0x39e]]
    %v7519 = vstv %s7518
    %v7520 = vmul.f32 %v3541, %v7519
    %v7521 = vmul.f32 %v3543, %v7519
    %7524 = vrot.lane.b32.xlu0 %v7520, 112
    %v7525 = vpop.permute.xlu0 %7524
    %7526 = vrot.lane.b32.xlu0 %v7521, 112
    %v7527 = vpop.permute.xlu0 %7526
    %v7528 = vsel %vm3589, %v7525, %v7527
    %v7531 = vadd.f32 %v7516, %v7528
    %v7532 = vadd.f32 %v7517, %v7527
    %s7533 = sld [smem:[#allocation6 + $0x39f]]
    %v7534 = vstv %s7533
    %v7535 = vmul.f32 %v3541, %v7534
    %v7536 = vmul.f32 %v3543, %v7534
    %7539 = vrot.lane.b32.xlu0 %v7535, 111
    %v7540 = vpop.permute.xlu0 %7539
    %7541 = vrot.lane.b32.xlu0 %v7536, 111
    %v7542 = vpop.permute.xlu0 %7541
    %v7543 = vsel %vm3605, %v7540, %v7542
    %v7546 = vadd.f32 %v7531, %v7543
    %v7547 = vadd.f32 %v7532, %v7542
    %s7548 = sld [smem:[#allocation6 + $0x3a0]]
    %v7549 = vstv %s7548
    %v7550 = vmul.f32 %v3541, %v7549
    %v7551 = vmul.f32 %v3543, %v7549
    %7554 = vrot.lane.b32.xlu0 %v7550, 110
    %v7555 = vpop.permute.xlu0 %7554
    %7556 = vrot.lane.b32.xlu0 %v7551, 110
    %v7557 = vpop.permute.xlu0 %7556
    %v7558 = vsel %vm3621, %v7555, %v7557
    %v7561 = vadd.f32 %v7546, %v7558
    %v7562 = vadd.f32 %v7547, %v7557
    %s7563 = sld [smem:[#allocation6 + $0x3a1]]
    %v7564 = vstv %s7563
    %v7565 = vmul.f32 %v3541, %v7564
    %v7566 = vmul.f32 %v3543, %v7564
    %7569 = vrot.lane.b32.xlu0 %v7565, 96
    %v7570 = vpop.permute.xlu0 %7569
    %7571 = vrot.lane.b32.xlu0 %v7566, 96
    %v7572 = vpop.permute.xlu0 %7571
    %v7573 = vsel %vm536, %v7570, %v7572
    %v7576 = vadd.f32 %v7561, %v7573
    %v7577 = vadd.f32 %v7562, %v7572
    %s7578 = sld [smem:[#allocation6 + $0x3a2]]
    %v7579 = vstv %s7578
    %v7580 = vmul.f32 %v3541, %v7579
    %v7581 = vmul.f32 %v3543, %v7579
    %7584 = vrot.lane.b32.xlu0 %v7580, 95
    %v7585 = vpop.permute.xlu0 %7584
    %7586 = vrot.lane.b32.xlu0 %v7581, 95
    %v7587 = vpop.permute.xlu0 %7586
    %v7588 = vsel %vm3652, %v7585, %v7587
    %v7591 = vadd.f32 %v7576, %v7588
    %v7592 = vadd.f32 %v7577, %v7587
    %s7593 = sld [smem:[#allocation6 + $0x3a3]]
    %v7594 = vstv %s7593
    %v7595 = vmul.f32 %v3541, %v7594
    %v7596 = vmul.f32 %v3543, %v7594
    %7599 = vrot.lane.b32.xlu0 %v7595, 94
    %v7600 = vpop.permute.xlu0 %7599
    %7601 = vrot.lane.b32.xlu0 %v7596, 94
    %v7602 = vpop.permute.xlu0 %7601
    %v7603 = vsel %vm3668, %v7600, %v7602
    %v7606 = vadd.f32 %v7591, %v7603
    %v7607 = vadd.f32 %v7592, %v7602
    %s7608 = sld [smem:[#allocation7 + $0x7]]
    %v7609 = vstv %s7608
    %v7610 = vadd.f32 %v7606, %v7609
    %v7611 = vadd.f32 %v7607, %v7609
    %v7612 = vmax.f32 %v7610, 0.0
    %v7613 = vmax.f32 %v7611, 0.0
    %7616 = vrot.lane.b32.xlu0 %v4056, 127
    %v7617 = vpop.permute.xlu0 %7616
    %7618 = vrot.lane.b32.xlu0 %v4057, 127
    %v7619 = vpop.permute.xlu0 %7618
    %v7620 = vsel %vm332, %v7617, %v7619
    %v7623 = vmax.f32 %v4056, %v7620
    %v7624 = vmax.f32 %v4057, %v7619
    %7627 = vrot.lane.b32.xlu0 %v7623, 112
    %v7628 = vpop.permute.xlu0 %7627
    %7629 = vrot.lane.b32.xlu0 %v7624, 112
    %v7630 = vpop.permute.xlu0 %7629
    %v7631 = vsel %vm3589, %v7628, %v7630
    %v7634 = vmax.f32 %v7623, %v7631
    %v7635 = vmax.f32 %v7624, %v7630
    %v7636 = vld [vmem:[%s6] sm:$0xff]
    %v7637 = vld [vmem:[%s6 + $0x8] sm:$0xff]
    %v7638 = vld [vmem:[%s6 + $0x10] sm:$0xff]
    %v7639 = vld [vmem:[%s6 + $0x18] sm:$0xff]
    %v7640 = vld [vmem:[%s6 + $0x20] sm:$0xff]
    %v7641 = vld [vmem:[%s6 + $0x28] sm:$0xff]
    %v7642 = vld [vmem:[%s6 + $0x30] sm:$0xff]
    %v7643 = vld [vmem:[%s6 + $0x38] sm:$0xff]
    %v7644 = vld [vmem:[%s6 + $0x40] sm:$0xff]
    %v7645 = vld [vmem:[%s6 + $0x48] sm:$0xff]
    %v7646 = vld [vmem:[%s6 + $0x50] sm:$0xff]
    %v7647 = vld [vmem:[%s6 + $0x58] sm:$0xff]
    %v7648 = vld [vmem:[%s6 + $0x60] sm:$0xff]
    %v7649 = vld [vmem:[%s6 + $0x68] sm:$0xff]
    %v7650 = vld [vmem:[%s6 + $0x70] sm:$0xff]
    %v7651 = vld [vmem:[%s6 + $0x78] sm:$0xff]
    %v7652 = vld [vmem:[%s6 + $0x80] sm:$0xff]
    %v7653 = vld [vmem:[%s6 + $0x88] sm:$0xff]
    %v7654 = vld [vmem:[%s6 + $0x90] sm:$0xff]
    %v7655 = vld [vmem:[%s6 + $0x98] sm:$0xff]
    %v7656 = vld [vmem:[%s6 + $0xa0] sm:$0xff]
    %v7657 = vld [vmem:[%s6 + $0xa8] sm:$0xff]
    %v7658 = vld [vmem:[%s6 + $0xb0] sm:$0xff]
    %v7659 = vld [vmem:[%s6 + $0xb8] sm:$0xff]
    %v7660 = vld [vmem:[%s6 + $0xc0] sm:$0xff]
    %v7661 = vld [vmem:[%s6 + $0xc8] sm:$0x1f]
    %7664 = vrot.lane.b32.xlu0 %v4564, 127
    %v7665 = vpop.permute.xlu0 %7664
    %7666 = vrot.lane.b32.xlu0 %v4565, 127
    %v7667 = vpop.permute.xlu0 %7666
    %v7668 = vsel %vm332, %v7665, %v7667
    %v7671 = vmax.f32 %v4564, %v7668
    %v7672 = vmax.f32 %v4565, %v7667
    %7675 = vrot.lane.b32.xlu0 %v7671, 112
    %v7676 = vpop.permute.xlu0 %7675
    %7677 = vrot.lane.b32.xlu0 %v7672, 112
    %v7678 = vpop.permute.xlu0 %7677
    %v7679 = vsel %vm3589, %v7676, %v7678
    %v7682 = vmax.f32 %v7671, %v7679
    %v7683 = vmax.f32 %v7672, %v7678
    %s7684 = scalar_lea.vmem %s6, 208
    %v7685 = vld [vmem:[%s7684] sm:$0xff]
    %v7686 = vld [vmem:[%s7684 + $0x8] sm:$0xff]
    %v7687 = vld [vmem:[%s7684 + $0x10] sm:$0xff]
    %v7688 = vld [vmem:[%s7684 + $0x18] sm:$0xff]
    %v7689 = vld [vmem:[%s7684 + $0x20] sm:$0xff]
    %v7690 = vld [vmem:[%s7684 + $0x28] sm:$0xff]
    %v7691 = vld [vmem:[%s7684 + $0x30] sm:$0xff]
    %v7692 = vld [vmem:[%s7684 + $0x38] sm:$0xff]
    %v7693 = vld [vmem:[%s7684 + $0x40] sm:$0xff]
    %v7694 = vld [vmem:[%s7684 + $0x48] sm:$0xff]
    %v7695 = vld [vmem:[%s7684 + $0x50] sm:$0xff]
    %v7696 = vld [vmem:[%s7684 + $0x58] sm:$0xff]
    %v7697 = vld [vmem:[%s7684 + $0x60] sm:$0xff]
    %v7698 = vld [vmem:[%s7684 + $0x68] sm:$0xff]
    %v7699 = vld [vmem:[%s7684 + $0x70] sm:$0xff]
    %v7700 = vld [vmem:[%s7684 + $0x78] sm:$0xff]
    %v7701 = vld [vmem:[%s7684 + $0x80] sm:$0xff]
    %v7702 = vld [vmem:[%s7684 + $0x88] sm:$0xff]
    %v7703 = vld [vmem:[%s7684 + $0x90] sm:$0xff]
    %v7704 = vld [vmem:[%s7684 + $0x98] sm:$0xff]
    %v7705 = vld [vmem:[%s7684 + $0xa0] sm:$0xff]
    %v7706 = vld [vmem:[%s7684 + $0xa8] sm:$0xff]
    %v7707 = vld [vmem:[%s7684 + $0xb0] sm:$0xff]
    %v7708 = vld [vmem:[%s7684 + $0xb8] sm:$0xff]
    %v7709 = vld [vmem:[%s7684 + $0xc0] sm:$0xff]
    %v7710 = vld [vmem:[%s7684 + $0xc8] sm:$0x1f]
    %vm7711 = vcmask 629760
    %v7713 = vsel %vm7711, %v7683, 0
    %vm7715 = vcmask 1044480
    %v7717 = vsel %vm7715, %v7710, 0
    %7719 = vmatprep.subr.mxu0 0.0
    %7720 = vmatpush1.msra.mxu0 %v7685
    %7721 = vmatprep.subr.mxu0 0.0
    %7722 = vmatpush1.msra.mxu0 %v7686
    %7723 = vmatprep.subr.mxu0 0.0
    %7724 = vmatpush1.msra.mxu0 %v7687
    %7725 = vmatprep.subr.mxu0 0.0
    %7726 = vmatpush1.msra.mxu0 %v7688
    %7727 = vmatprep.subr.mxu0 0.0
    %7728 = vmatpush1.msra.mxu0 %v7689
    %7729 = vmatprep.subr.mxu0 0.0
    %7730 = vmatpush1.msra.mxu0 %v7690
    %7731 = vmatprep.subr.mxu0 0.0
    %7732 = vmatpush1.msra.mxu0 %v7691
    %7733 = vmatprep.subr.mxu0 0.0
    %7734 = vmatpush1.msra.mxu0 %v7692
    %7735 = vmatprep.subr.mxu0 0.0
    %7736 = vmatpush1.msra.mxu0 %v7693
    %7737 = vmatprep.subr.mxu0 0.0
    %7738 = vmatpush1.msra.mxu0 %v7694
    %7739 = vmatprep.subr.mxu0 0.0
    %7740 = vmatpush1.msra.mxu0 %v7695
    %7741 = vmatprep.subr.mxu0 0.0
    %7742 = vmatpush1.msra.mxu0 %v7696
    %7743 = vmatprep.subr.mxu0 0.0
    %7744 = vmatpush1.msra.mxu0 %v7697
    %7745 = vmatprep.subr.mxu0 0.0
    %7746 = vmatpush1.msra.mxu0 %v7698
    %7747 = vmatprep.subr.mxu0 0.0
    %7748 = vmatpush1.msra.mxu0 %v7699
    %7749 = vmatprep.subr.mxu0 0.0
    %7750 = vmatpush1.msra.mxu0 %v7700
    %7751 = vmatprep.subr.mxu0 0.0
    %7752 = vmatpush1.msra.mxu0 %v7701
    %7753 = vmatprep.subr.mxu0 0.0
    %7754 = vmatpush1.msra.mxu0 %v7702
    %7755 = vmatprep.subr.mxu0 0.0
    %7756 = vmatpush1.msra.mxu0 %v7703
    %7757 = vmatprep.subr.mxu0 0.0
    %7758 = vmatpush1.msra.mxu0 %v7704
    %7759 = vmatprep.subr.mxu0 0.0
    %7760 = vmatpush1.msra.mxu0 %v7705
    %7761 = vmatprep.subr.mxu0 0.0
    %7762 = vmatpush1.msra.mxu0 %v7706
    %7763 = vmatprep.subr.mxu0 0.0
    %7764 = vmatpush1.msra.mxu0 %v7707
    %7765 = vmatprep.subr.mxu0 0.0
    %7766 = vmatpush1.msra.mxu0 %v7708
    %7767 = vmatprep.subr.mxu0 0.0
    %7768 = vmatpush1.msra.mxu0 %v7709
    %7769 = vmatprep.subr.mxu0 0.0
    %7770 = vmatpush1.msra.mxu0 %v7717
    %7771 = vmatprep.subr.mxu0 0.0
    %7772 = vmatpush1.msra.mxu0 0.0
    %7773 = vmatprep.subr.mxu0 0.0
    %7774 = vmatpush1.msra.mxu0 0.0
    %7775 = vmatprep.subr.mxu0 0.0
    %7776 = vmatpush1.msra.mxu0 0.0
    %7777 = vmatprep.subr.mxu0 0.0
    %7778 = vmatpush1.msra.mxu0 0.0
    %7779 = vmatprep.subr.mxu0 0.0
    %7780 = vmatpush1.msra.mxu0 0.0
    %7781 = vmatprep.subr.mxu0 0.0
    %7782 = vmatpush1.msra.mxu0 0.0
    %7783 = vmatprep.mubr.f32.mxu0 %v7713
    %7784 = vmatmul.mubr.f32.gmra.mrb[0].mxu0 %v7682
    %v7785 = vpop.f32.mrb[0].mxu0
    %v7786 = vadd.f32 0.0, %v7785
    %v7787 = vpop.f32.mrb[0].mxu0
    %7788 = vdwg.mxu0
    %v7790 = vsel %vm7711, %v7635, 0
    %v7793 = vsel %vm7715, %v7661, 0
    %7795 = vmatprep.subr.mxu0 0.0
    %7796 = vmatpush1.msra.mxu0 %v7636
    %7797 = vmatprep.subr.mxu0 0.0
    %7798 = vmatpush1.msra.mxu0 %v7637
    %7799 = vmatprep.subr.mxu0 0.0
    %7800 = vmatpush1.msra.mxu0 %v7638
    %7801 = vmatprep.subr.mxu0 0.0
    %7802 = vmatpush1.msra.mxu0 %v7639
    %7803 = vmatprep.subr.mxu0 0.0
    %7804 = vmatpush1.msra.mxu0 %v7640
    %7805 = vmatprep.subr.mxu0 0.0
    %7806 = vmatpush1.msra.mxu0 %v7641
    %7807 = vmatprep.subr.mxu0 0.0
    %7808 = vmatpush1.msra.mxu0 %v7642
    %7809 = vmatprep.subr.mxu0 0.0
    %7810 = vmatpush1.msra.mxu0 %v7643
    %7811 = vmatprep.subr.mxu0 0.0
    %7812 = vmatpush1.msra.mxu0 %v7644
    %7813 = vmatprep.subr.mxu0 0.0
    %7814 = vmatpush1.msra.mxu0 %v7645
    %7815 = vmatprep.subr.mxu0 0.0
    %7816 = vmatpush1.msra.mxu0 %v7646
    %7817 = vmatprep.subr.mxu0 0.0
    %7818 = vmatpush1.msra.mxu0 %v7647
    %7819 = vmatprep.subr.mxu0 0.0
    %7820 = vmatpush1.msra.mxu0 %v7648
    %7821 = vmatprep.subr.mxu0 0.0
    %7822 = vmatpush1.msra.mxu0 %v7649
    %7823 = vmatprep.subr.mxu0 0.0
    %7824 = vmatpush1.msra.mxu0 %v7650
    %7825 = vmatprep.subr.mxu0 0.0
    %7826 = vmatpush1.msra.mxu0 %v7651
    %7827 = vmatprep.subr.mxu0 0.0
    %7828 = vmatpush1.msra.mxu0 %v7652
    %7829 = vmatprep.subr.mxu0 0.0
    %7830 = vmatpush1.msra.mxu0 %v7653
    %7831 = vmatprep.subr.mxu0 0.0
    %7832 = vmatpush1.msra.mxu0 %v7654
    %7833 = vmatprep.subr.mxu0 0.0
    %7834 = vmatpush1.msra.mxu0 %v7655
    %7835 = vmatprep.subr.mxu0 0.0
    %7836 = vmatpush1.msra.mxu0 %v7656
    %7837 = vmatprep.subr.mxu0 0.0
    %7838 = vmatpush1.msra.mxu0 %v7657
    %7839 = vmatprep.subr.mxu0 0.0
    %7840 = vmatpush1.msra.mxu0 %v7658
    %7841 = vmatprep.subr.mxu0 0.0
    %7842 = vmatpush1.msra.mxu0 %v7659
    %7843 = vmatprep.subr.mxu0 0.0
    %7844 = vmatpush1.msra.mxu0 %v7660
    %7845 = vmatprep.subr.mxu0 0.0
    %7846 = vmatpush1.msra.mxu0 %v7793
    %7847 = vmatprep.subr.mxu0 0.0
    %7848 = vmatpush1.msra.mxu0 0.0
    %7849 = vmatprep.subr.mxu0 0.0
    %7850 = vmatpush1.msra.mxu0 0.0
    %7851 = vmatprep.subr.mxu0 0.0
    %7852 = vmatpush1.msra.mxu0 0.0
    %7853 = vmatprep.subr.mxu0 0.0
    %7854 = vmatpush1.msra.mxu0 0.0
    %7855 = vmatprep.subr.mxu0 0.0
    %7856 = vmatpush1.msra.mxu0 0.0
    %7857 = vmatprep.subr.mxu0 0.0
    %7858 = vmatpush1.msra.mxu0 0.0
    %7859 = vmatprep.mubr.f32.mxu0 %v7790
    %7860 = vmatmul.mubr.f32.gmra.mrb[0].mxu0 %v7634
    %v7861 = vpop.f32.mrb[0].mxu0
    %v7862 = vadd.f32 %v7786, %v7861
    %v7863 = vpop.f32.mrb[0].mxu0
    %7864 = vdwg.mxu0
    %7867 = vrot.lane.b32.xlu0 %v5072, 127
    %v7868 = vpop.permute.xlu0 %7867
    %7869 = vrot.lane.b32.xlu0 %v5073, 127
    %v7870 = vpop.permute.xlu0 %7869
    %v7871 = vsel %vm332, %v7868, %v7870
    %v7874 = vmax.f32 %v5072, %v7871
    %v7875 = vmax.f32 %v5073, %v7870
    %7878 = vrot.lane.b32.xlu0 %v7874, 112
    %v7879 = vpop.permute.xlu0 %7878
    %7880 = vrot.lane.b32.xlu0 %v7875, 112
    %v7881 = vpop.permute.xlu0 %7880
    %v7882 = vsel %vm3589, %v7879, %v7881
    %v7885 = vmax.f32 %v7874, %v7882
    %v7886 = vmax.f32 %v7875, %v7881
    %s7887 = scalar_lea.vmem %s6, 416
    %v7888 = vld [vmem:[%s7887] sm:$0xff]
    %v7889 = vld [vmem:[%s7887 + $0x8] sm:$0xff]
    %v7890 = vld [vmem:[%s7887 + $0x10] sm:$0xff]
    %v7891 = vld [vmem:[%s7887 + $0x18] sm:$0xff]
    %v7892 = vld [vmem:[%s7887 + $0x20] sm:$0xff]
    %v7893 = vld [vmem:[%s7887 + $0x28] sm:$0xff]
    %v7894 = vld [vmem:[%s7887 + $0x30] sm:$0xff]
    %v7895 = vld [vmem:[%s7887 + $0x38] sm:$0xff]
    %v7896 = vld [vmem:[%s7887 + $0x40] sm:$0xff]
    %v7897 = vld [vmem:[%s7887 + $0x48] sm:$0xff]
    %v7898 = vld [vmem:[%s7887 + $0x50] sm:$0xff]
    %v7899 = vld [vmem:[%s7887 + $0x58] sm:$0xff]
    %v7900 = vld [vmem:[%s7887 + $0x60] sm:$0xff]
    %v7901 = vld [vmem:[%s7887 + $0x68] sm:$0xff]
    %v7902 = vld [vmem:[%s7887 + $0x70] sm:$0xff]
    %v7903 = vld [vmem:[%s7887 + $0x78] sm:$0xff]
    %v7904 = vld [vmem:[%s7887 + $0x80] sm:$0xff]
    %v7905 = vld [vmem:[%s7887 + $0x88] sm:$0xff]
    %v7906 = vld [vmem:[%s7887 + $0x90] sm:$0xff]
    %v7907 = vld [vmem:[%s7887 + $0x98] sm:$0xff]
    %v7908 = vld [vmem:[%s7887 + $0xa0] sm:$0xff]
    %v7909 = vld [vmem:[%s7887 + $0xa8] sm:$0xff]
    %v7910 = vld [vmem:[%s7887 + $0xb0] sm:$0xff]
    %v7911 = vld [vmem:[%s7887 + $0xb8] sm:$0xff]
    %v7912 = vld [vmem:[%s7887 + $0xc0] sm:$0xff]
    %v7913 = vld [vmem:[%s7887 + $0xc8] sm:$0x1f]
    %v7915 = vsel %vm7711, %v7886, 0
    %v7918 = vsel %vm7715, %v7913, 0
    %7920 = vmatprep.subr.mxu0 0.0
    %7921 = vmatpush1.msra.mxu0 %v7888
    %7922 = vmatprep.subr.mxu0 0.0
    %7923 = vmatpush1.msra.mxu0 %v7889
    %7924 = vmatprep.subr.mxu0 0.0
    %7925 = vmatpush1.msra.mxu0 %v7890
    %7926 = vmatprep.subr.mxu0 0.0
    %7927 = vmatpush1.msra.mxu0 %v7891
    %7928 = vmatprep.subr.mxu0 0.0
    %7929 = vmatpush1.msra.mxu0 %v7892
    %7930 = vmatprep.subr.mxu0 0.0
    %7931 = vmatpush1.msra.mxu0 %v7893
    %7932 = vmatprep.subr.mxu0 0.0
    %7933 = vmatpush1.msra.mxu0 %v7894
    %7934 = vmatprep.subr.mxu0 0.0
    %7935 = vmatpush1.msra.mxu0 %v7895
    %7936 = vmatprep.subr.mxu0 0.0
    %7937 = vmatpush1.msra.mxu0 %v7896
    %7938 = vmatprep.subr.mxu0 0.0
    %7939 = vmatpush1.msra.mxu0 %v7897
    %7940 = vmatprep.subr.mxu0 0.0
    %7941 = vmatpush1.msra.mxu0 %v7898
    %7942 = vmatprep.subr.mxu0 0.0
    %7943 = vmatpush1.msra.mxu0 %v7899
    %7944 = vmatprep.subr.mxu0 0.0
    %7945 = vmatpush1.msra.mxu0 %v7900
    %7946 = vmatprep.subr.mxu0 0.0
    %7947 = vmatpush1.msra.mxu0 %v7901
    %7948 = vmatprep.subr.mxu0 0.0
    %7949 = vmatpush1.msra.mxu0 %v7902
    %7950 = vmatprep.subr.mxu0 0.0
    %7951 = vmatpush1.msra.mxu0 %v7903
    %7952 = vmatprep.subr.mxu0 0.0
    %7953 = vmatpush1.msra.mxu0 %v7904
    %7954 = vmatprep.subr.mxu0 0.0
    %7955 = vmatpush1.msra.mxu0 %v7905
    %7956 = vmatprep.subr.mxu0 0.0
    %7957 = vmatpush1.msra.mxu0 %v7906
    %7958 = vmatprep.subr.mxu0 0.0
    %7959 = vmatpush1.msra.mxu0 %v7907
    %7960 = vmatprep.subr.mxu0 0.0
    %7961 = vmatpush1.msra.mxu0 %v7908
    %7962 = vmatprep.subr.mxu0 0.0
    %7963 = vmatpush1.msra.mxu0 %v7909
    %7964 = vmatprep.subr.mxu0 0.0
    %7965 = vmatpush1.msra.mxu0 %v7910
    %7966 = vmatprep.subr.mxu0 0.0
    %7967 = vmatpush1.msra.mxu0 %v7911
    %7968 = vmatprep.subr.mxu0 0.0
    %7969 = vmatpush1.msra.mxu0 %v7912
    %7970 = vmatprep.subr.mxu0 0.0
    %7971 = vmatpush1.msra.mxu0 %v7918
    %7972 = vmatprep.subr.mxu0 0.0
    %7973 = vmatpush1.msra.mxu0 0.0
    %7974 = vmatprep.subr.mxu0 0.0
    %7975 = vmatpush1.msra.mxu0 0.0
    %7976 = vmatprep.subr.mxu0 0.0
    %7977 = vmatpush1.msra.mxu0 0.0
    %7978 = vmatprep.subr.mxu0 0.0
    %7979 = vmatpush1.msra.mxu0 0.0
    %7980 = vmatprep.subr.mxu0 0.0
    %7981 = vmatpush1.msra.mxu0 0.0
    %7982 = vmatprep.subr.mxu0 0.0
    %7983 = vmatpush1.msra.mxu0 0.0
    %7984 = vmatprep.mubr.f32.mxu0 %v7915
    %7985 = vmatmul.mubr.f32.gmra.mrb[0].mxu0 %v7885
    %v7986 = vpop.f32.mrb[0].mxu0
    %v7987 = vadd.f32 0.0, %v7986
    %v7988 = vpop.f32.mrb[0].mxu0
    %7989 = vdwg.mxu0
    %v7990 = vadd.f32 %v7862, %v7987
    %7993 = vrot.lane.b32.xlu0 %v5580, 127
    %v7994 = vpop.permute.xlu0 %7993
    %7995 = vrot.lane.b32.xlu0 %v5581, 127
    %v7996 = vpop.permute.xlu0 %7995
    %v7997 = vsel %vm332, %v7994, %v7996
    %v8000 = vmax.f32 %v5580, %v7997
    %v8001 = vmax.f32 %v5581, %v7996
    %8004 = vrot.lane.b32.xlu0 %v8000, 112
    %v8005 = vpop.permute.xlu0 %8004
    %8006 = vrot.lane.b32.xlu0 %v8001, 112
    %v8007 = vpop.permute.xlu0 %8006
    %v8008 = vsel %vm3589, %v8005, %v8007
    %v8011 = vmax.f32 %v8000, %v8008
    %v8012 = vmax.f32 %v8001, %v8007
    %s8013 = scalar_lea.vmem %s6, 624
    %v8014 = vld [vmem:[%s8013] sm:$0xff]
    %v8015 = vld [vmem:[%s8013 + $0x8] sm:$0xff]
    %v8016 = vld [vmem:[%s8013 + $0x10] sm:$0xff]
    %v8017 = vld [vmem:[%s8013 + $0x18] sm:$0xff]
    %v8018 = vld [vmem:[%s8013 + $0x20] sm:$0xff]
    %v8019 = vld [vmem:[%s8013 + $0x28] sm:$0xff]
    %v8020 = vld [vmem:[%s8013 + $0x30] sm:$0xff]
    %v8021 = vld [vmem:[%s8013 + $0x38] sm:$0xff]
    %v8022 = vld [vmem:[%s8013 + $0x40] sm:$0xff]
    %v8023 = vld [vmem:[%s8013 + $0x48] sm:$0xff]
    %v8024 = vld [vmem:[%s8013 + $0x50] sm:$0xff]
    %v8025 = vld [vmem:[%s8013 + $0x58] sm:$0xff]
    %v8026 = vld [vmem:[%s8013 + $0x60] sm:$0xff]
    %v8027 = vld [vmem:[%s8013 + $0x68] sm:$0xff]
    %v8028 = vld [vmem:[%s8013 + $0x70] sm:$0xff]
    %v8029 = vld [vmem:[%s8013 + $0x78] sm:$0xff]
    %v8030 = vld [vmem:[%s8013 + $0x80] sm:$0xff]
    %v8031 = vld [vmem:[%s8013 + $0x88] sm:$0xff]
    %v8032 = vld [vmem:[%s8013 + $0x90] sm:$0xff]
    %v8033 = vld [vmem:[%s8013 + $0x98] sm:$0xff]
    %v8034 = vld [vmem:[%s8013 + $0xa0] sm:$0xff]
    %v8035 = vld [vmem:[%s8013 + $0xa8] sm:$0xff]
    %v8036 = vld [vmem:[%s8013 + $0xb0] sm:$0xff]
    %v8037 = vld [vmem:[%s8013 + $0xb8] sm:$0xff]
    %v8038 = vld [vmem:[%s8013 + $0xc0] sm:$0xff]
    %v8039 = vld [vmem:[%s8013 + $0xc8] sm:$0x1f]
    %v8041 = vsel %vm7711, %v8012, 0
    %v8044 = vsel %vm7715, %v8039, 0
    %8046 = vmatprep.subr.mxu0 0.0
    %8047 = vmatpush1.msra.mxu0 %v8014
    %8048 = vmatprep.subr.mxu0 0.0
    %8049 = vmatpush1.msra.mxu0 %v8015
    %8050 = vmatprep.subr.mxu0 0.0
    %8051 = vmatpush1.msra.mxu0 %v8016
    %8052 = vmatprep.subr.mxu0 0.0
    %8053 = vmatpush1.msra.mxu0 %v8017
    %8054 = vmatprep.subr.mxu0 0.0
    %8055 = vmatpush1.msra.mxu0 %v8018
    %8056 = vmatprep.subr.mxu0 0.0
    %8057 = vmatpush1.msra.mxu0 %v8019
    %8058 = vmatprep.subr.mxu0 0.0
    %8059 = vmatpush1.msra.mxu0 %v8020
    %8060 = vmatprep.subr.mxu0 0.0
    %8061 = vmatpush1.msra.mxu0 %v8021
    %8062 = vmatprep.subr.mxu0 0.0
    %8063 = vmatpush1.msra.mxu0 %v8022
    %8064 = vmatprep.subr.mxu0 0.0
    %8065 = vmatpush1.msra.mxu0 %v8023
    %8066 = vmatprep.subr.mxu0 0.0
    %8067 = vmatpush1.msra.mxu0 %v8024
    %8068 = vmatprep.subr.mxu0 0.0
    %8069 = vmatpush1.msra.mxu0 %v8025
    %8070 = vmatprep.subr.mxu0 0.0
    %8071 = vmatpush1.msra.mxu0 %v8026
    %8072 = vmatprep.subr.mxu0 0.0
    %8073 = vmatpush1.msra.mxu0 %v8027
    %8074 = vmatprep.subr.mxu0 0.0
    %8075 = vmatpush1.msra.mxu0 %v8028
    %8076 = vmatprep.subr.mxu0 0.0
    %8077 = vmatpush1.msra.mxu0 %v8029
    %8078 = vmatprep.subr.mxu0 0.0
    %8079 = vmatpush1.msra.mxu0 %v8030
    %8080 = vmatprep.subr.mxu0 0.0
    %8081 = vmatpush1.msra.mxu0 %v8031
    %8082 = vmatprep.subr.mxu0 0.0
    %8083 = vmatpush1.msra.mxu0 %v8032
    %8084 = vmatprep.subr.mxu0 0.0
    %8085 = vmatpush1.msra.mxu0 %v8033
    %8086 = vmatprep.subr.mxu0 0.0
    %8087 = vmatpush1.msra.mxu0 %v8034
    %8088 = vmatprep.subr.mxu0 0.0
    %8089 = vmatpush1.msra.mxu0 %v8035
    %8090 = vmatprep.subr.mxu0 0.0
    %8091 = vmatpush1.msra.mxu0 %v8036
    %8092 = vmatprep.subr.mxu0 0.0
    %8093 = vmatpush1.msra.mxu0 %v8037
    %8094 = vmatprep.subr.mxu0 0.0
    %8095 = vmatpush1.msra.mxu0 %v8038
    %8096 = vmatprep.subr.mxu0 0.0
    %8097 = vmatpush1.msra.mxu0 %v8044
    %8098 = vmatprep.subr.mxu0 0.0
    %8099 = vmatpush1.msra.mxu0 0.0
    %8100 = vmatprep.subr.mxu0 0.0
    %8101 = vmatpush1.msra.mxu0 0.0
    %8102 = vmatprep.subr.mxu0 0.0
    %8103 = vmatpush1.msra.mxu0 0.0
    %8104 = vmatprep.subr.mxu0 0.0
    %8105 = vmatpush1.msra.mxu0 0.0
    %8106 = vmatprep.subr.mxu0 0.0
    %8107 = vmatpush1.msra.mxu0 0.0
    %8108 = vmatprep.subr.mxu0 0.0
    %8109 = vmatpush1.msra.mxu0 0.0
    %8110 = vmatprep.mubr.f32.mxu0 %v8041
    %8111 = vmatmul.mubr.f32.gmra.mrb[0].mxu0 %v8011
    %v8112 = vpop.f32.mrb[0].mxu0
    %v8113 = vadd.f32 0.0, %v8112
    %v8114 = vpop.f32.mrb[0].mxu0
    %8115 = vdwg.mxu0
    %v8116 = vadd.f32 %v7990, %v8113
    %8119 = vrot.lane.b32.xlu0 %v6088, 127
    %v8120 = vpop.permute.xlu0 %8119
    %8121 = vrot.lane.b32.xlu0 %v6089, 127
    %v8122 = vpop.permute.xlu0 %8121
    %v8123 = vsel %vm332, %v8120, %v8122
    %v8126 = vmax.f32 %v6088, %v8123
    %v8127 = vmax.f32 %v6089, %v8122
    %8130 = vrot.lane.b32.xlu0 %v8126, 112
    %v8131 = vpop.permute.xlu0 %8130
    %8132 = vrot.lane.b32.xlu0 %v8127, 112
    %v8133 = vpop.permute.xlu0 %8132
    %v8134 = vsel %vm3589, %v8131, %v8133
    %v8137 = vmax.f32 %v8126, %v8134
    %v8138 = vmax.f32 %v8127, %v8133
    %s8139 = scalar_lea.vmem %s6, 832
    %v8140 = vld [vmem:[%s8139] sm:$0xff]
    %v8141 = vld [vmem:[%s8139 + $0x8] sm:$0xff]
    %v8142 = vld [vmem:[%s8139 + $0x10] sm:$0xff]
    %v8143 = vld [vmem:[%s8139 + $0x18] sm:$0xff]
    %v8144 = vld [vmem:[%s8139 + $0x20] sm:$0xff]
    %v8145 = vld [vmem:[%s8139 + $0x28] sm:$0xff]
    %v8146 = vld [vmem:[%s8139 + $0x30] sm:$0xff]
    %v8147 = vld [vmem:[%s8139 + $0x38] sm:$0xff]
    %v8148 = vld [vmem:[%s8139 + $0x40] sm:$0xff]
    %v8149 = vld [vmem:[%s8139 + $0x48] sm:$0xff]
    %v8150 = vld [vmem:[%s8139 + $0x50] sm:$0xff]
    %v8151 = vld [vmem:[%s8139 + $0x58] sm:$0xff]
    %v8152 = vld [vmem:[%s8139 + $0x60] sm:$0xff]
    %v8153 = vld [vmem:[%s8139 + $0x68] sm:$0xff]
    %v8154 = vld [vmem:[%s8139 + $0x70] sm:$0xff]
    %v8155 = vld [vmem:[%s8139 + $0x78] sm:$0xff]
    %v8156 = vld [vmem:[%s8139 + $0x80] sm:$0xff]
    %v8157 = vld [vmem:[%s8139 + $0x88] sm:$0xff]
    %v8158 = vld [vmem:[%s8139 + $0x90] sm:$0xff]
    %v8159 = vld [vmem:[%s8139 + $0x98] sm:$0xff]
    %v8160 = vld [vmem:[%s8139 + $0xa0] sm:$0xff]
    %v8161 = vld [vmem:[%s8139 + $0xa8] sm:$0xff]
    %v8162 = vld [vmem:[%s8139 + $0xb0] sm:$0xff]
    %v8163 = vld [vmem:[%s8139 + $0xb8] sm:$0xff]
    %v8164 = vld [vmem:[%s8139 + $0xc0] sm:$0xff]
    %v8165 = vld [vmem:[%s8139 + $0xc8] sm:$0x1f]
    %v8167 = vsel %vm7711, %v8138, 0
    %v8170 = vsel %vm7715, %v8165, 0
    %8172 = vmatprep.subr.mxu0 0.0
    %8173 = vmatpush1.msra.mxu0 %v8140
    %8174 = vmatprep.subr.mxu0 0.0
    %8175 = vmatpush1.msra.mxu0 %v8141
    %8176 = vmatprep.subr.mxu0 0.0
    %8177 = vmatpush1.msra.mxu0 %v8142
    %8178 = vmatprep.subr.mxu0 0.0
    %8179 = vmatpush1.msra.mxu0 %v8143
    %8180 = vmatprep.subr.mxu0 0.0
    %8181 = vmatpush1.msra.mxu0 %v8144
    %8182 = vmatprep.subr.mxu0 0.0
    %8183 = vmatpush1.msra.mxu0 %v8145
    %8184 = vmatprep.subr.mxu0 0.0
    %8185 = vmatpush1.msra.mxu0 %v8146
    %8186 = vmatprep.subr.mxu0 0.0
    %8187 = vmatpush1.msra.mxu0 %v8147
    %8188 = vmatprep.subr.mxu0 0.0
    %8189 = vmatpush1.msra.mxu0 %v8148
    %8190 = vmatprep.subr.mxu0 0.0
    %8191 = vmatpush1.msra.mxu0 %v8149
    %8192 = vmatprep.subr.mxu0 0.0
    %8193 = vmatpush1.msra.mxu0 %v8150
    %8194 = vmatprep.subr.mxu0 0.0
    %8195 = vmatpush1.msra.mxu0 %v8151
    %8196 = vmatprep.subr.mxu0 0.0
    %8197 = vmatpush1.msra.mxu0 %v8152
    %8198 = vmatprep.subr.mxu0 0.0
    %8199 = vmatpush1.msra.mxu0 %v8153
    %8200 = vmatprep.subr.mxu0 0.0
    %8201 = vmatpush1.msra.mxu0 %v8154
    %8202 = vmatprep.subr.mxu0 0.0
    %8203 = vmatpush1.msra.mxu0 %v8155
    %8204 = vmatprep.subr.mxu0 0.0
    %8205 = vmatpush1.msra.mxu0 %v8156
    %8206 = vmatprep.subr.mxu0 0.0
    %8207 = vmatpush1.msra.mxu0 %v8157
    %8208 = vmatprep.subr.mxu0 0.0
    %8209 = vmatpush1.msra.mxu0 %v8158
    %8210 = vmatprep.subr.mxu0 0.0
    %8211 = vmatpush1.msra.mxu0 %v8159
    %8212 = vmatprep.subr.mxu0 0.0
    %8213 = vmatpush1.msra.mxu0 %v8160
    %8214 = vmatprep.subr.mxu0 0.0
    %8215 = vmatpush1.msra.mxu0 %v8161
    %8216 = vmatprep.subr.mxu0 0.0
    %8217 = vmatpush1.msra.mxu0 %v8162
    %8218 = vmatprep.subr.mxu0 0.0
    %8219 = vmatpush1.msra.mxu0 %v8163
    %8220 = vmatprep.subr.mxu0 0.0
    %8221 = vmatpush1.msra.mxu0 %v8164
    %8222 = vmatprep.subr.mxu0 0.0
    %8223 = vmatpush1.msra.mxu0 %v8170
    %8224 = vmatprep.subr.mxu0 0.0
    %8225 = vmatpush1.msra.mxu0 0.0
    %8226 = vmatprep.subr.mxu0 0.0
    %8227 = vmatpush1.msra.mxu0 0.0
    %8228 = vmatprep.subr.mxu0 0.0
    %8229 = vmatpush1.msra.mxu0 0.0
    %8230 = vmatprep.subr.mxu0 0.0
    %8231 = vmatpush1.msra.mxu0 0.0
    %8232 = vmatprep.subr.mxu0 0.0
    %8233 = vmatpush1.msra.mxu0 0.0
    %8234 = vmatprep.subr.mxu0 0.0
    %8235 = vmatpush1.msra.mxu0 0.0
    %8236 = vmatprep.mubr.f32.mxu0 %v8167
    %8237 = vmatmul.mubr.f32.gmra.mrb[0].mxu0 %v8137
    %v8238 = vpop.f32.mrb[0].mxu0
    %v8239 = vadd.f32 0.0, %v8238
    %v8240 = vpop.f32.mrb[0].mxu0
    %8241 = vdwg.mxu0
    %v8242 = vadd.f32 %v8116, %v8239
    %8245 = vrot.lane.b32.xlu0 %v6596, 127
    %v8246 = vpop.permute.xlu0 %8245
    %8247 = vrot.lane.b32.xlu0 %v6597, 127
    %v8248 = vpop.permute.xlu0 %8247
    %v8249 = vsel %vm332, %v8246, %v8248
    %v8252 = vmax.f32 %v6596, %v8249
    %v8253 = vmax.f32 %v6597, %v8248
    %8256 = vrot.lane.b32.xlu0 %v8252, 112
    %v8257 = vpop.permute.xlu0 %8256
    %8258 = vrot.lane.b32.xlu0 %v8253, 112
    %v8259 = vpop.permute.xlu0 %8258
    %v8260 = vsel %vm3589, %v8257, %v8259
    %v8263 = vmax.f32 %v8252, %v8260
    %v8264 = vmax.f32 %v8253, %v8259
    %s8265 = scalar_lea.vmem %s6, 1040
    %v8266 = vld [vmem:[%s8265] sm:$0xff]
    %v8267 = vld [vmem:[%s8265 + $0x8] sm:$0xff]
    %v8268 = vld [vmem:[%s8265 + $0x10] sm:$0xff]
    %v8269 = vld [vmem:[%s8265 + $0x18] sm:$0xff]
    %v8270 = vld [vmem:[%s8265 + $0x20] sm:$0xff]
    %v8271 = vld [vmem:[%s8265 + $0x28] sm:$0xff]
    %v8272 = vld [vmem:[%s8265 + $0x30] sm:$0xff]
    %v8273 = vld [vmem:[%s8265 + $0x38] sm:$0xff]
    %v8274 = vld [vmem:[%s8265 + $0x40] sm:$0xff]
    %v8275 = vld [vmem:[%s8265 + $0x48] sm:$0xff]
    %v8276 = vld [vmem:[%s8265 + $0x50] sm:$0xff]
    %v8277 = vld [vmem:[%s8265 + $0x58] sm:$0xff]
    %v8278 = vld [vmem:[%s8265 + $0x60] sm:$0xff]
    %v8279 = vld [vmem:[%s8265 + $0x68] sm:$0xff]
    %v8280 = vld [vmem:[%s8265 + $0x70] sm:$0xff]
    %v8281 = vld [vmem:[%s8265 + $0x78] sm:$0xff]
    %v8282 = vld [vmem:[%s8265 + $0x80] sm:$0xff]
    %v8283 = vld [vmem:[%s8265 + $0x88] sm:$0xff]
    %v8284 = vld [vmem:[%s8265 + $0x90] sm:$0xff]
    %v8285 = vld [vmem:[%s8265 + $0x98] sm:$0xff]
    %v8286 = vld [vmem:[%s8265 + $0xa0] sm:$0xff]
    %v8287 = vld [vmem:[%s8265 + $0xa8] sm:$0xff]
    %v8288 = vld [vmem:[%s8265 + $0xb0] sm:$0xff]
    %v8289 = vld [vmem:[%s8265 + $0xb8] sm:$0xff]
    %v8290 = vld [vmem:[%s8265 + $0xc0] sm:$0xff]
    %v8291 = vld [vmem:[%s8265 + $0xc8] sm:$0x1f]
    %v8293 = vsel %vm7711, %v8264, 0
    %v8296 = vsel %vm7715, %v8291, 0
    %8298 = vmatprep.subr.mxu0 0.0
    %8299 = vmatpush1.msra.mxu0 %v8266
    %8300 = vmatprep.subr.mxu0 0.0
    %8301 = vmatpush1.msra.mxu0 %v8267
    %8302 = vmatprep.subr.mxu0 0.0
    %8303 = vmatpush1.msra.mxu0 %v8268
    %8304 = vmatprep.subr.mxu0 0.0
    %8305 = vmatpush1.msra.mxu0 %v8269
    %8306 = vmatprep.subr.mxu0 0.0
    %8307 = vmatpush1.msra.mxu0 %v8270
    %8308 = vmatprep.subr.mxu0 0.0
    %8309 = vmatpush1.msra.mxu0 %v8271
    %8310 = vmatprep.subr.mxu0 0.0
    %8311 = vmatpush1.msra.mxu0 %v8272
    %8312 = vmatprep.subr.mxu0 0.0
    %8313 = vmatpush1.msra.mxu0 %v8273
    %8314 = vmatprep.subr.mxu0 0.0
    %8315 = vmatpush1.msra.mxu0 %v8274
    %8316 = vmatprep.subr.mxu0 0.0
    %8317 = vmatpush1.msra.mxu0 %v8275
    %8318 = vmatprep.subr.mxu0 0.0
    %8319 = vmatpush1.msra.mxu0 %v8276
    %8320 = vmatprep.subr.mxu0 0.0
    %8321 = vmatpush1.msra.mxu0 %v8277
    %8322 = vmatprep.subr.mxu0 0.0
    %8323 = vmatpush1.msra.mxu0 %v8278
    %8324 = vmatprep.subr.mxu0 0.0
    %8325 = vmatpush1.msra.mxu0 %v8279
    %8326 = vmatprep.subr.mxu0 0.0
    %8327 = vmatpush1.msra.mxu0 %v8280
    %8328 = vmatprep.subr.mxu0 0.0
    %8329 = vmatpush1.msra.mxu0 %v8281
    %8330 = vmatprep.subr.mxu0 0.0
    %8331 = vmatpush1.msra.mxu0 %v8282
    %8332 = vmatprep.subr.mxu0 0.0
    %8333 = vmatpush1.msra.mxu0 %v8283
    %8334 = vmatprep.subr.mxu0 0.0
    %8335 = vmatpush1.msra.mxu0 %v8284
    %8336 = vmatprep.subr.mxu0 0.0
    %8337 = vmatpush1.msra.mxu0 %v8285
    %8338 = vmatprep.subr.mxu0 0.0
    %8339 = vmatpush1.msra.mxu0 %v8286
    %8340 = vmatprep.subr.mxu0 0.0
    %8341 = vmatpush1.msra.mxu0 %v8287
    %8342 = vmatprep.subr.mxu0 0.0
    %8343 = vmatpush1.msra.mxu0 %v8288
    %8344 = vmatprep.subr.mxu0 0.0
    %8345 = vmatpush1.msra.mxu0 %v8289
    %8346 = vmatprep.subr.mxu0 0.0
    %8347 = vmatpush1.msra.mxu0 %v8290
    %8348 = vmatprep.subr.mxu0 0.0
    %8349 = vmatpush1.msra.mxu0 %v8296
    %8350 = vmatprep.subr.mxu0 0.0
    %8351 = vmatpush1.msra.mxu0 0.0
    %8352 = vmatprep.subr.mxu0 0.0
    %8353 = vmatpush1.msra.mxu0 0.0
    %8354 = vmatprep.subr.mxu0 0.0
    %8355 = vmatpush1.msra.mxu0 0.0
    %8356 = vmatprep.subr.mxu0 0.0
    %8357 = vmatpush1.msra.mxu0 0.0
    %8358 = vmatprep.subr.mxu0 0.0
    %8359 = vmatpush1.msra.mxu0 0.0
    %8360 = vmatprep.subr.mxu0 0.0
    %8361 = vmatpush1.msra.mxu0 0.0
    %8362 = vmatprep.mubr.f32.mxu0 %v8293
    %8363 = vmatmul.mubr.f32.gmra.mrb[0].mxu0 %v8263
    %v8364 = vpop.f32.mrb[0].mxu0
    %v8365 = vadd.f32 0.0, %v8364
    %v8366 = vpop.f32.mrb[0].mxu0
    %8367 = vdwg.mxu0
    %v8368 = vadd.f32 %v8242, %v8365
    %8371 = vrot.lane.b32.xlu0 %v7104, 127
    %v8372 = vpop.permute.xlu0 %8371
    %8373 = vrot.lane.b32.xlu0 %v7105, 127
    %v8374 = vpop.permute.xlu0 %8373
    %v8375 = vsel %vm332, %v8372, %v8374
    %v8378 = vmax.f32 %v7104, %v8375
    %v8379 = vmax.f32 %v7105, %v8374
    %8382 = vrot.lane.b32.xlu0 %v8378, 112
    %v8383 = vpop.permute.xlu0 %8382
    %8384 = vrot.lane.b32.xlu0 %v8379, 112
    %v8385 = vpop.permute.xlu0 %8384
    %v8386 = vsel %vm3589, %v8383, %v8385
    %v8389 = vmax.f32 %v8378, %v8386
    %v8390 = vmax.f32 %v8379, %v8385
    %s8391 = scalar_lea.vmem %s6, 1248
    %v8392 = vld [vmem:[%s8391] sm:$0xff]
    %v8393 = vld [vmem:[%s8391 + $0x8] sm:$0xff]
    %v8394 = vld [vmem:[%s8391 + $0x10] sm:$0xff]
    %v8395 = vld [vmem:[%s8391 + $0x18] sm:$0xff]
    %v8396 = vld [vmem:[%s8391 + $0x20] sm:$0xff]
    %v8397 = vld [vmem:[%s8391 + $0x28] sm:$0xff]
    %v8398 = vld [vmem:[%s8391 + $0x30] sm:$0xff]
    %v8399 = vld [vmem:[%s8391 + $0x38] sm:$0xff]
    %v8400 = vld [vmem:[%s8391 + $0x40] sm:$0xff]
    %v8401 = vld [vmem:[%s8391 + $0x48] sm:$0xff]
    %v8402 = vld [vmem:[%s8391 + $0x50] sm:$0xff]
    %v8403 = vld [vmem:[%s8391 + $0x58] sm:$0xff]
    %v8404 = vld [vmem:[%s8391 + $0x60] sm:$0xff]
    %v8405 = vld [vmem:[%s8391 + $0x68] sm:$0xff]
    %v8406 = vld [vmem:[%s8391 + $0x70] sm:$0xff]
    %v8407 = vld [vmem:[%s8391 + $0x78] sm:$0xff]
    %v8408 = vld [vmem:[%s8391 + $0x80] sm:$0xff]
    %v8409 = vld [vmem:[%s8391 + $0x88] sm:$0xff]
    %v8410 = vld [vmem:[%s8391 + $0x90] sm:$0xff]
    %v8411 = vld [vmem:[%s8391 + $0x98] sm:$0xff]
    %v8412 = vld [vmem:[%s8391 + $0xa0] sm:$0xff]
    %v8413 = vld [vmem:[%s8391 + $0xa8] sm:$0xff]
    %v8414 = vld [vmem:[%s8391 + $0xb0] sm:$0xff]
    %v8415 = vld [vmem:[%s8391 + $0xb8] sm:$0xff]
    %v8416 = vld [vmem:[%s8391 + $0xc0] sm:$0xff]
    %v8417 = vld [vmem:[%s8391 + $0xc8] sm:$0x1f]
    %v8419 = vsel %vm7711, %v8390, 0
    %v8422 = vsel %vm7715, %v8417, 0
    %8424 = vmatprep.subr.mxu0 0.0
    %8425 = vmatpush1.msra.mxu0 %v8392
    %8426 = vmatprep.subr.mxu0 0.0
    %8427 = vmatpush1.msra.mxu0 %v8393
    %8428 = vmatprep.subr.mxu0 0.0
    %8429 = vmatpush1.msra.mxu0 %v8394
    %8430 = vmatprep.subr.mxu0 0.0
    %8431 = vmatpush1.msra.mxu0 %v8395
    %8432 = vmatprep.subr.mxu0 0.0
    %8433 = vmatpush1.msra.mxu0 %v8396
    %8434 = vmatprep.subr.mxu0 0.0
    %8435 = vmatpush1.msra.mxu0 %v8397
    %8436 = vmatprep.subr.mxu0 0.0
    %8437 = vmatpush1.msra.mxu0 %v8398
    %8438 = vmatprep.subr.mxu0 0.0
    %8439 = vmatpush1.msra.mxu0 %v8399
    %8440 = vmatprep.subr.mxu0 0.0
    %8441 = vmatpush1.msra.mxu0 %v8400
    %8442 = vmatprep.subr.mxu0 0.0
    %8443 = vmatpush1.msra.mxu0 %v8401
    %8444 = vmatprep.subr.mxu0 0.0
    %8445 = vmatpush1.msra.mxu0 %v8402
    %8446 = vmatprep.subr.mxu0 0.0
    %8447 = vmatpush1.msra.mxu0 %v8403
    %8448 = vmatprep.subr.mxu0 0.0
    %8449 = vmatpush1.msra.mxu0 %v8404
    %8450 = vmatprep.subr.mxu0 0.0
    %8451 = vmatpush1.msra.mxu0 %v8405
    %8452 = vmatprep.subr.mxu0 0.0
    %8453 = vmatpush1.msra.mxu0 %v8406
    %8454 = vmatprep.subr.mxu0 0.0
    %8455 = vmatpush1.msra.mxu0 %v8407
    %8456 = vmatprep.subr.mxu0 0.0
    %8457 = vmatpush1.msra.mxu0 %v8408
    %8458 = vmatprep.subr.mxu0 0.0
    %8459 = vmatpush1.msra.mxu0 %v8409
    %8460 = vmatprep.subr.mxu0 0.0
    %8461 = vmatpush1.msra.mxu0 %v8410
    %8462 = vmatprep.subr.mxu0 0.0
    %8463 = vmatpush1.msra.mxu0 %v8411
    %8464 = vmatprep.subr.mxu0 0.0
    %8465 = vmatpush1.msra.mxu0 %v8412
    %8466 = vmatprep.subr.mxu0 0.0
    %8467 = vmatpush1.msra.mxu0 %v8413
    %8468 = vmatprep.subr.mxu0 0.0
    %8469 = vmatpush1.msra.mxu0 %v8414
    %8470 = vmatprep.subr.mxu0 0.0
    %8471 = vmatpush1.msra.mxu0 %v8415
    %8472 = vmatprep.subr.mxu0 0.0
    %8473 = vmatpush1.msra.mxu0 %v8416
    %8474 = vmatprep.subr.mxu0 0.0
    %8475 = vmatpush1.msra.mxu0 %v8422
    %8476 = vmatprep.subr.mxu0 0.0
    %8477 = vmatpush1.msra.mxu0 0.0
    %8478 = vmatprep.subr.mxu0 0.0
    %8479 = vmatpush1.msra.mxu0 0.0
    %8480 = vmatprep.subr.mxu0 0.0
    %8481 = vmatpush1.msra.mxu0 0.0
    %8482 = vmatprep.subr.mxu0 0.0
    %8483 = vmatpush1.msra.mxu0 0.0
    %8484 = vmatprep.subr.mxu0 0.0
    %8485 = vmatpush1.msra.mxu0 0.0
    %8486 = vmatprep.subr.mxu0 0.0
    %8487 = vmatpush1.msra.mxu0 0.0
    %8488 = vmatprep.mubr.f32.mxu0 %v8419
    %8489 = vmatmul.mubr.f32.gmra.mrb[0].mxu0 %v8389
    %v8490 = vpop.f32.mrb[0].mxu0
    %v8491 = vadd.f32 0.0, %v8490
    %v8492 = vpop.f32.mrb[0].mxu0
    %8493 = vdwg.mxu0
    %v8494 = vadd.f32 %v8368, %v8491
    %8497 = vrot.lane.b32.xlu0 %v7612, 127
    %v8498 = vpop.permute.xlu0 %8497
    %8499 = vrot.lane.b32.xlu0 %v7613, 127
    %v8500 = vpop.permute.xlu0 %8499
    %v8501 = vsel %vm332, %v8498, %v8500
    %v8504 = vmax.f32 %v7612, %v8501
    %v8505 = vmax.f32 %v7613, %v8500
    %8508 = vrot.lane.b32.xlu0 %v8504, 112
    %v8509 = vpop.permute.xlu0 %8508
    %8510 = vrot.lane.b32.xlu0 %v8505, 112
    %v8511 = vpop.permute.xlu0 %8510
    %v8512 = vsel %vm3589, %v8509, %v8511
    %v8515 = vmax.f32 %v8504, %v8512
    %v8516 = vmax.f32 %v8505, %v8511
    %s8517 = scalar_lea.vmem %s6, 1456
    %v8518 = vld [vmem:[%s8517] sm:$0xff]
    %v8519 = vld [vmem:[%s8517 + $0x8] sm:$0xff]
    %v8520 = vld [vmem:[%s8517 + $0x10] sm:$0xff]
    %v8521 = vld [vmem:[%s8517 + $0x18] sm:$0xff]
    %v8522 = vld [vmem:[%s8517 + $0x20] sm:$0xff]
    %v8523 = vld [vmem:[%s8517 + $0x28] sm:$0xff]
    %v8524 = vld [vmem:[%s8517 + $0x30] sm:$0xff]
    %v8525 = vld [vmem:[%s8517 + $0x38] sm:$0xff]
    %v8526 = vld [vmem:[%s8517 + $0x40] sm:$0xff]
    %v8527 = vld [vmem:[%s8517 + $0x48] sm:$0xff]
    %v8528 = vld [vmem:[%s8517 + $0x50] sm:$0xff]
    %v8529 = vld [vmem:[%s8517 + $0x58] sm:$0xff]
    %v8530 = vld [vmem:[%s8517 + $0x60] sm:$0xff]
    %v8531 = vld [vmem:[%s8517 + $0x68] sm:$0xff]
    %v8532 = vld [vmem:[%s8517 + $0x70] sm:$0xff]
    %v8533 = vld [vmem:[%s8517 + $0x78] sm:$0xff]
    %v8534 = vld [vmem:[%s8517 + $0x80] sm:$0xff]
    %v8535 = vld [vmem:[%s8517 + $0x88] sm:$0xff]
    %v8536 = vld [vmem:[%s8517 + $0x90] sm:$0xff]
    %v8537 = vld [vmem:[%s8517 + $0x98] sm:$0xff]
    %v8538 = vld [vmem:[%s8517 + $0xa0] sm:$0xff]
    %v8539 = vld [vmem:[%s8517 + $0xa8] sm:$0xff]
    %v8540 = vld [vmem:[%s8517 + $0xb0] sm:$0xff]
    %v8541 = vld [vmem:[%s8517 + $0xb8] sm:$0xff]
    %v8542 = vld [vmem:[%s8517 + $0xc0] sm:$0xff]
    %v8543 = vld [vmem:[%s8517 + $0xc8] sm:$0x1f]
    %v8545 = vsel %vm7711, %v8516, 0
    %v8548 = vsel %vm7715, %v8543, 0
    %8550 = vmatprep.subr.mxu0 0.0
    %8551 = vmatpush1.msra.mxu0 %v8518
    %8552 = vmatprep.subr.mxu0 0.0
    %8553 = vmatpush1.msra.mxu0 %v8519
    %8554 = vmatprep.subr.mxu0 0.0
    %8555 = vmatpush1.msra.mxu0 %v8520
    %8556 = vmatprep.subr.mxu0 0.0
    %8557 = vmatpush1.msra.mxu0 %v8521
    %8558 = vmatprep.subr.mxu0 0.0
    %8559 = vmatpush1.msra.mxu0 %v8522
    %8560 = vmatprep.subr.mxu0 0.0
    %8561 = vmatpush1.msra.mxu0 %v8523
    %8562 = vmatprep.subr.mxu0 0.0
    %8563 = vmatpush1.msra.mxu0 %v8524
    %8564 = vmatprep.subr.mxu0 0.0
    %8565 = vmatpush1.msra.mxu0 %v8525
    %8566 = vmatprep.subr.mxu0 0.0
    %8567 = vmatpush1.msra.mxu0 %v8526
    %8568 = vmatprep.subr.mxu0 0.0
    %8569 = vmatpush1.msra.mxu0 %v8527
    %8570 = vmatprep.subr.mxu0 0.0
    %8571 = vmatpush1.msra.mxu0 %v8528
    %8572 = vmatprep.subr.mxu0 0.0
    %8573 = vmatpush1.msra.mxu0 %v8529
    %8574 = vmatprep.subr.mxu0 0.0
    %8575 = vmatpush1.msra.mxu0 %v8530
    %8576 = vmatprep.subr.mxu0 0.0
    %8577 = vmatpush1.msra.mxu0 %v8531
    %8578 = vmatprep.subr.mxu0 0.0
    %8579 = vmatpush1.msra.mxu0 %v8532
    %8580 = vmatprep.subr.mxu0 0.0
    %8581 = vmatpush1.msra.mxu0 %v8533
    %8582 = vmatprep.subr.mxu0 0.0
    %8583 = vmatpush1.msra.mxu0 %v8534
    %8584 = vmatprep.subr.mxu0 0.0
    %8585 = vmatpush1.msra.mxu0 %v8535
    %8586 = vmatprep.subr.mxu0 0.0
    %8587 = vmatpush1.msra.mxu0 %v8536
    %8588 = vmatprep.subr.mxu0 0.0
    %8589 = vmatpush1.msra.mxu0 %v8537
    %8590 = vmatprep.subr.mxu0 0.0
    %8591 = vmatpush1.msra.mxu0 %v8538
    %8592 = vmatprep.subr.mxu0 0.0
    %8593 = vmatpush1.msra.mxu0 %v8539
    %8594 = vmatprep.subr.mxu0 0.0
    %8595 = vmatpush1.msra.mxu0 %v8540
    %8596 = vmatprep.subr.mxu0 0.0
    %8597 = vmatpush1.msra.mxu0 %v8541
    %8598 = vmatprep.subr.mxu0 0.0
    %8599 = vmatpush1.msra.mxu0 %v8542
    %8600 = vmatprep.subr.mxu0 0.0
    %8601 = vmatpush1.msra.mxu0 %v8548
    %8602 = vmatprep.subr.mxu0 0.0
    %8603 = vmatpush1.msra.mxu0 0.0
    %8604 = vmatprep.subr.mxu0 0.0
    %8605 = vmatpush1.msra.mxu0 0.0
    %8606 = vmatprep.subr.mxu0 0.0
    %8607 = vmatpush1.msra.mxu0 0.0
    %8608 = vmatprep.subr.mxu0 0.0
    %8609 = vmatpush1.msra.mxu0 0.0
    %8610 = vmatprep.subr.mxu0 0.0
    %8611 = vmatpush1.msra.mxu0 0.0
    %8612 = vmatprep.subr.mxu0 0.0
    %8613 = vmatpush1.msra.mxu0 0.0
    %8614 = vmatprep.mubr.f32.mxu0 %v8545
    %8615 = vmatmul.mubr.f32.gmra.mrb[0].mxu0 %v8515
    %v8616 = vpop.f32.mrb[0].mxu0
    %v8617 = vadd.f32 0.0, %v8616
    %v8618 = vpop.f32.mrb[0].mxu0
    %8619 = vdwg.mxu0
    %v8620 = vadd.f32 %v8494, %v8617
    %v8621 = vld [vmem:[%s7] sm:$0x1]
    %v8623 = vlaneseq
    %v8624 = vshrl.u32 %v8623, 7
    %v8625 = vsub.s32 0, %v8624
    %v8626 = vrot.slane %v8621, %v8625
    %v8628 = vadd.f32 %v8620, %v8626
    %v8629 = vmax.f32 %v8628, 0.0
    %v8630 = vld [vmem:[%s8] sm:$0xff]
    %v8631 = vld [vmem:[%s8 + $0x8] sm:$0xff]
    %v8632 = vld [vmem:[%s8 + $0x10] sm:$0xff]
    %v8633 = vld [vmem:[%s8 + $0x18] sm:$0xff]
    %v8634 = vld [vmem:[%s9] sm:$0x1]
    %v8636 = vlaneseq
    %v8637 = vshrl.u32 %v8636, 7
    %v8638 = vsub.s32 0, %v8637
    %v8639 = vrot.slane %v8634, %v8638
    %vm8641 = vcmask 261120
    %v8643 = vsel %vm8641, %v8629, 0
    %8645 = vmatprep.subr.mxu0 0.0
    %8646 = vmatpush1.msra.mxu0 %v8630
    %8647 = vmatprep.subr.mxu0 0.0
    %8648 = vmatpush1.msra.mxu0 %v8631
    %8649 = vmatprep.subr.mxu0 0.0
    %8650 = vmatpush1.msra.mxu0 %v8632
    %8651 = vmatprep.subr.mxu0 0.0
    %8652 = vmatpush1.msra.mxu0 %v8633
    %8653 = vmatprep.subr.mxu0 0.0
    %8654 = vmatpush1.msra.mxu0 0.0
    %8655 = vmatprep.subr.mxu0 0.0
    %8656 = vmatpush1.msra.mxu0 0.0
    %8657 = vmatprep.subr.mxu0 0.0
    %8658 = vmatpush1.msra.mxu0 0.0
    %8659 = vmatprep.subr.mxu0 0.0
    %8660 = vmatpush1.msra.mxu0 0.0
    %8661 = vmatprep.subr.mxu0 0.0
    %8662 = vmatpush1.msra.mxu0 0.0
    %8663 = vmatprep.subr.mxu0 0.0
    %8664 = vmatpush1.msra.mxu0 0.0
    %8665 = vmatprep.subr.mxu0 0.0
    %8666 = vmatpush1.msra.mxu0 0.0
    %8667 = vmatprep.subr.mxu0 0.0
    %8668 = vmatpush1.msra.mxu0 0.0
    %8669 = vmatprep.subr.mxu0 0.0
    %8670 = vmatpush1.msra.mxu0 0.0
    %8671 = vmatprep.subr.mxu0 0.0
    %8672 = vmatpush1.msra.mxu0 0.0
    %8673 = vmatprep.subr.mxu0 0.0
    %8674 = vmatpush1.msra.mxu0 0.0
    %8675 = vmatprep.subr.mxu0 0.0
    %8676 = vmatpush1.msra.mxu0 0.0
    %8677 = vmatprep.subr.mxu0 0.0
    %8678 = vmatpush1.msra.mxu0 0.0
    %8679 = vmatprep.subr.mxu0 0.0
    %8680 = vmatpush1.msra.mxu0 0.0
    %8681 = vmatprep.subr.mxu0 0.0
    %8682 = vmatpush1.msra.mxu0 0.0
    %8683 = vmatprep.subr.mxu0 0.0
    %8684 = vmatpush1.msra.mxu0 0.0
    %8685 = vmatprep.subr.mxu0 0.0
    %8686 = vmatpush1.msra.mxu0 0.0
    %8687 = vmatprep.subr.mxu0 0.0
    %8688 = vmatpush1.msra.mxu0 0.0
    %8689 = vmatprep.subr.mxu0 0.0
    %8690 = vmatpush1.msra.mxu0 0.0
    %8691 = vmatprep.subr.mxu0 0.0
    %8692 = vmatpush1.msra.mxu0 0.0
    %8693 = vmatprep.subr.mxu0 0.0
    %8694 = vmatpush1.msra.mxu0 0.0
    %8695 = vmatprep.subr.mxu0 0.0
    %8696 = vmatpush1.msra.mxu0 0.0
    %8697 = vmatprep.subr.mxu0 0.0
    %8698 = vmatpush1.msra.mxu0 0.0
    %8699 = vmatprep.subr.mxu0 0.0
    %8700 = vmatpush1.msra.mxu0 0.0
    %8701 = vmatprep.subr.mxu0 0.0
    %8702 = vmatpush1.msra.mxu0 0.0
    %8703 = vmatprep.subr.mxu0 0.0
    %8704 = vmatpush1.msra.mxu0 0.0
    %8705 = vmatprep.subr.mxu0 0.0
    %8706 = vmatpush1.msra.mxu0 0.0
    %8707 = vmatprep.subr.mxu0 0.0
    %8708 = vmatpush1.msra.mxu0 0.0
    %8709 = vmatprep.mubr.f32.mxu0 0.0
    %8710 = vmatmul.mubr.f32.gmra.mrb[0].mxu0 %v8643
    %v8711 = vpop.f32.mrb[0].mxu0
    %v8712 = vadd.f32 %v8639, %v8711
    %v8713 = vpop.f32.mrb[0].mxu0
    %8714 = vdwg.mxu0
    %vm8715 = vcmask 80896
    %8716 = vst.msk [vmem:[%s10] sm:$0xff] %vm8715, %v8712
    // Predicated region
    $region58: #{net_forward.1} parent=1 // pred_check
      _
    $region59: #{net_forward.1} parent=1 // pred_check_branch
      %8718 = sbr.rel (0) target = $region61
    $region60: #{net_forward.1} parent=1 // pred_region
      _
    $region61: #{net_forward.1} parent=1 // pred_fallthru
      _
    // Predicated region
    $region62: #{net_forward.1} parent=1 // pred_check
      _
    $region63: #{net_forward.1} parent=1 // pred_check_branch
      %8720 = sbr.rel (0) target = $region65
    $region64: #{net_forward.1} parent=1 // pred_region
      _
    $region65: #{net_forward.1} parent=1 // pred_fallthru
      _
    %8721 = vsyncpa [#allocation3], 1
    %8722 = vsyncpa [#allocation5], 1
    %8723 = vsyncpa [#allocation8], 1

</llo_original>
